<compile_context>
chip_gen: v6e
topology: v6e:2x2x1
jax: 0.10.0
libtpu: 0.0.40
codegen_flags: <defaults>
</compile_context>

<pallas_src>
import numpy as np
import jax
import jax.numpy as jnp
from jax import lax
from jax.experimental import pallas as pl
from jax.experimental.pallas import tpu as pltpu

_HI = lax.Precision.HIGHEST
_VMEM_LIMIT = 48 * 1024 * 1024  # fits v5e/v6e (128 MiB) and v7x (64 MiB) physical VMEM


def _dot(a, b):
    return jnp.dot(a, b, preferred_element_type=jnp.float32, precision=_HI)


# ----------------------------------------------------------------------------
# Kernel 1: one RGCN layer (mean-aggregated RGCNConv + root weight + bias + ReLU)
#   out_tile = relu( x_tile @ W_root + b + sum_r (A_r_tile @ X) @ W_r )
# Grid axis = row tiles of the node dimension ("parallel" -> megacore on v7x).
# ----------------------------------------------------------------------------
def rgcn_layer_kernel(a_cat_ref, x_tile_ref, x_full_ref, wrel_ref, wroot_ref,
                      bias_ref, out_ref):
    # a_cat_ref : (TM, R*N)  relation-concatenated, degree-normalized adjacency rows
    # x_tile_ref: (TM, Din)  rows of X for this output tile (root term)
    # x_full_ref: (N,  Din)  all of X (message sources)
    # wrel_ref  : (R, Din, Dout)   wroot_ref: (Din, Dout)   bias_ref: (1, Dout)
    n = x_full_ref.shape[0]
    num_rel = wrel_ref.shape[0]
    x_full = x_full_ref[...]
    a_cat = a_cat_ref[...]

    acc = _dot(x_tile_ref[...], wroot_ref[...]) + bias_ref[...]
    # Static unroll over the tiny relation count.  Aggregate-then-transform:
    # per-tile FLOPs = R*TM*N*Din + R*TM*Din*Dout, no cross-tile recomputation.
    for r in range(num_rel):
        agg_r = _dot(a_cat[:, r * n:(r + 1) * n], x_full)   # (TM, Din)
        acc = acc + _dot(agg_r, wrel_ref[r])                 # (TM, Dout)
    out_ref[...] = jnp.maximum(acc, 0.0)


def rgcn_layer(x, a_cat, w_rel, w_root, bias, *, row_tile=128):
    n, d_in = x.shape
    num_rel, _, d_out = w_rel.shape
    assert a_cat.shape == (n, num_rel * n)
    tm = min(row_tile, n)
    assert n % tm == 0 and (tm % 8 == 0 or tm == n)
    num_tiles = n // tm

    cost = pl.CostEstimate(
        flops=(2 * num_rel * n * n * d_in          # aggregation  A_r @ X
               + 2 * num_rel * n * d_in * d_out    # per-relation transform
               + 2 * n * d_in * d_out),            # root
        transcendentals=0,
        bytes_accessed=4 * (n * num_rel * n + 2 * n * d_in
                            + num_rel * d_in * d_out + d_in * d_out
                            + d_out + n * d_out))

    return pl.pallas_call(
        rgcn_layer_kernel,
        out_shape=jax.ShapeDtypeStruct((n, d_out), jnp.float32),
        grid_spec=pltpu.PrefetchScalarGridSpec(
            num_scalar_prefetch=0,
            grid=(num_tiles,),
            in_specs=[
                pl.BlockSpec((tm, num_rel * n), lambda i: (i, 0)),       # A_cat rows
                pl.BlockSpec((tm, d_in), lambda i: (i, 0)),              # x row tile
                pl.BlockSpec((n, d_in), lambda i: (0, 0)),               # x full
                pl.BlockSpec((num_rel, d_in, d_out), lambda i: (0, 0, 0)),
                pl.BlockSpec((d_in, d_out), lambda i: (0, 0)),
                pl.BlockSpec((1, d_out), lambda i: (0, 0)),
            ],
            out_specs=pl.BlockSpec((tm, d_out), lambda i: (i, 0)),
        ),
        compiler_params=pltpu.CompilerParams(
            dimension_semantics=("parallel",),
            vmem_limit_bytes=_VMEM_LIMIT),
        cost_estimate=cost,
    )(a_cat, x, x, w_rel, w_root, bias)


# ----------------------------------------------------------------------------
# Kernel 2: ComboMLP
#   x_ab = relu( Z @ W_bilinear_flat + b )   with K = G*G (one lane-dense matmul)
#   out  = relu(relu(x_ab @ W1 + b1) @ W2 + b2) @ W3 + b3
# Grid axis = pair tiles ("parallel").
# ----------------------------------------------------------------------------
def combo_mlp_kernel(z_ref, wbf_ref, bb_ref, w1_ref, b1_ref, w2_ref, b2_ref,
                     w3_ref, b3_ref, out_ref):
    x_ab = jnp.maximum(_dot(z_ref[...], wbf_ref[...]) + bb_ref[...], 0.0)
    h = jnp.maximum(_dot(x_ab, w1_ref[...]) + b1_ref[...], 0.0)
    h = jnp.maximum(_dot(h, w2_ref[...]) + b2_ref[...], 0.0)
    out_ref[...] = _dot(h, w3_ref[...]) + b3_ref[...]


def combo_mlp(z, wb_flat, bb, w1, b1, w2, b2, w3, b3, *, pair_tile=8):
    p, k2 = z.shape
    g = w1.shape[0]
    e = w3.shape[1]
    tp = min(pair_tile, p)
    assert p % tp == 0 and (tp % 8 == 0 or tp == p)
    num_tiles = p // tp

    cost = pl.CostEstimate(
        flops=2 * p * (k2 * g + g * g + g * g + g * e),
        transcendentals=0,
        bytes_accessed=4 * (p * k2 + k2 * g + 2 * g * g + g * e + p * e + 4 * g + e))

    return pl.pallas_call(
        combo_mlp_kernel,
        out_shape=jax.ShapeDtypeStruct((p, e), jnp.float32),
        grid_spec=pltpu.PrefetchScalarGridSpec(
            num_scalar_prefetch=0,
            grid=(num_tiles,),
            in_specs=[
                pl.BlockSpec((tp, k2), lambda i: (i, 0)),
                pl.BlockSpec((k2, g), lambda i: (0, 0)),
                pl.BlockSpec((1, g), lambda i: (0, 0)),
                pl.BlockSpec((g, g), lambda i: (0, 0)),
                pl.BlockSpec((1, g), lambda i: (0, 0)),
                pl.BlockSpec((g, g), lambda i: (0, 0)),
                pl.BlockSpec((1, g), lambda i: (0, 0)),
                pl.BlockSpec((g, e), lambda i: (0, 0)),
                pl.BlockSpec((1, e), lambda i: (0, 0)),
            ],
            out_specs=pl.BlockSpec((tp, e), lambda i: (i, 0)),
        ),
        compiler_params=pltpu.CompilerParams(
            dimension_semantics=("parallel",),
            vmem_limit_bytes=_VMEM_LIMIT),
        cost_estimate=cost,
    )(z, wb_flat, bb, w1, b1, w2, b2, w3, b3)


# ----------------------------------------------------------------------------
# Wrapper glue (adjacency build, gathers, outer-product layout plumbing)
# ----------------------------------------------------------------------------
def build_normalized_adjacency(edge_index, edge_type, num_nodes, num_relations):
    src, dst = edge_index[0], edge_index[1]
    a = jnp.zeros((num_relations, num_nodes, num_nodes), jnp.float32)
    a = a.at[edge_type, dst, src].add(1.0)
    deg = a.sum(axis=-1, keepdims=True)
    a_norm = a / jnp.maximum(deg, 1.0)                # RGCNConv mean aggregation
    # Fold the relation index onto the contraction axis:
    #   a_cat[m, r*N + n] = a_norm[r, m, n]
    a_cat = jnp.transpose(a_norm, (1, 0, 2)).reshape(num_nodes,
                                                     num_relations * num_nodes)
    return a_norm, a_cat


def drug_pair_encoder_forward(params, kg_x, edge_index, edge_type, drug_idx,
                              edge_filter, num_relations, *, row_tile=128,
                              pair_tile=8):
    n = kg_x.shape[0]
    _, a_cat = build_normalized_adjacency(edge_index, edge_type, n, num_relations)

    h = kg_x
    for (w_rel, w_root, b) in params["rgcn"]:
        h = rgcn_layer(h, a_cat, w_rel, w_root, b, row_tile=row_tile)

    # TODO(synk): fuse these gathers into the combo kernel via
    # PrefetchScalarGridSpec(num_scalar_prefetch=1) + pl.Element row-gather maps.
    drug_embeds = jnp.take(h, drug_idx, axis=0)       # node_type == 0 rows
    xa = jnp.take(drug_embeds, edge_filter[0], axis=0)
    xb = jnp.take(drug_embeds, edge_filter[1], axis=0)

    # Row-wise outer-product feature map (layout plumbing, fused by XLA) so the
    # bilinear form becomes a single K = G*G lane-dense matmul in the kernel.
    g = xa.shape[1]
    z = (xa[:, :, None] * xb[:, None, :]).reshape(xa.shape[0], g * g)

    c = params["combo"]
    return combo_mlp(z, c["wb_flat"], c["bb"], c["w1"], c["b1"],
                     c["w2"], c["b2"], c["w3"], c["b3"], pair_tile=pair_tile)


# ----------------------------------------------------------------------------
# Pure-JAX reference (same math, no Pallas) for correctness checking.
# ----------------------------------------------------------------------------
def reference_forward(params, kg_x, edge_index, edge_type, drug_idx, edge_filter,
                      num_relations):
    n = kg_x.shape[0]
    a_norm, _ = build_normalized_adjacency(edge_index, edge_type, n, num_relations)

    h = kg_x
    for (w_rel, w_root, b) in params["rgcn"]:
        msgs = jnp.einsum("nd,rde->rne", h, w_rel, precision=_HI)
        agg = jnp.einsum("rmn,rne->me", a_norm, msgs, precision=_HI)
        h = jax.nn.relu(jnp.dot(h, w_root, precision=_HI) + b + agg)

    drug_embeds = jnp.take(h, drug_idx, axis=0)
    xa = jnp.take(drug_embeds, edge_filter[0], axis=0)
    xb = jnp.take(drug_embeds, edge_filter[1], axis=0)

    c = params["combo"]
    x_ab = jax.nn.relu(
        jnp.einsum("pi,oij,pj->po", xa, c["wb"], xb, precision=_HI) + c["bb"])
    hdd = jax.nn.relu(jnp.dot(x_ab, c["w1"], precision=_HI) + c["b1"])
    hdd = jax.nn.relu(jnp.dot(hdd, c["w2"], precision=_HI) + c["b2"])
    return jnp.dot(hdd, c["w3"], precision=_HI) + c["b3"]


def init_params(key, input_dim, gnn_dim, embed_dim, num_relations):
    def dense(k, fan_in, shape):
        return (jax.random.normal(k, shape, jnp.float32) / np.sqrt(fan_in)).astype(jnp.float32)

    keys = jax.random.split(key, 16)
    rgcn = []
    dims = [(input_dim, gnn_dim), (gnn_dim, gnn_dim), (gnn_dim, gnn_dim)]
    for li, (din, dout) in enumerate(dims):
        w_rel = dense(keys[3 * li + 0], din, (num_relations, din, dout))
        w_root = dense(keys[3 * li + 1], din, (din, dout))
        b = 0.01 * jax.random.normal(keys[3 * li + 2], (1, dout), jnp.float32)
        rgcn.append((w_rel, w_root, b))

    g = gnn_dim
    wb = dense(keys[9], g, (g, g, g))                  # nn.Bilinear layout (out, in1, in2)
    combo = {
        "wb": wb,
        # flattened for the kernel: wb_flat[i*G + j, o] = wb[o, i, j]
        "wb_flat": jnp.transpose(wb, (1, 2, 0)).reshape(g * g, g),
        "bb": 0.01 * jax.random.normal(keys[10], (1, g), jnp.float32),
        "w1": dense(keys[11], g, (g, g)),
        "b1": 0.01 * jax.random.normal(keys[12], (1, g), jnp.float32),
        "w2": dense(keys[13], g, (g, g)),
        "b2": 0.01 * jax.random.normal(keys[14], (1, g), jnp.float32),
        "w3": dense(keys[15], g, (g, embed_dim)),
        "b3": jnp.zeros((1, embed_dim), jnp.float32),
    }
    return {"rgcn": rgcn, "combo": combo}


if __name__ == "__main__":
    # Lane-dense channel dims (128) and a >1-step grid on both kernels.
    input_dim, gnn_dim, embed_dim = 64, 128, 128
    num_nodes, num_relations, num_node_types = 256, 3, 2
    num_edges, num_pairs = 512, 16

    key = jax.random.PRNGKey(0)
    k_x, k_ei, k_et, k_ef, k_p = jax.random.split(key, 5)

    kg_x = jax.random.normal(k_x, (num_nodes, input_dim), jnp.float32)
    edge_index = jax.random.randint(k_ei, (2, num_edges), 0, num_nodes, jnp.int32)
    edge_type = jax.random.randint(k_et, (num_edges,), 0, num_relations, jnp.int32)

    # node_type: even nodes are drugs (type 0) -> static drug index set.
    node_type = np.arange(num_nodes) % num_node_types
    drug_idx = jnp.asarray(np.where(node_type == 0)[0], jnp.int32)
    num_drugs = int(drug_idx.shape[0])

    edge_filter = jax.random.randint(k_ef, (2, num_pairs), 0, num_drugs, jnp.int32)

    params = init_params(k_p, input_dim, gnn_dim, embed_dim, num_relations)

    out = drug_pair_encoder_forward(params, kg_x, edge_index, edge_type,
                                    drug_idx, edge_filter, num_relations,
                                    row_tile=128, pair_tile=8)
    out = jax.block_until_ready(out)

    ref = jax.block_until_ready(
        reference_forward(params, kg_x, edge_index, edge_type,
                          drug_idx, edge_filter, num_relations))

    assert out.shape == (num_pairs, embed_dim)
    np.testing.assert_allclose(np.asarray(out), np.asarray(ref), rtol=2e-3, atol=2e-3)
    print("KERNEL_OK")
</pallas_src>

<mosaic_0001>
module attributes {stable_mosaic.version = 11 : i64} {
  func.func @rgcn_layer_kernel(%arg0: i32, %arg1: memref<128x768xf32, #tpu.memory_space<vmem>>, %arg2: memref<128x64xf32, #tpu.memory_space<vmem>>, %arg3: memref<256x64xf32, #tpu.memory_space<vmem>>, %arg4: memref<3x64x128xf32, #tpu.memory_space<vmem>>, %arg5: memref<64x128xf32, #tpu.memory_space<vmem>>, %arg6: memref<1x128xf32, #tpu.memory_space<vmem>>, %arg7: memref<128x128xf32, #tpu.memory_space<vmem>>) attributes {dimension_semantics = [#tpu.dimension_semantics<parallel>], iteration_bounds = array<i64: 2>, scalar_prefetch = 0 : i64, scratch_operands = 0 : i64, tpu.core_type = #tpu.core_type<tc>, window_params = [{transform_indices = @transform_0, window_bounds = array<i64: 128, 768>}, {transform_indices = @transform_1, window_bounds = array<i64: 128, 64>}, {pipeline_mode = #tpu.pipeline_mode<synchronous>, transform_indices = @transform_2, window_bounds = array<i64: 256, 64>}, {pipeline_mode = #tpu.pipeline_mode<synchronous>, transform_indices = @transform_3, window_bounds = array<i64: 3, 64, 128>}, {pipeline_mode = #tpu.pipeline_mode<synchronous>, transform_indices = @transform_4, window_bounds = array<i64: 64, 128>}, {pipeline_mode = #tpu.pipeline_mode<synchronous>, transform_indices = @transform_5, window_bounds = array<i64: 1, 128>}, {transform_indices = @transform_6, window_bounds = array<i64: 128, 128>}]} {
    %c0 = arith.constant 0 : index
    %c0_0 = arith.constant 0 : index
    %0 = vector.load %arg3[%c0, %c0_0] : memref<256x64xf32, #tpu.memory_space<vmem>>, vector<256x64xf32>
    %c0_1 = arith.constant 0 : index
    %c0_2 = arith.constant 0 : index
    %1 = vector.load %arg1[%c0_1, %c0_2] : memref<128x768xf32, #tpu.memory_space<vmem>>, vector<128x768xf32>
    %c0_3 = arith.constant 0 : index
    %c0_4 = arith.constant 0 : index
    %2 = vector.load %arg2[%c0_3, %c0_4] : memref<128x64xf32, #tpu.memory_space<vmem>>, vector<128x64xf32>
    %c0_5 = arith.constant 0 : index
    %c0_6 = arith.constant 0 : index
    %3 = vector.load %arg5[%c0_5, %c0_6] : memref<64x128xf32, #tpu.memory_space<vmem>>, vector<64x128xf32>
    %cst = arith.constant dense<0.000000e+00> : vector<128x128xf32>
    %4 = tpu.matmul %2, %3, %cst {dimension_numbers = #tpu.dot_dimension_numbers<[1], [0], [0], [1], [0, 0, 1, 1], [], []>, precision = #tpu.contract_precision<fp32>} : vector<128x64xf32>, vector<64x128xf32>, vector<128x128xf32> -> vector<128x128xf32>
    %c0_7 = arith.constant 0 : index
    %c0_8 = arith.constant 0 : index
    %5 = vector.load %arg6[%c0_7, %c0_8] : memref<1x128xf32, #tpu.memory_space<vmem>>, vector<1x128xf32>
    %6 = vector.broadcast %5 : vector<1x128xf32> to vector<128x128xf32>
    %7 = arith.addf %4, %6 : vector<128x128xf32>
    %8 = vector.extract_strided_slice %1 {offsets = [0, 0], sizes = [128, 256], strides = [1, 1]} : vector<128x768xf32> to vector<128x256xf32>
    %cst_9 = arith.constant dense<0.000000e+00> : vector<128x64xf32>
    %9 = tpu.matmul %8, %0, %cst_9 {dimension_numbers = #tpu.dot_dimension_numbers<[1], [0], [0], [1], [0, 0, 1, 1], [], []>, precision = #tpu.contract_precision<fp32>} : vector<128x256xf32>, vector<256x64xf32>, vector<128x64xf32> -> vector<128x64xf32>
    %c0_10 = arith.constant 0 : index
    %c0_11 = arith.constant 0 : index
    %c0_12 = arith.constant 0 : index
    %10 = vector.load %arg4[%c0_10, %c0_11, %c0_12] : memref<3x64x128xf32, #tpu.memory_space<vmem>>, vector<1x64x128xf32>
    %11 = vector.shape_cast %10 : vector<1x64x128xf32> to vector<64x128xf32>
    %cst_13 = arith.constant dense<0.000000e+00> : vector<128x128xf32>
    %12 = tpu.matmul %9, %11, %cst_13 {dimension_numbers = #tpu.dot_dimension_numbers<[1], [0], [0], [1], [0, 0, 1, 1], [], []>, precision = #tpu.contract_precision<fp32>} : vector<128x64xf32>, vector<64x128xf32>, vector<128x128xf32> -> vector<128x128xf32>
    %13 = arith.addf %7, %12 : vector<128x128xf32>
    %14 = vector.extract_strided_slice %1 {offsets = [0, 256], sizes = [128, 256], strides = [1, 1]} : vector<128x768xf32> to vector<128x256xf32>
    %cst_14 = arith.constant dense<0.000000e+00> : vector<128x64xf32>
    %15 = tpu.matmul %14, %0, %cst_14 {dimension_numbers = #tpu.dot_dimension_numbers<[1], [0], [0], [1], [0, 0, 1, 1], [], []>, precision = #tpu.contract_precision<fp32>} : vector<128x256xf32>, vector<256x64xf32>, vector<128x64xf32> -> vector<128x64xf32>
    %c1 = arith.constant 1 : index
    %c0_15 = arith.constant 0 : index
    %c0_16 = arith.constant 0 : index
    %16 = vector.load %arg4[%c1, %c0_15, %c0_16] : memref<3x64x128xf32, #tpu.memory_space<vmem>>, vector<1x64x128xf32>
    %17 = vector.shape_cast %16 : vector<1x64x128xf32> to vector<64x128xf32>
    %cst_17 = arith.constant dense<0.000000e+00> : vector<128x128xf32>
    %18 = tpu.matmul %15, %17, %cst_17 {dimension_numbers = #tpu.dot_dimension_numbers<[1], [0], [0], [1], [0, 0, 1, 1], [], []>, precision = #tpu.contract_precision<fp32>} : vector<128x64xf32>, vector<64x128xf32>, vector<128x128xf32> -> vector<128x128xf32>
    %19 = arith.addf %13, %18 : vector<128x128xf32>
    %20 = vector.extract_strided_slice %1 {offsets = [0, 512], sizes = [128, 256], strides = [1, 1]} : vector<128x768xf32> to vector<128x256xf32>
    %cst_18 = arith.constant dense<0.000000e+00> : vector<128x64xf32>
    %21 = tpu.matmul %20, %0, %cst_18 {dimension_numbers = #tpu.dot_dimension_numbers<[1], [0], [0], [1], [0, 0, 1, 1], [], []>, precision = #tpu.contract_precision<fp32>} : vector<128x256xf32>, vector<256x64xf32>, vector<128x64xf32> -> vector<128x64xf32>
    %c2 = arith.constant 2 : index
    %c0_19 = arith.constant 0 : index
    %c0_20 = arith.constant 0 : index
    %22 = vector.load %arg4[%c2, %c0_19, %c0_20] : memref<3x64x128xf32, #tpu.memory_space<vmem>>, vector<1x64x128xf32>
    %23 = vector.shape_cast %22 : vector<1x64x128xf32> to vector<64x128xf32>
    %cst_21 = arith.constant dense<0.000000e+00> : vector<128x128xf32>
    %24 = tpu.matmul %21, %23, %cst_21 {dimension_numbers = #tpu.dot_dimension_numbers<[1], [0], [0], [1], [0, 0, 1, 1], [], []>, precision = #tpu.contract_precision<fp32>} : vector<128x64xf32>, vector<64x128xf32>, vector<128x128xf32> -> vector<128x128xf32>
    %25 = arith.addf %19, %24 : vector<128x128xf32>
    %cst_22 = arith.constant 0.000000e+00 : f32
    %26 = vector.broadcast %cst_22 : f32 to vector<128x128xf32>
    %27 = arith.maximumf %25, %26 : vector<128x128xf32>
    %c0_23 = arith.constant 0 : index
    %c0_24 = arith.constant 0 : index
    %28 = vector.load %arg7[%c0_23, %c0_24] : memref<128x128xf32, #tpu.memory_space<vmem>>, vector<128x128xf32>
    tpu.vector_store %arg7[%c0_23, %c0_24], %27 {strides = array<i32>} : memref<128x128xf32, #tpu.memory_space<vmem>>, vector<128x128xf32>,
    return
  }
  func.func @transform_0(%arg0: i32) -> (i32, i32) {
    %c0_i32 = arith.constant 0 : i32
    %c0_i32_0 = arith.constant 0 : i32
    return %arg0, %c0_i32 : i32, i32
  }
  func.func @transform_1(%arg0: i32) -> (i32, i32) {
    %c0_i32 = arith.constant 0 : i32
    %c0_i32_0 = arith.constant 0 : i32
    return %arg0, %c0_i32 : i32, i32
  }
  func.func @transform_2(%arg0: i32) -> (i32, i32) {
    %c0_i32 = arith.constant 0 : i32
    %c0_i32_0 = arith.constant 0 : i32
    %c0_i32_1 = arith.constant 0 : i32
    return %c0_i32, %c0_i32_0 : i32, i32
  }
  func.func @transform_3(%arg0: i32) -> (i32, i32, i32) {
    %c0_i32 = arith.constant 0 : i32
    %c0_i32_0 = arith.constant 0 : i32
    %c0_i32_1 = arith.constant 0 : i32
    %c0_i32_2 = arith.constant 0 : i32
    return %c0_i32, %c0_i32_0, %c0_i32_1 : i32, i32, i32
  }
  func.func @transform_4(%arg0: i32) -> (i32, i32) {
    %c0_i32 = arith.constant 0 : i32
    %c0_i32_0 = arith.constant 0 : i32
    %c0_i32_1 = arith.constant 0 : i32
    return %c0_i32, %c0_i32_0 : i32, i32
  }
  func.func @transform_5(%arg0: i32) -> (i32, i32) {
    %c0_i32 = arith.constant 0 : i32
    %c0_i32_0 = arith.constant 0 : i32
    %c0_i32_1 = arith.constant 0 : i32
    return %c0_i32, %c0_i32_0 : i32, i32
  }
  func.func @transform_6(%arg0: i32) -> (i32, i32) {
    %c0_i32 = arith.constant 0 : i32
    %c0_i32_0 = arith.constant 0 : i32
    return %arg0, %c0_i32 : i32, i32
  }
}

</mosaic_0001>

<llo_original>
// kernel: tpu_custom_call.1
$region0: #{tpu_custom_call.1}
  #allocation0 [shape = 'u32[]', space=smem, size = 0x4, offset = 0x4, fixed_abs, tag = 'smem constant byte address 0x4 - core index']
  #allocation1 [shape = 'u32[144,128]{1,0:T(1,128)}', space=vmem, size = 0x12000, scoped, tag = 'internal scratch']
  %s0 = inlined_call_operand.hbm [shape: f32[256,768], index: 0, kind: input, shape index: {}]
  %s1 = inlined_call_operand.vmem [shape: f32[256,64], index: 1, kind: input, shape index: {}]
  %s2 = inlined_call_operand.vmem [shape: f32[256,64], index: 2, kind: input, shape index: {}]
  %s3 = inlined_call_operand.vmem [shape: f32[3,64,128], index: 3, kind: input, shape index: {}]
  %s4 = inlined_call_operand.vmem [shape: f32[64,128], index: 4, kind: input, shape index: {}]
  %s5 = inlined_call_operand.vmem [shape: f32[1,128], index: 5, kind: input, shape index: {}]
  %s6 = inlined_call_operand.hbm [shape: f32[256,128], index: 6, kind: output, shape index: {}]
  %s7 = sld [smem:[#allocation0]]
  $region61: #{tpu_custom_call.1} parent=0
    _
  %s9 = ssub.s32 1, %s7
  %s10 = scalar_select 0, %s9, %s7
  $region1: #{tpu_custom_call.1} parent=0
    #allocation2 [shape = 'u8[786432]{0}', space=vmem, size = 0xc0000, scoped, tag = 'input window, operand 0']
    #allocation3 [shape = 's32[2]{0}', space=sflag, size = 0x8, scoped, tag = 'scoped memory for tpu_custom_call.1']
    #allocation4 [shape = 's32[2]{0}', space=sflag, size = 0x8, scoped, tag = 'scoped memory for tpu_custom_call.1']
    #allocation5 [shape = 'u8[131072]{0}', space=vmem, size = 0x20000, scoped, tag = 'output window, operand 0']
    %11 = vsyncpa [#allocation3], 0
    %s12 = scalar_lea.sflag [#allocation3], 1
    %13 = vsyncpa %s12, 0
    %14 = vsyncpa [#allocation4], 0
    %s15 = scalar_lea.sflag [#allocation4], 1
    %16 = vsyncpa %s15, 0
    loop: start=0, step=1, limit=4
    $region2: #{tpu_custom_call.1} parent=1 // loop_pre_header
      _
    $region3: #{tpu_custom_call.1} parent=1 // loop_header
      %s18 = sphi 0, %s22
      %p19 = scmp.ge.s32.totalorder %s18, 4
      %s28 = sphi 0, %s30
      %s31 = sphi 0, %s28
      %s32 = sphi 0, %s31
      %s48 = sphi 0, %s32
      %s54 = sphi 0, %s56
      %s57 = sphi 0, %s54
      %s58 = sphi 0, %s57
      %s74 = sphi 0, %s58
      %s78 = sphi 0, %s78
      %s80 = sphi 0, %s78
      %s81 = sphi 0, %s80
      %s95 = sphi 0, %s81
      %s99 = sphi 0, %s99
      %s101 = sphi 0, %s99
      %s102 = sphi 0, %s101
      %s116 = sphi 0, %s102
      %s120 = sphi 0, %s120
      %s122 = sphi 0, %s120
      %s123 = sphi 0, %s122
      %s137 = sphi 0, %s123
      %s141 = sphi 0, %s141
      %s143 = sphi 0, %s141
      %s144 = sphi 0, %s143
      %s158 = sphi 0, %s144
      %s164 = sphi 0, %s166
      %s167 = sphi 0, %s164
      %s168 = sphi 0, %s167
      %s184 = sphi 0, %s168
    $region4: #{tpu_custom_call.1} parent=1 // loop_header_branch
      %21 = sbr.rel (%p19) target = $region8
    $region5: #{tpu_custom_call.1} parent=1 // loop_body
      %s23 = ssub.s32 %s18, 1
      %s24 = ssub.s32 %s18, 2
      %s25 = sadd.s32 %s18, 1
      %s26 = ssub.s32 %s18, %s25
      %p27 = scmp.eq.s32.totalorder %s26, 0
      %s29 = sadd.s32 %s28, 1
      %s30 = scalar_select %p27, %s28, %s29
      %p33 = pneg %p27
      %p34 = scmp.eq.s32.totalorder %s18, 1
      %p35 = por %p33, %p34
      %p36 = scmp.ne.s32.totalorder %s28, %s31
      %p37 = scmp.eq.s32.totalorder %s18, 0
      %p38 = por %p36, %p37
      %p39 = scmp.ne.s32.totalorder %s28, %s31
      %p40 = scmp.eq.s32.totalorder %s23, 1
      %p41 = por %p39, %p40
      %p42 = scmp.ne.s32.totalorder %s31, %s32
      %p43 = scmp.eq.s32.totalorder %s23, 0
      %p44 = por %p42, %p43
      %p45 = scmp.ne.s32.totalorder %s31, %s32
      %p46 = scmp.eq.s32.totalorder %s24, 1
      %p47 = por %p45, %p46
      %p49 = scmp.ne.s32.totalorder %s32, %s48
      %p50 = scmp.eq.s32.totalorder %s24, 0
      %p51 = por %p49, %p50
      %s52 = ssub.s32 %s18, %s25
      %p53 = scmp.eq.s32.totalorder %s52, 0
      %s55 = sadd.s32 %s54, 1
      %s56 = scalar_select %p53, %s54, %s55
      %p59 = pneg %p53
      %p60 = scmp.eq.s32.totalorder %s18, 1
      %p61 = por %p59, %p60
      %p62 = scmp.ne.s32.totalorder %s54, %s57
      %p63 = scmp.eq.s32.totalorder %s18, 0
      %p64 = por %p62, %p63
      %p65 = scmp.ne.s32.totalorder %s54, %s57
      %p66 = scmp.eq.s32.totalorder %s23, 1
      %p67 = por %p65, %p66
      %p68 = scmp.ne.s32.totalorder %s57, %s58
      %p69 = scmp.eq.s32.totalorder %s23, 0
      %p70 = por %p68, %p69
      %p71 = scmp.ne.s32.totalorder %s57, %s58
      %p72 = scmp.eq.s32.totalorder %s24, 1
      %p73 = por %p71, %p72
      %p75 = scmp.ne.s32.totalorder %s58, %s74
      %p76 = scmp.eq.s32.totalorder %s24, 0
      %p77 = por %p75, %p76
      %s79 = sadd.s32 %s78, 1
      %p82 = scmp.eq.s32.totalorder %s18, 1
      %p83 = scmp.ne.s32.totalorder %s78, %s80
      %p84 = scmp.eq.s32.totalorder %s18, 0
      %p85 = por %p83, %p84
      %p86 = scmp.ne.s32.totalorder %s78, %s80
      %p87 = scmp.eq.s32.totalorder %s23, 1
      %p88 = por %p86, %p87
      %p89 = scmp.ne.s32.totalorder %s80, %s81
      %p90 = scmp.eq.s32.totalorder %s23, 0
      %p91 = por %p89, %p90
      %p92 = scmp.ne.s32.totalorder %s80, %s81
      %p93 = scmp.eq.s32.totalorder %s24, 1
      %p94 = por %p92, %p93
      %p96 = scmp.ne.s32.totalorder %s81, %s95
      %p97 = scmp.eq.s32.totalorder %s24, 0
      %p98 = por %p96, %p97
      %s100 = sadd.s32 %s99, 1
      %p103 = scmp.eq.s32.totalorder %s18, 1
      %p104 = scmp.ne.s32.totalorder %s99, %s101
      %p105 = scmp.eq.s32.totalorder %s18, 0
      %p106 = por %p104, %p105
      %p107 = scmp.ne.s32.totalorder %s99, %s101
      %p108 = scmp.eq.s32.totalorder %s23, 1
      %p109 = por %p107, %p108
      %p110 = scmp.ne.s32.totalorder %s101, %s102
      %p111 = scmp.eq.s32.totalorder %s23, 0
      %p112 = por %p110, %p111
      %p113 = scmp.ne.s32.totalorder %s101, %s102
      %p114 = scmp.eq.s32.totalorder %s24, 1
      %p115 = por %p113, %p114
      %p117 = scmp.ne.s32.totalorder %s102, %s116
      %p118 = scmp.eq.s32.totalorder %s24, 0
      %p119 = por %p117, %p118
      %s121 = sadd.s32 %s120, 1
      %p124 = scmp.eq.s32.totalorder %s18, 1
      %p125 = scmp.ne.s32.totalorder %s120, %s122
      %p126 = scmp.eq.s32.totalorder %s18, 0
      %p127 = por %p125, %p126
      %p128 = scmp.ne.s32.totalorder %s120, %s122
      %p129 = scmp.eq.s32.totalorder %s23, 1
      %p130 = por %p128, %p129
      %p131 = scmp.ne.s32.totalorder %s122, %s123
      %p132 = scmp.eq.s32.totalorder %s23, 0
      %p133 = por %p131, %p132
      %p134 = scmp.ne.s32.totalorder %s122, %s123
      %p135 = scmp.eq.s32.totalorder %s24, 1
      %p136 = por %p134, %p135
      %p138 = scmp.ne.s32.totalorder %s123, %s137
      %p139 = scmp.eq.s32.totalorder %s24, 0
      %p140 = por %p138, %p139
      %s142 = sadd.s32 %s141, 1
      %p145 = scmp.eq.s32.totalorder %s18, 1
      %p146 = scmp.ne.s32.totalorder %s141, %s143
      %p147 = scmp.eq.s32.totalorder %s18, 0
      %p148 = por %p146, %p147
      %p149 = scmp.ne.s32.totalorder %s141, %s143
      %p150 = scmp.eq.s32.totalorder %s23, 1
      %p151 = por %p149, %p150
      %p152 = scmp.ne.s32.totalorder %s143, %s144
      %p153 = scmp.eq.s32.totalorder %s23, 0
      %p154 = por %p152, %p153
      %p155 = scmp.ne.s32.totalorder %s143, %s144
      %p156 = scmp.eq.s32.totalorder %s24, 1
      %p157 = por %p155, %p156
      %p159 = scmp.ne.s32.totalorder %s144, %s158
      %p160 = scmp.eq.s32.totalorder %s24, 0
      %p161 = por %p159, %p160
      %s162 = ssub.s32 %s18, %s25
      %p163 = scmp.eq.s32.totalorder %s162, 0
      %s165 = sadd.s32 %s164, 1
      %s166 = scalar_select %p163, %s164, %s165
      %p169 = pneg %p163
      %p170 = scmp.eq.s32.totalorder %s18, 1
      %p171 = por %p169, %p170
      %p172 = scmp.ne.s32.totalorder %s164, %s167
      %p173 = scmp.eq.s32.totalorder %s18, 0
      %p174 = por %p172, %p173
      %p175 = scmp.ne.s32.totalorder %s164, %s167
      %p176 = scmp.eq.s32.totalorder %s23, 1
      %p177 = por %p175, %p176
      %p178 = scmp.ne.s32.totalorder %s167, %s168
      %p179 = scmp.eq.s32.totalorder %s23, 0
      %p180 = por %p178, %p179
      %p181 = scmp.ne.s32.totalorder %s167, %s168
      %p182 = scmp.eq.s32.totalorder %s24, 1
      %p183 = por %p181, %p182
      %p185 = scmp.ne.s32.totalorder %s168, %s184
      %p186 = scmp.eq.s32.totalorder %s24, 0
      %p187 = por %p185, %p186
      %p188 = scmp.le.s32.totalorder 1, %s18
      %p189 = scmp.lt.s32.totalorder %s18, 3
      %p190 = pnand %p188, %p189
      %p191 = pneg %p190
      // Predicated region
      $region9: #{tpu_custom_call.1} parent=5 // pred_check
        _
      $region10: #{tpu_custom_call.1} parent=5 // pred_check_branch
        %193 = sbr.rel (%p190) target = $region12
      $region11: #{tpu_custom_call.1} parent=5 // pred_region
        %s194 = ssub.s32 %s18, 1
        // Predicated region
        $region13: #{tpu_custom_call.1} parent=11 // pred_check
          %p195 = pneg %p91
        $region14: #{tpu_custom_call.1} parent=11 // pred_check_branch
          %197 = sbr.rel (%p195) target = $region16
        $region15: #{tpu_custom_call.1} parent=11 // pred_region
          _
        $region16: #{tpu_custom_call.1} parent=11 // pred_fallthru
          _
        // Predicated region
        $region17: #{tpu_custom_call.1} parent=11 // pred_check
          %p198 = pneg %p112
        $region18: #{tpu_custom_call.1} parent=11 // pred_check_branch
          %200 = sbr.rel (%p198) target = $region20
        $region19: #{tpu_custom_call.1} parent=11 // pred_region
          _
        $region20: #{tpu_custom_call.1} parent=11 // pred_fallthru
          _
        // Predicated region
        $region21: #{tpu_custom_call.1} parent=11 // pred_check
          %p201 = pneg %p133
        $region22: #{tpu_custom_call.1} parent=11 // pred_check_branch
          %203 = sbr.rel (%p201) target = $region24
        $region23: #{tpu_custom_call.1} parent=11 // pred_region
          _
        $region24: #{tpu_custom_call.1} parent=11 // pred_fallthru
          _
        // Predicated region
        $region25: #{tpu_custom_call.1} parent=11 // pred_check
          %p204 = pneg %p154
        $region26: #{tpu_custom_call.1} parent=11 // pred_check_branch
          %206 = sbr.rel (%p204) target = $region28
        $region27: #{tpu_custom_call.1} parent=11 // pred_region
          _
        $region28: #{tpu_custom_call.1} parent=11 // pred_fallthru
          _
      $region12: #{tpu_custom_call.1} parent=5 // pred_fallthru
        _
      %p207 = scmp.lt.s32.totalorder %s18, 2
      // Predicated region
      $region29: #{tpu_custom_call.1} parent=5 // pred_check
        %p208 = pneg %p207
      $region30: #{tpu_custom_call.1} parent=5 // pred_check_branch
        %210 = sbr.rel (%p208) target = $region32
      $region31: #{tpu_custom_call.1} parent=5 // pred_region
        // Predicated region
        $region33: #{tpu_custom_call.1} parent=31 // pred_check
          %p211 = pneg %p38
        $region34: #{tpu_custom_call.1} parent=31 // pred_check_branch
          %213 = sbr.rel (%p211) target = $region36
        $region35: #{tpu_custom_call.1} parent=31 // pred_region
          %s214 = sand.u32 %s28, 1
          %s215 = scalar_lea.sflag [#allocation3], %s214
          %s216 = sand.u32 %s28, 1
          %s217 = smul.addr %s216, 768
          %s218 = scalar_lea.vmem [#allocation2], %s217
          %s219 = smul.u32 16, %s18
          %s221 = ssub.s32 12288, 12288
          %222 = vsyncadd %s215, %s221
          %s223 = smul.addr %s219, 6
          %s224 = smul.addr %s223, 128
          %s225 = scalar_lea.hbm %s0, %s224
          %s226 = sshll.u32 %s218, 4
          %s227 = int_to_ptr.vmem [resolvable:$true] %s226
          %232 = dma.hbm_to_vmem [thread:$0]  %s225, 12288, %s227, %s215, 768, 768, 48
        $region36: #{tpu_custom_call.1} parent=31 // pred_fallthru
          _
        // Predicated region
        $region37: #{tpu_custom_call.1} parent=31 // pred_check
          %p233 = pneg %p64
        $region38: #{tpu_custom_call.1} parent=31 // pred_check_branch
          %235 = sbr.rel (%p233) target = $region40
        $region39: #{tpu_custom_call.1} parent=31 // pred_region
          %s236 = smul.u32 16, %s18
          %p237 = scmp.lt.s32.totalorder %s236, 31
          %s238 = scalar_select %p237, %s236, 31
          %s239 = smul.addr %s238, 8
          %s240 = scalar_lea.vmem %s1, %s239
          %s241 = smul.u32 16, %s18
        $region40: #{tpu_custom_call.1} parent=31 // pred_fallthru
          _
      $region32: #{tpu_custom_call.1} parent=5 // pred_fallthru
        _
      %p242 = scmp.le.s32.totalorder 1, %s18
      %p243 = scmp.lt.s32.totalorder %s18, 3
      %p244 = pnand %p242, %p243
      %p245 = pneg %p244
      // Predicated region
      $region41: #{tpu_custom_call.1} parent=5 // pred_check
        _
      $region42: #{tpu_custom_call.1} parent=5 // pred_check_branch
        %247 = sbr.rel (%p244) target = $region44
      $region43: #{tpu_custom_call.1} parent=5 // pred_region
        %s248 = ssub.s32 %s18, 1
        %s249 = sand.u32 %s31, 1
        %s250 = scalar_lea.sflag [#allocation3], %s249
        %s251 = sand.u32 %s31, 1
        %s252 = smul.addr %s251, 768
        %s253 = scalar_lea.vmem [#allocation2], %s252
        // Predicated region
        $region45: #{tpu_custom_call.1} parent=43 // pred_check
          %p254 = pneg %p44
        $region46: #{tpu_custom_call.1} parent=43 // pred_check_branch
          %256 = sbr.rel (%p254) target = $region48
        $region47: #{tpu_custom_call.1} parent=43 // pred_region
          %257 = dma.done %s250, 12288
        $region48: #{tpu_custom_call.1} parent=43 // pred_fallthru
          _
        %s258 = sand.u32 %s31, 1
        %s259 = scalar_lea.sflag [#allocation3], %s258
        %s260 = sand.u32 %s31, 1
        %s261 = smul.addr %s260, 768
        %s262 = scalar_lea.vmem [#allocation2], %s261
        %p263 = pneg %p44
        %p264 = pneg %p41
        %s265 = smul.u32 16, %s23
        %p266 = scmp.lt.s32.totalorder %s265, 31
        %s267 = scalar_select %p266, %s265, 31
        %s268 = smul.addr %s267, 8
        %s269 = scalar_lea.vmem %s1, %s268
        %p270 = pneg %p70
        %p271 = pneg %p67
        %p272 = pneg %p91
        %p273 = pneg %p88
        %p274 = pneg %p112
        %p275 = pneg %p109
        %p276 = pneg %p133
        %p277 = pneg %p130
        %p278 = pneg %p154
        %p279 = pneg %p151
        %p280 = pneg %p180
        %p281 = pneg %p177
        %s282 = sand.u32 %s167, 1
        %s283 = scalar_lea.sflag [#allocation4], %s282
        %s284 = sand.u32 %s167, 1
        %s285 = smul.addr %s284, 128
        %s286 = scalar_lea.vmem [#allocation5], %s285
        %s287 = smul.u32 16, %s23
        %s288 = smul.u32 16, %s23
        %p289 = scmp.lt.s32.totalorder %s288, 31
        %s290 = scalar_select %p289, %s288, 31
        %s291 = smul.addr %s290, 8
        %s292 = scalar_lea.vmem %s1, %s291
        %s293 = smul.u32 16, %s23
        %s294 = smul.u32 16, %s23
        %v295 = vld [vmem:[%s2] sm:$0xff]
        %v296 = vld [vmem:[%s2 + $0x8] sm:$0xff]
        %v297 = vld [vmem:[%s2 + $0x10] sm:$0xff]
        %v298 = vld [vmem:[%s2 + $0x18] sm:$0xff]
        %v299 = vld [vmem:[%s2 + $0x20] sm:$0xff]
        %v300 = vld [vmem:[%s2 + $0x28] sm:$0xff]
        %v301 = vld [vmem:[%s2 + $0x30] sm:$0xff]
        %v302 = vld [vmem:[%s2 + $0x38] sm:$0xff]
        %v303 = vld [vmem:[%s2 + $0x40] sm:$0xff]
        %v304 = vld [vmem:[%s2 + $0x48] sm:$0xff]
        %v305 = vld [vmem:[%s2 + $0x50] sm:$0xff]
        %v306 = vld [vmem:[%s2 + $0x58] sm:$0xff]
        %v307 = vld [vmem:[%s2 + $0x60] sm:$0xff]
        %v308 = vld [vmem:[%s2 + $0x68] sm:$0xff]
        %v309 = vld [vmem:[%s2 + $0x70] sm:$0xff]
        %v310 = vld [vmem:[%s2 + $0x78] sm:$0xff]
        %v311 = vld [vmem:[%s2 + $0x80] sm:$0xff]
        %v312 = vld [vmem:[%s2 + $0x88] sm:$0xff]
        %v313 = vld [vmem:[%s2 + $0x90] sm:$0xff]
        %v314 = vld [vmem:[%s2 + $0x98] sm:$0xff]
        %v315 = vld [vmem:[%s2 + $0xa0] sm:$0xff]
        %v316 = vld [vmem:[%s2 + $0xa8] sm:$0xff]
        %v317 = vld [vmem:[%s2 + $0xb0] sm:$0xff]
        %v318 = vld [vmem:[%s2 + $0xb8] sm:$0xff]
        %v319 = vld [vmem:[%s2 + $0xc0] sm:$0xff]
        %v320 = vld [vmem:[%s2 + $0xc8] sm:$0xff]
        %v321 = vld [vmem:[%s2 + $0xd0] sm:$0xff]
        %v322 = vld [vmem:[%s2 + $0xd8] sm:$0xff]
        %v323 = vld [vmem:[%s2 + $0xe0] sm:$0xff]
        %v324 = vld [vmem:[%s2 + $0xe8] sm:$0xff]
        %v325 = vld [vmem:[%s2 + $0xf0] sm:$0xff]
        %v326 = vld [vmem:[%s2 + $0xf8] sm:$0xff]
        %v327 = vld [vmem:[%s253] sm:$0xff]
        %v328 = vld [vmem:[%s253 + $0x8] sm:$0xff]
        %v329 = vld [vmem:[%s253 + $0x10] sm:$0xff]
        %v330 = vld [vmem:[%s253 + $0x18] sm:$0xff]
        %v331 = vld [vmem:[%s253 + $0x20] sm:$0xff]
        %v332 = vld [vmem:[%s253 + $0x28] sm:$0xff]
        %v333 = vld [vmem:[%s253 + $0x30] sm:$0xff]
        %v334 = vld [vmem:[%s253 + $0x38] sm:$0xff]
        %v335 = vld [vmem:[%s253 + $0x40] sm:$0xff]
        %v336 = vld [vmem:[%s253 + $0x48] sm:$0xff]
        %v337 = vld [vmem:[%s253 + $0x50] sm:$0xff]
        %v338 = vld [vmem:[%s253 + $0x58] sm:$0xff]
        %v339 = vld [vmem:[%s253 + $0x60] sm:$0xff]
        %v340 = vld [vmem:[%s253 + $0x68] sm:$0xff]
        %v341 = vld [vmem:[%s253 + $0x70] sm:$0xff]
        %v342 = vld [vmem:[%s253 + $0x78] sm:$0xff]
        %v343 = vld [vmem:[%s253 + $0x80] sm:$0xff]
        %v344 = vld [vmem:[%s253 + $0x88] sm:$0xff]
        %v345 = vld [vmem:[%s253 + $0x90] sm:$0xff]
        %v346 = vld [vmem:[%s253 + $0x98] sm:$0xff]
        %v347 = vld [vmem:[%s253 + $0xa0] sm:$0xff]
        %v348 = vld [vmem:[%s253 + $0xa8] sm:$0xff]
        %v349 = vld [vmem:[%s253 + $0xb0] sm:$0xff]
        %v350 = vld [vmem:[%s253 + $0xb8] sm:$0xff]
        %v351 = vld [vmem:[%s253 + $0xc0] sm:$0xff]
        %v352 = vld [vmem:[%s253 + $0xc8] sm:$0xff]
        %v353 = vld [vmem:[%s253 + $0xd0] sm:$0xff]
        %v354 = vld [vmem:[%s253 + $0xd8] sm:$0xff]
        %v355 = vld [vmem:[%s253 + $0xe0] sm:$0xff]
        %v356 = vld [vmem:[%s253 + $0xe8] sm:$0xff]
        %v357 = vld [vmem:[%s253 + $0xf0] sm:$0xff]
        %v358 = vld [vmem:[%s253 + $0xf8] sm:$0xff]
        %v359 = vld [vmem:[%s253 + $0x100] sm:$0xff]
        %v360 = vld [vmem:[%s253 + $0x108] sm:$0xff]
        %v361 = vld [vmem:[%s253 + $0x110] sm:$0xff]
        %v362 = vld [vmem:[%s253 + $0x118] sm:$0xff]
        %v363 = vld [vmem:[%s253 + $0x120] sm:$0xff]
        %v364 = vld [vmem:[%s253 + $0x128] sm:$0xff]
        %v365 = vld [vmem:[%s253 + $0x130] sm:$0xff]
        %v366 = vld [vmem:[%s253 + $0x138] sm:$0xff]
        %v367 = vld [vmem:[%s253 + $0x140] sm:$0xff]
        %v368 = vld [vmem:[%s253 + $0x148] sm:$0xff]
        %v369 = vld [vmem:[%s253 + $0x150] sm:$0xff]
        %v370 = vld [vmem:[%s253 + $0x158] sm:$0xff]
        %v371 = vld [vmem:[%s253 + $0x160] sm:$0xff]
        %v372 = vld [vmem:[%s253 + $0x168] sm:$0xff]
        %v373 = vld [vmem:[%s253 + $0x170] sm:$0xff]
        %v374 = vld [vmem:[%s253 + $0x178] sm:$0xff]
        %v375 = vld [vmem:[%s253 + $0x180] sm:$0xff]
        %v376 = vld [vmem:[%s253 + $0x188] sm:$0xff]
        %v377 = vld [vmem:[%s253 + $0x190] sm:$0xff]
        %v378 = vld [vmem:[%s253 + $0x198] sm:$0xff]
        %v379 = vld [vmem:[%s253 + $0x1a0] sm:$0xff]
        %v380 = vld [vmem:[%s253 + $0x1a8] sm:$0xff]
        %v381 = vld [vmem:[%s253 + $0x1b0] sm:$0xff]
        %v382 = vld [vmem:[%s253 + $0x1b8] sm:$0xff]
        %v383 = vld [vmem:[%s253 + $0x1c0] sm:$0xff]
        %v384 = vld [vmem:[%s253 + $0x1c8] sm:$0xff]
        %v385 = vld [vmem:[%s253 + $0x1d0] sm:$0xff]
        %v386 = vld [vmem:[%s253 + $0x1d8] sm:$0xff]
        %v387 = vld [vmem:[%s253 + $0x1e0] sm:$0xff]
        %v388 = vld [vmem:[%s253 + $0x1e8] sm:$0xff]
        %v389 = vld [vmem:[%s253 + $0x1f0] sm:$0xff]
        %v390 = vld [vmem:[%s253 + $0x1f8] sm:$0xff]
        %v391 = vld [vmem:[%s253 + $0x200] sm:$0xff]
        %v392 = vld [vmem:[%s253 + $0x208] sm:$0xff]
        %v393 = vld [vmem:[%s253 + $0x210] sm:$0xff]
        %v394 = vld [vmem:[%s253 + $0x218] sm:$0xff]
        %v395 = vld [vmem:[%s253 + $0x220] sm:$0xff]
        %v396 = vld [vmem:[%s253 + $0x228] sm:$0xff]
        %v397 = vld [vmem:[%s253 + $0x230] sm:$0xff]
        %v398 = vld [vmem:[%s253 + $0x238] sm:$0xff]
        %v399 = vld [vmem:[%s253 + $0x240] sm:$0xff]
        %v400 = vld [vmem:[%s253 + $0x248] sm:$0xff]
        %v401 = vld [vmem:[%s253 + $0x250] sm:$0xff]
        %v402 = vld [vmem:[%s253 + $0x258] sm:$0xff]
        %v403 = vld [vmem:[%s253 + $0x260] sm:$0xff]
        %v404 = vld [vmem:[%s253 + $0x268] sm:$0xff]
        %v405 = vld [vmem:[%s253 + $0x270] sm:$0xff]
        %v406 = vld [vmem:[%s253 + $0x278] sm:$0xff]
        %v407 = vld [vmem:[%s253 + $0x280] sm:$0xff]
        %v408 = vld [vmem:[%s253 + $0x288] sm:$0xff]
        %v409 = vld [vmem:[%s253 + $0x290] sm:$0xff]
        %v410 = vld [vmem:[%s253 + $0x298] sm:$0xff]
        %v411 = vld [vmem:[%s253 + $0x2a0] sm:$0xff]
        %v412 = vld [vmem:[%s253 + $0x2a8] sm:$0xff]
        %v413 = vld [vmem:[%s253 + $0x2b0] sm:$0xff]
        %v414 = vld [vmem:[%s253 + $0x2b8] sm:$0xff]
        %v415 = vld [vmem:[%s253 + $0x2c0] sm:$0xff]
        %v416 = vld [vmem:[%s253 + $0x2c8] sm:$0xff]
        %v417 = vld [vmem:[%s253 + $0x2d0] sm:$0xff]
        %v418 = vld [vmem:[%s253 + $0x2d8] sm:$0xff]
        %v419 = vld [vmem:[%s253 + $0x2e0] sm:$0xff]
        %v420 = vld [vmem:[%s253 + $0x2e8] sm:$0xff]
        %v421 = vld [vmem:[%s253 + $0x2f0] sm:$0xff]
        %v422 = vld [vmem:[%s253 + $0x2f8] sm:$0xff]
        %v423 = vld [vmem:[%s292] sm:$0xff]
        %v424 = vld [vmem:[%s292 + $0x8] sm:$0xff]
        %v425 = vld [vmem:[%s292 + $0x10] sm:$0xff]
        %v426 = vld [vmem:[%s292 + $0x18] sm:$0xff]
        %v427 = vld [vmem:[%s292 + $0x20] sm:$0xff]
        %v428 = vld [vmem:[%s292 + $0x28] sm:$0xff]
        %v429 = vld [vmem:[%s292 + $0x30] sm:$0xff]
        %v430 = vld [vmem:[%s292 + $0x38] sm:$0xff]
        %v431 = vld [vmem:[%s292 + $0x40] sm:$0xff]
        %v432 = vld [vmem:[%s292 + $0x48] sm:$0xff]
        %v433 = vld [vmem:[%s292 + $0x50] sm:$0xff]
        %v434 = vld [vmem:[%s292 + $0x58] sm:$0xff]
        %v435 = vld [vmem:[%s292 + $0x60] sm:$0xff]
        %v436 = vld [vmem:[%s292 + $0x68] sm:$0xff]
        %v437 = vld [vmem:[%s292 + $0x70] sm:$0xff]
        %v438 = vld [vmem:[%s292 + $0x78] sm:$0xff]
        %v439 = vld [vmem:[%s4] sm:$0xff]
        %v440 = vld [vmem:[%s4 + $0x8] sm:$0xff]
        %v441 = vld [vmem:[%s4 + $0x10] sm:$0xff]
        %v442 = vld [vmem:[%s4 + $0x18] sm:$0xff]
        %v443 = vld [vmem:[%s4 + $0x20] sm:$0xff]
        %v444 = vld [vmem:[%s4 + $0x28] sm:$0xff]
        %v445 = vld [vmem:[%s4 + $0x30] sm:$0xff]
        %v446 = vld [vmem:[%s4 + $0x38] sm:$0xff]
        %v447 = vld [vmem:[%s5] sm:$0x1]
        %v449 = vlaneseq
        %v450 = vshrl.u32 %v449, 7
        %v451 = vsub.s32 0, %v450
        %v452 = vrot.slane %v447, %v451
        %vm454 = vcmask 523264
        %v456 = vsel %vm454, %v423, 0
        %v459 = vsel %vm454, %v424, 0
        %v462 = vsel %vm454, %v425, 0
        %v465 = vsel %vm454, %v426, 0
        %v468 = vsel %vm454, %v427, 0
        %v471 = vsel %vm454, %v428, 0
        %v474 = vsel %vm454, %v429, 0
        %v477 = vsel %vm454, %v430, 0
        %v480 = vsel %vm454, %v431, 0
        %v483 = vsel %vm454, %v432, 0
        %v486 = vsel %vm454, %v433, 0
        %v489 = vsel %vm454, %v434, 0
        %v492 = vsel %vm454, %v435, 0
        %v495 = vsel %vm454, %v436, 0
        %v498 = vsel %vm454, %v437, 0
        %v501 = vsel %vm454, %v438, 0
        %503 = vmatprep.subr.mxu0 0.0
        %504 = vmatpush1.msra.mxu0 0.0
        %505 = vmatprep.subr.mxu0 0.0
        %506 = vmatpush1.msra.mxu0 0.0
        %507 = vmatprep.subr.mxu0 0.0
        %508 = vmatpush1.msra.mxu0 0.0
        %509 = vmatprep.subr.mxu0 0.0
        %510 = vmatpush1.msra.mxu0 0.0
        %511 = vmatprep.subr.mxu0 0.0
        %512 = vmatpush1.msra.mxu0 0.0
        %513 = vmatprep.subr.mxu0 0.0
        %514 = vmatpush1.msra.mxu0 0.0
        %515 = vmatprep.subr.mxu0 0.0
        %516 = vmatpush1.msra.mxu0 0.0
        %517 = vmatprep.subr.mxu0 0.0
        %518 = vmatpush1.msra.mxu0 0.0
        %519 = vmatprep.subr.mxu0 0.0
        %v520 = vand.u32 %v446, 4294901760
        %521 = vmatpush1.msra.mxu0 %v520
        %522 = vmatprep.subr.mxu0 0.0
        %v523 = vand.u32 %v445, 4294901760
        %524 = vmatpush1.msra.mxu0 %v523
        %525 = vmatprep.subr.mxu0 0.0
        %v526 = vand.u32 %v444, 4294901760
        %527 = vmatpush1.msra.mxu0 %v526
        %528 = vmatprep.subr.mxu0 0.0
        %v529 = vand.u32 %v443, 4294901760
        %530 = vmatpush1.msra.mxu0 %v529
        %531 = vmatprep.subr.mxu0 0.0
        %v532 = vand.u32 %v442, 4294901760
        %533 = vmatpush1.msra.mxu0 %v532
        %534 = vmatprep.subr.mxu0 0.0
        %v535 = vand.u32 %v441, 4294901760
        %536 = vmatpush1.msra.mxu0 %v535
        %537 = vmatprep.subr.mxu0 0.0
        %v538 = vand.u32 %v440, 4294901760
        %539 = vmatpush1.msra.mxu0 %v538
        %540 = vmatprep.subr.mxu0 0.0
        %v541 = vand.u32 %v439, 4294901760
        %542 = vmatpush1.msra.mxu0 %v541
        %543 = vmatprep.subr.mxu0 0.0
        %544 = vmatpush2.msra.mxu0 0.0
        %545 = vmatprep.subr.mxu0 0.0
        %546 = vmatpush2.msra.mxu0 0.0
        %547 = vmatprep.subr.mxu0 0.0
        %548 = vmatpush2.msra.mxu0 0.0
        %549 = vmatprep.subr.mxu0 0.0
        %550 = vmatpush2.msra.mxu0 0.0
        %551 = vmatprep.subr.mxu0 0.0
        %552 = vmatpush2.msra.mxu0 0.0
        %553 = vmatprep.subr.mxu0 0.0
        %554 = vmatpush2.msra.mxu0 0.0
        %555 = vmatprep.subr.mxu0 0.0
        %556 = vmatpush2.msra.mxu0 0.0
        %557 = vmatprep.subr.mxu0 0.0
        %558 = vmatpush2.msra.mxu0 0.0
        %559 = vmatprep.subr.mxu0 0.0
        %560 = vmatpush2.msra.mxu0 0.0
        %561 = vmatprep.subr.mxu0 0.0
        %562 = vmatpush2.msra.mxu0 0.0
        %563 = vmatprep.subr.mxu0 0.0
        %564 = vmatpush2.msra.mxu0 0.0
        %565 = vmatprep.subr.mxu0 0.0
        %566 = vmatpush2.msra.mxu0 0.0
        %567 = vmatprep.subr.mxu0 0.0
        %568 = vmatpush2.msra.mxu0 0.0
        %569 = vmatprep.subr.mxu0 0.0
        %570 = vmatpush2.msra.mxu0 0.0
        %571 = vmatprep.subr.mxu0 0.0
        %572 = vmatpush2.msra.mxu0 0.0
        %573 = vmatprep.subr.mxu0 0.0
        %574 = vmatpush2.msra.mxu0 0.0
        %575 = vmatprep.mubr.f32.mxu0 0.0
        %v576 = vand.u32 %v456, 4294901760
        %v577 = vsub.f32 %v456, %v576
        %v578 = vand.u32 %v577, 4294901760
        %v579 = vsub.f32 %v577, %v578
        %v580 = vand.u32 %v579, 4294901760
        %581 = vmatmul.mubr.f32.gmra.mxu0 %v580
        %v582 = vpop.f32.mrf.mxu0
        %v583 = vadd.f32 %v452, %v582
        %v584 = vpop.f32.mrf.mxu0
        %585 = vmatprep.mubr.f32.mxu0 0.0
        %v586 = vand.u32 %v459, 4294901760
        %v587 = vsub.f32 %v459, %v586
        %v588 = vand.u32 %v587, 4294901760
        %v589 = vsub.f32 %v587, %v588
        %v590 = vand.u32 %v589, 4294901760
        %591 = vmatmul.mubr.f32.gmra.mxu0 %v590
        %v592 = vpop.f32.mrf.mxu0
        %v593 = vadd.f32 %v452, %v592
        %v594 = vpop.f32.mrf.mxu0
        %595 = vmatprep.mubr.f32.mxu0 0.0
        %v596 = vand.u32 %v462, 4294901760
        %v597 = vsub.f32 %v462, %v596
        %v598 = vand.u32 %v597, 4294901760
        %v599 = vsub.f32 %v597, %v598
        %v600 = vand.u32 %v599, 4294901760
        %601 = vmatmul.mubr.f32.gmra.mxu0 %v600
        %v602 = vpop.f32.mrf.mxu0
        %v603 = vadd.f32 %v452, %v602
        %v604 = vpop.f32.mrf.mxu0
        %605 = vmatprep.mubr.f32.mxu0 0.0
        %v606 = vand.u32 %v465, 4294901760
        %v607 = vsub.f32 %v465, %v606
        %v608 = vand.u32 %v607, 4294901760
        %v609 = vsub.f32 %v607, %v608
        %v610 = vand.u32 %v609, 4294901760
        %611 = vmatmul.mubr.f32.gmra.mxu0 %v610
        %v612 = vpop.f32.mrf.mxu0
        %v613 = vadd.f32 %v452, %v612
        %v614 = vpop.f32.mrf.mxu0
        %615 = vmatprep.mubr.f32.mxu0 0.0
        %v616 = vand.u32 %v468, 4294901760
        %v617 = vsub.f32 %v468, %v616
        %v618 = vand.u32 %v617, 4294901760
        %v619 = vsub.f32 %v617, %v618
        %v620 = vand.u32 %v619, 4294901760
        %621 = vmatmul.mubr.f32.gmra.mxu0 %v620
        %v622 = vpop.f32.mrf.mxu0
        %v623 = vadd.f32 %v452, %v622
        %v624 = vpop.f32.mrf.mxu0
        %625 = vmatprep.mubr.f32.mxu0 0.0
        %v626 = vand.u32 %v471, 4294901760
        %v627 = vsub.f32 %v471, %v626
        %v628 = vand.u32 %v627, 4294901760
        %v629 = vsub.f32 %v627, %v628
        %v630 = vand.u32 %v629, 4294901760
        %631 = vmatmul.mubr.f32.gmra.mxu0 %v630
        %v632 = vpop.f32.mrf.mxu0
        %v633 = vadd.f32 %v452, %v632
        %v634 = vpop.f32.mrf.mxu0
        %635 = vmatprep.mubr.f32.mxu0 0.0
        %v636 = vand.u32 %v474, 4294901760
        %v637 = vsub.f32 %v474, %v636
        %v638 = vand.u32 %v637, 4294901760
        %v639 = vsub.f32 %v637, %v638
        %v640 = vand.u32 %v639, 4294901760
        %641 = vmatmul.mubr.f32.gmra.mxu0 %v640
        %v642 = vpop.f32.mrf.mxu0
        %v643 = vadd.f32 %v452, %v642
        %v644 = vpop.f32.mrf.mxu0
        %645 = vmatprep.mubr.f32.mxu0 0.0
        %v646 = vand.u32 %v477, 4294901760
        %v647 = vsub.f32 %v477, %v646
        %v648 = vand.u32 %v647, 4294901760
        %v649 = vsub.f32 %v647, %v648
        %v650 = vand.u32 %v649, 4294901760
        %651 = vmatmul.mubr.f32.gmra.mxu0 %v650
        %v652 = vpop.f32.mrf.mxu0
        %v653 = vadd.f32 %v452, %v652
        %v654 = vpop.f32.mrf.mxu0
        %655 = vmatprep.mubr.f32.mxu0 0.0
        %v656 = vand.u32 %v480, 4294901760
        %v657 = vsub.f32 %v480, %v656
        %v658 = vand.u32 %v657, 4294901760
        %v659 = vsub.f32 %v657, %v658
        %v660 = vand.u32 %v659, 4294901760
        %661 = vmatmul.mubr.f32.gmra.mxu0 %v660
        %v662 = vpop.f32.mrf.mxu0
        %v663 = vadd.f32 %v452, %v662
        %v664 = vpop.f32.mrf.mxu0
        %665 = vmatprep.mubr.f32.mxu0 0.0
        %v666 = vand.u32 %v483, 4294901760
        %v667 = vsub.f32 %v483, %v666
        %v668 = vand.u32 %v667, 4294901760
        %v669 = vsub.f32 %v667, %v668
        %v670 = vand.u32 %v669, 4294901760
        %671 = vmatmul.mubr.f32.gmra.mxu0 %v670
        %v672 = vpop.f32.mrf.mxu0
        %v673 = vadd.f32 %v452, %v672
        %v674 = vpop.f32.mrf.mxu0
        %675 = vmatprep.mubr.f32.mxu0 0.0
        %v676 = vand.u32 %v486, 4294901760
        %v677 = vsub.f32 %v486, %v676
        %v678 = vand.u32 %v677, 4294901760
        %v679 = vsub.f32 %v677, %v678
        %v680 = vand.u32 %v679, 4294901760
        %681 = vmatmul.mubr.f32.gmra.mxu0 %v680
        %v682 = vpop.f32.mrf.mxu0
        %v683 = vadd.f32 %v452, %v682
        %v684 = vpop.f32.mrf.mxu0
        %685 = vmatprep.mubr.f32.mxu0 0.0
        %v686 = vand.u32 %v489, 4294901760
        %v687 = vsub.f32 %v489, %v686
        %v688 = vand.u32 %v687, 4294901760
        %v689 = vsub.f32 %v687, %v688
        %v690 = vand.u32 %v689, 4294901760
        %691 = vmatmul.mubr.f32.gmra.mxu0 %v690
        %v692 = vpop.f32.mrf.mxu0
        %v693 = vadd.f32 %v452, %v692
        %v694 = vpop.f32.mrf.mxu0
        %695 = vmatprep.mubr.f32.mxu0 0.0
        %v696 = vand.u32 %v492, 4294901760
        %v697 = vsub.f32 %v492, %v696
        %v698 = vand.u32 %v697, 4294901760
        %v699 = vsub.f32 %v697, %v698
        %v700 = vand.u32 %v699, 4294901760
        %701 = vmatmul.mubr.f32.gmra.mxu0 %v700
        %v702 = vpop.f32.mrf.mxu0
        %v703 = vadd.f32 %v452, %v702
        %v704 = vpop.f32.mrf.mxu0
        %705 = vmatprep.mubr.f32.mxu0 0.0
        %v706 = vand.u32 %v495, 4294901760
        %v707 = vsub.f32 %v495, %v706
        %v708 = vand.u32 %v707, 4294901760
        %v709 = vsub.f32 %v707, %v708
        %v710 = vand.u32 %v709, 4294901760
        %711 = vmatmul.mubr.f32.gmra.mxu0 %v710
        %v712 = vpop.f32.mrf.mxu0
        %v713 = vadd.f32 %v452, %v712
        %v714 = vpop.f32.mrf.mxu0
        %715 = vmatprep.mubr.f32.mxu0 0.0
        %v716 = vand.u32 %v498, 4294901760
        %v717 = vsub.f32 %v498, %v716
        %v718 = vand.u32 %v717, 4294901760
        %v719 = vsub.f32 %v717, %v718
        %v720 = vand.u32 %v719, 4294901760
        %721 = vmatmul.mubr.f32.gmra.mxu0 %v720
        %v722 = vpop.f32.mrf.mxu0
        %v723 = vadd.f32 %v452, %v722
        %v724 = vpop.f32.mrf.mxu0
        %725 = vmatprep.mubr.f32.mxu0 0.0
        %v726 = vand.u32 %v501, 4294901760
        %v727 = vsub.f32 %v501, %v726
        %v728 = vand.u32 %v727, 4294901760
        %v729 = vsub.f32 %v727, %v728
        %v730 = vand.u32 %v729, 4294901760
        %731 = vmatmul.mubr.f32.gmra.mxu0 %v730
        %v732 = vpop.f32.mrf.mxu0
        %v733 = vadd.f32 %v452, %v732
        %v734 = vpop.f32.mrf.mxu0
        %735 = vdwg.mxu0
        %736 = vmatprep.subr.mxu0 0.0
        %737 = vmatpush1.msra.mxu0 0.0
        %738 = vmatprep.subr.mxu0 0.0
        %739 = vmatpush1.msra.mxu0 0.0
        %740 = vmatprep.subr.mxu0 0.0
        %741 = vmatpush1.msra.mxu0 0.0
        %742 = vmatprep.subr.mxu0 0.0
        %743 = vmatpush1.msra.mxu0 0.0
        %744 = vmatprep.subr.mxu0 0.0
        %745 = vmatpush1.msra.mxu0 0.0
        %746 = vmatprep.subr.mxu0 0.0
        %747 = vmatpush1.msra.mxu0 0.0
        %748 = vmatprep.subr.mxu0 0.0
        %749 = vmatpush1.msra.mxu0 0.0
        %750 = vmatprep.subr.mxu0 0.0
        %751 = vmatpush1.msra.mxu0 0.0
        %752 = vmatprep.subr.mxu0 0.0
        %v753 = vand.u32 %v446, 4294901760
        %v754 = vsub.f32 %v446, %v753
        %v755 = vand.u32 %v754, 4294901760
        %v756 = vsub.f32 %v754, %v755
        %v757 = vand.u32 %v756, 4294901760
        %758 = vmatpush1.msra.mxu0 %v757
        %759 = vmatprep.subr.mxu0 0.0
        %v760 = vand.u32 %v445, 4294901760
        %v761 = vsub.f32 %v445, %v760
        %v762 = vand.u32 %v761, 4294901760
        %v763 = vsub.f32 %v761, %v762
        %v764 = vand.u32 %v763, 4294901760
        %765 = vmatpush1.msra.mxu0 %v764
        %766 = vmatprep.subr.mxu0 0.0
        %v767 = vand.u32 %v444, 4294901760
        %v768 = vsub.f32 %v444, %v767
        %v769 = vand.u32 %v768, 4294901760
        %v770 = vsub.f32 %v768, %v769
        %v771 = vand.u32 %v770, 4294901760
        %772 = vmatpush1.msra.mxu0 %v771
        %773 = vmatprep.subr.mxu0 0.0
        %v774 = vand.u32 %v443, 4294901760
        %v775 = vsub.f32 %v443, %v774
        %v776 = vand.u32 %v775, 4294901760
        %v777 = vsub.f32 %v775, %v776
        %v778 = vand.u32 %v777, 4294901760
        %779 = vmatpush1.msra.mxu0 %v778
        %780 = vmatprep.subr.mxu0 0.0
        %v781 = vand.u32 %v442, 4294901760
        %v782 = vsub.f32 %v442, %v781
        %v783 = vand.u32 %v782, 4294901760
        %v784 = vsub.f32 %v782, %v783
        %v785 = vand.u32 %v784, 4294901760
        %786 = vmatpush1.msra.mxu0 %v785
        %787 = vmatprep.subr.mxu0 0.0
        %v788 = vand.u32 %v441, 4294901760
        %v789 = vsub.f32 %v441, %v788
        %v790 = vand.u32 %v789, 4294901760
        %v791 = vsub.f32 %v789, %v790
        %v792 = vand.u32 %v791, 4294901760
        %793 = vmatpush1.msra.mxu0 %v792
        %794 = vmatprep.subr.mxu0 0.0
        %v795 = vand.u32 %v440, 4294901760
        %v796 = vsub.f32 %v440, %v795
        %v797 = vand.u32 %v796, 4294901760
        %v798 = vsub.f32 %v796, %v797
        %v799 = vand.u32 %v798, 4294901760
        %800 = vmatpush1.msra.mxu0 %v799
        %801 = vmatprep.subr.mxu0 0.0
        %v802 = vand.u32 %v439, 4294901760
        %v803 = vsub.f32 %v439, %v802
        %v804 = vand.u32 %v803, 4294901760
        %v805 = vsub.f32 %v803, %v804
        %v806 = vand.u32 %v805, 4294901760
        %807 = vmatpush1.msra.mxu0 %v806
        %808 = vmatprep.subr.mxu0 0.0
        %809 = vmatpush2.msra.mxu0 0.0
        %810 = vmatprep.subr.mxu0 0.0
        %811 = vmatpush2.msra.mxu0 0.0
        %812 = vmatprep.subr.mxu0 0.0
        %813 = vmatpush2.msra.mxu0 0.0
        %814 = vmatprep.subr.mxu0 0.0
        %815 = vmatpush2.msra.mxu0 0.0
        %816 = vmatprep.subr.mxu0 0.0
        %817 = vmatpush2.msra.mxu0 0.0
        %818 = vmatprep.subr.mxu0 0.0
        %819 = vmatpush2.msra.mxu0 0.0
        %820 = vmatprep.subr.mxu0 0.0
        %821 = vmatpush2.msra.mxu0 0.0
        %822 = vmatprep.subr.mxu0 0.0
        %823 = vmatpush2.msra.mxu0 0.0
        %824 = vmatprep.subr.mxu0 0.0
        %825 = vmatpush2.msra.mxu0 0.0
        %826 = vmatprep.subr.mxu0 0.0
        %827 = vmatpush2.msra.mxu0 0.0
        %828 = vmatprep.subr.mxu0 0.0
        %829 = vmatpush2.msra.mxu0 0.0
        %830 = vmatprep.subr.mxu0 0.0
        %831 = vmatpush2.msra.mxu0 0.0
        %832 = vmatprep.subr.mxu0 0.0
        %833 = vmatpush2.msra.mxu0 0.0
        %834 = vmatprep.subr.mxu0 0.0
        %835 = vmatpush2.msra.mxu0 0.0
        %836 = vmatprep.subr.mxu0 0.0
        %837 = vmatpush2.msra.mxu0 0.0
        %838 = vmatprep.subr.mxu0 0.0
        %839 = vmatpush2.msra.mxu0 0.0
        %840 = vmatprep.mubr.f32.mxu0 0.0
        %v841 = vand.u32 %v456, 4294901760
        %842 = vmatmul.mubr.f32.gmra.mxu0 %v841
        %v843 = vpop.f32.mrf.mxu0
        %v844 = vadd.f32 %v583, %v843
        %v845 = vpop.f32.mrf.mxu0
        %846 = vmatprep.mubr.f32.mxu0 0.0
        %v847 = vand.u32 %v459, 4294901760
        %848 = vmatmul.mubr.f32.gmra.mxu0 %v847
        %v849 = vpop.f32.mrf.mxu0
        %v850 = vadd.f32 %v593, %v849
        %v851 = vpop.f32.mrf.mxu0
        %852 = vmatprep.mubr.f32.mxu0 0.0
        %v853 = vand.u32 %v462, 4294901760
        %854 = vmatmul.mubr.f32.gmra.mxu0 %v853
        %v855 = vpop.f32.mrf.mxu0
        %v856 = vadd.f32 %v603, %v855
        %v857 = vpop.f32.mrf.mxu0
        %858 = vmatprep.mubr.f32.mxu0 0.0
        %v859 = vand.u32 %v465, 4294901760
        %860 = vmatmul.mubr.f32.gmra.mxu0 %v859
        %v861 = vpop.f32.mrf.mxu0
        %v862 = vadd.f32 %v613, %v861
        %v863 = vpop.f32.mrf.mxu0
        %864 = vmatprep.mubr.f32.mxu0 0.0
        %v865 = vand.u32 %v468, 4294901760
        %866 = vmatmul.mubr.f32.gmra.mxu0 %v865
        %v867 = vpop.f32.mrf.mxu0
        %v868 = vadd.f32 %v623, %v867
        %v869 = vpop.f32.mrf.mxu0
        %870 = vmatprep.mubr.f32.mxu0 0.0
        %v871 = vand.u32 %v471, 4294901760
        %872 = vmatmul.mubr.f32.gmra.mxu0 %v871
        %v873 = vpop.f32.mrf.mxu0
        %v874 = vadd.f32 %v633, %v873
        %v875 = vpop.f32.mrf.mxu0
        %876 = vmatprep.mubr.f32.mxu0 0.0
        %v877 = vand.u32 %v474, 4294901760
        %878 = vmatmul.mubr.f32.gmra.mxu0 %v877
        %v879 = vpop.f32.mrf.mxu0
        %v880 = vadd.f32 %v643, %v879
        %v881 = vpop.f32.mrf.mxu0
        %882 = vmatprep.mubr.f32.mxu0 0.0
        %v883 = vand.u32 %v477, 4294901760
        %884 = vmatmul.mubr.f32.gmra.mxu0 %v883
        %v885 = vpop.f32.mrf.mxu0
        %v886 = vadd.f32 %v653, %v885
        %v887 = vpop.f32.mrf.mxu0
        %888 = vmatprep.mubr.f32.mxu0 0.0
        %v889 = vand.u32 %v480, 4294901760
        %890 = vmatmul.mubr.f32.gmra.mxu0 %v889
        %v891 = vpop.f32.mrf.mxu0
        %v892 = vadd.f32 %v663, %v891
        %v893 = vpop.f32.mrf.mxu0
        %894 = vmatprep.mubr.f32.mxu0 0.0
        %v895 = vand.u32 %v483, 4294901760
        %896 = vmatmul.mubr.f32.gmra.mxu0 %v895
        %v897 = vpop.f32.mrf.mxu0
        %v898 = vadd.f32 %v673, %v897
        %v899 = vpop.f32.mrf.mxu0
        %900 = vmatprep.mubr.f32.mxu0 0.0
        %v901 = vand.u32 %v486, 4294901760
        %902 = vmatmul.mubr.f32.gmra.mxu0 %v901
        %v903 = vpop.f32.mrf.mxu0
        %v904 = vadd.f32 %v683, %v903
        %v905 = vpop.f32.mrf.mxu0
        %906 = vmatprep.mubr.f32.mxu0 0.0
        %v907 = vand.u32 %v489, 4294901760
        %908 = vmatmul.mubr.f32.gmra.mxu0 %v907
        %v909 = vpop.f32.mrf.mxu0
        %v910 = vadd.f32 %v693, %v909
        %v911 = vpop.f32.mrf.mxu0
        %912 = vmatprep.mubr.f32.mxu0 0.0
        %v913 = vand.u32 %v492, 4294901760
        %914 = vmatmul.mubr.f32.gmra.mxu0 %v913
        %v915 = vpop.f32.mrf.mxu0
        %v916 = vadd.f32 %v703, %v915
        %v917 = vpop.f32.mrf.mxu0
        %918 = vmatprep.mubr.f32.mxu0 0.0
        %v919 = vand.u32 %v495, 4294901760
        %920 = vmatmul.mubr.f32.gmra.mxu0 %v919
        %v921 = vpop.f32.mrf.mxu0
        %v922 = vadd.f32 %v713, %v921
        %v923 = vpop.f32.mrf.mxu0
        %924 = vmatprep.mubr.f32.mxu0 0.0
        %v925 = vand.u32 %v498, 4294901760
        %926 = vmatmul.mubr.f32.gmra.mxu0 %v925
        %v927 = vpop.f32.mrf.mxu0
        %v928 = vadd.f32 %v723, %v927
        %v929 = vpop.f32.mrf.mxu0
        %930 = vmatprep.mubr.f32.mxu0 0.0
        %v931 = vand.u32 %v501, 4294901760
        %932 = vmatmul.mubr.f32.gmra.mxu0 %v931
        %v933 = vpop.f32.mrf.mxu0
        %v934 = vadd.f32 %v733, %v933
        %v935 = vpop.f32.mrf.mxu0
        %936 = vdwg.mxu0
        %937 = vmatprep.subr.mxu0 0.0
        %938 = vmatpush1.msra.mxu0 0.0
        %939 = vmatprep.subr.mxu0 0.0
        %940 = vmatpush1.msra.mxu0 0.0
        %941 = vmatprep.subr.mxu0 0.0
        %942 = vmatpush1.msra.mxu0 0.0
        %943 = vmatprep.subr.mxu0 0.0
        %944 = vmatpush1.msra.mxu0 0.0
        %945 = vmatprep.subr.mxu0 0.0
        %946 = vmatpush1.msra.mxu0 0.0
        %947 = vmatprep.subr.mxu0 0.0
        %948 = vmatpush1.msra.mxu0 0.0
        %949 = vmatprep.subr.mxu0 0.0
        %950 = vmatpush1.msra.mxu0 0.0
        %951 = vmatprep.subr.mxu0 0.0
        %952 = vmatpush1.msra.mxu0 0.0
        %953 = vmatprep.subr.mxu0 0.0
        %v954 = vand.u32 %v446, 4294901760
        %v955 = vsub.f32 %v446, %v954
        %956 = vmatpush1.msra.mxu0 %v955
        %957 = vmatprep.subr.mxu0 0.0
        %v958 = vand.u32 %v445, 4294901760
        %v959 = vsub.f32 %v445, %v958
        %960 = vmatpush1.msra.mxu0 %v959
        %961 = vmatprep.subr.mxu0 0.0
        %v962 = vand.u32 %v444, 4294901760
        %v963 = vsub.f32 %v444, %v962
        %964 = vmatpush1.msra.mxu0 %v963
        %965 = vmatprep.subr.mxu0 0.0
        %v966 = vand.u32 %v443, 4294901760
        %v967 = vsub.f32 %v443, %v966
        %968 = vmatpush1.msra.mxu0 %v967
        %969 = vmatprep.subr.mxu0 0.0
        %v970 = vand.u32 %v442, 4294901760
        %v971 = vsub.f32 %v442, %v970
        %972 = vmatpush1.msra.mxu0 %v971
        %973 = vmatprep.subr.mxu0 0.0
        %v974 = vand.u32 %v441, 4294901760
        %v975 = vsub.f32 %v441, %v974
        %976 = vmatpush1.msra.mxu0 %v975
        %977 = vmatprep.subr.mxu0 0.0
        %v978 = vand.u32 %v440, 4294901760
        %v979 = vsub.f32 %v440, %v978
        %980 = vmatpush1.msra.mxu0 %v979
        %981 = vmatprep.subr.mxu0 0.0
        %v982 = vand.u32 %v439, 4294901760
        %v983 = vsub.f32 %v439, %v982
        %984 = vmatpush1.msra.mxu0 %v983
        %985 = vmatprep.subr.mxu0 0.0
        %986 = vmatpush2.msra.mxu0 0.0
        %987 = vmatprep.subr.mxu0 0.0
        %988 = vmatpush2.msra.mxu0 0.0
        %989 = vmatprep.subr.mxu0 0.0
        %990 = vmatpush2.msra.mxu0 0.0
        %991 = vmatprep.subr.mxu0 0.0
        %992 = vmatpush2.msra.mxu0 0.0
        %993 = vmatprep.subr.mxu0 0.0
        %994 = vmatpush2.msra.mxu0 0.0
        %995 = vmatprep.subr.mxu0 0.0
        %996 = vmatpush2.msra.mxu0 0.0
        %997 = vmatprep.subr.mxu0 0.0
        %998 = vmatpush2.msra.mxu0 0.0
        %999 = vmatprep.subr.mxu0 0.0
        %1000 = vmatpush2.msra.mxu0 0.0
        %1001 = vmatprep.subr.mxu0 0.0
        %1002 = vmatpush2.msra.mxu0 0.0
        %1003 = vmatprep.subr.mxu0 0.0
        %1004 = vmatpush2.msra.mxu0 0.0
        %1005 = vmatprep.subr.mxu0 0.0
        %1006 = vmatpush2.msra.mxu0 0.0
        %1007 = vmatprep.subr.mxu0 0.0
        %1008 = vmatpush2.msra.mxu0 0.0
        %1009 = vmatprep.subr.mxu0 0.0
        %1010 = vmatpush2.msra.mxu0 0.0
        %1011 = vmatprep.subr.mxu0 0.0
        %1012 = vmatpush2.msra.mxu0 0.0
        %1013 = vmatprep.subr.mxu0 0.0
        %1014 = vmatpush2.msra.mxu0 0.0
        %1015 = vmatprep.subr.mxu0 0.0
        %1016 = vmatpush2.msra.mxu0 0.0
        %1017 = vmatprep.mubr.f32.mxu0 0.0
        %v1018 = vand.u32 %v456, 4294901760
        %v1019 = vsub.f32 %v456, %v1018
        %1020 = vmatmul.mubr.f32.gmra.mxu0 %v1019
        %v1021 = vpop.f32.mrf.mxu0
        %v1022 = vadd.f32 %v844, %v1021
        %v1023 = vpop.f32.mrf.mxu0
        %1024 = vmatprep.mubr.f32.mxu0 0.0
        %v1025 = vand.u32 %v459, 4294901760
        %v1026 = vsub.f32 %v459, %v1025
        %1027 = vmatmul.mubr.f32.gmra.mxu0 %v1026
        %v1028 = vpop.f32.mrf.mxu0
        %v1029 = vadd.f32 %v850, %v1028
        %v1030 = vpop.f32.mrf.mxu0
        %1031 = vmatprep.mubr.f32.mxu0 0.0
        %v1032 = vand.u32 %v462, 4294901760
        %v1033 = vsub.f32 %v462, %v1032
        %1034 = vmatmul.mubr.f32.gmra.mxu0 %v1033
        %v1035 = vpop.f32.mrf.mxu0
        %v1036 = vadd.f32 %v856, %v1035
        %v1037 = vpop.f32.mrf.mxu0
        %1038 = vmatprep.mubr.f32.mxu0 0.0
        %v1039 = vand.u32 %v465, 4294901760
        %v1040 = vsub.f32 %v465, %v1039
        %1041 = vmatmul.mubr.f32.gmra.mxu0 %v1040
        %v1042 = vpop.f32.mrf.mxu0
        %v1043 = vadd.f32 %v862, %v1042
        %v1044 = vpop.f32.mrf.mxu0
        %1045 = vmatprep.mubr.f32.mxu0 0.0
        %v1046 = vand.u32 %v468, 4294901760
        %v1047 = vsub.f32 %v468, %v1046
        %1048 = vmatmul.mubr.f32.gmra.mxu0 %v1047
        %v1049 = vpop.f32.mrf.mxu0
        %v1050 = vadd.f32 %v868, %v1049
        %v1051 = vpop.f32.mrf.mxu0
        %1052 = vmatprep.mubr.f32.mxu0 0.0
        %v1053 = vand.u32 %v471, 4294901760
        %v1054 = vsub.f32 %v471, %v1053
        %1055 = vmatmul.mubr.f32.gmra.mxu0 %v1054
        %v1056 = vpop.f32.mrf.mxu0
        %v1057 = vadd.f32 %v874, %v1056
        %v1058 = vpop.f32.mrf.mxu0
        %1059 = vmatprep.mubr.f32.mxu0 0.0
        %v1060 = vand.u32 %v474, 4294901760
        %v1061 = vsub.f32 %v474, %v1060
        %1062 = vmatmul.mubr.f32.gmra.mxu0 %v1061
        %v1063 = vpop.f32.mrf.mxu0
        %v1064 = vadd.f32 %v880, %v1063
        %v1065 = vpop.f32.mrf.mxu0
        %1066 = vmatprep.mubr.f32.mxu0 0.0
        %v1067 = vand.u32 %v477, 4294901760
        %v1068 = vsub.f32 %v477, %v1067
        %1069 = vmatmul.mubr.f32.gmra.mxu0 %v1068
        %v1070 = vpop.f32.mrf.mxu0
        %v1071 = vadd.f32 %v886, %v1070
        %v1072 = vpop.f32.mrf.mxu0
        %1073 = vmatprep.mubr.f32.mxu0 0.0
        %v1074 = vand.u32 %v480, 4294901760
        %v1075 = vsub.f32 %v480, %v1074
        %1076 = vmatmul.mubr.f32.gmra.mxu0 %v1075
        %v1077 = vpop.f32.mrf.mxu0
        %v1078 = vadd.f32 %v892, %v1077
        %v1079 = vpop.f32.mrf.mxu0
        %1080 = vmatprep.mubr.f32.mxu0 0.0
        %v1081 = vand.u32 %v483, 4294901760
        %v1082 = vsub.f32 %v483, %v1081
        %1083 = vmatmul.mubr.f32.gmra.mxu0 %v1082
        %v1084 = vpop.f32.mrf.mxu0
        %v1085 = vadd.f32 %v898, %v1084
        %v1086 = vpop.f32.mrf.mxu0
        %1087 = vmatprep.mubr.f32.mxu0 0.0
        %v1088 = vand.u32 %v486, 4294901760
        %v1089 = vsub.f32 %v486, %v1088
        %1090 = vmatmul.mubr.f32.gmra.mxu0 %v1089
        %v1091 = vpop.f32.mrf.mxu0
        %v1092 = vadd.f32 %v904, %v1091
        %v1093 = vpop.f32.mrf.mxu0
        %1094 = vmatprep.mubr.f32.mxu0 0.0
        %v1095 = vand.u32 %v489, 4294901760
        %v1096 = vsub.f32 %v489, %v1095
        %1097 = vmatmul.mubr.f32.gmra.mxu0 %v1096
        %v1098 = vpop.f32.mrf.mxu0
        %v1099 = vadd.f32 %v910, %v1098
        %v1100 = vpop.f32.mrf.mxu0
        %1101 = vmatprep.mubr.f32.mxu0 0.0
        %v1102 = vand.u32 %v492, 4294901760
        %v1103 = vsub.f32 %v492, %v1102
        %1104 = vmatmul.mubr.f32.gmra.mxu0 %v1103
        %v1105 = vpop.f32.mrf.mxu0
        %v1106 = vadd.f32 %v916, %v1105
        %v1107 = vpop.f32.mrf.mxu0
        %1108 = vmatprep.mubr.f32.mxu0 0.0
        %v1109 = vand.u32 %v495, 4294901760
        %v1110 = vsub.f32 %v495, %v1109
        %1111 = vmatmul.mubr.f32.gmra.mxu0 %v1110
        %v1112 = vpop.f32.mrf.mxu0
        %v1113 = vadd.f32 %v922, %v1112
        %v1114 = vpop.f32.mrf.mxu0
        %1115 = vmatprep.mubr.f32.mxu0 0.0
        %v1116 = vand.u32 %v498, 4294901760
        %v1117 = vsub.f32 %v498, %v1116
        %1118 = vmatmul.mubr.f32.gmra.mxu0 %v1117
        %v1119 = vpop.f32.mrf.mxu0
        %v1120 = vadd.f32 %v928, %v1119
        %v1121 = vpop.f32.mrf.mxu0
        %1122 = vmatprep.mubr.f32.mxu0 0.0
        %v1123 = vand.u32 %v501, 4294901760
        %v1124 = vsub.f32 %v501, %v1123
        %1125 = vmatmul.mubr.f32.gmra.mxu0 %v1124
        %v1126 = vpop.f32.mrf.mxu0
        %v1127 = vadd.f32 %v934, %v1126
        %v1128 = vpop.f32.mrf.mxu0
        %1129 = vdwg.mxu0
        %1130 = vmatprep.subr.mxu0 0.0
        %1131 = vmatpush1.msra.mxu0 0.0
        %1132 = vmatprep.subr.mxu0 0.0
        %1133 = vmatpush1.msra.mxu0 0.0
        %1134 = vmatprep.subr.mxu0 0.0
        %1135 = vmatpush1.msra.mxu0 0.0
        %1136 = vmatprep.subr.mxu0 0.0
        %1137 = vmatpush1.msra.mxu0 0.0
        %1138 = vmatprep.subr.mxu0 0.0
        %1139 = vmatpush1.msra.mxu0 0.0
        %1140 = vmatprep.subr.mxu0 0.0
        %1141 = vmatpush1.msra.mxu0 0.0
        %1142 = vmatprep.subr.mxu0 0.0
        %1143 = vmatpush1.msra.mxu0 0.0
        %1144 = vmatprep.subr.mxu0 0.0
        %1145 = vmatpush1.msra.mxu0 0.0
        %1146 = vmatprep.subr.mxu0 0.0
        %v1147 = vand.u32 %v446, 4294901760
        %1148 = vmatpush1.msra.mxu0 %v1147
        %1149 = vmatprep.subr.mxu0 0.0
        %v1150 = vand.u32 %v445, 4294901760
        %1151 = vmatpush1.msra.mxu0 %v1150
        %1152 = vmatprep.subr.mxu0 0.0
        %v1153 = vand.u32 %v444, 4294901760
        %1154 = vmatpush1.msra.mxu0 %v1153
        %1155 = vmatprep.subr.mxu0 0.0
        %v1156 = vand.u32 %v443, 4294901760
        %1157 = vmatpush1.msra.mxu0 %v1156
        %1158 = vmatprep.subr.mxu0 0.0
        %v1159 = vand.u32 %v442, 4294901760
        %1160 = vmatpush1.msra.mxu0 %v1159
        %1161 = vmatprep.subr.mxu0 0.0
        %v1162 = vand.u32 %v441, 4294901760
        %1163 = vmatpush1.msra.mxu0 %v1162
        %1164 = vmatprep.subr.mxu0 0.0
        %v1165 = vand.u32 %v440, 4294901760
        %1166 = vmatpush1.msra.mxu0 %v1165
        %1167 = vmatprep.subr.mxu0 0.0
        %v1168 = vand.u32 %v439, 4294901760
        %1169 = vmatpush1.msra.mxu0 %v1168
        %1170 = vmatprep.subr.mxu0 0.0
        %1171 = vmatpush2.msra.mxu0 0.0
        %1172 = vmatprep.subr.mxu0 0.0
        %1173 = vmatpush2.msra.mxu0 0.0
        %1174 = vmatprep.subr.mxu0 0.0
        %1175 = vmatpush2.msra.mxu0 0.0
        %1176 = vmatprep.subr.mxu0 0.0
        %1177 = vmatpush2.msra.mxu0 0.0
        %1178 = vmatprep.subr.mxu0 0.0
        %1179 = vmatpush2.msra.mxu0 0.0
        %1180 = vmatprep.subr.mxu0 0.0
        %1181 = vmatpush2.msra.mxu0 0.0
        %1182 = vmatprep.subr.mxu0 0.0
        %1183 = vmatpush2.msra.mxu0 0.0
        %1184 = vmatprep.subr.mxu0 0.0
        %1185 = vmatpush2.msra.mxu0 0.0
        %1186 = vmatprep.subr.mxu0 0.0
        %1187 = vmatpush2.msra.mxu0 0.0
        %1188 = vmatprep.subr.mxu0 0.0
        %1189 = vmatpush2.msra.mxu0 0.0
        %1190 = vmatprep.subr.mxu0 0.0
        %1191 = vmatpush2.msra.mxu0 0.0
        %1192 = vmatprep.subr.mxu0 0.0
        %1193 = vmatpush2.msra.mxu0 0.0
        %1194 = vmatprep.subr.mxu0 0.0
        %1195 = vmatpush2.msra.mxu0 0.0
        %1196 = vmatprep.subr.mxu0 0.0
        %1197 = vmatpush2.msra.mxu0 0.0
        %1198 = vmatprep.subr.mxu0 0.0
        %1199 = vmatpush2.msra.mxu0 0.0
        %1200 = vmatprep.subr.mxu0 0.0
        %1201 = vmatpush2.msra.mxu0 0.0
        %1202 = vmatprep.mubr.f32.mxu0 0.0
        %v1203 = vand.u32 %v456, 4294901760
        %v1204 = vsub.f32 %v456, %v1203
        %v1205 = vand.u32 %v1204, 4294901760
        %1206 = vmatmul.mubr.f32.gmra.mxu0 %v1205
        %v1207 = vpop.f32.mrf.mxu0
        %v1208 = vadd.f32 %v1022, %v1207
        %v1209 = vpop.f32.mrf.mxu0
        %1210 = vmatprep.mubr.f32.mxu0 0.0
        %v1211 = vand.u32 %v459, 4294901760
        %v1212 = vsub.f32 %v459, %v1211
        %v1213 = vand.u32 %v1212, 4294901760
        %1214 = vmatmul.mubr.f32.gmra.mxu0 %v1213
        %v1215 = vpop.f32.mrf.mxu0
        %v1216 = vadd.f32 %v1029, %v1215
        %v1217 = vpop.f32.mrf.mxu0
        %1218 = vmatprep.mubr.f32.mxu0 0.0
        %v1219 = vand.u32 %v462, 4294901760
        %v1220 = vsub.f32 %v462, %v1219
        %v1221 = vand.u32 %v1220, 4294901760
        %1222 = vmatmul.mubr.f32.gmra.mxu0 %v1221
        %v1223 = vpop.f32.mrf.mxu0
        %v1224 = vadd.f32 %v1036, %v1223
        %v1225 = vpop.f32.mrf.mxu0
        %1226 = vmatprep.mubr.f32.mxu0 0.0
        %v1227 = vand.u32 %v465, 4294901760
        %v1228 = vsub.f32 %v465, %v1227
        %v1229 = vand.u32 %v1228, 4294901760
        %1230 = vmatmul.mubr.f32.gmra.mxu0 %v1229
        %v1231 = vpop.f32.mrf.mxu0
        %v1232 = vadd.f32 %v1043, %v1231
        %v1233 = vpop.f32.mrf.mxu0
        %1234 = vmatprep.mubr.f32.mxu0 0.0
        %v1235 = vand.u32 %v468, 4294901760
        %v1236 = vsub.f32 %v468, %v1235
        %v1237 = vand.u32 %v1236, 4294901760
        %1238 = vmatmul.mubr.f32.gmra.mxu0 %v1237
        %v1239 = vpop.f32.mrf.mxu0
        %v1240 = vadd.f32 %v1050, %v1239
        %v1241 = vpop.f32.mrf.mxu0
        %1242 = vmatprep.mubr.f32.mxu0 0.0
        %v1243 = vand.u32 %v471, 4294901760
        %v1244 = vsub.f32 %v471, %v1243
        %v1245 = vand.u32 %v1244, 4294901760
        %1246 = vmatmul.mubr.f32.gmra.mxu0 %v1245
        %v1247 = vpop.f32.mrf.mxu0
        %v1248 = vadd.f32 %v1057, %v1247
        %v1249 = vpop.f32.mrf.mxu0
        %1250 = vmatprep.mubr.f32.mxu0 0.0
        %v1251 = vand.u32 %v474, 4294901760
        %v1252 = vsub.f32 %v474, %v1251
        %v1253 = vand.u32 %v1252, 4294901760
        %1254 = vmatmul.mubr.f32.gmra.mxu0 %v1253
        %v1255 = vpop.f32.mrf.mxu0
        %v1256 = vadd.f32 %v1064, %v1255
        %v1257 = vpop.f32.mrf.mxu0
        %1258 = vmatprep.mubr.f32.mxu0 0.0
        %v1259 = vand.u32 %v477, 4294901760
        %v1260 = vsub.f32 %v477, %v1259
        %v1261 = vand.u32 %v1260, 4294901760
        %1262 = vmatmul.mubr.f32.gmra.mxu0 %v1261
        %v1263 = vpop.f32.mrf.mxu0
        %v1264 = vadd.f32 %v1071, %v1263
        %v1265 = vpop.f32.mrf.mxu0
        %1266 = vmatprep.mubr.f32.mxu0 0.0
        %v1267 = vand.u32 %v480, 4294901760
        %v1268 = vsub.f32 %v480, %v1267
        %v1269 = vand.u32 %v1268, 4294901760
        %1270 = vmatmul.mubr.f32.gmra.mxu0 %v1269
        %v1271 = vpop.f32.mrf.mxu0
        %v1272 = vadd.f32 %v1078, %v1271
        %v1273 = vpop.f32.mrf.mxu0
        %1274 = vmatprep.mubr.f32.mxu0 0.0
        %v1275 = vand.u32 %v483, 4294901760
        %v1276 = vsub.f32 %v483, %v1275
        %v1277 = vand.u32 %v1276, 4294901760
        %1278 = vmatmul.mubr.f32.gmra.mxu0 %v1277
        %v1279 = vpop.f32.mrf.mxu0
        %v1280 = vadd.f32 %v1085, %v1279
        %v1281 = vpop.f32.mrf.mxu0
        %1282 = vmatprep.mubr.f32.mxu0 0.0
        %v1283 = vand.u32 %v486, 4294901760
        %v1284 = vsub.f32 %v486, %v1283
        %v1285 = vand.u32 %v1284, 4294901760
        %1286 = vmatmul.mubr.f32.gmra.mxu0 %v1285
        %v1287 = vpop.f32.mrf.mxu0
        %v1288 = vadd.f32 %v1092, %v1287
        %v1289 = vpop.f32.mrf.mxu0
        %1290 = vmatprep.mubr.f32.mxu0 0.0
        %v1291 = vand.u32 %v489, 4294901760
        %v1292 = vsub.f32 %v489, %v1291
        %v1293 = vand.u32 %v1292, 4294901760
        %1294 = vmatmul.mubr.f32.gmra.mxu0 %v1293
        %v1295 = vpop.f32.mrf.mxu0
        %v1296 = vadd.f32 %v1099, %v1295
        %v1297 = vpop.f32.mrf.mxu0
        %1298 = vmatprep.mubr.f32.mxu0 0.0
        %v1299 = vand.u32 %v492, 4294901760
        %v1300 = vsub.f32 %v492, %v1299
        %v1301 = vand.u32 %v1300, 4294901760
        %1302 = vmatmul.mubr.f32.gmra.mxu0 %v1301
        %v1303 = vpop.f32.mrf.mxu0
        %v1304 = vadd.f32 %v1106, %v1303
        %v1305 = vpop.f32.mrf.mxu0
        %1306 = vmatprep.mubr.f32.mxu0 0.0
        %v1307 = vand.u32 %v495, 4294901760
        %v1308 = vsub.f32 %v495, %v1307
        %v1309 = vand.u32 %v1308, 4294901760
        %1310 = vmatmul.mubr.f32.gmra.mxu0 %v1309
        %v1311 = vpop.f32.mrf.mxu0
        %v1312 = vadd.f32 %v1113, %v1311
        %v1313 = vpop.f32.mrf.mxu0
        %1314 = vmatprep.mubr.f32.mxu0 0.0
        %v1315 = vand.u32 %v498, 4294901760
        %v1316 = vsub.f32 %v498, %v1315
        %v1317 = vand.u32 %v1316, 4294901760
        %1318 = vmatmul.mubr.f32.gmra.mxu0 %v1317
        %v1319 = vpop.f32.mrf.mxu0
        %v1320 = vadd.f32 %v1120, %v1319
        %v1321 = vpop.f32.mrf.mxu0
        %1322 = vmatprep.mubr.f32.mxu0 0.0
        %v1323 = vand.u32 %v501, 4294901760
        %v1324 = vsub.f32 %v501, %v1323
        %v1325 = vand.u32 %v1324, 4294901760
        %1326 = vmatmul.mubr.f32.gmra.mxu0 %v1325
        %v1327 = vpop.f32.mrf.mxu0
        %v1328 = vadd.f32 %v1127, %v1327
        %v1329 = vpop.f32.mrf.mxu0
        %1330 = vdwg.mxu0
        %1331 = vmatprep.subr.mxu0 0.0
        %1332 = vmatpush1.msra.mxu0 0.0
        %1333 = vmatprep.subr.mxu0 0.0
        %1334 = vmatpush1.msra.mxu0 0.0
        %1335 = vmatprep.subr.mxu0 0.0
        %1336 = vmatpush1.msra.mxu0 0.0
        %1337 = vmatprep.subr.mxu0 0.0
        %1338 = vmatpush1.msra.mxu0 0.0
        %1339 = vmatprep.subr.mxu0 0.0
        %1340 = vmatpush1.msra.mxu0 0.0
        %1341 = vmatprep.subr.mxu0 0.0
        %1342 = vmatpush1.msra.mxu0 0.0
        %1343 = vmatprep.subr.mxu0 0.0
        %1344 = vmatpush1.msra.mxu0 0.0
        %1345 = vmatprep.subr.mxu0 0.0
        %1346 = vmatpush1.msra.mxu0 0.0
        %1347 = vmatprep.subr.mxu0 0.0
        %v1348 = vand.u32 %v446, 4294901760
        %v1349 = vsub.f32 %v446, %v1348
        %v1350 = vand.u32 %v1349, 4294901760
        %1351 = vmatpush1.msra.mxu0 %v1350
        %1352 = vmatprep.subr.mxu0 0.0
        %v1353 = vand.u32 %v445, 4294901760
        %v1354 = vsub.f32 %v445, %v1353
        %v1355 = vand.u32 %v1354, 4294901760
        %1356 = vmatpush1.msra.mxu0 %v1355
        %1357 = vmatprep.subr.mxu0 0.0
        %v1358 = vand.u32 %v444, 4294901760
        %v1359 = vsub.f32 %v444, %v1358
        %v1360 = vand.u32 %v1359, 4294901760
        %1361 = vmatpush1.msra.mxu0 %v1360
        %1362 = vmatprep.subr.mxu0 0.0
        %v1363 = vand.u32 %v443, 4294901760
        %v1364 = vsub.f32 %v443, %v1363
        %v1365 = vand.u32 %v1364, 4294901760
        %1366 = vmatpush1.msra.mxu0 %v1365
        %1367 = vmatprep.subr.mxu0 0.0
        %v1368 = vand.u32 %v442, 4294901760
        %v1369 = vsub.f32 %v442, %v1368
        %v1370 = vand.u32 %v1369, 4294901760
        %1371 = vmatpush1.msra.mxu0 %v1370
        %1372 = vmatprep.subr.mxu0 0.0
        %v1373 = vand.u32 %v441, 4294901760
        %v1374 = vsub.f32 %v441, %v1373
        %v1375 = vand.u32 %v1374, 4294901760
        %1376 = vmatpush1.msra.mxu0 %v1375
        %1377 = vmatprep.subr.mxu0 0.0
        %v1378 = vand.u32 %v440, 4294901760
        %v1379 = vsub.f32 %v440, %v1378
        %v1380 = vand.u32 %v1379, 4294901760
        %1381 = vmatpush1.msra.mxu0 %v1380
        %1382 = vmatprep.subr.mxu0 0.0
        %v1383 = vand.u32 %v439, 4294901760
        %v1384 = vsub.f32 %v439, %v1383
        %v1385 = vand.u32 %v1384, 4294901760
        %1386 = vmatpush1.msra.mxu0 %v1385
        %1387 = vmatprep.subr.mxu0 0.0
        %1388 = vmatpush2.msra.mxu0 0.0
        %1389 = vmatprep.subr.mxu0 0.0
        %1390 = vmatpush2.msra.mxu0 0.0
        %1391 = vmatprep.subr.mxu0 0.0
        %1392 = vmatpush2.msra.mxu0 0.0
        %1393 = vmatprep.subr.mxu0 0.0
        %1394 = vmatpush2.msra.mxu0 0.0
        %1395 = vmatprep.subr.mxu0 0.0
        %1396 = vmatpush2.msra.mxu0 0.0
        %1397 = vmatprep.subr.mxu0 0.0
        %1398 = vmatpush2.msra.mxu0 0.0
        %1399 = vmatprep.subr.mxu0 0.0
        %1400 = vmatpush2.msra.mxu0 0.0
        %1401 = vmatprep.subr.mxu0 0.0
        %1402 = vmatpush2.msra.mxu0 0.0
        %1403 = vmatprep.subr.mxu0 0.0
        %1404 = vmatpush2.msra.mxu0 0.0
        %1405 = vmatprep.subr.mxu0 0.0
        %1406 = vmatpush2.msra.mxu0 0.0
        %1407 = vmatprep.subr.mxu0 0.0
        %1408 = vmatpush2.msra.mxu0 0.0
        %1409 = vmatprep.subr.mxu0 0.0
        %1410 = vmatpush2.msra.mxu0 0.0
        %1411 = vmatprep.subr.mxu0 0.0
        %1412 = vmatpush2.msra.mxu0 0.0
        %1413 = vmatprep.subr.mxu0 0.0
        %1414 = vmatpush2.msra.mxu0 0.0
        %1415 = vmatprep.subr.mxu0 0.0
        %1416 = vmatpush2.msra.mxu0 0.0
        %1417 = vmatprep.subr.mxu0 0.0
        %1418 = vmatpush2.msra.mxu0 0.0
        %1419 = vmatprep.mubr.f32.mxu0 0.0
        %v1420 = vand.u32 %v456, 4294901760
        %1421 = vmatmul.mubr.f32.gmra.mxu0 %v1420
        %v1422 = vpop.f32.mrf.mxu0
        %v1423 = vadd.f32 %v1208, %v1422
        %v1424 = vpop.f32.mrf.mxu0
        %1425 = vmatprep.mubr.f32.mxu0 0.0
        %v1426 = vand.u32 %v459, 4294901760
        %1427 = vmatmul.mubr.f32.gmra.mxu0 %v1426
        %v1428 = vpop.f32.mrf.mxu0
        %v1429 = vadd.f32 %v1216, %v1428
        %v1430 = vpop.f32.mrf.mxu0
        %1431 = vmatprep.mubr.f32.mxu0 0.0
        %v1432 = vand.u32 %v462, 4294901760
        %1433 = vmatmul.mubr.f32.gmra.mxu0 %v1432
        %v1434 = vpop.f32.mrf.mxu0
        %v1435 = vadd.f32 %v1224, %v1434
        %v1436 = vpop.f32.mrf.mxu0
        %1437 = vmatprep.mubr.f32.mxu0 0.0
        %v1438 = vand.u32 %v465, 4294901760
        %1439 = vmatmul.mubr.f32.gmra.mxu0 %v1438
        %v1440 = vpop.f32.mrf.mxu0
        %v1441 = vadd.f32 %v1232, %v1440
        %v1442 = vpop.f32.mrf.mxu0
        %1443 = vmatprep.mubr.f32.mxu0 0.0
        %v1444 = vand.u32 %v468, 4294901760
        %1445 = vmatmul.mubr.f32.gmra.mxu0 %v1444
        %v1446 = vpop.f32.mrf.mxu0
        %v1447 = vadd.f32 %v1240, %v1446
        %v1448 = vpop.f32.mrf.mxu0
        %1449 = vmatprep.mubr.f32.mxu0 0.0
        %v1450 = vand.u32 %v471, 4294901760
        %1451 = vmatmul.mubr.f32.gmra.mxu0 %v1450
        %v1452 = vpop.f32.mrf.mxu0
        %v1453 = vadd.f32 %v1248, %v1452
        %v1454 = vpop.f32.mrf.mxu0
        %1455 = vmatprep.mubr.f32.mxu0 0.0
        %v1456 = vand.u32 %v474, 4294901760
        %1457 = vmatmul.mubr.f32.gmra.mxu0 %v1456
        %v1458 = vpop.f32.mrf.mxu0
        %v1459 = vadd.f32 %v1256, %v1458
        %v1460 = vpop.f32.mrf.mxu0
        %1461 = vmatprep.mubr.f32.mxu0 0.0
        %v1462 = vand.u32 %v477, 4294901760
        %1463 = vmatmul.mubr.f32.gmra.mxu0 %v1462
        %v1464 = vpop.f32.mrf.mxu0
        %v1465 = vadd.f32 %v1264, %v1464
        %v1466 = vpop.f32.mrf.mxu0
        %1467 = vmatprep.mubr.f32.mxu0 0.0
        %v1468 = vand.u32 %v480, 4294901760
        %1469 = vmatmul.mubr.f32.gmra.mxu0 %v1468
        %v1470 = vpop.f32.mrf.mxu0
        %v1471 = vadd.f32 %v1272, %v1470
        %v1472 = vpop.f32.mrf.mxu0
        %1473 = vmatprep.mubr.f32.mxu0 0.0
        %v1474 = vand.u32 %v483, 4294901760
        %1475 = vmatmul.mubr.f32.gmra.mxu0 %v1474
        %v1476 = vpop.f32.mrf.mxu0
        %v1477 = vadd.f32 %v1280, %v1476
        %v1478 = vpop.f32.mrf.mxu0
        %1479 = vmatprep.mubr.f32.mxu0 0.0
        %v1480 = vand.u32 %v486, 4294901760
        %1481 = vmatmul.mubr.f32.gmra.mxu0 %v1480
        %v1482 = vpop.f32.mrf.mxu0
        %v1483 = vadd.f32 %v1288, %v1482
        %v1484 = vpop.f32.mrf.mxu0
        %1485 = vmatprep.mubr.f32.mxu0 0.0
        %v1486 = vand.u32 %v489, 4294901760
        %1487 = vmatmul.mubr.f32.gmra.mxu0 %v1486
        %v1488 = vpop.f32.mrf.mxu0
        %v1489 = vadd.f32 %v1296, %v1488
        %v1490 = vpop.f32.mrf.mxu0
        %1491 = vmatprep.mubr.f32.mxu0 0.0
        %v1492 = vand.u32 %v492, 4294901760
        %1493 = vmatmul.mubr.f32.gmra.mxu0 %v1492
        %v1494 = vpop.f32.mrf.mxu0
        %v1495 = vadd.f32 %v1304, %v1494
        %v1496 = vpop.f32.mrf.mxu0
        %1497 = vmatprep.mubr.f32.mxu0 0.0
        %v1498 = vand.u32 %v495, 4294901760
        %1499 = vmatmul.mubr.f32.gmra.mxu0 %v1498
        %v1500 = vpop.f32.mrf.mxu0
        %v1501 = vadd.f32 %v1312, %v1500
        %v1502 = vpop.f32.mrf.mxu0
        %1503 = vmatprep.mubr.f32.mxu0 0.0
        %v1504 = vand.u32 %v498, 4294901760
        %1505 = vmatmul.mubr.f32.gmra.mxu0 %v1504
        %v1506 = vpop.f32.mrf.mxu0
        %v1507 = vadd.f32 %v1320, %v1506
        %v1508 = vpop.f32.mrf.mxu0
        %1509 = vmatprep.mubr.f32.mxu0 0.0
        %v1510 = vand.u32 %v501, 4294901760
        %1511 = vmatmul.mubr.f32.gmra.mxu0 %v1510
        %v1512 = vpop.f32.mrf.mxu0
        %v1513 = vadd.f32 %v1328, %v1512
        %v1514 = vpop.f32.mrf.mxu0
        %1515 = vdwg.mxu0
        %1516 = vmatprep.subr.mxu0 0.0
        %1517 = vmatpush1.msra.mxu0 0.0
        %1518 = vmatprep.subr.mxu0 0.0
        %1519 = vmatpush1.msra.mxu0 0.0
        %1520 = vmatprep.subr.mxu0 0.0
        %1521 = vmatpush1.msra.mxu0 0.0
        %1522 = vmatprep.subr.mxu0 0.0
        %1523 = vmatpush1.msra.mxu0 0.0
        %1524 = vmatprep.subr.mxu0 0.0
        %1525 = vmatpush1.msra.mxu0 0.0
        %1526 = vmatprep.subr.mxu0 0.0
        %1527 = vmatpush1.msra.mxu0 0.0
        %1528 = vmatprep.subr.mxu0 0.0
        %1529 = vmatpush1.msra.mxu0 0.0
        %1530 = vmatprep.subr.mxu0 0.0
        %1531 = vmatpush1.msra.mxu0 0.0
        %1532 = vmatprep.subr.mxu0 0.0
        %v1533 = vand.u32 %v446, 4294901760
        %1534 = vmatpush1.msra.mxu0 %v1533
        %1535 = vmatprep.subr.mxu0 0.0
        %v1536 = vand.u32 %v445, 4294901760
        %1537 = vmatpush1.msra.mxu0 %v1536
        %1538 = vmatprep.subr.mxu0 0.0
        %v1539 = vand.u32 %v444, 4294901760
        %1540 = vmatpush1.msra.mxu0 %v1539
        %1541 = vmatprep.subr.mxu0 0.0
        %v1542 = vand.u32 %v443, 4294901760
        %1543 = vmatpush1.msra.mxu0 %v1542
        %1544 = vmatprep.subr.mxu0 0.0
        %v1545 = vand.u32 %v442, 4294901760
        %1546 = vmatpush1.msra.mxu0 %v1545
        %1547 = vmatprep.subr.mxu0 0.0
        %v1548 = vand.u32 %v441, 4294901760
        %1549 = vmatpush1.msra.mxu0 %v1548
        %1550 = vmatprep.subr.mxu0 0.0
        %v1551 = vand.u32 %v440, 4294901760
        %1552 = vmatpush1.msra.mxu0 %v1551
        %1553 = vmatprep.subr.mxu0 0.0
        %v1554 = vand.u32 %v439, 4294901760
        %1555 = vmatpush1.msra.mxu0 %v1554
        %1556 = vmatprep.subr.mxu0 0.0
        %1557 = vmatpush2.msra.mxu0 0.0
        %1558 = vmatprep.subr.mxu0 0.0
        %1559 = vmatpush2.msra.mxu0 0.0
        %1560 = vmatprep.subr.mxu0 0.0
        %1561 = vmatpush2.msra.mxu0 0.0
        %1562 = vmatprep.subr.mxu0 0.0
        %1563 = vmatpush2.msra.mxu0 0.0
        %1564 = vmatprep.subr.mxu0 0.0
        %1565 = vmatpush2.msra.mxu0 0.0
        %1566 = vmatprep.subr.mxu0 0.0
        %1567 = vmatpush2.msra.mxu0 0.0
        %1568 = vmatprep.subr.mxu0 0.0
        %1569 = vmatpush2.msra.mxu0 0.0
        %1570 = vmatprep.subr.mxu0 0.0
        %1571 = vmatpush2.msra.mxu0 0.0
        %1572 = vmatprep.subr.mxu0 0.0
        %1573 = vmatpush2.msra.mxu0 0.0
        %1574 = vmatprep.subr.mxu0 0.0
        %1575 = vmatpush2.msra.mxu0 0.0
        %1576 = vmatprep.subr.mxu0 0.0
        %1577 = vmatpush2.msra.mxu0 0.0
        %1578 = vmatprep.subr.mxu0 0.0
        %1579 = vmatpush2.msra.mxu0 0.0
        %1580 = vmatprep.subr.mxu0 0.0
        %1581 = vmatpush2.msra.mxu0 0.0
        %1582 = vmatprep.subr.mxu0 0.0
        %1583 = vmatpush2.msra.mxu0 0.0
        %1584 = vmatprep.subr.mxu0 0.0
        %1585 = vmatpush2.msra.mxu0 0.0
        %1586 = vmatprep.subr.mxu0 0.0
        %1587 = vmatpush2.msra.mxu0 0.0
        %1588 = vmatprep.mubr.f32.mxu0 0.0
        %v1589 = vand.u32 %v456, 4294901760
        %1590 = vmatmul.mubr.f32.gmra.mxu0 %v1589
        %v1591 = vpop.f32.mrf.mxu0
        %v1592 = vadd.f32 %v1423, %v1591
        %v1593 = vpop.f32.mrf.mxu0
        %1594 = vmatprep.mubr.f32.mxu0 0.0
        %v1595 = vand.u32 %v459, 4294901760
        %1596 = vmatmul.mubr.f32.gmra.mxu0 %v1595
        %v1597 = vpop.f32.mrf.mxu0
        %v1598 = vadd.f32 %v1429, %v1597
        %v1599 = vpop.f32.mrf.mxu0
        %1600 = vmatprep.mubr.f32.mxu0 0.0
        %v1601 = vand.u32 %v462, 4294901760
        %1602 = vmatmul.mubr.f32.gmra.mxu0 %v1601
        %v1603 = vpop.f32.mrf.mxu0
        %v1604 = vadd.f32 %v1435, %v1603
        %v1605 = vpop.f32.mrf.mxu0
        %1606 = vmatprep.mubr.f32.mxu0 0.0
        %v1607 = vand.u32 %v465, 4294901760
        %1608 = vmatmul.mubr.f32.gmra.mxu0 %v1607
        %v1609 = vpop.f32.mrf.mxu0
        %v1610 = vadd.f32 %v1441, %v1609
        %v1611 = vpop.f32.mrf.mxu0
        %1612 = vmatprep.mubr.f32.mxu0 0.0
        %v1613 = vand.u32 %v468, 4294901760
        %1614 = vmatmul.mubr.f32.gmra.mxu0 %v1613
        %v1615 = vpop.f32.mrf.mxu0
        %v1616 = vadd.f32 %v1447, %v1615
        %v1617 = vpop.f32.mrf.mxu0
        %1618 = vmatprep.mubr.f32.mxu0 0.0
        %v1619 = vand.u32 %v471, 4294901760
        %1620 = vmatmul.mubr.f32.gmra.mxu0 %v1619
        %v1621 = vpop.f32.mrf.mxu0
        %v1622 = vadd.f32 %v1453, %v1621
        %v1623 = vpop.f32.mrf.mxu0
        %1624 = vmatprep.mubr.f32.mxu0 0.0
        %v1625 = vand.u32 %v474, 4294901760
        %1626 = vmatmul.mubr.f32.gmra.mxu0 %v1625
        %v1627 = vpop.f32.mrf.mxu0
        %v1628 = vadd.f32 %v1459, %v1627
        %v1629 = vpop.f32.mrf.mxu0
        %1630 = vmatprep.mubr.f32.mxu0 0.0
        %v1631 = vand.u32 %v477, 4294901760
        %1632 = vmatmul.mubr.f32.gmra.mxu0 %v1631
        %v1633 = vpop.f32.mrf.mxu0
        %v1634 = vadd.f32 %v1465, %v1633
        %v1635 = vpop.f32.mrf.mxu0
        %1636 = vmatprep.mubr.f32.mxu0 0.0
        %v1637 = vand.u32 %v480, 4294901760
        %1638 = vmatmul.mubr.f32.gmra.mxu0 %v1637
        %v1639 = vpop.f32.mrf.mxu0
        %v1640 = vadd.f32 %v1471, %v1639
        %v1641 = vpop.f32.mrf.mxu0
        %1642 = vmatprep.mubr.f32.mxu0 0.0
        %v1643 = vand.u32 %v483, 4294901760
        %1644 = vmatmul.mubr.f32.gmra.mxu0 %v1643
        %v1645 = vpop.f32.mrf.mxu0
        %v1646 = vadd.f32 %v1477, %v1645
        %v1647 = vpop.f32.mrf.mxu0
        %1648 = vmatprep.mubr.f32.mxu0 0.0
        %v1649 = vand.u32 %v486, 4294901760
        %1650 = vmatmul.mubr.f32.gmra.mxu0 %v1649
        %v1651 = vpop.f32.mrf.mxu0
        %v1652 = vadd.f32 %v1483, %v1651
        %v1653 = vpop.f32.mrf.mxu0
        %1654 = vmatprep.mubr.f32.mxu0 0.0
        %v1655 = vand.u32 %v489, 4294901760
        %1656 = vmatmul.mubr.f32.gmra.mxu0 %v1655
        %v1657 = vpop.f32.mrf.mxu0
        %v1658 = vadd.f32 %v1489, %v1657
        %v1659 = vpop.f32.mrf.mxu0
        %1660 = vmatprep.mubr.f32.mxu0 0.0
        %v1661 = vand.u32 %v492, 4294901760
        %1662 = vmatmul.mubr.f32.gmra.mxu0 %v1661
        %v1663 = vpop.f32.mrf.mxu0
        %v1664 = vadd.f32 %v1495, %v1663
        %v1665 = vpop.f32.mrf.mxu0
        %1666 = vmatprep.mubr.f32.mxu0 0.0
        %v1667 = vand.u32 %v495, 4294901760
        %1668 = vmatmul.mubr.f32.gmra.mxu0 %v1667
        %v1669 = vpop.f32.mrf.mxu0
        %v1670 = vadd.f32 %v1501, %v1669
        %v1671 = vpop.f32.mrf.mxu0
        %1672 = vmatprep.mubr.f32.mxu0 0.0
        %v1673 = vand.u32 %v498, 4294901760
        %1674 = vmatmul.mubr.f32.gmra.mxu0 %v1673
        %v1675 = vpop.f32.mrf.mxu0
        %v1676 = vadd.f32 %v1507, %v1675
        %v1677 = vpop.f32.mrf.mxu0
        %1678 = vmatprep.mubr.f32.mxu0 0.0
        %v1679 = vand.u32 %v501, 4294901760
        %1680 = vmatmul.mubr.f32.gmra.mxu0 %v1679
        %v1681 = vpop.f32.mrf.mxu0
        %v1682 = vadd.f32 %v1513, %v1681
        %v1683 = vpop.f32.mrf.mxu0
        %1684 = vdwg.mxu0
        %1685 = vmatprep.subr.mxu0 0.0
        %v1686 = vand.u32 %v310, 4294901760
        %1687 = vmatpush1.msra.mxu0 %v1686
        %1688 = vmatprep.subr.mxu0 0.0
        %v1689 = vand.u32 %v309, 4294901760
        %1690 = vmatpush1.msra.mxu0 %v1689
        %1691 = vmatprep.subr.mxu0 0.0
        %v1692 = vand.u32 %v308, 4294901760
        %1693 = vmatpush1.msra.mxu0 %v1692
        %1694 = vmatprep.subr.mxu0 0.0
        %v1695 = vand.u32 %v307, 4294901760
        %1696 = vmatpush1.msra.mxu0 %v1695
        %1697 = vmatprep.subr.mxu0 0.0
        %v1698 = vand.u32 %v306, 4294901760
        %1699 = vmatpush1.msra.mxu0 %v1698
        %1700 = vmatprep.subr.mxu0 0.0
        %v1701 = vand.u32 %v305, 4294901760
        %1702 = vmatpush1.msra.mxu0 %v1701
        %1703 = vmatprep.subr.mxu0 0.0
        %v1704 = vand.u32 %v304, 4294901760
        %1705 = vmatpush1.msra.mxu0 %v1704
        %1706 = vmatprep.subr.mxu0 0.0
        %v1707 = vand.u32 %v303, 4294901760
        %1708 = vmatpush1.msra.mxu0 %v1707
        %1709 = vmatprep.subr.mxu0 0.0
        %v1710 = vand.u32 %v302, 4294901760
        %1711 = vmatpush1.msra.mxu0 %v1710
        %1712 = vmatprep.subr.mxu0 0.0
        %v1713 = vand.u32 %v301, 4294901760
        %1714 = vmatpush1.msra.mxu0 %v1713
        %1715 = vmatprep.subr.mxu0 0.0
        %v1716 = vand.u32 %v300, 4294901760
        %1717 = vmatpush1.msra.mxu0 %v1716
        %1718 = vmatprep.subr.mxu0 0.0
        %v1719 = vand.u32 %v299, 4294901760
        %1720 = vmatpush1.msra.mxu0 %v1719
        %1721 = vmatprep.subr.mxu0 0.0
        %v1722 = vand.u32 %v298, 4294901760
        %1723 = vmatpush1.msra.mxu0 %v1722
        %1724 = vmatprep.subr.mxu0 0.0
        %v1725 = vand.u32 %v297, 4294901760
        %1726 = vmatpush1.msra.mxu0 %v1725
        %1727 = vmatprep.subr.mxu0 0.0
        %v1728 = vand.u32 %v296, 4294901760
        %1729 = vmatpush1.msra.mxu0 %v1728
        %1730 = vmatprep.subr.mxu0 0.0
        %v1731 = vand.u32 %v295, 4294901760
        %1732 = vmatpush1.msra.mxu0 %v1731
        %1733 = vmatprep.subr.mxu0 0.0
        %v1734 = vand.u32 %v326, 4294901760
        %1735 = vmatpush2.msra.mxu0 %v1734
        %1736 = vmatprep.subr.mxu0 0.0
        %v1737 = vand.u32 %v325, 4294901760
        %1738 = vmatpush2.msra.mxu0 %v1737
        %1739 = vmatprep.subr.mxu0 0.0
        %v1740 = vand.u32 %v324, 4294901760
        %1741 = vmatpush2.msra.mxu0 %v1740
        %1742 = vmatprep.subr.mxu0 0.0
        %v1743 = vand.u32 %v323, 4294901760
        %1744 = vmatpush2.msra.mxu0 %v1743
        %1745 = vmatprep.subr.mxu0 0.0
        %v1746 = vand.u32 %v322, 4294901760
        %1747 = vmatpush2.msra.mxu0 %v1746
        %1748 = vmatprep.subr.mxu0 0.0
        %v1749 = vand.u32 %v321, 4294901760
        %1750 = vmatpush2.msra.mxu0 %v1749
        %1751 = vmatprep.subr.mxu0 0.0
        %v1752 = vand.u32 %v320, 4294901760
        %1753 = vmatpush2.msra.mxu0 %v1752
        %1754 = vmatprep.subr.mxu0 0.0
        %v1755 = vand.u32 %v319, 4294901760
        %1756 = vmatpush2.msra.mxu0 %v1755
        %1757 = vmatprep.subr.mxu0 0.0
        %v1758 = vand.u32 %v318, 4294901760
        %1759 = vmatpush2.msra.mxu0 %v1758
        %1760 = vmatprep.subr.mxu0 0.0
        %v1761 = vand.u32 %v317, 4294901760
        %1762 = vmatpush2.msra.mxu0 %v1761
        %1763 = vmatprep.subr.mxu0 0.0
        %v1764 = vand.u32 %v316, 4294901760
        %1765 = vmatpush2.msra.mxu0 %v1764
        %1766 = vmatprep.subr.mxu0 0.0
        %v1767 = vand.u32 %v315, 4294901760
        %1768 = vmatpush2.msra.mxu0 %v1767
        %1769 = vmatprep.subr.mxu0 0.0
        %v1770 = vand.u32 %v314, 4294901760
        %1771 = vmatpush2.msra.mxu0 %v1770
        %1772 = vmatprep.subr.mxu0 0.0
        %v1773 = vand.u32 %v313, 4294901760
        %1774 = vmatpush2.msra.mxu0 %v1773
        %1775 = vmatprep.subr.mxu0 0.0
        %v1776 = vand.u32 %v312, 4294901760
        %1777 = vmatpush2.msra.mxu0 %v1776
        %1778 = vmatprep.subr.mxu0 0.0
        %v1779 = vand.u32 %v311, 4294901760
        %1780 = vmatpush2.msra.mxu0 %v1779
        %v1781 = vand.u32 %v328, 4294901760
        %v1782 = vsub.f32 %v328, %v1781
        %v1783 = vand.u32 %v1782, 4294901760
        %v1784 = vsub.f32 %v1782, %v1783
        %v1785 = vand.u32 %v1784, 4294901760
        %1786 = vmatprep.mubr.f32.mxu0 %v1785
        %v1787 = vand.u32 %v327, 4294901760
        %v1788 = vsub.f32 %v327, %v1787
        %v1789 = vand.u32 %v1788, 4294901760
        %v1790 = vsub.f32 %v1788, %v1789
        %v1791 = vand.u32 %v1790, 4294901760
        %1792 = vmatmul.mubr.f32.gmra.mxu0 %v1791
        %v1793 = vpop.f32.mrf.mxu0
        %v1794 = vadd.f32 0.0, %v1793
        %v1795 = vpop.f32.mrf.mxu0
        %v1796 = vand.u32 %v334, 4294901760
        %v1797 = vsub.f32 %v334, %v1796
        %v1798 = vand.u32 %v1797, 4294901760
        %v1799 = vsub.f32 %v1797, %v1798
        %v1800 = vand.u32 %v1799, 4294901760
        %1801 = vmatprep.mubr.f32.mxu0 %v1800
        %v1802 = vand.u32 %v333, 4294901760
        %v1803 = vsub.f32 %v333, %v1802
        %v1804 = vand.u32 %v1803, 4294901760
        %v1805 = vsub.f32 %v1803, %v1804
        %v1806 = vand.u32 %v1805, 4294901760
        %1807 = vmatmul.mubr.f32.gmra.mxu0 %v1806
        %v1808 = vpop.f32.mrf.mxu0
        %v1809 = vadd.f32 0.0, %v1808
        %v1810 = vpop.f32.mrf.mxu0
        %v1811 = vand.u32 %v340, 4294901760
        %v1812 = vsub.f32 %v340, %v1811
        %v1813 = vand.u32 %v1812, 4294901760
        %v1814 = vsub.f32 %v1812, %v1813
        %v1815 = vand.u32 %v1814, 4294901760
        %1816 = vmatprep.mubr.f32.mxu0 %v1815
        %v1817 = vand.u32 %v339, 4294901760
        %v1818 = vsub.f32 %v339, %v1817
        %v1819 = vand.u32 %v1818, 4294901760
        %v1820 = vsub.f32 %v1818, %v1819
        %v1821 = vand.u32 %v1820, 4294901760
        %1822 = vmatmul.mubr.f32.gmra.mxu0 %v1821
        %v1823 = vpop.f32.mrf.mxu0
        %v1824 = vadd.f32 0.0, %v1823
        %v1825 = vpop.f32.mrf.mxu0
        %v1826 = vand.u32 %v346, 4294901760
        %v1827 = vsub.f32 %v346, %v1826
        %v1828 = vand.u32 %v1827, 4294901760
        %v1829 = vsub.f32 %v1827, %v1828
        %v1830 = vand.u32 %v1829, 4294901760
        %1831 = vmatprep.mubr.f32.mxu0 %v1830
        %v1832 = vand.u32 %v345, 4294901760
        %v1833 = vsub.f32 %v345, %v1832
        %v1834 = vand.u32 %v1833, 4294901760
        %v1835 = vsub.f32 %v1833, %v1834
        %v1836 = vand.u32 %v1835, 4294901760
        %1837 = vmatmul.mubr.f32.gmra.mxu0 %v1836
        %v1838 = vpop.f32.mrf.mxu0
        %v1839 = vadd.f32 0.0, %v1838
        %v1840 = vpop.f32.mrf.mxu0
        %v1841 = vand.u32 %v352, 4294901760
        %v1842 = vsub.f32 %v352, %v1841
        %v1843 = vand.u32 %v1842, 4294901760
        %v1844 = vsub.f32 %v1842, %v1843
        %v1845 = vand.u32 %v1844, 4294901760
        %1846 = vmatprep.mubr.f32.mxu0 %v1845
        %v1847 = vand.u32 %v351, 4294901760
        %v1848 = vsub.f32 %v351, %v1847
        %v1849 = vand.u32 %v1848, 4294901760
        %v1850 = vsub.f32 %v1848, %v1849
        %v1851 = vand.u32 %v1850, 4294901760
        %1852 = vmatmul.mubr.f32.gmra.mxu0 %v1851
        %v1853 = vpop.f32.mrf.mxu0
        %v1854 = vadd.f32 0.0, %v1853
        %v1855 = vpop.f32.mrf.mxu0
        %v1856 = vand.u32 %v358, 4294901760
        %v1857 = vsub.f32 %v358, %v1856
        %v1858 = vand.u32 %v1857, 4294901760
        %v1859 = vsub.f32 %v1857, %v1858
        %v1860 = vand.u32 %v1859, 4294901760
        %1861 = vmatprep.mubr.f32.mxu0 %v1860
        %v1862 = vand.u32 %v357, 4294901760
        %v1863 = vsub.f32 %v357, %v1862
        %v1864 = vand.u32 %v1863, 4294901760
        %v1865 = vsub.f32 %v1863, %v1864
        %v1866 = vand.u32 %v1865, 4294901760
        %1867 = vmatmul.mubr.f32.gmra.mxu0 %v1866
        %v1868 = vpop.f32.mrf.mxu0
        %v1869 = vadd.f32 0.0, %v1868
        %v1870 = vpop.f32.mrf.mxu0
        %v1871 = vand.u32 %v364, 4294901760
        %v1872 = vsub.f32 %v364, %v1871
        %v1873 = vand.u32 %v1872, 4294901760
        %v1874 = vsub.f32 %v1872, %v1873
        %v1875 = vand.u32 %v1874, 4294901760
        %1876 = vmatprep.mubr.f32.mxu0 %v1875
        %v1877 = vand.u32 %v363, 4294901760
        %v1878 = vsub.f32 %v363, %v1877
        %v1879 = vand.u32 %v1878, 4294901760
        %v1880 = vsub.f32 %v1878, %v1879
        %v1881 = vand.u32 %v1880, 4294901760
        %1882 = vmatmul.mubr.f32.gmra.mxu0 %v1881
        %v1883 = vpop.f32.mrf.mxu0
        %v1884 = vadd.f32 0.0, %v1883
        %v1885 = vpop.f32.mrf.mxu0
        %v1886 = vand.u32 %v370, 4294901760
        %v1887 = vsub.f32 %v370, %v1886
        %v1888 = vand.u32 %v1887, 4294901760
        %v1889 = vsub.f32 %v1887, %v1888
        %v1890 = vand.u32 %v1889, 4294901760
        %1891 = vmatprep.mubr.f32.mxu0 %v1890
        %v1892 = vand.u32 %v369, 4294901760
        %v1893 = vsub.f32 %v369, %v1892
        %v1894 = vand.u32 %v1893, 4294901760
        %v1895 = vsub.f32 %v1893, %v1894
        %v1896 = vand.u32 %v1895, 4294901760
        %1897 = vmatmul.mubr.f32.gmra.mxu0 %v1896
        %v1898 = vpop.f32.mrf.mxu0
        %v1899 = vadd.f32 0.0, %v1898
        %v1900 = vpop.f32.mrf.mxu0
        %v1901 = vand.u32 %v376, 4294901760
        %v1902 = vsub.f32 %v376, %v1901
        %v1903 = vand.u32 %v1902, 4294901760
        %v1904 = vsub.f32 %v1902, %v1903
        %v1905 = vand.u32 %v1904, 4294901760
        %1906 = vmatprep.mubr.f32.mxu0 %v1905
        %v1907 = vand.u32 %v375, 4294901760
        %v1908 = vsub.f32 %v375, %v1907
        %v1909 = vand.u32 %v1908, 4294901760
        %v1910 = vsub.f32 %v1908, %v1909
        %v1911 = vand.u32 %v1910, 4294901760
        %1912 = vmatmul.mubr.f32.gmra.mxu0 %v1911
        %v1913 = vpop.f32.mrf.mxu0
        %v1914 = vadd.f32 0.0, %v1913
        %v1915 = vpop.f32.mrf.mxu0
        %v1916 = vand.u32 %v382, 4294901760
        %v1917 = vsub.f32 %v382, %v1916
        %v1918 = vand.u32 %v1917, 4294901760
        %v1919 = vsub.f32 %v1917, %v1918
        %v1920 = vand.u32 %v1919, 4294901760
        %1921 = vmatprep.mubr.f32.mxu0 %v1920
        %v1922 = vand.u32 %v381, 4294901760
        %v1923 = vsub.f32 %v381, %v1922
        %v1924 = vand.u32 %v1923, 4294901760
        %v1925 = vsub.f32 %v1923, %v1924
        %v1926 = vand.u32 %v1925, 4294901760
        %1927 = vmatmul.mubr.f32.gmra.mxu0 %v1926
        %v1928 = vpop.f32.mrf.mxu0
        %v1929 = vadd.f32 0.0, %v1928
        %v1930 = vpop.f32.mrf.mxu0
        %v1931 = vand.u32 %v388, 4294901760
        %v1932 = vsub.f32 %v388, %v1931
        %v1933 = vand.u32 %v1932, 4294901760
        %v1934 = vsub.f32 %v1932, %v1933
        %v1935 = vand.u32 %v1934, 4294901760
        %1936 = vmatprep.mubr.f32.mxu0 %v1935
        %v1937 = vand.u32 %v387, 4294901760
        %v1938 = vsub.f32 %v387, %v1937
        %v1939 = vand.u32 %v1938, 4294901760
        %v1940 = vsub.f32 %v1938, %v1939
        %v1941 = vand.u32 %v1940, 4294901760
        %1942 = vmatmul.mubr.f32.gmra.mxu0 %v1941
        %v1943 = vpop.f32.mrf.mxu0
        %v1944 = vadd.f32 0.0, %v1943
        %v1945 = vpop.f32.mrf.mxu0
        %v1946 = vand.u32 %v394, 4294901760
        %v1947 = vsub.f32 %v394, %v1946
        %v1948 = vand.u32 %v1947, 4294901760
        %v1949 = vsub.f32 %v1947, %v1948
        %v1950 = vand.u32 %v1949, 4294901760
        %1951 = vmatprep.mubr.f32.mxu0 %v1950
        %v1952 = vand.u32 %v393, 4294901760
        %v1953 = vsub.f32 %v393, %v1952
        %v1954 = vand.u32 %v1953, 4294901760
        %v1955 = vsub.f32 %v1953, %v1954
        %v1956 = vand.u32 %v1955, 4294901760
        %1957 = vmatmul.mubr.f32.gmra.mxu0 %v1956
        %v1958 = vpop.f32.mrf.mxu0
        %v1959 = vadd.f32 0.0, %v1958
        %v1960 = vpop.f32.mrf.mxu0
        %v1961 = vand.u32 %v400, 4294901760
        %v1962 = vsub.f32 %v400, %v1961
        %v1963 = vand.u32 %v1962, 4294901760
        %v1964 = vsub.f32 %v1962, %v1963
        %v1965 = vand.u32 %v1964, 4294901760
        %1966 = vmatprep.mubr.f32.mxu0 %v1965
        %v1967 = vand.u32 %v399, 4294901760
        %v1968 = vsub.f32 %v399, %v1967
        %v1969 = vand.u32 %v1968, 4294901760
        %v1970 = vsub.f32 %v1968, %v1969
        %v1971 = vand.u32 %v1970, 4294901760
        %1972 = vmatmul.mubr.f32.gmra.mxu0 %v1971
        %v1973 = vpop.f32.mrf.mxu0
        %v1974 = vadd.f32 0.0, %v1973
        %v1975 = vpop.f32.mrf.mxu0
        %v1976 = vand.u32 %v406, 4294901760
        %v1977 = vsub.f32 %v406, %v1976
        %v1978 = vand.u32 %v1977, 4294901760
        %v1979 = vsub.f32 %v1977, %v1978
        %v1980 = vand.u32 %v1979, 4294901760
        %1981 = vmatprep.mubr.f32.mxu0 %v1980
        %v1982 = vand.u32 %v405, 4294901760
        %v1983 = vsub.f32 %v405, %v1982
        %v1984 = vand.u32 %v1983, 4294901760
        %v1985 = vsub.f32 %v1983, %v1984
        %v1986 = vand.u32 %v1985, 4294901760
        %1987 = vmatmul.mubr.f32.gmra.mxu0 %v1986
        %v1988 = vpop.f32.mrf.mxu0
        %v1989 = vadd.f32 0.0, %v1988
        %v1990 = vpop.f32.mrf.mxu0
        %v1991 = vand.u32 %v412, 4294901760
        %v1992 = vsub.f32 %v412, %v1991
        %v1993 = vand.u32 %v1992, 4294901760
        %v1994 = vsub.f32 %v1992, %v1993
        %v1995 = vand.u32 %v1994, 4294901760
        %1996 = vmatprep.mubr.f32.mxu0 %v1995
        %v1997 = vand.u32 %v411, 4294901760
        %v1998 = vsub.f32 %v411, %v1997
        %v1999 = vand.u32 %v1998, 4294901760
        %v2000 = vsub.f32 %v1998, %v1999
        %v2001 = vand.u32 %v2000, 4294901760
        %2002 = vmatmul.mubr.f32.gmra.mxu0 %v2001
        %v2003 = vpop.f32.mrf.mxu0
        %v2004 = vadd.f32 0.0, %v2003
        %v2005 = vpop.f32.mrf.mxu0
        %v2006 = vand.u32 %v418, 4294901760
        %v2007 = vsub.f32 %v418, %v2006
        %v2008 = vand.u32 %v2007, 4294901760
        %v2009 = vsub.f32 %v2007, %v2008
        %v2010 = vand.u32 %v2009, 4294901760
        %2011 = vmatprep.mubr.f32.mxu0 %v2010
        %v2012 = vand.u32 %v417, 4294901760
        %v2013 = vsub.f32 %v417, %v2012
        %v2014 = vand.u32 %v2013, 4294901760
        %v2015 = vsub.f32 %v2013, %v2014
        %v2016 = vand.u32 %v2015, 4294901760
        %2017 = vmatmul.mubr.f32.gmra.mxu0 %v2016
        %v2018 = vpop.f32.mrf.mxu0
        %v2019 = vadd.f32 0.0, %v2018
        %v2020 = vpop.f32.mrf.mxu0
        %2021 = vdwg.mxu0
        %2022 = vmatprep.subr.mxu0 0.0
        %v2023 = vand.u32 %v310, 4294901760
        %v2024 = vsub.f32 %v310, %v2023
        %v2025 = vand.u32 %v2024, 4294901760
        %v2026 = vsub.f32 %v2024, %v2025
        %v2027 = vand.u32 %v2026, 4294901760
        %2028 = vmatpush1.msra.mxu0 %v2027
        %2029 = vmatprep.subr.mxu0 0.0
        %v2030 = vand.u32 %v309, 4294901760
        %v2031 = vsub.f32 %v309, %v2030
        %v2032 = vand.u32 %v2031, 4294901760
        %v2033 = vsub.f32 %v2031, %v2032
        %v2034 = vand.u32 %v2033, 4294901760
        %2035 = vmatpush1.msra.mxu0 %v2034
        %2036 = vmatprep.subr.mxu0 0.0
        %v2037 = vand.u32 %v308, 4294901760
        %v2038 = vsub.f32 %v308, %v2037
        %v2039 = vand.u32 %v2038, 4294901760
        %v2040 = vsub.f32 %v2038, %v2039
        %v2041 = vand.u32 %v2040, 4294901760
        %2042 = vmatpush1.msra.mxu0 %v2041
        %2043 = vmatprep.subr.mxu0 0.0
        %v2044 = vand.u32 %v307, 4294901760
        %v2045 = vsub.f32 %v307, %v2044
        %v2046 = vand.u32 %v2045, 4294901760
        %v2047 = vsub.f32 %v2045, %v2046
        %v2048 = vand.u32 %v2047, 4294901760
        %2049 = vmatpush1.msra.mxu0 %v2048
        %2050 = vmatprep.subr.mxu0 0.0
        %v2051 = vand.u32 %v306, 4294901760
        %v2052 = vsub.f32 %v306, %v2051
        %v2053 = vand.u32 %v2052, 4294901760
        %v2054 = vsub.f32 %v2052, %v2053
        %v2055 = vand.u32 %v2054, 4294901760
        %2056 = vmatpush1.msra.mxu0 %v2055
        %2057 = vmatprep.subr.mxu0 0.0
        %v2058 = vand.u32 %v305, 4294901760
        %v2059 = vsub.f32 %v305, %v2058
        %v2060 = vand.u32 %v2059, 4294901760
        %v2061 = vsub.f32 %v2059, %v2060
        %v2062 = vand.u32 %v2061, 4294901760
        %2063 = vmatpush1.msra.mxu0 %v2062
        %2064 = vmatprep.subr.mxu0 0.0
        %v2065 = vand.u32 %v304, 4294901760
        %v2066 = vsub.f32 %v304, %v2065
        %v2067 = vand.u32 %v2066, 4294901760
        %v2068 = vsub.f32 %v2066, %v2067
        %v2069 = vand.u32 %v2068, 4294901760
        %2070 = vmatpush1.msra.mxu0 %v2069
        %2071 = vmatprep.subr.mxu0 0.0
        %v2072 = vand.u32 %v303, 4294901760
        %v2073 = vsub.f32 %v303, %v2072
        %v2074 = vand.u32 %v2073, 4294901760
        %v2075 = vsub.f32 %v2073, %v2074
        %v2076 = vand.u32 %v2075, 4294901760
        %2077 = vmatpush1.msra.mxu0 %v2076
        %2078 = vmatprep.subr.mxu0 0.0
        %v2079 = vand.u32 %v302, 4294901760
        %v2080 = vsub.f32 %v302, %v2079
        %v2081 = vand.u32 %v2080, 4294901760
        %v2082 = vsub.f32 %v2080, %v2081
        %v2083 = vand.u32 %v2082, 4294901760
        %2084 = vmatpush1.msra.mxu0 %v2083
        %2085 = vmatprep.subr.mxu0 0.0
        %v2086 = vand.u32 %v301, 4294901760
        %v2087 = vsub.f32 %v301, %v2086
        %v2088 = vand.u32 %v2087, 4294901760
        %v2089 = vsub.f32 %v2087, %v2088
        %v2090 = vand.u32 %v2089, 4294901760
        %2091 = vmatpush1.msra.mxu0 %v2090
        %2092 = vmatprep.subr.mxu0 0.0
        %v2093 = vand.u32 %v300, 4294901760
        %v2094 = vsub.f32 %v300, %v2093
        %v2095 = vand.u32 %v2094, 4294901760
        %v2096 = vsub.f32 %v2094, %v2095
        %v2097 = vand.u32 %v2096, 4294901760
        %2098 = vmatpush1.msra.mxu0 %v2097
        %2099 = vmatprep.subr.mxu0 0.0
        %v2100 = vand.u32 %v299, 4294901760
        %v2101 = vsub.f32 %v299, %v2100
        %v2102 = vand.u32 %v2101, 4294901760
        %v2103 = vsub.f32 %v2101, %v2102
        %v2104 = vand.u32 %v2103, 4294901760
        %2105 = vmatpush1.msra.mxu0 %v2104
        %2106 = vmatprep.subr.mxu0 0.0
        %v2107 = vand.u32 %v298, 4294901760
        %v2108 = vsub.f32 %v298, %v2107
        %v2109 = vand.u32 %v2108, 4294901760
        %v2110 = vsub.f32 %v2108, %v2109
        %v2111 = vand.u32 %v2110, 4294901760
        %2112 = vmatpush1.msra.mxu0 %v2111
        %2113 = vmatprep.subr.mxu0 0.0
        %v2114 = vand.u32 %v297, 4294901760
        %v2115 = vsub.f32 %v297, %v2114
        %v2116 = vand.u32 %v2115, 4294901760
        %v2117 = vsub.f32 %v2115, %v2116
        %v2118 = vand.u32 %v2117, 4294901760
        %2119 = vmatpush1.msra.mxu0 %v2118
        %2120 = vmatprep.subr.mxu0 0.0
        %v2121 = vand.u32 %v296, 4294901760
        %v2122 = vsub.f32 %v296, %v2121
        %v2123 = vand.u32 %v2122, 4294901760
        %v2124 = vsub.f32 %v2122, %v2123
        %v2125 = vand.u32 %v2124, 4294901760
        %2126 = vmatpush1.msra.mxu0 %v2125
        %2127 = vmatprep.subr.mxu0 0.0
        %v2128 = vand.u32 %v295, 4294901760
        %v2129 = vsub.f32 %v295, %v2128
        %v2130 = vand.u32 %v2129, 4294901760
        %v2131 = vsub.f32 %v2129, %v2130
        %v2132 = vand.u32 %v2131, 4294901760
        %2133 = vmatpush1.msra.mxu0 %v2132
        %2134 = vmatprep.subr.mxu0 0.0
        %v2135 = vand.u32 %v326, 4294901760
        %v2136 = vsub.f32 %v326, %v2135
        %v2137 = vand.u32 %v2136, 4294901760
        %v2138 = vsub.f32 %v2136, %v2137
        %v2139 = vand.u32 %v2138, 4294901760
        %2140 = vmatpush2.msra.mxu0 %v2139
        %2141 = vmatprep.subr.mxu0 0.0
        %v2142 = vand.u32 %v325, 4294901760
        %v2143 = vsub.f32 %v325, %v2142
        %v2144 = vand.u32 %v2143, 4294901760
        %v2145 = vsub.f32 %v2143, %v2144
        %v2146 = vand.u32 %v2145, 4294901760
        %2147 = vmatpush2.msra.mxu0 %v2146
        %2148 = vmatprep.subr.mxu0 0.0
        %v2149 = vand.u32 %v324, 4294901760
        %v2150 = vsub.f32 %v324, %v2149
        %v2151 = vand.u32 %v2150, 4294901760
        %v2152 = vsub.f32 %v2150, %v2151
        %v2153 = vand.u32 %v2152, 4294901760
        %2154 = vmatpush2.msra.mxu0 %v2153
        %2155 = vmatprep.subr.mxu0 0.0
        %v2156 = vand.u32 %v323, 4294901760
        %v2157 = vsub.f32 %v323, %v2156
        %v2158 = vand.u32 %v2157, 4294901760
        %v2159 = vsub.f32 %v2157, %v2158
        %v2160 = vand.u32 %v2159, 4294901760
        %2161 = vmatpush2.msra.mxu0 %v2160
        %2162 = vmatprep.subr.mxu0 0.0
        %v2163 = vand.u32 %v322, 4294901760
        %v2164 = vsub.f32 %v322, %v2163
        %v2165 = vand.u32 %v2164, 4294901760
        %v2166 = vsub.f32 %v2164, %v2165
        %v2167 = vand.u32 %v2166, 4294901760
        %2168 = vmatpush2.msra.mxu0 %v2167
        %2169 = vmatprep.subr.mxu0 0.0
        %v2170 = vand.u32 %v321, 4294901760
        %v2171 = vsub.f32 %v321, %v2170
        %v2172 = vand.u32 %v2171, 4294901760
        %v2173 = vsub.f32 %v2171, %v2172
        %v2174 = vand.u32 %v2173, 4294901760
        %2175 = vmatpush2.msra.mxu0 %v2174
        %2176 = vmatprep.subr.mxu0 0.0
        %v2177 = vand.u32 %v320, 4294901760
        %v2178 = vsub.f32 %v320, %v2177
        %v2179 = vand.u32 %v2178, 4294901760
        %v2180 = vsub.f32 %v2178, %v2179
        %v2181 = vand.u32 %v2180, 4294901760
        %2182 = vmatpush2.msra.mxu0 %v2181
        %2183 = vmatprep.subr.mxu0 0.0
        %v2184 = vand.u32 %v319, 4294901760
        %v2185 = vsub.f32 %v319, %v2184
        %v2186 = vand.u32 %v2185, 4294901760
        %v2187 = vsub.f32 %v2185, %v2186
        %v2188 = vand.u32 %v2187, 4294901760
        %2189 = vmatpush2.msra.mxu0 %v2188
        %2190 = vmatprep.subr.mxu0 0.0
        %v2191 = vand.u32 %v318, 4294901760
        %v2192 = vsub.f32 %v318, %v2191
        %v2193 = vand.u32 %v2192, 4294901760
        %v2194 = vsub.f32 %v2192, %v2193
        %v2195 = vand.u32 %v2194, 4294901760
        %2196 = vmatpush2.msra.mxu0 %v2195
        %2197 = vmatprep.subr.mxu0 0.0
        %v2198 = vand.u32 %v317, 4294901760
        %v2199 = vsub.f32 %v317, %v2198
        %v2200 = vand.u32 %v2199, 4294901760
        %v2201 = vsub.f32 %v2199, %v2200
        %v2202 = vand.u32 %v2201, 4294901760
        %2203 = vmatpush2.msra.mxu0 %v2202
        %2204 = vmatprep.subr.mxu0 0.0
        %v2205 = vand.u32 %v316, 4294901760
        %v2206 = vsub.f32 %v316, %v2205
        %v2207 = vand.u32 %v2206, 4294901760
        %v2208 = vsub.f32 %v2206, %v2207
        %v2209 = vand.u32 %v2208, 4294901760
        %2210 = vmatpush2.msra.mxu0 %v2209
        %2211 = vmatprep.subr.mxu0 0.0
        %v2212 = vand.u32 %v315, 4294901760
        %v2213 = vsub.f32 %v315, %v2212
        %v2214 = vand.u32 %v2213, 4294901760
        %v2215 = vsub.f32 %v2213, %v2214
        %v2216 = vand.u32 %v2215, 4294901760
        %2217 = vmatpush2.msra.mxu0 %v2216
        %2218 = vmatprep.subr.mxu0 0.0
        %v2219 = vand.u32 %v314, 4294901760
        %v2220 = vsub.f32 %v314, %v2219
        %v2221 = vand.u32 %v2220, 4294901760
        %v2222 = vsub.f32 %v2220, %v2221
        %v2223 = vand.u32 %v2222, 4294901760
        %2224 = vmatpush2.msra.mxu0 %v2223
        %2225 = vmatprep.subr.mxu0 0.0
        %v2226 = vand.u32 %v313, 4294901760
        %v2227 = vsub.f32 %v313, %v2226
        %v2228 = vand.u32 %v2227, 4294901760
        %v2229 = vsub.f32 %v2227, %v2228
        %v2230 = vand.u32 %v2229, 4294901760
        %2231 = vmatpush2.msra.mxu0 %v2230
        %2232 = vmatprep.subr.mxu0 0.0
        %v2233 = vand.u32 %v312, 4294901760
        %v2234 = vsub.f32 %v312, %v2233
        %v2235 = vand.u32 %v2234, 4294901760
        %v2236 = vsub.f32 %v2234, %v2235
        %v2237 = vand.u32 %v2236, 4294901760
        %2238 = vmatpush2.msra.mxu0 %v2237
        %2239 = vmatprep.subr.mxu0 0.0
        %v2240 = vand.u32 %v311, 4294901760
        %v2241 = vsub.f32 %v311, %v2240
        %v2242 = vand.u32 %v2241, 4294901760
        %v2243 = vsub.f32 %v2241, %v2242
        %v2244 = vand.u32 %v2243, 4294901760
        %2245 = vmatpush2.msra.mxu0 %v2244
        %v2246 = vand.u32 %v328, 4294901760
        %2247 = vmatprep.mubr.f32.mxu0 %v2246
        %v2248 = vand.u32 %v327, 4294901760
        %2249 = vmatmul.mubr.f32.gmra.mxu0 %v2248
        %v2250 = vpop.f32.mrf.mxu0
        %v2251 = vadd.f32 %v1794, %v2250
        %v2252 = vpop.f32.mrf.mxu0
        %v2253 = vand.u32 %v334, 4294901760
        %2254 = vmatprep.mubr.f32.mxu0 %v2253
        %v2255 = vand.u32 %v333, 4294901760
        %2256 = vmatmul.mubr.f32.gmra.mxu0 %v2255
        %v2257 = vpop.f32.mrf.mxu0
        %v2258 = vadd.f32 %v1809, %v2257
        %v2259 = vpop.f32.mrf.mxu0
        %v2260 = vand.u32 %v340, 4294901760
        %2261 = vmatprep.mubr.f32.mxu0 %v2260
        %v2262 = vand.u32 %v339, 4294901760
        %2263 = vmatmul.mubr.f32.gmra.mxu0 %v2262
        %v2264 = vpop.f32.mrf.mxu0
        %v2265 = vadd.f32 %v1824, %v2264
        %v2266 = vpop.f32.mrf.mxu0
        %v2267 = vand.u32 %v346, 4294901760
        %2268 = vmatprep.mubr.f32.mxu0 %v2267
        %v2269 = vand.u32 %v345, 4294901760
        %2270 = vmatmul.mubr.f32.gmra.mxu0 %v2269
        %v2271 = vpop.f32.mrf.mxu0
        %v2272 = vadd.f32 %v1839, %v2271
        %v2273 = vpop.f32.mrf.mxu0
        %v2274 = vand.u32 %v352, 4294901760
        %2275 = vmatprep.mubr.f32.mxu0 %v2274
        %v2276 = vand.u32 %v351, 4294901760
        %2277 = vmatmul.mubr.f32.gmra.mxu0 %v2276
        %v2278 = vpop.f32.mrf.mxu0
        %v2279 = vadd.f32 %v1854, %v2278
        %v2280 = vpop.f32.mrf.mxu0
        %v2281 = vand.u32 %v358, 4294901760
        %2282 = vmatprep.mubr.f32.mxu0 %v2281
        %v2283 = vand.u32 %v357, 4294901760
        %2284 = vmatmul.mubr.f32.gmra.mxu0 %v2283
        %v2285 = vpop.f32.mrf.mxu0
        %v2286 = vadd.f32 %v1869, %v2285
        %v2287 = vpop.f32.mrf.mxu0
        %v2288 = vand.u32 %v364, 4294901760
        %2289 = vmatprep.mubr.f32.mxu0 %v2288
        %v2290 = vand.u32 %v363, 4294901760
        %2291 = vmatmul.mubr.f32.gmra.mxu0 %v2290
        %v2292 = vpop.f32.mrf.mxu0
        %v2293 = vadd.f32 %v1884, %v2292
        %v2294 = vpop.f32.mrf.mxu0
        %v2295 = vand.u32 %v370, 4294901760
        %2296 = vmatprep.mubr.f32.mxu0 %v2295
        %v2297 = vand.u32 %v369, 4294901760
        %2298 = vmatmul.mubr.f32.gmra.mxu0 %v2297
        %v2299 = vpop.f32.mrf.mxu0
        %v2300 = vadd.f32 %v1899, %v2299
        %v2301 = vpop.f32.mrf.mxu0
        %v2302 = vand.u32 %v376, 4294901760
        %2303 = vmatprep.mubr.f32.mxu0 %v2302
        %v2304 = vand.u32 %v375, 4294901760
        %2305 = vmatmul.mubr.f32.gmra.mxu0 %v2304
        %v2306 = vpop.f32.mrf.mxu0
        %v2307 = vadd.f32 %v1914, %v2306
        %v2308 = vpop.f32.mrf.mxu0
        %v2309 = vand.u32 %v382, 4294901760
        %2310 = vmatprep.mubr.f32.mxu0 %v2309
        %v2311 = vand.u32 %v381, 4294901760
        %2312 = vmatmul.mubr.f32.gmra.mxu0 %v2311
        %v2313 = vpop.f32.mrf.mxu0
        %v2314 = vadd.f32 %v1929, %v2313
        %v2315 = vpop.f32.mrf.mxu0
        %v2316 = vand.u32 %v388, 4294901760
        %2317 = vmatprep.mubr.f32.mxu0 %v2316
        %v2318 = vand.u32 %v387, 4294901760
        %2319 = vmatmul.mubr.f32.gmra.mxu0 %v2318
        %v2320 = vpop.f32.mrf.mxu0
        %v2321 = vadd.f32 %v1944, %v2320
        %v2322 = vpop.f32.mrf.mxu0
        %v2323 = vand.u32 %v394, 4294901760
        %2324 = vmatprep.mubr.f32.mxu0 %v2323
        %v2325 = vand.u32 %v393, 4294901760
        %2326 = vmatmul.mubr.f32.gmra.mxu0 %v2325
        %v2327 = vpop.f32.mrf.mxu0
        %v2328 = vadd.f32 %v1959, %v2327
        %v2329 = vpop.f32.mrf.mxu0
        %v2330 = vand.u32 %v400, 4294901760
        %2331 = vmatprep.mubr.f32.mxu0 %v2330
        %v2332 = vand.u32 %v399, 4294901760
        %2333 = vmatmul.mubr.f32.gmra.mxu0 %v2332
        %v2334 = vpop.f32.mrf.mxu0
        %v2335 = vadd.f32 %v1974, %v2334
        %v2336 = vpop.f32.mrf.mxu0
        %v2337 = vand.u32 %v406, 4294901760
        %2338 = vmatprep.mubr.f32.mxu0 %v2337
        %v2339 = vand.u32 %v405, 4294901760
        %2340 = vmatmul.mubr.f32.gmra.mxu0 %v2339
        %v2341 = vpop.f32.mrf.mxu0
        %v2342 = vadd.f32 %v1989, %v2341
        %v2343 = vpop.f32.mrf.mxu0
        %v2344 = vand.u32 %v412, 4294901760
        %2345 = vmatprep.mubr.f32.mxu0 %v2344
        %v2346 = vand.u32 %v411, 4294901760
        %2347 = vmatmul.mubr.f32.gmra.mxu0 %v2346
        %v2348 = vpop.f32.mrf.mxu0
        %v2349 = vadd.f32 %v2004, %v2348
        %v2350 = vpop.f32.mrf.mxu0
        %v2351 = vand.u32 %v418, 4294901760
        %2352 = vmatprep.mubr.f32.mxu0 %v2351
        %v2353 = vand.u32 %v417, 4294901760
        %2354 = vmatmul.mubr.f32.gmra.mxu0 %v2353
        %v2355 = vpop.f32.mrf.mxu0
        %v2356 = vadd.f32 %v2019, %v2355
        %v2357 = vpop.f32.mrf.mxu0
        %2358 = vdwg.mxu0
        %2359 = vmatprep.subr.mxu0 0.0
        %v2360 = vand.u32 %v310, 4294901760
        %v2361 = vsub.f32 %v310, %v2360
        %2362 = vmatpush1.msra.mxu0 %v2361
        %2363 = vmatprep.subr.mxu0 0.0
        %v2364 = vand.u32 %v309, 4294901760
        %v2365 = vsub.f32 %v309, %v2364
        %2366 = vmatpush1.msra.mxu0 %v2365
        %2367 = vmatprep.subr.mxu0 0.0
        %v2368 = vand.u32 %v308, 4294901760
        %v2369 = vsub.f32 %v308, %v2368
        %2370 = vmatpush1.msra.mxu0 %v2369
        %2371 = vmatprep.subr.mxu0 0.0
        %v2372 = vand.u32 %v307, 4294901760
        %v2373 = vsub.f32 %v307, %v2372
        %2374 = vmatpush1.msra.mxu0 %v2373
        %2375 = vmatprep.subr.mxu0 0.0
        %v2376 = vand.u32 %v306, 4294901760
        %v2377 = vsub.f32 %v306, %v2376
        %2378 = vmatpush1.msra.mxu0 %v2377
        %2379 = vmatprep.subr.mxu0 0.0
        %v2380 = vand.u32 %v305, 4294901760
        %v2381 = vsub.f32 %v305, %v2380
        %2382 = vmatpush1.msra.mxu0 %v2381
        %2383 = vmatprep.subr.mxu0 0.0
        %v2384 = vand.u32 %v304, 4294901760
        %v2385 = vsub.f32 %v304, %v2384
        %2386 = vmatpush1.msra.mxu0 %v2385
        %2387 = vmatprep.subr.mxu0 0.0
        %v2388 = vand.u32 %v303, 4294901760
        %v2389 = vsub.f32 %v303, %v2388
        %2390 = vmatpush1.msra.mxu0 %v2389
        %2391 = vmatprep.subr.mxu0 0.0
        %v2392 = vand.u32 %v302, 4294901760
        %v2393 = vsub.f32 %v302, %v2392
        %2394 = vmatpush1.msra.mxu0 %v2393
        %2395 = vmatprep.subr.mxu0 0.0
        %v2396 = vand.u32 %v301, 4294901760
        %v2397 = vsub.f32 %v301, %v2396
        %2398 = vmatpush1.msra.mxu0 %v2397
        %2399 = vmatprep.subr.mxu0 0.0
        %v2400 = vand.u32 %v300, 4294901760
        %v2401 = vsub.f32 %v300, %v2400
        %2402 = vmatpush1.msra.mxu0 %v2401
        %2403 = vmatprep.subr.mxu0 0.0
        %v2404 = vand.u32 %v299, 4294901760
        %v2405 = vsub.f32 %v299, %v2404
        %2406 = vmatpush1.msra.mxu0 %v2405
        %2407 = vmatprep.subr.mxu0 0.0
        %v2408 = vand.u32 %v298, 4294901760
        %v2409 = vsub.f32 %v298, %v2408
        %2410 = vmatpush1.msra.mxu0 %v2409
        %2411 = vmatprep.subr.mxu0 0.0
        %v2412 = vand.u32 %v297, 4294901760
        %v2413 = vsub.f32 %v297, %v2412
        %2414 = vmatpush1.msra.mxu0 %v2413
        %2415 = vmatprep.subr.mxu0 0.0
        %v2416 = vand.u32 %v296, 4294901760
        %v2417 = vsub.f32 %v296, %v2416
        %2418 = vmatpush1.msra.mxu0 %v2417
        %2419 = vmatprep.subr.mxu0 0.0
        %v2420 = vand.u32 %v295, 4294901760
        %v2421 = vsub.f32 %v295, %v2420
        %2422 = vmatpush1.msra.mxu0 %v2421
        %2423 = vmatprep.subr.mxu0 0.0
        %v2424 = vand.u32 %v326, 4294901760
        %v2425 = vsub.f32 %v326, %v2424
        %2426 = vmatpush2.msra.mxu0 %v2425
        %2427 = vmatprep.subr.mxu0 0.0
        %v2428 = vand.u32 %v325, 4294901760
        %v2429 = vsub.f32 %v325, %v2428
        %2430 = vmatpush2.msra.mxu0 %v2429
        %2431 = vmatprep.subr.mxu0 0.0
        %v2432 = vand.u32 %v324, 4294901760
        %v2433 = vsub.f32 %v324, %v2432
        %2434 = vmatpush2.msra.mxu0 %v2433
        %2435 = vmatprep.subr.mxu0 0.0
        %v2436 = vand.u32 %v323, 4294901760
        %v2437 = vsub.f32 %v323, %v2436
        %2438 = vmatpush2.msra.mxu0 %v2437
        %2439 = vmatprep.subr.mxu0 0.0
        %v2440 = vand.u32 %v322, 4294901760
        %v2441 = vsub.f32 %v322, %v2440
        %2442 = vmatpush2.msra.mxu0 %v2441
        %2443 = vmatprep.subr.mxu0 0.0
        %v2444 = vand.u32 %v321, 4294901760
        %v2445 = vsub.f32 %v321, %v2444
        %2446 = vmatpush2.msra.mxu0 %v2445
        %2447 = vmatprep.subr.mxu0 0.0
        %v2448 = vand.u32 %v320, 4294901760
        %v2449 = vsub.f32 %v320, %v2448
        %2450 = vmatpush2.msra.mxu0 %v2449
        %2451 = vmatprep.subr.mxu0 0.0
        %v2452 = vand.u32 %v319, 4294901760
        %v2453 = vsub.f32 %v319, %v2452
        %2454 = vmatpush2.msra.mxu0 %v2453
        %2455 = vmatprep.subr.mxu0 0.0
        %v2456 = vand.u32 %v318, 4294901760
        %v2457 = vsub.f32 %v318, %v2456
        %2458 = vmatpush2.msra.mxu0 %v2457
        %2459 = vmatprep.subr.mxu0 0.0
        %v2460 = vand.u32 %v317, 4294901760
        %v2461 = vsub.f32 %v317, %v2460
        %2462 = vmatpush2.msra.mxu0 %v2461
        %2463 = vmatprep.subr.mxu0 0.0
        %v2464 = vand.u32 %v316, 4294901760
        %v2465 = vsub.f32 %v316, %v2464
        %2466 = vmatpush2.msra.mxu0 %v2465
        %2467 = vmatprep.subr.mxu0 0.0
        %v2468 = vand.u32 %v315, 4294901760
        %v2469 = vsub.f32 %v315, %v2468
        %2470 = vmatpush2.msra.mxu0 %v2469
        %2471 = vmatprep.subr.mxu0 0.0
        %v2472 = vand.u32 %v314, 4294901760
        %v2473 = vsub.f32 %v314, %v2472
        %2474 = vmatpush2.msra.mxu0 %v2473
        %2475 = vmatprep.subr.mxu0 0.0
        %v2476 = vand.u32 %v313, 4294901760
        %v2477 = vsub.f32 %v313, %v2476
        %2478 = vmatpush2.msra.mxu0 %v2477
        %2479 = vmatprep.subr.mxu0 0.0
        %v2480 = vand.u32 %v312, 4294901760
        %v2481 = vsub.f32 %v312, %v2480
        %2482 = vmatpush2.msra.mxu0 %v2481
        %2483 = vmatprep.subr.mxu0 0.0
        %v2484 = vand.u32 %v311, 4294901760
        %v2485 = vsub.f32 %v311, %v2484
        %2486 = vmatpush2.msra.mxu0 %v2485
        %v2487 = vand.u32 %v328, 4294901760
        %v2488 = vsub.f32 %v328, %v2487
        %2489 = vmatprep.mubr.f32.mxu0 %v2488
        %v2490 = vand.u32 %v327, 4294901760
        %v2491 = vsub.f32 %v327, %v2490
        %2492 = vmatmul.mubr.f32.gmra.mxu0 %v2491
        %v2493 = vpop.f32.mrf.mxu0
        %v2494 = vadd.f32 %v2251, %v2493
        %v2495 = vpop.f32.mrf.mxu0
        %v2496 = vand.u32 %v334, 4294901760
        %v2497 = vsub.f32 %v334, %v2496
        %2498 = vmatprep.mubr.f32.mxu0 %v2497
        %v2499 = vand.u32 %v333, 4294901760
        %v2500 = vsub.f32 %v333, %v2499
        %2501 = vmatmul.mubr.f32.gmra.mxu0 %v2500
        %v2502 = vpop.f32.mrf.mxu0
        %v2503 = vadd.f32 %v2258, %v2502
        %v2504 = vpop.f32.mrf.mxu0
        %v2505 = vand.u32 %v340, 4294901760
        %v2506 = vsub.f32 %v340, %v2505
        %2507 = vmatprep.mubr.f32.mxu0 %v2506
        %v2508 = vand.u32 %v339, 4294901760
        %v2509 = vsub.f32 %v339, %v2508
        %2510 = vmatmul.mubr.f32.gmra.mxu0 %v2509
        %v2511 = vpop.f32.mrf.mxu0
        %v2512 = vadd.f32 %v2265, %v2511
        %v2513 = vpop.f32.mrf.mxu0
        %v2514 = vand.u32 %v346, 4294901760
        %v2515 = vsub.f32 %v346, %v2514
        %2516 = vmatprep.mubr.f32.mxu0 %v2515
        %v2517 = vand.u32 %v345, 4294901760
        %v2518 = vsub.f32 %v345, %v2517
        %2519 = vmatmul.mubr.f32.gmra.mxu0 %v2518
        %v2520 = vpop.f32.mrf.mxu0
        %v2521 = vadd.f32 %v2272, %v2520
        %v2522 = vpop.f32.mrf.mxu0
        %v2523 = vand.u32 %v352, 4294901760
        %v2524 = vsub.f32 %v352, %v2523
        %2525 = vmatprep.mubr.f32.mxu0 %v2524
        %v2526 = vand.u32 %v351, 4294901760
        %v2527 = vsub.f32 %v351, %v2526
        %2528 = vmatmul.mubr.f32.gmra.mxu0 %v2527
        %v2529 = vpop.f32.mrf.mxu0
        %v2530 = vadd.f32 %v2279, %v2529
        %v2531 = vpop.f32.mrf.mxu0
        %v2532 = vand.u32 %v358, 4294901760
        %v2533 = vsub.f32 %v358, %v2532
        %2534 = vmatprep.mubr.f32.mxu0 %v2533
        %v2535 = vand.u32 %v357, 4294901760
        %v2536 = vsub.f32 %v357, %v2535
        %2537 = vmatmul.mubr.f32.gmra.mxu0 %v2536
        %v2538 = vpop.f32.mrf.mxu0
        %v2539 = vadd.f32 %v2286, %v2538
        %v2540 = vpop.f32.mrf.mxu0
        %v2541 = vand.u32 %v364, 4294901760
        %v2542 = vsub.f32 %v364, %v2541
        %2543 = vmatprep.mubr.f32.mxu0 %v2542
        %v2544 = vand.u32 %v363, 4294901760
        %v2545 = vsub.f32 %v363, %v2544
        %2546 = vmatmul.mubr.f32.gmra.mxu0 %v2545
        %v2547 = vpop.f32.mrf.mxu0
        %v2548 = vadd.f32 %v2293, %v2547
        %v2549 = vpop.f32.mrf.mxu0
        %v2550 = vand.u32 %v370, 4294901760
        %v2551 = vsub.f32 %v370, %v2550
        %2552 = vmatprep.mubr.f32.mxu0 %v2551
        %v2553 = vand.u32 %v369, 4294901760
        %v2554 = vsub.f32 %v369, %v2553
        %2555 = vmatmul.mubr.f32.gmra.mxu0 %v2554
        %v2556 = vpop.f32.mrf.mxu0
        %v2557 = vadd.f32 %v2300, %v2556
        %v2558 = vpop.f32.mrf.mxu0
        %v2559 = vand.u32 %v376, 4294901760
        %v2560 = vsub.f32 %v376, %v2559
        %2561 = vmatprep.mubr.f32.mxu0 %v2560
        %v2562 = vand.u32 %v375, 4294901760
        %v2563 = vsub.f32 %v375, %v2562
        %2564 = vmatmul.mubr.f32.gmra.mxu0 %v2563
        %v2565 = vpop.f32.mrf.mxu0
        %v2566 = vadd.f32 %v2307, %v2565
        %v2567 = vpop.f32.mrf.mxu0
        %v2568 = vand.u32 %v382, 4294901760
        %v2569 = vsub.f32 %v382, %v2568
        %2570 = vmatprep.mubr.f32.mxu0 %v2569
        %v2571 = vand.u32 %v381, 4294901760
        %v2572 = vsub.f32 %v381, %v2571
        %2573 = vmatmul.mubr.f32.gmra.mxu0 %v2572
        %v2574 = vpop.f32.mrf.mxu0
        %v2575 = vadd.f32 %v2314, %v2574
        %v2576 = vpop.f32.mrf.mxu0
        %v2577 = vand.u32 %v388, 4294901760
        %v2578 = vsub.f32 %v388, %v2577
        %2579 = vmatprep.mubr.f32.mxu0 %v2578
        %v2580 = vand.u32 %v387, 4294901760
        %v2581 = vsub.f32 %v387, %v2580
        %2582 = vmatmul.mubr.f32.gmra.mxu0 %v2581
        %v2583 = vpop.f32.mrf.mxu0
        %v2584 = vadd.f32 %v2321, %v2583
        %v2585 = vpop.f32.mrf.mxu0
        %v2586 = vand.u32 %v394, 4294901760
        %v2587 = vsub.f32 %v394, %v2586
        %2588 = vmatprep.mubr.f32.mxu0 %v2587
        %v2589 = vand.u32 %v393, 4294901760
        %v2590 = vsub.f32 %v393, %v2589
        %2591 = vmatmul.mubr.f32.gmra.mxu0 %v2590
        %v2592 = vpop.f32.mrf.mxu0
        %v2593 = vadd.f32 %v2328, %v2592
        %v2594 = vpop.f32.mrf.mxu0
        %v2595 = vand.u32 %v400, 4294901760
        %v2596 = vsub.f32 %v400, %v2595
        %2597 = vmatprep.mubr.f32.mxu0 %v2596
        %v2598 = vand.u32 %v399, 4294901760
        %v2599 = vsub.f32 %v399, %v2598
        %2600 = vmatmul.mubr.f32.gmra.mxu0 %v2599
        %v2601 = vpop.f32.mrf.mxu0
        %v2602 = vadd.f32 %v2335, %v2601
        %v2603 = vpop.f32.mrf.mxu0
        %v2604 = vand.u32 %v406, 4294901760
        %v2605 = vsub.f32 %v406, %v2604
        %2606 = vmatprep.mubr.f32.mxu0 %v2605
        %v2607 = vand.u32 %v405, 4294901760
        %v2608 = vsub.f32 %v405, %v2607
        %2609 = vmatmul.mubr.f32.gmra.mxu0 %v2608
        %v2610 = vpop.f32.mrf.mxu0
        %v2611 = vadd.f32 %v2342, %v2610
        %v2612 = vpop.f32.mrf.mxu0
        %v2613 = vand.u32 %v412, 4294901760
        %v2614 = vsub.f32 %v412, %v2613
        %2615 = vmatprep.mubr.f32.mxu0 %v2614
        %v2616 = vand.u32 %v411, 4294901760
        %v2617 = vsub.f32 %v411, %v2616
        %2618 = vmatmul.mubr.f32.gmra.mxu0 %v2617
        %v2619 = vpop.f32.mrf.mxu0
        %v2620 = vadd.f32 %v2349, %v2619
        %v2621 = vpop.f32.mrf.mxu0
        %v2622 = vand.u32 %v418, 4294901760
        %v2623 = vsub.f32 %v418, %v2622
        %2624 = vmatprep.mubr.f32.mxu0 %v2623
        %v2625 = vand.u32 %v417, 4294901760
        %v2626 = vsub.f32 %v417, %v2625
        %2627 = vmatmul.mubr.f32.gmra.mxu0 %v2626
        %v2628 = vpop.f32.mrf.mxu0
        %v2629 = vadd.f32 %v2356, %v2628
        %v2630 = vpop.f32.mrf.mxu0
        %2631 = vdwg.mxu0
        %2632 = vmatprep.subr.mxu0 0.0
        %v2633 = vand.u32 %v310, 4294901760
        %2634 = vmatpush1.msra.mxu0 %v2633
        %2635 = vmatprep.subr.mxu0 0.0
        %v2636 = vand.u32 %v309, 4294901760
        %2637 = vmatpush1.msra.mxu0 %v2636
        %2638 = vmatprep.subr.mxu0 0.0
        %v2639 = vand.u32 %v308, 4294901760
        %2640 = vmatpush1.msra.mxu0 %v2639
        %2641 = vmatprep.subr.mxu0 0.0
        %v2642 = vand.u32 %v307, 4294901760
        %2643 = vmatpush1.msra.mxu0 %v2642
        %2644 = vmatprep.subr.mxu0 0.0
        %v2645 = vand.u32 %v306, 4294901760
        %2646 = vmatpush1.msra.mxu0 %v2645
        %2647 = vmatprep.subr.mxu0 0.0
        %v2648 = vand.u32 %v305, 4294901760
        %2649 = vmatpush1.msra.mxu0 %v2648
        %2650 = vmatprep.subr.mxu0 0.0
        %v2651 = vand.u32 %v304, 4294901760
        %2652 = vmatpush1.msra.mxu0 %v2651
        %2653 = vmatprep.subr.mxu0 0.0
        %v2654 = vand.u32 %v303, 4294901760
        %2655 = vmatpush1.msra.mxu0 %v2654
        %2656 = vmatprep.subr.mxu0 0.0
        %v2657 = vand.u32 %v302, 4294901760
        %2658 = vmatpush1.msra.mxu0 %v2657
        %2659 = vmatprep.subr.mxu0 0.0
        %v2660 = vand.u32 %v301, 4294901760
        %2661 = vmatpush1.msra.mxu0 %v2660
        %2662 = vmatprep.subr.mxu0 0.0
        %v2663 = vand.u32 %v300, 4294901760
        %2664 = vmatpush1.msra.mxu0 %v2663
        %2665 = vmatprep.subr.mxu0 0.0
        %v2666 = vand.u32 %v299, 4294901760
        %2667 = vmatpush1.msra.mxu0 %v2666
        %2668 = vmatprep.subr.mxu0 0.0
        %v2669 = vand.u32 %v298, 4294901760
        %2670 = vmatpush1.msra.mxu0 %v2669
        %2671 = vmatprep.subr.mxu0 0.0
        %v2672 = vand.u32 %v297, 4294901760
        %2673 = vmatpush1.msra.mxu0 %v2672
        %2674 = vmatprep.subr.mxu0 0.0
        %v2675 = vand.u32 %v296, 4294901760
        %2676 = vmatpush1.msra.mxu0 %v2675
        %2677 = vmatprep.subr.mxu0 0.0
        %v2678 = vand.u32 %v295, 4294901760
        %2679 = vmatpush1.msra.mxu0 %v2678
        %2680 = vmatprep.subr.mxu0 0.0
        %v2681 = vand.u32 %v326, 4294901760
        %2682 = vmatpush2.msra.mxu0 %v2681
        %2683 = vmatprep.subr.mxu0 0.0
        %v2684 = vand.u32 %v325, 4294901760
        %2685 = vmatpush2.msra.mxu0 %v2684
        %2686 = vmatprep.subr.mxu0 0.0
        %v2687 = vand.u32 %v324, 4294901760
        %2688 = vmatpush2.msra.mxu0 %v2687
        %2689 = vmatprep.subr.mxu0 0.0
        %v2690 = vand.u32 %v323, 4294901760
        %2691 = vmatpush2.msra.mxu0 %v2690
        %2692 = vmatprep.subr.mxu0 0.0
        %v2693 = vand.u32 %v322, 4294901760
        %2694 = vmatpush2.msra.mxu0 %v2693
        %2695 = vmatprep.subr.mxu0 0.0
        %v2696 = vand.u32 %v321, 4294901760
        %2697 = vmatpush2.msra.mxu0 %v2696
        %2698 = vmatprep.subr.mxu0 0.0
        %v2699 = vand.u32 %v320, 4294901760
        %2700 = vmatpush2.msra.mxu0 %v2699
        %2701 = vmatprep.subr.mxu0 0.0
        %v2702 = vand.u32 %v319, 4294901760
        %2703 = vmatpush2.msra.mxu0 %v2702
        %2704 = vmatprep.subr.mxu0 0.0
        %v2705 = vand.u32 %v318, 4294901760
        %2706 = vmatpush2.msra.mxu0 %v2705
        %2707 = vmatprep.subr.mxu0 0.0
        %v2708 = vand.u32 %v317, 4294901760
        %2709 = vmatpush2.msra.mxu0 %v2708
        %2710 = vmatprep.subr.mxu0 0.0
        %v2711 = vand.u32 %v316, 4294901760
        %2712 = vmatpush2.msra.mxu0 %v2711
        %2713 = vmatprep.subr.mxu0 0.0
        %v2714 = vand.u32 %v315, 4294901760
        %2715 = vmatpush2.msra.mxu0 %v2714
        %2716 = vmatprep.subr.mxu0 0.0
        %v2717 = vand.u32 %v314, 4294901760
        %2718 = vmatpush2.msra.mxu0 %v2717
        %2719 = vmatprep.subr.mxu0 0.0
        %v2720 = vand.u32 %v313, 4294901760
        %2721 = vmatpush2.msra.mxu0 %v2720
        %2722 = vmatprep.subr.mxu0 0.0
        %v2723 = vand.u32 %v312, 4294901760
        %2724 = vmatpush2.msra.mxu0 %v2723
        %2725 = vmatprep.subr.mxu0 0.0
        %v2726 = vand.u32 %v311, 4294901760
        %2727 = vmatpush2.msra.mxu0 %v2726
        %v2728 = vand.u32 %v328, 4294901760
        %v2729 = vsub.f32 %v328, %v2728
        %v2730 = vand.u32 %v2729, 4294901760
        %2731 = vmatprep.mubr.f32.mxu0 %v2730
        %v2732 = vand.u32 %v327, 4294901760
        %v2733 = vsub.f32 %v327, %v2732
        %v2734 = vand.u32 %v2733, 4294901760
        %2735 = vmatmul.mubr.f32.gmra.mxu0 %v2734
        %v2736 = vpop.f32.mrf.mxu0
        %v2737 = vadd.f32 %v2494, %v2736
        %v2738 = vpop.f32.mrf.mxu0
        %v2739 = vand.u32 %v334, 4294901760
        %v2740 = vsub.f32 %v334, %v2739
        %v2741 = vand.u32 %v2740, 4294901760
        %2742 = vmatprep.mubr.f32.mxu0 %v2741
        %v2743 = vand.u32 %v333, 4294901760
        %v2744 = vsub.f32 %v333, %v2743
        %v2745 = vand.u32 %v2744, 4294901760
        %2746 = vmatmul.mubr.f32.gmra.mxu0 %v2745
        %v2747 = vpop.f32.mrf.mxu0
        %v2748 = vadd.f32 %v2503, %v2747
        %v2749 = vpop.f32.mrf.mxu0
        %v2750 = vand.u32 %v340, 4294901760
        %v2751 = vsub.f32 %v340, %v2750
        %v2752 = vand.u32 %v2751, 4294901760
        %2753 = vmatprep.mubr.f32.mxu0 %v2752
        %v2754 = vand.u32 %v339, 4294901760
        %v2755 = vsub.f32 %v339, %v2754
        %v2756 = vand.u32 %v2755, 4294901760
        %2757 = vmatmul.mubr.f32.gmra.mxu0 %v2756
        %v2758 = vpop.f32.mrf.mxu0
        %v2759 = vadd.f32 %v2512, %v2758
        %v2760 = vpop.f32.mrf.mxu0
        %v2761 = vand.u32 %v346, 4294901760
        %v2762 = vsub.f32 %v346, %v2761
        %v2763 = vand.u32 %v2762, 4294901760
        %2764 = vmatprep.mubr.f32.mxu0 %v2763
        %v2765 = vand.u32 %v345, 4294901760
        %v2766 = vsub.f32 %v345, %v2765
        %v2767 = vand.u32 %v2766, 4294901760
        %2768 = vmatmul.mubr.f32.gmra.mxu0 %v2767
        %v2769 = vpop.f32.mrf.mxu0
        %v2770 = vadd.f32 %v2521, %v2769
        %v2771 = vpop.f32.mrf.mxu0
        %v2772 = vand.u32 %v352, 4294901760
        %v2773 = vsub.f32 %v352, %v2772
        %v2774 = vand.u32 %v2773, 4294901760
        %2775 = vmatprep.mubr.f32.mxu0 %v2774
        %v2776 = vand.u32 %v351, 4294901760
        %v2777 = vsub.f32 %v351, %v2776
        %v2778 = vand.u32 %v2777, 4294901760
        %2779 = vmatmul.mubr.f32.gmra.mxu0 %v2778
        %v2780 = vpop.f32.mrf.mxu0
        %v2781 = vadd.f32 %v2530, %v2780
        %v2782 = vpop.f32.mrf.mxu0
        %v2783 = vand.u32 %v358, 4294901760
        %v2784 = vsub.f32 %v358, %v2783
        %v2785 = vand.u32 %v2784, 4294901760
        %2786 = vmatprep.mubr.f32.mxu0 %v2785
        %v2787 = vand.u32 %v357, 4294901760
        %v2788 = vsub.f32 %v357, %v2787
        %v2789 = vand.u32 %v2788, 4294901760
        %2790 = vmatmul.mubr.f32.gmra.mxu0 %v2789
        %v2791 = vpop.f32.mrf.mxu0
        %v2792 = vadd.f32 %v2539, %v2791
        %v2793 = vpop.f32.mrf.mxu0
        %v2794 = vand.u32 %v364, 4294901760
        %v2795 = vsub.f32 %v364, %v2794
        %v2796 = vand.u32 %v2795, 4294901760
        %2797 = vmatprep.mubr.f32.mxu0 %v2796
        %v2798 = vand.u32 %v363, 4294901760
        %v2799 = vsub.f32 %v363, %v2798
        %v2800 = vand.u32 %v2799, 4294901760
        %2801 = vmatmul.mubr.f32.gmra.mxu0 %v2800
        %v2802 = vpop.f32.mrf.mxu0
        %v2803 = vadd.f32 %v2548, %v2802
        %v2804 = vpop.f32.mrf.mxu0
        %v2805 = vand.u32 %v370, 4294901760
        %v2806 = vsub.f32 %v370, %v2805
        %v2807 = vand.u32 %v2806, 4294901760
        %2808 = vmatprep.mubr.f32.mxu0 %v2807
        %v2809 = vand.u32 %v369, 4294901760
        %v2810 = vsub.f32 %v369, %v2809
        %v2811 = vand.u32 %v2810, 4294901760
        %2812 = vmatmul.mubr.f32.gmra.mxu0 %v2811
        %v2813 = vpop.f32.mrf.mxu0
        %v2814 = vadd.f32 %v2557, %v2813
        %v2815 = vpop.f32.mrf.mxu0
        %v2816 = vand.u32 %v376, 4294901760
        %v2817 = vsub.f32 %v376, %v2816
        %v2818 = vand.u32 %v2817, 4294901760
        %2819 = vmatprep.mubr.f32.mxu0 %v2818
        %v2820 = vand.u32 %v375, 4294901760
        %v2821 = vsub.f32 %v375, %v2820
        %v2822 = vand.u32 %v2821, 4294901760
        %2823 = vmatmul.mubr.f32.gmra.mxu0 %v2822
        %v2824 = vpop.f32.mrf.mxu0
        %v2825 = vadd.f32 %v2566, %v2824
        %v2826 = vpop.f32.mrf.mxu0
        %v2827 = vand.u32 %v382, 4294901760
        %v2828 = vsub.f32 %v382, %v2827
        %v2829 = vand.u32 %v2828, 4294901760
        %2830 = vmatprep.mubr.f32.mxu0 %v2829
        %v2831 = vand.u32 %v381, 4294901760
        %v2832 = vsub.f32 %v381, %v2831
        %v2833 = vand.u32 %v2832, 4294901760
        %2834 = vmatmul.mubr.f32.gmra.mxu0 %v2833
        %v2835 = vpop.f32.mrf.mxu0
        %v2836 = vadd.f32 %v2575, %v2835
        %v2837 = vpop.f32.mrf.mxu0
        %v2838 = vand.u32 %v388, 4294901760
        %v2839 = vsub.f32 %v388, %v2838
        %v2840 = vand.u32 %v2839, 4294901760
        %2841 = vmatprep.mubr.f32.mxu0 %v2840
        %v2842 = vand.u32 %v387, 4294901760
        %v2843 = vsub.f32 %v387, %v2842
        %v2844 = vand.u32 %v2843, 4294901760
        %2845 = vmatmul.mubr.f32.gmra.mxu0 %v2844
        %v2846 = vpop.f32.mrf.mxu0
        %v2847 = vadd.f32 %v2584, %v2846
        %v2848 = vpop.f32.mrf.mxu0
        %v2849 = vand.u32 %v394, 4294901760
        %v2850 = vsub.f32 %v394, %v2849
        %v2851 = vand.u32 %v2850, 4294901760
        %2852 = vmatprep.mubr.f32.mxu0 %v2851
        %v2853 = vand.u32 %v393, 4294901760
        %v2854 = vsub.f32 %v393, %v2853
        %v2855 = vand.u32 %v2854, 4294901760
        %2856 = vmatmul.mubr.f32.gmra.mxu0 %v2855
        %v2857 = vpop.f32.mrf.mxu0
        %v2858 = vadd.f32 %v2593, %v2857
        %v2859 = vpop.f32.mrf.mxu0
        %v2860 = vand.u32 %v400, 4294901760
        %v2861 = vsub.f32 %v400, %v2860
        %v2862 = vand.u32 %v2861, 4294901760
        %2863 = vmatprep.mubr.f32.mxu0 %v2862
        %v2864 = vand.u32 %v399, 4294901760
        %v2865 = vsub.f32 %v399, %v2864
        %v2866 = vand.u32 %v2865, 4294901760
        %2867 = vmatmul.mubr.f32.gmra.mxu0 %v2866
        %v2868 = vpop.f32.mrf.mxu0
        %v2869 = vadd.f32 %v2602, %v2868
        %v2870 = vpop.f32.mrf.mxu0
        %v2871 = vand.u32 %v406, 4294901760
        %v2872 = vsub.f32 %v406, %v2871
        %v2873 = vand.u32 %v2872, 4294901760
        %2874 = vmatprep.mubr.f32.mxu0 %v2873
        %v2875 = vand.u32 %v405, 4294901760
        %v2876 = vsub.f32 %v405, %v2875
        %v2877 = vand.u32 %v2876, 4294901760
        %2878 = vmatmul.mubr.f32.gmra.mxu0 %v2877
        %v2879 = vpop.f32.mrf.mxu0
        %v2880 = vadd.f32 %v2611, %v2879
        %v2881 = vpop.f32.mrf.mxu0
        %v2882 = vand.u32 %v412, 4294901760
        %v2883 = vsub.f32 %v412, %v2882
        %v2884 = vand.u32 %v2883, 4294901760
        %2885 = vmatprep.mubr.f32.mxu0 %v2884
        %v2886 = vand.u32 %v411, 4294901760
        %v2887 = vsub.f32 %v411, %v2886
        %v2888 = vand.u32 %v2887, 4294901760
        %2889 = vmatmul.mubr.f32.gmra.mxu0 %v2888
        %v2890 = vpop.f32.mrf.mxu0
        %v2891 = vadd.f32 %v2620, %v2890
        %v2892 = vpop.f32.mrf.mxu0
        %v2893 = vand.u32 %v418, 4294901760
        %v2894 = vsub.f32 %v418, %v2893
        %v2895 = vand.u32 %v2894, 4294901760
        %2896 = vmatprep.mubr.f32.mxu0 %v2895
        %v2897 = vand.u32 %v417, 4294901760
        %v2898 = vsub.f32 %v417, %v2897
        %v2899 = vand.u32 %v2898, 4294901760
        %2900 = vmatmul.mubr.f32.gmra.mxu0 %v2899
        %v2901 = vpop.f32.mrf.mxu0
        %v2902 = vadd.f32 %v2629, %v2901
        %v2903 = vpop.f32.mrf.mxu0
        %2904 = vdwg.mxu0
        %2905 = vmatprep.subr.mxu0 0.0
        %v2906 = vand.u32 %v310, 4294901760
        %v2907 = vsub.f32 %v310, %v2906
        %v2908 = vand.u32 %v2907, 4294901760
        %2909 = vmatpush1.msra.mxu0 %v2908
        %2910 = vmatprep.subr.mxu0 0.0
        %v2911 = vand.u32 %v309, 4294901760
        %v2912 = vsub.f32 %v309, %v2911
        %v2913 = vand.u32 %v2912, 4294901760
        %2914 = vmatpush1.msra.mxu0 %v2913
        %2915 = vmatprep.subr.mxu0 0.0
        %v2916 = vand.u32 %v308, 4294901760
        %v2917 = vsub.f32 %v308, %v2916
        %v2918 = vand.u32 %v2917, 4294901760
        %2919 = vmatpush1.msra.mxu0 %v2918
        %2920 = vmatprep.subr.mxu0 0.0
        %v2921 = vand.u32 %v307, 4294901760
        %v2922 = vsub.f32 %v307, %v2921
        %v2923 = vand.u32 %v2922, 4294901760
        %2924 = vmatpush1.msra.mxu0 %v2923
        %2925 = vmatprep.subr.mxu0 0.0
        %v2926 = vand.u32 %v306, 4294901760
        %v2927 = vsub.f32 %v306, %v2926
        %v2928 = vand.u32 %v2927, 4294901760
        %2929 = vmatpush1.msra.mxu0 %v2928
        %2930 = vmatprep.subr.mxu0 0.0
        %v2931 = vand.u32 %v305, 4294901760
        %v2932 = vsub.f32 %v305, %v2931
        %v2933 = vand.u32 %v2932, 4294901760
        %2934 = vmatpush1.msra.mxu0 %v2933
        %2935 = vmatprep.subr.mxu0 0.0
        %v2936 = vand.u32 %v304, 4294901760
        %v2937 = vsub.f32 %v304, %v2936
        %v2938 = vand.u32 %v2937, 4294901760
        %2939 = vmatpush1.msra.mxu0 %v2938
        %2940 = vmatprep.subr.mxu0 0.0
        %v2941 = vand.u32 %v303, 4294901760
        %v2942 = vsub.f32 %v303, %v2941
        %v2943 = vand.u32 %v2942, 4294901760
        %2944 = vmatpush1.msra.mxu0 %v2943
        %2945 = vmatprep.subr.mxu0 0.0
        %v2946 = vand.u32 %v302, 4294901760
        %v2947 = vsub.f32 %v302, %v2946
        %v2948 = vand.u32 %v2947, 4294901760
        %2949 = vmatpush1.msra.mxu0 %v2948
        %2950 = vmatprep.subr.mxu0 0.0
        %v2951 = vand.u32 %v301, 4294901760
        %v2952 = vsub.f32 %v301, %v2951
        %v2953 = vand.u32 %v2952, 4294901760
        %2954 = vmatpush1.msra.mxu0 %v2953
        %2955 = vmatprep.subr.mxu0 0.0
        %v2956 = vand.u32 %v300, 4294901760
        %v2957 = vsub.f32 %v300, %v2956
        %v2958 = vand.u32 %v2957, 4294901760
        %2959 = vmatpush1.msra.mxu0 %v2958
        %2960 = vmatprep.subr.mxu0 0.0
        %v2961 = vand.u32 %v299, 4294901760
        %v2962 = vsub.f32 %v299, %v2961
        %v2963 = vand.u32 %v2962, 4294901760
        %2964 = vmatpush1.msra.mxu0 %v2963
        %2965 = vmatprep.subr.mxu0 0.0
        %v2966 = vand.u32 %v298, 4294901760
        %v2967 = vsub.f32 %v298, %v2966
        %v2968 = vand.u32 %v2967, 4294901760
        %2969 = vmatpush1.msra.mxu0 %v2968
        %2970 = vmatprep.subr.mxu0 0.0
        %v2971 = vand.u32 %v297, 4294901760
        %v2972 = vsub.f32 %v297, %v2971
        %v2973 = vand.u32 %v2972, 4294901760
        %2974 = vmatpush1.msra.mxu0 %v2973
        %2975 = vmatprep.subr.mxu0 0.0
        %v2976 = vand.u32 %v296, 4294901760
        %v2977 = vsub.f32 %v296, %v2976
        %v2978 = vand.u32 %v2977, 4294901760
        %2979 = vmatpush1.msra.mxu0 %v2978
        %2980 = vmatprep.subr.mxu0 0.0
        %v2981 = vand.u32 %v295, 4294901760
        %v2982 = vsub.f32 %v295, %v2981
        %v2983 = vand.u32 %v2982, 4294901760
        %2984 = vmatpush1.msra.mxu0 %v2983
        %2985 = vmatprep.subr.mxu0 0.0
        %v2986 = vand.u32 %v326, 4294901760
        %v2987 = vsub.f32 %v326, %v2986
        %v2988 = vand.u32 %v2987, 4294901760
        %2989 = vmatpush2.msra.mxu0 %v2988
        %2990 = vmatprep.subr.mxu0 0.0
        %v2991 = vand.u32 %v325, 4294901760
        %v2992 = vsub.f32 %v325, %v2991
        %v2993 = vand.u32 %v2992, 4294901760
        %2994 = vmatpush2.msra.mxu0 %v2993
        %2995 = vmatprep.subr.mxu0 0.0
        %v2996 = vand.u32 %v324, 4294901760
        %v2997 = vsub.f32 %v324, %v2996
        %v2998 = vand.u32 %v2997, 4294901760
        %2999 = vmatpush2.msra.mxu0 %v2998
        %3000 = vmatprep.subr.mxu0 0.0
        %v3001 = vand.u32 %v323, 4294901760
        %v3002 = vsub.f32 %v323, %v3001
        %v3003 = vand.u32 %v3002, 4294901760
        %3004 = vmatpush2.msra.mxu0 %v3003
        %3005 = vmatprep.subr.mxu0 0.0
        %v3006 = vand.u32 %v322, 4294901760
        %v3007 = vsub.f32 %v322, %v3006
        %v3008 = vand.u32 %v3007, 4294901760
        %3009 = vmatpush2.msra.mxu0 %v3008
        %3010 = vmatprep.subr.mxu0 0.0
        %v3011 = vand.u32 %v321, 4294901760
        %v3012 = vsub.f32 %v321, %v3011
        %v3013 = vand.u32 %v3012, 4294901760
        %3014 = vmatpush2.msra.mxu0 %v3013
        %3015 = vmatprep.subr.mxu0 0.0
        %v3016 = vand.u32 %v320, 4294901760
        %v3017 = vsub.f32 %v320, %v3016
        %v3018 = vand.u32 %v3017, 4294901760
        %3019 = vmatpush2.msra.mxu0 %v3018
        %3020 = vmatprep.subr.mxu0 0.0
        %v3021 = vand.u32 %v319, 4294901760
        %v3022 = vsub.f32 %v319, %v3021
        %v3023 = vand.u32 %v3022, 4294901760
        %3024 = vmatpush2.msra.mxu0 %v3023
        %3025 = vmatprep.subr.mxu0 0.0
        %v3026 = vand.u32 %v318, 4294901760
        %v3027 = vsub.f32 %v318, %v3026
        %v3028 = vand.u32 %v3027, 4294901760
        %3029 = vmatpush2.msra.mxu0 %v3028
        %3030 = vmatprep.subr.mxu0 0.0
        %v3031 = vand.u32 %v317, 4294901760
        %v3032 = vsub.f32 %v317, %v3031
        %v3033 = vand.u32 %v3032, 4294901760
        %3034 = vmatpush2.msra.mxu0 %v3033
        %3035 = vmatprep.subr.mxu0 0.0
        %v3036 = vand.u32 %v316, 4294901760
        %v3037 = vsub.f32 %v316, %v3036
        %v3038 = vand.u32 %v3037, 4294901760
        %3039 = vmatpush2.msra.mxu0 %v3038
        %3040 = vmatprep.subr.mxu0 0.0
        %v3041 = vand.u32 %v315, 4294901760
        %v3042 = vsub.f32 %v315, %v3041
        %v3043 = vand.u32 %v3042, 4294901760
        %3044 = vmatpush2.msra.mxu0 %v3043
        %3045 = vmatprep.subr.mxu0 0.0
        %v3046 = vand.u32 %v314, 4294901760
        %v3047 = vsub.f32 %v314, %v3046
        %v3048 = vand.u32 %v3047, 4294901760
        %3049 = vmatpush2.msra.mxu0 %v3048
        %3050 = vmatprep.subr.mxu0 0.0
        %v3051 = vand.u32 %v313, 4294901760
        %v3052 = vsub.f32 %v313, %v3051
        %v3053 = vand.u32 %v3052, 4294901760
        %3054 = vmatpush2.msra.mxu0 %v3053
        %3055 = vmatprep.subr.mxu0 0.0
        %v3056 = vand.u32 %v312, 4294901760
        %v3057 = vsub.f32 %v312, %v3056
        %v3058 = vand.u32 %v3057, 4294901760
        %3059 = vmatpush2.msra.mxu0 %v3058
        %3060 = vmatprep.subr.mxu0 0.0
        %v3061 = vand.u32 %v311, 4294901760
        %v3062 = vsub.f32 %v311, %v3061
        %v3063 = vand.u32 %v3062, 4294901760
        %3064 = vmatpush2.msra.mxu0 %v3063
        %v3065 = vand.u32 %v328, 4294901760
        %3066 = vmatprep.mubr.f32.mxu0 %v3065
        %v3067 = vand.u32 %v327, 4294901760
        %3068 = vmatmul.mubr.f32.gmra.mxu0 %v3067
        %v3069 = vpop.f32.mrf.mxu0
        %v3070 = vadd.f32 %v2737, %v3069
        %v3071 = vpop.f32.mrf.mxu0
        %v3072 = vand.u32 %v334, 4294901760
        %3073 = vmatprep.mubr.f32.mxu0 %v3072
        %v3074 = vand.u32 %v333, 4294901760
        %3075 = vmatmul.mubr.f32.gmra.mxu0 %v3074
        %v3076 = vpop.f32.mrf.mxu0
        %v3077 = vadd.f32 %v2748, %v3076
        %v3078 = vpop.f32.mrf.mxu0
        %v3079 = vand.u32 %v340, 4294901760
        %3080 = vmatprep.mubr.f32.mxu0 %v3079
        %v3081 = vand.u32 %v339, 4294901760
        %3082 = vmatmul.mubr.f32.gmra.mxu0 %v3081
        %v3083 = vpop.f32.mrf.mxu0
        %v3084 = vadd.f32 %v2759, %v3083
        %v3085 = vpop.f32.mrf.mxu0
        %v3086 = vand.u32 %v346, 4294901760
        %3087 = vmatprep.mubr.f32.mxu0 %v3086
        %v3088 = vand.u32 %v345, 4294901760
        %3089 = vmatmul.mubr.f32.gmra.mxu0 %v3088
        %v3090 = vpop.f32.mrf.mxu0
        %v3091 = vadd.f32 %v2770, %v3090
        %v3092 = vpop.f32.mrf.mxu0
        %v3093 = vand.u32 %v352, 4294901760
        %3094 = vmatprep.mubr.f32.mxu0 %v3093
        %v3095 = vand.u32 %v351, 4294901760
        %3096 = vmatmul.mubr.f32.gmra.mxu0 %v3095
        %v3097 = vpop.f32.mrf.mxu0
        %v3098 = vadd.f32 %v2781, %v3097
        %v3099 = vpop.f32.mrf.mxu0
        %v3100 = vand.u32 %v358, 4294901760
        %3101 = vmatprep.mubr.f32.mxu0 %v3100
        %v3102 = vand.u32 %v357, 4294901760
        %3103 = vmatmul.mubr.f32.gmra.mxu0 %v3102
        %v3104 = vpop.f32.mrf.mxu0
        %v3105 = vadd.f32 %v2792, %v3104
        %v3106 = vpop.f32.mrf.mxu0
        %v3107 = vand.u32 %v364, 4294901760
        %3108 = vmatprep.mubr.f32.mxu0 %v3107
        %v3109 = vand.u32 %v363, 4294901760
        %3110 = vmatmul.mubr.f32.gmra.mxu0 %v3109
        %v3111 = vpop.f32.mrf.mxu0
        %v3112 = vadd.f32 %v2803, %v3111
        %v3113 = vpop.f32.mrf.mxu0
        %v3114 = vand.u32 %v370, 4294901760
        %3115 = vmatprep.mubr.f32.mxu0 %v3114
        %v3116 = vand.u32 %v369, 4294901760
        %3117 = vmatmul.mubr.f32.gmra.mxu0 %v3116
        %v3118 = vpop.f32.mrf.mxu0
        %v3119 = vadd.f32 %v2814, %v3118
        %v3120 = vpop.f32.mrf.mxu0
        %v3121 = vand.u32 %v376, 4294901760
        %3122 = vmatprep.mubr.f32.mxu0 %v3121
        %v3123 = vand.u32 %v375, 4294901760
        %3124 = vmatmul.mubr.f32.gmra.mxu0 %v3123
        %v3125 = vpop.f32.mrf.mxu0
        %v3126 = vadd.f32 %v2825, %v3125
        %v3127 = vpop.f32.mrf.mxu0
        %v3128 = vand.u32 %v382, 4294901760
        %3129 = vmatprep.mubr.f32.mxu0 %v3128
        %v3130 = vand.u32 %v381, 4294901760
        %3131 = vmatmul.mubr.f32.gmra.mxu0 %v3130
        %v3132 = vpop.f32.mrf.mxu0
        %v3133 = vadd.f32 %v2836, %v3132
        %v3134 = vpop.f32.mrf.mxu0
        %v3135 = vand.u32 %v388, 4294901760
        %3136 = vmatprep.mubr.f32.mxu0 %v3135
        %v3137 = vand.u32 %v387, 4294901760
        %3138 = vmatmul.mubr.f32.gmra.mxu0 %v3137
        %v3139 = vpop.f32.mrf.mxu0
        %v3140 = vadd.f32 %v2847, %v3139
        %v3141 = vpop.f32.mrf.mxu0
        %v3142 = vand.u32 %v394, 4294901760
        %3143 = vmatprep.mubr.f32.mxu0 %v3142
        %v3144 = vand.u32 %v393, 4294901760
        %3145 = vmatmul.mubr.f32.gmra.mxu0 %v3144
        %v3146 = vpop.f32.mrf.mxu0
        %v3147 = vadd.f32 %v2858, %v3146
        %v3148 = vpop.f32.mrf.mxu0
        %v3149 = vand.u32 %v400, 4294901760
        %3150 = vmatprep.mubr.f32.mxu0 %v3149
        %v3151 = vand.u32 %v399, 4294901760
        %3152 = vmatmul.mubr.f32.gmra.mxu0 %v3151
        %v3153 = vpop.f32.mrf.mxu0
        %v3154 = vadd.f32 %v2869, %v3153
        %v3155 = vpop.f32.mrf.mxu0
        %v3156 = vand.u32 %v406, 4294901760
        %3157 = vmatprep.mubr.f32.mxu0 %v3156
        %v3158 = vand.u32 %v405, 4294901760
        %3159 = vmatmul.mubr.f32.gmra.mxu0 %v3158
        %v3160 = vpop.f32.mrf.mxu0
        %v3161 = vadd.f32 %v2880, %v3160
        %v3162 = vpop.f32.mrf.mxu0
        %v3163 = vand.u32 %v412, 4294901760
        %3164 = vmatprep.mubr.f32.mxu0 %v3163
        %v3165 = vand.u32 %v411, 4294901760
        %3166 = vmatmul.mubr.f32.gmra.mxu0 %v3165
        %v3167 = vpop.f32.mrf.mxu0
        %v3168 = vadd.f32 %v2891, %v3167
        %v3169 = vpop.f32.mrf.mxu0
        %v3170 = vand.u32 %v418, 4294901760
        %3171 = vmatprep.mubr.f32.mxu0 %v3170
        %v3172 = vand.u32 %v417, 4294901760
        %3173 = vmatmul.mubr.f32.gmra.mxu0 %v3172
        %v3174 = vpop.f32.mrf.mxu0
        %v3175 = vadd.f32 %v2902, %v3174
        %v3176 = vpop.f32.mrf.mxu0
        %3177 = vdwg.mxu0
        %3178 = vmatprep.subr.mxu0 0.0
        %v3179 = vand.u32 %v310, 4294901760
        %3180 = vmatpush1.msra.mxu0 %v3179
        %3181 = vmatprep.subr.mxu0 0.0
        %v3182 = vand.u32 %v309, 4294901760
        %3183 = vmatpush1.msra.mxu0 %v3182
        %3184 = vmatprep.subr.mxu0 0.0
        %v3185 = vand.u32 %v308, 4294901760
        %3186 = vmatpush1.msra.mxu0 %v3185
        %3187 = vmatprep.subr.mxu0 0.0
        %v3188 = vand.u32 %v307, 4294901760
        %3189 = vmatpush1.msra.mxu0 %v3188
        %3190 = vmatprep.subr.mxu0 0.0
        %v3191 = vand.u32 %v306, 4294901760
        %3192 = vmatpush1.msra.mxu0 %v3191
        %3193 = vmatprep.subr.mxu0 0.0
        %v3194 = vand.u32 %v305, 4294901760
        %3195 = vmatpush1.msra.mxu0 %v3194
        %3196 = vmatprep.subr.mxu0 0.0
        %v3197 = vand.u32 %v304, 4294901760
        %3198 = vmatpush1.msra.mxu0 %v3197
        %3199 = vmatprep.subr.mxu0 0.0
        %v3200 = vand.u32 %v303, 4294901760
        %3201 = vmatpush1.msra.mxu0 %v3200
        %3202 = vmatprep.subr.mxu0 0.0
        %v3203 = vand.u32 %v302, 4294901760
        %3204 = vmatpush1.msra.mxu0 %v3203
        %3205 = vmatprep.subr.mxu0 0.0
        %v3206 = vand.u32 %v301, 4294901760
        %3207 = vmatpush1.msra.mxu0 %v3206
        %3208 = vmatprep.subr.mxu0 0.0
        %v3209 = vand.u32 %v300, 4294901760
        %3210 = vmatpush1.msra.mxu0 %v3209
        %3211 = vmatprep.subr.mxu0 0.0
        %v3212 = vand.u32 %v299, 4294901760
        %3213 = vmatpush1.msra.mxu0 %v3212
        %3214 = vmatprep.subr.mxu0 0.0
        %v3215 = vand.u32 %v298, 4294901760
        %3216 = vmatpush1.msra.mxu0 %v3215
        %3217 = vmatprep.subr.mxu0 0.0
        %v3218 = vand.u32 %v297, 4294901760
        %3219 = vmatpush1.msra.mxu0 %v3218
        %3220 = vmatprep.subr.mxu0 0.0
        %v3221 = vand.u32 %v296, 4294901760
        %3222 = vmatpush1.msra.mxu0 %v3221
        %3223 = vmatprep.subr.mxu0 0.0
        %v3224 = vand.u32 %v295, 4294901760
        %3225 = vmatpush1.msra.mxu0 %v3224
        %3226 = vmatprep.subr.mxu0 0.0
        %v3227 = vand.u32 %v326, 4294901760
        %3228 = vmatpush2.msra.mxu0 %v3227
        %3229 = vmatprep.subr.mxu0 0.0
        %v3230 = vand.u32 %v325, 4294901760
        %3231 = vmatpush2.msra.mxu0 %v3230
        %3232 = vmatprep.subr.mxu0 0.0
        %v3233 = vand.u32 %v324, 4294901760
        %3234 = vmatpush2.msra.mxu0 %v3233
        %3235 = vmatprep.subr.mxu0 0.0
        %v3236 = vand.u32 %v323, 4294901760
        %3237 = vmatpush2.msra.mxu0 %v3236
        %3238 = vmatprep.subr.mxu0 0.0
        %v3239 = vand.u32 %v322, 4294901760
        %3240 = vmatpush2.msra.mxu0 %v3239
        %3241 = vmatprep.subr.mxu0 0.0
        %v3242 = vand.u32 %v321, 4294901760
        %3243 = vmatpush2.msra.mxu0 %v3242
        %3244 = vmatprep.subr.mxu0 0.0
        %v3245 = vand.u32 %v320, 4294901760
        %3246 = vmatpush2.msra.mxu0 %v3245
        %3247 = vmatprep.subr.mxu0 0.0
        %v3248 = vand.u32 %v319, 4294901760
        %3249 = vmatpush2.msra.mxu0 %v3248
        %3250 = vmatprep.subr.mxu0 0.0
        %v3251 = vand.u32 %v318, 4294901760
        %3252 = vmatpush2.msra.mxu0 %v3251
        %3253 = vmatprep.subr.mxu0 0.0
        %v3254 = vand.u32 %v317, 4294901760
        %3255 = vmatpush2.msra.mxu0 %v3254
        %3256 = vmatprep.subr.mxu0 0.0
        %v3257 = vand.u32 %v316, 4294901760
        %3258 = vmatpush2.msra.mxu0 %v3257
        %3259 = vmatprep.subr.mxu0 0.0
        %v3260 = vand.u32 %v315, 4294901760
        %3261 = vmatpush2.msra.mxu0 %v3260
        %3262 = vmatprep.subr.mxu0 0.0
        %v3263 = vand.u32 %v314, 4294901760
        %3264 = vmatpush2.msra.mxu0 %v3263
        %3265 = vmatprep.subr.mxu0 0.0
        %v3266 = vand.u32 %v313, 4294901760
        %3267 = vmatpush2.msra.mxu0 %v3266
        %3268 = vmatprep.subr.mxu0 0.0
        %v3269 = vand.u32 %v312, 4294901760
        %3270 = vmatpush2.msra.mxu0 %v3269
        %3271 = vmatprep.subr.mxu0 0.0
        %v3272 = vand.u32 %v311, 4294901760
        %3273 = vmatpush2.msra.mxu0 %v3272
        %v3274 = vand.u32 %v328, 4294901760
        %3275 = vmatprep.mubr.f32.mxu0 %v3274
        %v3276 = vand.u32 %v327, 4294901760
        %3277 = vmatmul.mubr.f32.gmra.mxu0 %v3276
        %v3278 = vpop.f32.mrf.mxu0
        %v3279 = vadd.f32 %v3070, %v3278
        %v3280 = vpop.f32.mrf.mxu0
        %v3281 = vand.u32 %v334, 4294901760
        %3282 = vmatprep.mubr.f32.mxu0 %v3281
        %v3283 = vand.u32 %v333, 4294901760
        %3284 = vmatmul.mubr.f32.gmra.mxu0 %v3283
        %v3285 = vpop.f32.mrf.mxu0
        %v3286 = vadd.f32 %v3077, %v3285
        %v3287 = vpop.f32.mrf.mxu0
        %v3288 = vand.u32 %v340, 4294901760
        %3289 = vmatprep.mubr.f32.mxu0 %v3288
        %v3290 = vand.u32 %v339, 4294901760
        %3291 = vmatmul.mubr.f32.gmra.mxu0 %v3290
        %v3292 = vpop.f32.mrf.mxu0
        %v3293 = vadd.f32 %v3084, %v3292
        %v3294 = vpop.f32.mrf.mxu0
        %v3295 = vand.u32 %v346, 4294901760
        %3296 = vmatprep.mubr.f32.mxu0 %v3295
        %v3297 = vand.u32 %v345, 4294901760
        %3298 = vmatmul.mubr.f32.gmra.mxu0 %v3297
        %v3299 = vpop.f32.mrf.mxu0
        %v3300 = vadd.f32 %v3091, %v3299
        %v3301 = vpop.f32.mrf.mxu0
        %v3302 = vand.u32 %v352, 4294901760
        %3303 = vmatprep.mubr.f32.mxu0 %v3302
        %v3304 = vand.u32 %v351, 4294901760
        %3305 = vmatmul.mubr.f32.gmra.mxu0 %v3304
        %v3306 = vpop.f32.mrf.mxu0
        %v3307 = vadd.f32 %v3098, %v3306
        %v3308 = vpop.f32.mrf.mxu0
        %v3309 = vand.u32 %v358, 4294901760
        %3310 = vmatprep.mubr.f32.mxu0 %v3309
        %v3311 = vand.u32 %v357, 4294901760
        %3312 = vmatmul.mubr.f32.gmra.mxu0 %v3311
        %v3313 = vpop.f32.mrf.mxu0
        %v3314 = vadd.f32 %v3105, %v3313
        %v3315 = vpop.f32.mrf.mxu0
        %v3316 = vand.u32 %v364, 4294901760
        %3317 = vmatprep.mubr.f32.mxu0 %v3316
        %v3318 = vand.u32 %v363, 4294901760
        %3319 = vmatmul.mubr.f32.gmra.mxu0 %v3318
        %v3320 = vpop.f32.mrf.mxu0
        %v3321 = vadd.f32 %v3112, %v3320
        %v3322 = vpop.f32.mrf.mxu0
        %v3323 = vand.u32 %v370, 4294901760
        %3324 = vmatprep.mubr.f32.mxu0 %v3323
        %v3325 = vand.u32 %v369, 4294901760
        %3326 = vmatmul.mubr.f32.gmra.mxu0 %v3325
        %v3327 = vpop.f32.mrf.mxu0
        %v3328 = vadd.f32 %v3119, %v3327
        %v3329 = vpop.f32.mrf.mxu0
        %v3330 = vand.u32 %v376, 4294901760
        %3331 = vmatprep.mubr.f32.mxu0 %v3330
        %v3332 = vand.u32 %v375, 4294901760
        %3333 = vmatmul.mubr.f32.gmra.mxu0 %v3332
        %v3334 = vpop.f32.mrf.mxu0
        %v3335 = vadd.f32 %v3126, %v3334
        %v3336 = vpop.f32.mrf.mxu0
        %v3337 = vand.u32 %v382, 4294901760
        %3338 = vmatprep.mubr.f32.mxu0 %v3337
        %v3339 = vand.u32 %v381, 4294901760
        %3340 = vmatmul.mubr.f32.gmra.mxu0 %v3339
        %v3341 = vpop.f32.mrf.mxu0
        %v3342 = vadd.f32 %v3133, %v3341
        %v3343 = vpop.f32.mrf.mxu0
        %v3344 = vand.u32 %v388, 4294901760
        %3345 = vmatprep.mubr.f32.mxu0 %v3344
        %v3346 = vand.u32 %v387, 4294901760
        %3347 = vmatmul.mubr.f32.gmra.mxu0 %v3346
        %v3348 = vpop.f32.mrf.mxu0
        %v3349 = vadd.f32 %v3140, %v3348
        %v3350 = vpop.f32.mrf.mxu0
        %v3351 = vand.u32 %v394, 4294901760
        %3352 = vmatprep.mubr.f32.mxu0 %v3351
        %v3353 = vand.u32 %v393, 4294901760
        %3354 = vmatmul.mubr.f32.gmra.mxu0 %v3353
        %v3355 = vpop.f32.mrf.mxu0
        %v3356 = vadd.f32 %v3147, %v3355
        %v3357 = vpop.f32.mrf.mxu0
        %v3358 = vand.u32 %v400, 4294901760
        %3359 = vmatprep.mubr.f32.mxu0 %v3358
        %v3360 = vand.u32 %v399, 4294901760
        %3361 = vmatmul.mubr.f32.gmra.mxu0 %v3360
        %v3362 = vpop.f32.mrf.mxu0
        %v3363 = vadd.f32 %v3154, %v3362
        %v3364 = vpop.f32.mrf.mxu0
        %v3365 = vand.u32 %v406, 4294901760
        %3366 = vmatprep.mubr.f32.mxu0 %v3365
        %v3367 = vand.u32 %v405, 4294901760
        %3368 = vmatmul.mubr.f32.gmra.mxu0 %v3367
        %v3369 = vpop.f32.mrf.mxu0
        %v3370 = vadd.f32 %v3161, %v3369
        %v3371 = vpop.f32.mrf.mxu0
        %v3372 = vand.u32 %v412, 4294901760
        %3373 = vmatprep.mubr.f32.mxu0 %v3372
        %v3374 = vand.u32 %v411, 4294901760
        %3375 = vmatmul.mubr.f32.gmra.mxu0 %v3374
        %v3376 = vpop.f32.mrf.mxu0
        %v3377 = vadd.f32 %v3168, %v3376
        %v3378 = vpop.f32.mrf.mxu0
        %v3379 = vand.u32 %v418, 4294901760
        %3380 = vmatprep.mubr.f32.mxu0 %v3379
        %v3381 = vand.u32 %v417, 4294901760
        %3382 = vmatmul.mubr.f32.gmra.mxu0 %v3381
        %v3383 = vpop.f32.mrf.mxu0
        %v3384 = vadd.f32 %v3175, %v3383
        %v3385 = vpop.f32.mrf.mxu0
        %3386 = vdwg.mxu0
        %v3387 = vld [vmem:[%s3] sm:$0xff]
        %v3388 = vld [vmem:[%s3 + $0x8] sm:$0xff]
        %v3389 = vld [vmem:[%s3 + $0x10] sm:$0xff]
        %v3390 = vld [vmem:[%s3 + $0x18] sm:$0xff]
        %v3391 = vld [vmem:[%s3 + $0x20] sm:$0xff]
        %v3392 = vld [vmem:[%s3 + $0x28] sm:$0xff]
        %v3393 = vld [vmem:[%s3 + $0x30] sm:$0xff]
        %v3394 = vld [vmem:[%s3 + $0x38] sm:$0xff]
        %v3396 = vsel %vm454, %v3279, 0
        %v3399 = vsel %vm454, %v3286, 0
        %v3402 = vsel %vm454, %v3293, 0
        %v3405 = vsel %vm454, %v3300, 0
        %v3408 = vsel %vm454, %v3307, 0
        %v3411 = vsel %vm454, %v3314, 0
        %v3414 = vsel %vm454, %v3321, 0
        %v3417 = vsel %vm454, %v3328, 0
        %v3420 = vsel %vm454, %v3335, 0
        %v3423 = vsel %vm454, %v3342, 0
        %v3426 = vsel %vm454, %v3349, 0
        %v3429 = vsel %vm454, %v3356, 0
        %v3432 = vsel %vm454, %v3363, 0
        %v3435 = vsel %vm454, %v3370, 0
        %v3438 = vsel %vm454, %v3377, 0
        %v3441 = vsel %vm454, %v3384, 0
        %3443 = vmatprep.subr.mxu0 0.0
        %3444 = vmatpush1.msra.mxu0 0.0
        %3445 = vmatprep.subr.mxu0 0.0
        %3446 = vmatpush1.msra.mxu0 0.0
        %3447 = vmatprep.subr.mxu0 0.0
        %3448 = vmatpush1.msra.mxu0 0.0
        %3449 = vmatprep.subr.mxu0 0.0
        %3450 = vmatpush1.msra.mxu0 0.0
        %3451 = vmatprep.subr.mxu0 0.0
        %3452 = vmatpush1.msra.mxu0 0.0
        %3453 = vmatprep.subr.mxu0 0.0
        %3454 = vmatpush1.msra.mxu0 0.0
        %3455 = vmatprep.subr.mxu0 0.0
        %3456 = vmatpush1.msra.mxu0 0.0
        %3457 = vmatprep.subr.mxu0 0.0
        %3458 = vmatpush1.msra.mxu0 0.0
        %3459 = vmatprep.subr.mxu0 0.0
        %v3460 = vand.u32 %v3394, 4294901760
        %3461 = vmatpush1.msra.mxu0 %v3460
        %3462 = vmatprep.subr.mxu0 0.0
        %v3463 = vand.u32 %v3393, 4294901760
        %3464 = vmatpush1.msra.mxu0 %v3463
        %3465 = vmatprep.subr.mxu0 0.0
        %v3466 = vand.u32 %v3392, 4294901760
        %3467 = vmatpush1.msra.mxu0 %v3466
        %3468 = vmatprep.subr.mxu0 0.0
        %v3469 = vand.u32 %v3391, 4294901760
        %3470 = vmatpush1.msra.mxu0 %v3469
        %3471 = vmatprep.subr.mxu0 0.0
        %v3472 = vand.u32 %v3390, 4294901760
        %3473 = vmatpush1.msra.mxu0 %v3472
        %3474 = vmatprep.subr.mxu0 0.0
        %v3475 = vand.u32 %v3389, 4294901760
        %3476 = vmatpush1.msra.mxu0 %v3475
        %3477 = vmatprep.subr.mxu0 0.0
        %v3478 = vand.u32 %v3388, 4294901760
        %3479 = vmatpush1.msra.mxu0 %v3478
        %3480 = vmatprep.subr.mxu0 0.0
        %v3481 = vand.u32 %v3387, 4294901760
        %3482 = vmatpush1.msra.mxu0 %v3481
        %3483 = vmatprep.subr.mxu0 0.0
        %3484 = vmatpush2.msra.mxu0 0.0
        %3485 = vmatprep.subr.mxu0 0.0
        %3486 = vmatpush2.msra.mxu0 0.0
        %3487 = vmatprep.subr.mxu0 0.0
        %3488 = vmatpush2.msra.mxu0 0.0
        %3489 = vmatprep.subr.mxu0 0.0
        %3490 = vmatpush2.msra.mxu0 0.0
        %3491 = vmatprep.subr.mxu0 0.0
        %3492 = vmatpush2.msra.mxu0 0.0
        %3493 = vmatprep.subr.mxu0 0.0
        %3494 = vmatpush2.msra.mxu0 0.0
        %3495 = vmatprep.subr.mxu0 0.0
        %3496 = vmatpush2.msra.mxu0 0.0
        %3497 = vmatprep.subr.mxu0 0.0
        %3498 = vmatpush2.msra.mxu0 0.0
        %3499 = vmatprep.subr.mxu0 0.0
        %3500 = vmatpush2.msra.mxu0 0.0
        %3501 = vmatprep.subr.mxu0 0.0
        %3502 = vmatpush2.msra.mxu0 0.0
        %3503 = vmatprep.subr.mxu0 0.0
        %3504 = vmatpush2.msra.mxu0 0.0
        %3505 = vmatprep.subr.mxu0 0.0
        %3506 = vmatpush2.msra.mxu0 0.0
        %3507 = vmatprep.subr.mxu0 0.0
        %3508 = vmatpush2.msra.mxu0 0.0
        %3509 = vmatprep.subr.mxu0 0.0
        %3510 = vmatpush2.msra.mxu0 0.0
        %3511 = vmatprep.subr.mxu0 0.0
        %3512 = vmatpush2.msra.mxu0 0.0
        %3513 = vmatprep.subr.mxu0 0.0
        %3514 = vmatpush2.msra.mxu0 0.0
        %3515 = vmatprep.mubr.f32.mxu0 0.0
        %v3516 = vand.u32 %v3396, 4294901760
        %v3517 = vsub.f32 %v3396, %v3516
        %v3518 = vand.u32 %v3517, 4294901760
        %v3519 = vsub.f32 %v3517, %v3518
        %v3520 = vand.u32 %v3519, 4294901760
        %3521 = vmatmul.mubr.f32.gmra.mxu0 %v3520
        %v3522 = vpop.f32.mrf.mxu0
        %v3523 = vadd.f32 0.0, %v3522
        %v3524 = vpop.f32.mrf.mxu0
        %3525 = vmatprep.mubr.f32.mxu0 0.0
        %v3526 = vand.u32 %v3399, 4294901760
        %v3527 = vsub.f32 %v3399, %v3526
        %v3528 = vand.u32 %v3527, 4294901760
        %v3529 = vsub.f32 %v3527, %v3528
        %v3530 = vand.u32 %v3529, 4294901760
        %3531 = vmatmul.mubr.f32.gmra.mxu0 %v3530
        %v3532 = vpop.f32.mrf.mxu0
        %v3533 = vadd.f32 0.0, %v3532
        %v3534 = vpop.f32.mrf.mxu0
        %3535 = vmatprep.mubr.f32.mxu0 0.0
        %v3536 = vand.u32 %v3402, 4294901760
        %v3537 = vsub.f32 %v3402, %v3536
        %v3538 = vand.u32 %v3537, 4294901760
        %v3539 = vsub.f32 %v3537, %v3538
        %v3540 = vand.u32 %v3539, 4294901760
        %3541 = vmatmul.mubr.f32.gmra.mxu0 %v3540
        %v3542 = vpop.f32.mrf.mxu0
        %v3543 = vadd.f32 0.0, %v3542
        %v3544 = vpop.f32.mrf.mxu0
        %3545 = vmatprep.mubr.f32.mxu0 0.0
        %v3546 = vand.u32 %v3405, 4294901760
        %v3547 = vsub.f32 %v3405, %v3546
        %v3548 = vand.u32 %v3547, 4294901760
        %v3549 = vsub.f32 %v3547, %v3548
        %v3550 = vand.u32 %v3549, 4294901760
        %3551 = vmatmul.mubr.f32.gmra.mxu0 %v3550
        %v3552 = vpop.f32.mrf.mxu0
        %v3553 = vadd.f32 0.0, %v3552
        %v3554 = vpop.f32.mrf.mxu0
        %3555 = vmatprep.mubr.f32.mxu0 0.0
        %v3556 = vand.u32 %v3408, 4294901760
        %v3557 = vsub.f32 %v3408, %v3556
        %v3558 = vand.u32 %v3557, 4294901760
        %v3559 = vsub.f32 %v3557, %v3558
        %v3560 = vand.u32 %v3559, 4294901760
        %3561 = vmatmul.mubr.f32.gmra.mxu0 %v3560
        %v3562 = vpop.f32.mrf.mxu0
        %v3563 = vadd.f32 0.0, %v3562
        %v3564 = vpop.f32.mrf.mxu0
        %3565 = vmatprep.mubr.f32.mxu0 0.0
        %v3566 = vand.u32 %v3411, 4294901760
        %v3567 = vsub.f32 %v3411, %v3566
        %v3568 = vand.u32 %v3567, 4294901760
        %v3569 = vsub.f32 %v3567, %v3568
        %v3570 = vand.u32 %v3569, 4294901760
        %3571 = vmatmul.mubr.f32.gmra.mxu0 %v3570
        %v3572 = vpop.f32.mrf.mxu0
        %v3573 = vadd.f32 0.0, %v3572
        %v3574 = vpop.f32.mrf.mxu0
        %3575 = vmatprep.mubr.f32.mxu0 0.0
        %v3576 = vand.u32 %v3414, 4294901760
        %v3577 = vsub.f32 %v3414, %v3576
        %v3578 = vand.u32 %v3577, 4294901760
        %v3579 = vsub.f32 %v3577, %v3578
        %v3580 = vand.u32 %v3579, 4294901760
        %3581 = vmatmul.mubr.f32.gmra.mxu0 %v3580
        %v3582 = vpop.f32.mrf.mxu0
        %v3583 = vadd.f32 0.0, %v3582
        %v3584 = vpop.f32.mrf.mxu0
        %3585 = vmatprep.mubr.f32.mxu0 0.0
        %v3586 = vand.u32 %v3417, 4294901760
        %v3587 = vsub.f32 %v3417, %v3586
        %v3588 = vand.u32 %v3587, 4294901760
        %v3589 = vsub.f32 %v3587, %v3588
        %v3590 = vand.u32 %v3589, 4294901760
        %3591 = vmatmul.mubr.f32.gmra.mxu0 %v3590
        %v3592 = vpop.f32.mrf.mxu0
        %v3593 = vadd.f32 0.0, %v3592
        %v3594 = vpop.f32.mrf.mxu0
        %3595 = vmatprep.mubr.f32.mxu0 0.0
        %v3596 = vand.u32 %v3420, 4294901760
        %v3597 = vsub.f32 %v3420, %v3596
        %v3598 = vand.u32 %v3597, 4294901760
        %v3599 = vsub.f32 %v3597, %v3598
        %v3600 = vand.u32 %v3599, 4294901760
        %3601 = vmatmul.mubr.f32.gmra.mxu0 %v3600
        %v3602 = vpop.f32.mrf.mxu0
        %v3603 = vadd.f32 0.0, %v3602
        %v3604 = vpop.f32.mrf.mxu0
        %3605 = vmatprep.mubr.f32.mxu0 0.0
        %v3606 = vand.u32 %v3423, 4294901760
        %v3607 = vsub.f32 %v3423, %v3606
        %v3608 = vand.u32 %v3607, 4294901760
        %v3609 = vsub.f32 %v3607, %v3608
        %v3610 = vand.u32 %v3609, 4294901760
        %3611 = vmatmul.mubr.f32.gmra.mxu0 %v3610
        %v3612 = vpop.f32.mrf.mxu0
        %v3613 = vadd.f32 0.0, %v3612
        %v3614 = vpop.f32.mrf.mxu0
        %3615 = vmatprep.mubr.f32.mxu0 0.0
        %v3616 = vand.u32 %v3426, 4294901760
        %v3617 = vsub.f32 %v3426, %v3616
        %v3618 = vand.u32 %v3617, 4294901760
        %v3619 = vsub.f32 %v3617, %v3618
        %v3620 = vand.u32 %v3619, 4294901760
        %3621 = vmatmul.mubr.f32.gmra.mxu0 %v3620
        %v3622 = vpop.f32.mrf.mxu0
        %v3623 = vadd.f32 0.0, %v3622
        %v3624 = vpop.f32.mrf.mxu0
        %3625 = vmatprep.mubr.f32.mxu0 0.0
        %v3626 = vand.u32 %v3429, 4294901760
        %v3627 = vsub.f32 %v3429, %v3626
        %v3628 = vand.u32 %v3627, 4294901760
        %v3629 = vsub.f32 %v3627, %v3628
        %v3630 = vand.u32 %v3629, 4294901760
        %3631 = vmatmul.mubr.f32.gmra.mxu0 %v3630
        %v3632 = vpop.f32.mrf.mxu0
        %v3633 = vadd.f32 0.0, %v3632
        %v3634 = vpop.f32.mrf.mxu0
        %3635 = vmatprep.mubr.f32.mxu0 0.0
        %v3636 = vand.u32 %v3432, 4294901760
        %v3637 = vsub.f32 %v3432, %v3636
        %v3638 = vand.u32 %v3637, 4294901760
        %v3639 = vsub.f32 %v3637, %v3638
        %v3640 = vand.u32 %v3639, 4294901760
        %3641 = vmatmul.mubr.f32.gmra.mxu0 %v3640
        %v3642 = vpop.f32.mrf.mxu0
        %v3643 = vadd.f32 0.0, %v3642
        %v3644 = vpop.f32.mrf.mxu0
        %3645 = vmatprep.mubr.f32.mxu0 0.0
        %v3646 = vand.u32 %v3435, 4294901760
        %v3647 = vsub.f32 %v3435, %v3646
        %v3648 = vand.u32 %v3647, 4294901760
        %v3649 = vsub.f32 %v3647, %v3648
        %v3650 = vand.u32 %v3649, 4294901760
        %3651 = vmatmul.mubr.f32.gmra.mxu0 %v3650
        %v3652 = vpop.f32.mrf.mxu0
        %v3653 = vadd.f32 0.0, %v3652
        %v3654 = vpop.f32.mrf.mxu0
        %3655 = vmatprep.mubr.f32.mxu0 0.0
        %v3656 = vand.u32 %v3438, 4294901760
        %v3657 = vsub.f32 %v3438, %v3656
        %v3658 = vand.u32 %v3657, 4294901760
        %v3659 = vsub.f32 %v3657, %v3658
        %v3660 = vand.u32 %v3659, 4294901760
        %3661 = vmatmul.mubr.f32.gmra.mxu0 %v3660
        %v3662 = vpop.f32.mrf.mxu0
        %v3663 = vadd.f32 0.0, %v3662
        %v3664 = vpop.f32.mrf.mxu0
        %3665 = vmatprep.mubr.f32.mxu0 0.0
        %v3666 = vand.u32 %v3441, 4294901760
        %v3667 = vsub.f32 %v3441, %v3666
        %v3668 = vand.u32 %v3667, 4294901760
        %v3669 = vsub.f32 %v3667, %v3668
        %v3670 = vand.u32 %v3669, 4294901760
        %3671 = vmatmul.mubr.f32.gmra.mxu0 %v3670
        %v3672 = vpop.f32.mrf.mxu0
        %v3673 = vadd.f32 0.0, %v3672
        %v3674 = vpop.f32.mrf.mxu0
        %3675 = vdwg.mxu0
        %3676 = vmatprep.subr.mxu0 0.0
        %3677 = vmatpush1.msra.mxu0 0.0
        %3678 = vmatprep.subr.mxu0 0.0
        %3679 = vmatpush1.msra.mxu0 0.0
        %3680 = vmatprep.subr.mxu0 0.0
        %3681 = vmatpush1.msra.mxu0 0.0
        %3682 = vmatprep.subr.mxu0 0.0
        %3683 = vmatpush1.msra.mxu0 0.0
        %3684 = vmatprep.subr.mxu0 0.0
        %3685 = vmatpush1.msra.mxu0 0.0
        %3686 = vmatprep.subr.mxu0 0.0
        %3687 = vmatpush1.msra.mxu0 0.0
        %3688 = vmatprep.subr.mxu0 0.0
        %3689 = vmatpush1.msra.mxu0 0.0
        %3690 = vmatprep.subr.mxu0 0.0
        %3691 = vmatpush1.msra.mxu0 0.0
        %3692 = vmatprep.subr.mxu0 0.0
        %v3693 = vand.u32 %v3394, 4294901760
        %v3694 = vsub.f32 %v3394, %v3693
        %v3695 = vand.u32 %v3694, 4294901760
        %v3696 = vsub.f32 %v3694, %v3695
        %v3697 = vand.u32 %v3696, 4294901760
        %3698 = vmatpush1.msra.mxu0 %v3697
        %3699 = vmatprep.subr.mxu0 0.0
        %v3700 = vand.u32 %v3393, 4294901760
        %v3701 = vsub.f32 %v3393, %v3700
        %v3702 = vand.u32 %v3701, 4294901760
        %v3703 = vsub.f32 %v3701, %v3702
        %v3704 = vand.u32 %v3703, 4294901760
        %3705 = vmatpush1.msra.mxu0 %v3704
        %3706 = vmatprep.subr.mxu0 0.0
        %v3707 = vand.u32 %v3392, 4294901760
        %v3708 = vsub.f32 %v3392, %v3707
        %v3709 = vand.u32 %v3708, 4294901760
        %v3710 = vsub.f32 %v3708, %v3709
        %v3711 = vand.u32 %v3710, 4294901760
        %3712 = vmatpush1.msra.mxu0 %v3711
        %3713 = vmatprep.subr.mxu0 0.0
        %v3714 = vand.u32 %v3391, 4294901760
        %v3715 = vsub.f32 %v3391, %v3714
        %v3716 = vand.u32 %v3715, 4294901760
        %v3717 = vsub.f32 %v3715, %v3716
        %v3718 = vand.u32 %v3717, 4294901760
        %3719 = vmatpush1.msra.mxu0 %v3718
        %3720 = vmatprep.subr.mxu0 0.0
        %v3721 = vand.u32 %v3390, 4294901760
        %v3722 = vsub.f32 %v3390, %v3721
        %v3723 = vand.u32 %v3722, 4294901760
        %v3724 = vsub.f32 %v3722, %v3723
        %v3725 = vand.u32 %v3724, 4294901760
        %3726 = vmatpush1.msra.mxu0 %v3725
        %3727 = vmatprep.subr.mxu0 0.0
        %v3728 = vand.u32 %v3389, 4294901760
        %v3729 = vsub.f32 %v3389, %v3728
        %v3730 = vand.u32 %v3729, 4294901760
        %v3731 = vsub.f32 %v3729, %v3730
        %v3732 = vand.u32 %v3731, 4294901760
        %3733 = vmatpush1.msra.mxu0 %v3732
        %3734 = vmatprep.subr.mxu0 0.0
        %v3735 = vand.u32 %v3388, 4294901760
        %v3736 = vsub.f32 %v3388, %v3735
        %v3737 = vand.u32 %v3736, 4294901760
        %v3738 = vsub.f32 %v3736, %v3737
        %v3739 = vand.u32 %v3738, 4294901760
        %3740 = vmatpush1.msra.mxu0 %v3739
        %3741 = vmatprep.subr.mxu0 0.0
        %v3742 = vand.u32 %v3387, 4294901760
        %v3743 = vsub.f32 %v3387, %v3742
        %v3744 = vand.u32 %v3743, 4294901760
        %v3745 = vsub.f32 %v3743, %v3744
        %v3746 = vand.u32 %v3745, 4294901760
        %3747 = vmatpush1.msra.mxu0 %v3746
        %3748 = vmatprep.subr.mxu0 0.0
        %3749 = vmatpush2.msra.mxu0 0.0
        %3750 = vmatprep.subr.mxu0 0.0
        %3751 = vmatpush2.msra.mxu0 0.0
        %3752 = vmatprep.subr.mxu0 0.0
        %3753 = vmatpush2.msra.mxu0 0.0
        %3754 = vmatprep.subr.mxu0 0.0
        %3755 = vmatpush2.msra.mxu0 0.0
        %3756 = vmatprep.subr.mxu0 0.0
        %3757 = vmatpush2.msra.mxu0 0.0
        %3758 = vmatprep.subr.mxu0 0.0
        %3759 = vmatpush2.msra.mxu0 0.0
        %3760 = vmatprep.subr.mxu0 0.0
        %3761 = vmatpush2.msra.mxu0 0.0
        %3762 = vmatprep.subr.mxu0 0.0
        %3763 = vmatpush2.msra.mxu0 0.0
        %3764 = vmatprep.subr.mxu0 0.0
        %3765 = vmatpush2.msra.mxu0 0.0
        %3766 = vmatprep.subr.mxu0 0.0
        %3767 = vmatpush2.msra.mxu0 0.0
        %3768 = vmatprep.subr.mxu0 0.0
        %3769 = vmatpush2.msra.mxu0 0.0
        %3770 = vmatprep.subr.mxu0 0.0
        %3771 = vmatpush2.msra.mxu0 0.0
        %3772 = vmatprep.subr.mxu0 0.0
        %3773 = vmatpush2.msra.mxu0 0.0
        %3774 = vmatprep.subr.mxu0 0.0
        %3775 = vmatpush2.msra.mxu0 0.0
        %3776 = vmatprep.subr.mxu0 0.0
        %3777 = vmatpush2.msra.mxu0 0.0
        %3778 = vmatprep.subr.mxu0 0.0
        %3779 = vmatpush2.msra.mxu0 0.0
        %3780 = vmatprep.mubr.f32.mxu0 0.0
        %v3781 = vand.u32 %v3396, 4294901760
        %3782 = vmatmul.mubr.f32.gmra.mxu0 %v3781
        %v3783 = vpop.f32.mrf.mxu0
        %v3784 = vadd.f32 %v3523, %v3783
        %v3785 = vpop.f32.mrf.mxu0
        %3786 = vmatprep.mubr.f32.mxu0 0.0
        %v3787 = vand.u32 %v3399, 4294901760
        %3788 = vmatmul.mubr.f32.gmra.mxu0 %v3787
        %v3789 = vpop.f32.mrf.mxu0
        %v3790 = vadd.f32 %v3533, %v3789
        %v3791 = vpop.f32.mrf.mxu0
        %3792 = vmatprep.mubr.f32.mxu0 0.0
        %v3793 = vand.u32 %v3402, 4294901760
        %3794 = vmatmul.mubr.f32.gmra.mxu0 %v3793
        %v3795 = vpop.f32.mrf.mxu0
        %v3796 = vadd.f32 %v3543, %v3795
        %v3797 = vpop.f32.mrf.mxu0
        %3798 = vmatprep.mubr.f32.mxu0 0.0
        %v3799 = vand.u32 %v3405, 4294901760
        %3800 = vmatmul.mubr.f32.gmra.mxu0 %v3799
        %v3801 = vpop.f32.mrf.mxu0
        %v3802 = vadd.f32 %v3553, %v3801
        %v3803 = vpop.f32.mrf.mxu0
        %3804 = vmatprep.mubr.f32.mxu0 0.0
        %v3805 = vand.u32 %v3408, 4294901760
        %3806 = vmatmul.mubr.f32.gmra.mxu0 %v3805
        %v3807 = vpop.f32.mrf.mxu0
        %v3808 = vadd.f32 %v3563, %v3807
        %v3809 = vpop.f32.mrf.mxu0
        %3810 = vmatprep.mubr.f32.mxu0 0.0
        %v3811 = vand.u32 %v3411, 4294901760
        %3812 = vmatmul.mubr.f32.gmra.mxu0 %v3811
        %v3813 = vpop.f32.mrf.mxu0
        %v3814 = vadd.f32 %v3573, %v3813
        %v3815 = vpop.f32.mrf.mxu0
        %3816 = vmatprep.mubr.f32.mxu0 0.0
        %v3817 = vand.u32 %v3414, 4294901760
        %3818 = vmatmul.mubr.f32.gmra.mxu0 %v3817
        %v3819 = vpop.f32.mrf.mxu0
        %v3820 = vadd.f32 %v3583, %v3819
        %v3821 = vpop.f32.mrf.mxu0
        %3822 = vmatprep.mubr.f32.mxu0 0.0
        %v3823 = vand.u32 %v3417, 4294901760
        %3824 = vmatmul.mubr.f32.gmra.mxu0 %v3823
        %v3825 = vpop.f32.mrf.mxu0
        %v3826 = vadd.f32 %v3593, %v3825
        %v3827 = vpop.f32.mrf.mxu0
        %3828 = vmatprep.mubr.f32.mxu0 0.0
        %v3829 = vand.u32 %v3420, 4294901760
        %3830 = vmatmul.mubr.f32.gmra.mxu0 %v3829
        %v3831 = vpop.f32.mrf.mxu0
        %v3832 = vadd.f32 %v3603, %v3831
        %v3833 = vpop.f32.mrf.mxu0
        %3834 = vmatprep.mubr.f32.mxu0 0.0
        %v3835 = vand.u32 %v3423, 4294901760
        %3836 = vmatmul.mubr.f32.gmra.mxu0 %v3835
        %v3837 = vpop.f32.mrf.mxu0
        %v3838 = vadd.f32 %v3613, %v3837
        %v3839 = vpop.f32.mrf.mxu0
        %3840 = vmatprep.mubr.f32.mxu0 0.0
        %v3841 = vand.u32 %v3426, 4294901760
        %3842 = vmatmul.mubr.f32.gmra.mxu0 %v3841
        %v3843 = vpop.f32.mrf.mxu0
        %v3844 = vadd.f32 %v3623, %v3843
        %v3845 = vpop.f32.mrf.mxu0
        %3846 = vmatprep.mubr.f32.mxu0 0.0
        %v3847 = vand.u32 %v3429, 4294901760
        %3848 = vmatmul.mubr.f32.gmra.mxu0 %v3847
        %v3849 = vpop.f32.mrf.mxu0
        %v3850 = vadd.f32 %v3633, %v3849
        %v3851 = vpop.f32.mrf.mxu0
        %3852 = vmatprep.mubr.f32.mxu0 0.0
        %v3853 = vand.u32 %v3432, 4294901760
        %3854 = vmatmul.mubr.f32.gmra.mxu0 %v3853
        %v3855 = vpop.f32.mrf.mxu0
        %v3856 = vadd.f32 %v3643, %v3855
        %v3857 = vpop.f32.mrf.mxu0
        %3858 = vmatprep.mubr.f32.mxu0 0.0
        %v3859 = vand.u32 %v3435, 4294901760
        %3860 = vmatmul.mubr.f32.gmra.mxu0 %v3859
        %v3861 = vpop.f32.mrf.mxu0
        %v3862 = vadd.f32 %v3653, %v3861
        %v3863 = vpop.f32.mrf.mxu0
        %3864 = vmatprep.mubr.f32.mxu0 0.0
        %v3865 = vand.u32 %v3438, 4294901760
        %3866 = vmatmul.mubr.f32.gmra.mxu0 %v3865
        %v3867 = vpop.f32.mrf.mxu0
        %v3868 = vadd.f32 %v3663, %v3867
        %v3869 = vpop.f32.mrf.mxu0
        %3870 = vmatprep.mubr.f32.mxu0 0.0
        %v3871 = vand.u32 %v3441, 4294901760
        %3872 = vmatmul.mubr.f32.gmra.mxu0 %v3871
        %v3873 = vpop.f32.mrf.mxu0
        %v3874 = vadd.f32 %v3673, %v3873
        %v3875 = vpop.f32.mrf.mxu0
        %3876 = vdwg.mxu0
        %3877 = vmatprep.subr.mxu0 0.0
        %3878 = vmatpush1.msra.mxu0 0.0
        %3879 = vmatprep.subr.mxu0 0.0
        %3880 = vmatpush1.msra.mxu0 0.0
        %3881 = vmatprep.subr.mxu0 0.0
        %3882 = vmatpush1.msra.mxu0 0.0
        %3883 = vmatprep.subr.mxu0 0.0
        %3884 = vmatpush1.msra.mxu0 0.0
        %3885 = vmatprep.subr.mxu0 0.0
        %3886 = vmatpush1.msra.mxu0 0.0
        %3887 = vmatprep.subr.mxu0 0.0
        %3888 = vmatpush1.msra.mxu0 0.0
        %3889 = vmatprep.subr.mxu0 0.0
        %3890 = vmatpush1.msra.mxu0 0.0
        %3891 = vmatprep.subr.mxu0 0.0
        %3892 = vmatpush1.msra.mxu0 0.0
        %3893 = vmatprep.subr.mxu0 0.0
        %v3894 = vand.u32 %v3394, 4294901760
        %v3895 = vsub.f32 %v3394, %v3894
        %3896 = vmatpush1.msra.mxu0 %v3895
        %3897 = vmatprep.subr.mxu0 0.0
        %v3898 = vand.u32 %v3393, 4294901760
        %v3899 = vsub.f32 %v3393, %v3898
        %3900 = vmatpush1.msra.mxu0 %v3899
        %3901 = vmatprep.subr.mxu0 0.0
        %v3902 = vand.u32 %v3392, 4294901760
        %v3903 = vsub.f32 %v3392, %v3902
        %3904 = vmatpush1.msra.mxu0 %v3903
        %3905 = vmatprep.subr.mxu0 0.0
        %v3906 = vand.u32 %v3391, 4294901760
        %v3907 = vsub.f32 %v3391, %v3906
        %3908 = vmatpush1.msra.mxu0 %v3907
        %3909 = vmatprep.subr.mxu0 0.0
        %v3910 = vand.u32 %v3390, 4294901760
        %v3911 = vsub.f32 %v3390, %v3910
        %3912 = vmatpush1.msra.mxu0 %v3911
        %3913 = vmatprep.subr.mxu0 0.0
        %v3914 = vand.u32 %v3389, 4294901760
        %v3915 = vsub.f32 %v3389, %v3914
        %3916 = vmatpush1.msra.mxu0 %v3915
        %3917 = vmatprep.subr.mxu0 0.0
        %v3918 = vand.u32 %v3388, 4294901760
        %v3919 = vsub.f32 %v3388, %v3918
        %3920 = vmatpush1.msra.mxu0 %v3919
        %3921 = vmatprep.subr.mxu0 0.0
        %v3922 = vand.u32 %v3387, 4294901760
        %v3923 = vsub.f32 %v3387, %v3922
        %3924 = vmatpush1.msra.mxu0 %v3923
        %3925 = vmatprep.subr.mxu0 0.0
        %3926 = vmatpush2.msra.mxu0 0.0
        %3927 = vmatprep.subr.mxu0 0.0
        %3928 = vmatpush2.msra.mxu0 0.0
        %3929 = vmatprep.subr.mxu0 0.0
        %3930 = vmatpush2.msra.mxu0 0.0
        %3931 = vmatprep.subr.mxu0 0.0
        %3932 = vmatpush2.msra.mxu0 0.0
        %3933 = vmatprep.subr.mxu0 0.0
        %3934 = vmatpush2.msra.mxu0 0.0
        %3935 = vmatprep.subr.mxu0 0.0
        %3936 = vmatpush2.msra.mxu0 0.0
        %3937 = vmatprep.subr.mxu0 0.0
        %3938 = vmatpush2.msra.mxu0 0.0
        %3939 = vmatprep.subr.mxu0 0.0
        %3940 = vmatpush2.msra.mxu0 0.0
        %3941 = vmatprep.subr.mxu0 0.0
        %3942 = vmatpush2.msra.mxu0 0.0
        %3943 = vmatprep.subr.mxu0 0.0
        %3944 = vmatpush2.msra.mxu0 0.0
        %3945 = vmatprep.subr.mxu0 0.0
        %3946 = vmatpush2.msra.mxu0 0.0
        %3947 = vmatprep.subr.mxu0 0.0
        %3948 = vmatpush2.msra.mxu0 0.0
        %3949 = vmatprep.subr.mxu0 0.0
        %3950 = vmatpush2.msra.mxu0 0.0
        %3951 = vmatprep.subr.mxu0 0.0
        %3952 = vmatpush2.msra.mxu0 0.0
        %3953 = vmatprep.subr.mxu0 0.0
        %3954 = vmatpush2.msra.mxu0 0.0
        %3955 = vmatprep.subr.mxu0 0.0
        %3956 = vmatpush2.msra.mxu0 0.0
        %3957 = vmatprep.mubr.f32.mxu0 0.0
        %v3958 = vand.u32 %v3396, 4294901760
        %v3959 = vsub.f32 %v3396, %v3958
        %3960 = vmatmul.mubr.f32.gmra.mxu0 %v3959
        %v3961 = vpop.f32.mrf.mxu0
        %v3962 = vadd.f32 %v3784, %v3961
        %v3963 = vpop.f32.mrf.mxu0
        %3964 = vmatprep.mubr.f32.mxu0 0.0
        %v3965 = vand.u32 %v3399, 4294901760
        %v3966 = vsub.f32 %v3399, %v3965
        %3967 = vmatmul.mubr.f32.gmra.mxu0 %v3966
        %v3968 = vpop.f32.mrf.mxu0
        %v3969 = vadd.f32 %v3790, %v3968
        %v3970 = vpop.f32.mrf.mxu0
        %3971 = vmatprep.mubr.f32.mxu0 0.0
        %v3972 = vand.u32 %v3402, 4294901760
        %v3973 = vsub.f32 %v3402, %v3972
        %3974 = vmatmul.mubr.f32.gmra.mxu0 %v3973
        %v3975 = vpop.f32.mrf.mxu0
        %v3976 = vadd.f32 %v3796, %v3975
        %v3977 = vpop.f32.mrf.mxu0
        %3978 = vmatprep.mubr.f32.mxu0 0.0
        %v3979 = vand.u32 %v3405, 4294901760
        %v3980 = vsub.f32 %v3405, %v3979
        %3981 = vmatmul.mubr.f32.gmra.mxu0 %v3980
        %v3982 = vpop.f32.mrf.mxu0
        %v3983 = vadd.f32 %v3802, %v3982
        %v3984 = vpop.f32.mrf.mxu0
        %3985 = vmatprep.mubr.f32.mxu0 0.0
        %v3986 = vand.u32 %v3408, 4294901760
        %v3987 = vsub.f32 %v3408, %v3986
        %3988 = vmatmul.mubr.f32.gmra.mxu0 %v3987
        %v3989 = vpop.f32.mrf.mxu0
        %v3990 = vadd.f32 %v3808, %v3989
        %v3991 = vpop.f32.mrf.mxu0
        %3992 = vmatprep.mubr.f32.mxu0 0.0
        %v3993 = vand.u32 %v3411, 4294901760
        %v3994 = vsub.f32 %v3411, %v3993
        %3995 = vmatmul.mubr.f32.gmra.mxu0 %v3994
        %v3996 = vpop.f32.mrf.mxu0
        %v3997 = vadd.f32 %v3814, %v3996
        %v3998 = vpop.f32.mrf.mxu0
        %3999 = vmatprep.mubr.f32.mxu0 0.0
        %v4000 = vand.u32 %v3414, 4294901760
        %v4001 = vsub.f32 %v3414, %v4000
        %4002 = vmatmul.mubr.f32.gmra.mxu0 %v4001
        %v4003 = vpop.f32.mrf.mxu0
        %v4004 = vadd.f32 %v3820, %v4003
        %v4005 = vpop.f32.mrf.mxu0
        %4006 = vmatprep.mubr.f32.mxu0 0.0
        %v4007 = vand.u32 %v3417, 4294901760
        %v4008 = vsub.f32 %v3417, %v4007
        %4009 = vmatmul.mubr.f32.gmra.mxu0 %v4008
        %v4010 = vpop.f32.mrf.mxu0
        %v4011 = vadd.f32 %v3826, %v4010
        %v4012 = vpop.f32.mrf.mxu0
        %4013 = vmatprep.mubr.f32.mxu0 0.0
        %v4014 = vand.u32 %v3420, 4294901760
        %v4015 = vsub.f32 %v3420, %v4014
        %4016 = vmatmul.mubr.f32.gmra.mxu0 %v4015
        %v4017 = vpop.f32.mrf.mxu0
        %v4018 = vadd.f32 %v3832, %v4017
        %v4019 = vpop.f32.mrf.mxu0
        %4020 = vmatprep.mubr.f32.mxu0 0.0
        %v4021 = vand.u32 %v3423, 4294901760
        %v4022 = vsub.f32 %v3423, %v4021
        %4023 = vmatmul.mubr.f32.gmra.mxu0 %v4022
        %v4024 = vpop.f32.mrf.mxu0
        %v4025 = vadd.f32 %v3838, %v4024
        %v4026 = vpop.f32.mrf.mxu0
        %4027 = vmatprep.mubr.f32.mxu0 0.0
        %v4028 = vand.u32 %v3426, 4294901760
        %v4029 = vsub.f32 %v3426, %v4028
        %4030 = vmatmul.mubr.f32.gmra.mxu0 %v4029
        %v4031 = vpop.f32.mrf.mxu0
        %v4032 = vadd.f32 %v3844, %v4031
        %v4033 = vpop.f32.mrf.mxu0
        %4034 = vmatprep.mubr.f32.mxu0 0.0
        %v4035 = vand.u32 %v3429, 4294901760
        %v4036 = vsub.f32 %v3429, %v4035
        %4037 = vmatmul.mubr.f32.gmra.mxu0 %v4036
        %v4038 = vpop.f32.mrf.mxu0
        %v4039 = vadd.f32 %v3850, %v4038
        %v4040 = vpop.f32.mrf.mxu0
        %4041 = vmatprep.mubr.f32.mxu0 0.0
        %v4042 = vand.u32 %v3432, 4294901760
        %v4043 = vsub.f32 %v3432, %v4042
        %4044 = vmatmul.mubr.f32.gmra.mxu0 %v4043
        %v4045 = vpop.f32.mrf.mxu0
        %v4046 = vadd.f32 %v3856, %v4045
        %v4047 = vpop.f32.mrf.mxu0
        %4048 = vmatprep.mubr.f32.mxu0 0.0
        %v4049 = vand.u32 %v3435, 4294901760
        %v4050 = vsub.f32 %v3435, %v4049
        %4051 = vmatmul.mubr.f32.gmra.mxu0 %v4050
        %v4052 = vpop.f32.mrf.mxu0
        %v4053 = vadd.f32 %v3862, %v4052
        %v4054 = vpop.f32.mrf.mxu0
        %4055 = vmatprep.mubr.f32.mxu0 0.0
        %v4056 = vand.u32 %v3438, 4294901760
        %v4057 = vsub.f32 %v3438, %v4056
        %4058 = vmatmul.mubr.f32.gmra.mxu0 %v4057
        %v4059 = vpop.f32.mrf.mxu0
        %v4060 = vadd.f32 %v3868, %v4059
        %v4061 = vpop.f32.mrf.mxu0
        %4062 = vmatprep.mubr.f32.mxu0 0.0
        %v4063 = vand.u32 %v3441, 4294901760
        %v4064 = vsub.f32 %v3441, %v4063
        %4065 = vmatmul.mubr.f32.gmra.mxu0 %v4064
        %v4066 = vpop.f32.mrf.mxu0
        %v4067 = vadd.f32 %v3874, %v4066
        %v4068 = vpop.f32.mrf.mxu0
        %4069 = vdwg.mxu0
        %4070 = vmatprep.subr.mxu0 0.0
        %4071 = vmatpush1.msra.mxu0 0.0
        %4072 = vmatprep.subr.mxu0 0.0
        %4073 = vmatpush1.msra.mxu0 0.0
        %4074 = vmatprep.subr.mxu0 0.0
        %4075 = vmatpush1.msra.mxu0 0.0
        %4076 = vmatprep.subr.mxu0 0.0
        %4077 = vmatpush1.msra.mxu0 0.0
        %4078 = vmatprep.subr.mxu0 0.0
        %4079 = vmatpush1.msra.mxu0 0.0
        %4080 = vmatprep.subr.mxu0 0.0
        %4081 = vmatpush1.msra.mxu0 0.0
        %4082 = vmatprep.subr.mxu0 0.0
        %4083 = vmatpush1.msra.mxu0 0.0
        %4084 = vmatprep.subr.mxu0 0.0
        %4085 = vmatpush1.msra.mxu0 0.0
        %4086 = vmatprep.subr.mxu0 0.0
        %v4087 = vand.u32 %v3394, 4294901760
        %4088 = vmatpush1.msra.mxu0 %v4087
        %4089 = vmatprep.subr.mxu0 0.0
        %v4090 = vand.u32 %v3393, 4294901760
        %4091 = vmatpush1.msra.mxu0 %v4090
        %4092 = vmatprep.subr.mxu0 0.0
        %v4093 = vand.u32 %v3392, 4294901760
        %4094 = vmatpush1.msra.mxu0 %v4093
        %4095 = vmatprep.subr.mxu0 0.0
        %v4096 = vand.u32 %v3391, 4294901760
        %4097 = vmatpush1.msra.mxu0 %v4096
        %4098 = vmatprep.subr.mxu0 0.0
        %v4099 = vand.u32 %v3390, 4294901760
        %4100 = vmatpush1.msra.mxu0 %v4099
        %4101 = vmatprep.subr.mxu0 0.0
        %v4102 = vand.u32 %v3389, 4294901760
        %4103 = vmatpush1.msra.mxu0 %v4102
        %4104 = vmatprep.subr.mxu0 0.0
        %v4105 = vand.u32 %v3388, 4294901760
        %4106 = vmatpush1.msra.mxu0 %v4105
        %4107 = vmatprep.subr.mxu0 0.0
        %v4108 = vand.u32 %v3387, 4294901760
        %4109 = vmatpush1.msra.mxu0 %v4108
        %4110 = vmatprep.subr.mxu0 0.0
        %4111 = vmatpush2.msra.mxu0 0.0
        %4112 = vmatprep.subr.mxu0 0.0
        %4113 = vmatpush2.msra.mxu0 0.0
        %4114 = vmatprep.subr.mxu0 0.0
        %4115 = vmatpush2.msra.mxu0 0.0
        %4116 = vmatprep.subr.mxu0 0.0
        %4117 = vmatpush2.msra.mxu0 0.0
        %4118 = vmatprep.subr.mxu0 0.0
        %4119 = vmatpush2.msra.mxu0 0.0
        %4120 = vmatprep.subr.mxu0 0.0
        %4121 = vmatpush2.msra.mxu0 0.0
        %4122 = vmatprep.subr.mxu0 0.0
        %4123 = vmatpush2.msra.mxu0 0.0
        %4124 = vmatprep.subr.mxu0 0.0
        %4125 = vmatpush2.msra.mxu0 0.0
        %4126 = vmatprep.subr.mxu0 0.0
        %4127 = vmatpush2.msra.mxu0 0.0
        %4128 = vmatprep.subr.mxu0 0.0
        %4129 = vmatpush2.msra.mxu0 0.0
        %4130 = vmatprep.subr.mxu0 0.0
        %4131 = vmatpush2.msra.mxu0 0.0
        %4132 = vmatprep.subr.mxu0 0.0
        %4133 = vmatpush2.msra.mxu0 0.0
        %4134 = vmatprep.subr.mxu0 0.0
        %4135 = vmatpush2.msra.mxu0 0.0
        %4136 = vmatprep.subr.mxu0 0.0
        %4137 = vmatpush2.msra.mxu0 0.0
        %4138 = vmatprep.subr.mxu0 0.0
        %4139 = vmatpush2.msra.mxu0 0.0
        %4140 = vmatprep.subr.mxu0 0.0
        %4141 = vmatpush2.msra.mxu0 0.0
        %4142 = vmatprep.mubr.f32.mxu0 0.0
        %v4143 = vand.u32 %v3396, 4294901760
        %v4144 = vsub.f32 %v3396, %v4143
        %v4145 = vand.u32 %v4144, 4294901760
        %4146 = vmatmul.mubr.f32.gmra.mxu0 %v4145
        %v4147 = vpop.f32.mrf.mxu0
        %v4148 = vadd.f32 %v3962, %v4147
        %v4149 = vpop.f32.mrf.mxu0
        %4150 = vmatprep.mubr.f32.mxu0 0.0
        %v4151 = vand.u32 %v3399, 4294901760
        %v4152 = vsub.f32 %v3399, %v4151
        %v4153 = vand.u32 %v4152, 4294901760
        %4154 = vmatmul.mubr.f32.gmra.mxu0 %v4153
        %v4155 = vpop.f32.mrf.mxu0
        %v4156 = vadd.f32 %v3969, %v4155
        %v4157 = vpop.f32.mrf.mxu0
        %4158 = vmatprep.mubr.f32.mxu0 0.0
        %v4159 = vand.u32 %v3402, 4294901760
        %v4160 = vsub.f32 %v3402, %v4159
        %v4161 = vand.u32 %v4160, 4294901760
        %4162 = vmatmul.mubr.f32.gmra.mxu0 %v4161
        %v4163 = vpop.f32.mrf.mxu0
        %v4164 = vadd.f32 %v3976, %v4163
        %v4165 = vpop.f32.mrf.mxu0
        %4166 = vmatprep.mubr.f32.mxu0 0.0
        %v4167 = vand.u32 %v3405, 4294901760
        %v4168 = vsub.f32 %v3405, %v4167
        %v4169 = vand.u32 %v4168, 4294901760
        %4170 = vmatmul.mubr.f32.gmra.mxu0 %v4169
        %v4171 = vpop.f32.mrf.mxu0
        %v4172 = vadd.f32 %v3983, %v4171
        %v4173 = vpop.f32.mrf.mxu0
        %4174 = vmatprep.mubr.f32.mxu0 0.0
        %v4175 = vand.u32 %v3408, 4294901760
        %v4176 = vsub.f32 %v3408, %v4175
        %v4177 = vand.u32 %v4176, 4294901760
        %4178 = vmatmul.mubr.f32.gmra.mxu0 %v4177
        %v4179 = vpop.f32.mrf.mxu0
        %v4180 = vadd.f32 %v3990, %v4179
        %v4181 = vpop.f32.mrf.mxu0
        %4182 = vmatprep.mubr.f32.mxu0 0.0
        %v4183 = vand.u32 %v3411, 4294901760
        %v4184 = vsub.f32 %v3411, %v4183
        %v4185 = vand.u32 %v4184, 4294901760
        %4186 = vmatmul.mubr.f32.gmra.mxu0 %v4185
        %v4187 = vpop.f32.mrf.mxu0
        %v4188 = vadd.f32 %v3997, %v4187
        %v4189 = vpop.f32.mrf.mxu0
        %4190 = vmatprep.mubr.f32.mxu0 0.0
        %v4191 = vand.u32 %v3414, 4294901760
        %v4192 = vsub.f32 %v3414, %v4191
        %v4193 = vand.u32 %v4192, 4294901760
        %4194 = vmatmul.mubr.f32.gmra.mxu0 %v4193
        %v4195 = vpop.f32.mrf.mxu0
        %v4196 = vadd.f32 %v4004, %v4195
        %v4197 = vpop.f32.mrf.mxu0
        %4198 = vmatprep.mubr.f32.mxu0 0.0
        %v4199 = vand.u32 %v3417, 4294901760
        %v4200 = vsub.f32 %v3417, %v4199
        %v4201 = vand.u32 %v4200, 4294901760
        %4202 = vmatmul.mubr.f32.gmra.mxu0 %v4201
        %v4203 = vpop.f32.mrf.mxu0
        %v4204 = vadd.f32 %v4011, %v4203
        %v4205 = vpop.f32.mrf.mxu0
        %4206 = vmatprep.mubr.f32.mxu0 0.0
        %v4207 = vand.u32 %v3420, 4294901760
        %v4208 = vsub.f32 %v3420, %v4207
        %v4209 = vand.u32 %v4208, 4294901760
        %4210 = vmatmul.mubr.f32.gmra.mxu0 %v4209
        %v4211 = vpop.f32.mrf.mxu0
        %v4212 = vadd.f32 %v4018, %v4211
        %v4213 = vpop.f32.mrf.mxu0
        %4214 = vmatprep.mubr.f32.mxu0 0.0
        %v4215 = vand.u32 %v3423, 4294901760
        %v4216 = vsub.f32 %v3423, %v4215
        %v4217 = vand.u32 %v4216, 4294901760
        %4218 = vmatmul.mubr.f32.gmra.mxu0 %v4217
        %v4219 = vpop.f32.mrf.mxu0
        %v4220 = vadd.f32 %v4025, %v4219
        %v4221 = vpop.f32.mrf.mxu0
        %4222 = vmatprep.mubr.f32.mxu0 0.0
        %v4223 = vand.u32 %v3426, 4294901760
        %v4224 = vsub.f32 %v3426, %v4223
        %v4225 = vand.u32 %v4224, 4294901760
        %4226 = vmatmul.mubr.f32.gmra.mxu0 %v4225
        %v4227 = vpop.f32.mrf.mxu0
        %v4228 = vadd.f32 %v4032, %v4227
        %v4229 = vpop.f32.mrf.mxu0
        %4230 = vmatprep.mubr.f32.mxu0 0.0
        %v4231 = vand.u32 %v3429, 4294901760
        %v4232 = vsub.f32 %v3429, %v4231
        %v4233 = vand.u32 %v4232, 4294901760
        %4234 = vmatmul.mubr.f32.gmra.mxu0 %v4233
        %v4235 = vpop.f32.mrf.mxu0
        %v4236 = vadd.f32 %v4039, %v4235
        %v4237 = vpop.f32.mrf.mxu0
        %4238 = vmatprep.mubr.f32.mxu0 0.0
        %v4239 = vand.u32 %v3432, 4294901760
        %v4240 = vsub.f32 %v3432, %v4239
        %v4241 = vand.u32 %v4240, 4294901760
        %4242 = vmatmul.mubr.f32.gmra.mxu0 %v4241
        %v4243 = vpop.f32.mrf.mxu0
        %v4244 = vadd.f32 %v4046, %v4243
        %v4245 = vpop.f32.mrf.mxu0
        %4246 = vmatprep.mubr.f32.mxu0 0.0
        %v4247 = vand.u32 %v3435, 4294901760
        %v4248 = vsub.f32 %v3435, %v4247
        %v4249 = vand.u32 %v4248, 4294901760
        %4250 = vmatmul.mubr.f32.gmra.mxu0 %v4249
        %v4251 = vpop.f32.mrf.mxu0
        %v4252 = vadd.f32 %v4053, %v4251
        %v4253 = vpop.f32.mrf.mxu0
        %4254 = vmatprep.mubr.f32.mxu0 0.0
        %v4255 = vand.u32 %v3438, 4294901760
        %v4256 = vsub.f32 %v3438, %v4255
        %v4257 = vand.u32 %v4256, 4294901760
        %4258 = vmatmul.mubr.f32.gmra.mxu0 %v4257
        %v4259 = vpop.f32.mrf.mxu0
        %v4260 = vadd.f32 %v4060, %v4259
        %v4261 = vpop.f32.mrf.mxu0
        %4262 = vmatprep.mubr.f32.mxu0 0.0
        %v4263 = vand.u32 %v3441, 4294901760
        %v4264 = vsub.f32 %v3441, %v4263
        %v4265 = vand.u32 %v4264, 4294901760
        %4266 = vmatmul.mubr.f32.gmra.mxu0 %v4265
        %v4267 = vpop.f32.mrf.mxu0
        %v4268 = vadd.f32 %v4067, %v4267
        %v4269 = vpop.f32.mrf.mxu0
        %4270 = vdwg.mxu0
        %4271 = vmatprep.subr.mxu0 0.0
        %4272 = vmatpush1.msra.mxu0 0.0
        %4273 = vmatprep.subr.mxu0 0.0
        %4274 = vmatpush1.msra.mxu0 0.0
        %4275 = vmatprep.subr.mxu0 0.0
        %4276 = vmatpush1.msra.mxu0 0.0
        %4277 = vmatprep.subr.mxu0 0.0
        %4278 = vmatpush1.msra.mxu0 0.0
        %4279 = vmatprep.subr.mxu0 0.0
        %4280 = vmatpush1.msra.mxu0 0.0
        %4281 = vmatprep.subr.mxu0 0.0
        %4282 = vmatpush1.msra.mxu0 0.0
        %4283 = vmatprep.subr.mxu0 0.0
        %4284 = vmatpush1.msra.mxu0 0.0
        %4285 = vmatprep.subr.mxu0 0.0
        %4286 = vmatpush1.msra.mxu0 0.0
        %4287 = vmatprep.subr.mxu0 0.0
        %v4288 = vand.u32 %v3394, 4294901760
        %v4289 = vsub.f32 %v3394, %v4288
        %v4290 = vand.u32 %v4289, 4294901760
        %4291 = vmatpush1.msra.mxu0 %v4290
        %4292 = vmatprep.subr.mxu0 0.0
        %v4293 = vand.u32 %v3393, 4294901760
        %v4294 = vsub.f32 %v3393, %v4293
        %v4295 = vand.u32 %v4294, 4294901760
        %4296 = vmatpush1.msra.mxu0 %v4295
        %4297 = vmatprep.subr.mxu0 0.0
        %v4298 = vand.u32 %v3392, 4294901760
        %v4299 = vsub.f32 %v3392, %v4298
        %v4300 = vand.u32 %v4299, 4294901760
        %4301 = vmatpush1.msra.mxu0 %v4300
        %4302 = vmatprep.subr.mxu0 0.0
        %v4303 = vand.u32 %v3391, 4294901760
        %v4304 = vsub.f32 %v3391, %v4303
        %v4305 = vand.u32 %v4304, 4294901760
        %4306 = vmatpush1.msra.mxu0 %v4305
        %4307 = vmatprep.subr.mxu0 0.0
        %v4308 = vand.u32 %v3390, 4294901760
        %v4309 = vsub.f32 %v3390, %v4308
        %v4310 = vand.u32 %v4309, 4294901760
        %4311 = vmatpush1.msra.mxu0 %v4310
        %4312 = vmatprep.subr.mxu0 0.0
        %v4313 = vand.u32 %v3389, 4294901760
        %v4314 = vsub.f32 %v3389, %v4313
        %v4315 = vand.u32 %v4314, 4294901760
        %4316 = vmatpush1.msra.mxu0 %v4315
        %4317 = vmatprep.subr.mxu0 0.0
        %v4318 = vand.u32 %v3388, 4294901760
        %v4319 = vsub.f32 %v3388, %v4318
        %v4320 = vand.u32 %v4319, 4294901760
        %4321 = vmatpush1.msra.mxu0 %v4320
        %4322 = vmatprep.subr.mxu0 0.0
        %v4323 = vand.u32 %v3387, 4294901760
        %v4324 = vsub.f32 %v3387, %v4323
        %v4325 = vand.u32 %v4324, 4294901760
        %4326 = vmatpush1.msra.mxu0 %v4325
        %4327 = vmatprep.subr.mxu0 0.0
        %4328 = vmatpush2.msra.mxu0 0.0
        %4329 = vmatprep.subr.mxu0 0.0
        %4330 = vmatpush2.msra.mxu0 0.0
        %4331 = vmatprep.subr.mxu0 0.0
        %4332 = vmatpush2.msra.mxu0 0.0
        %4333 = vmatprep.subr.mxu0 0.0
        %4334 = vmatpush2.msra.mxu0 0.0
        %4335 = vmatprep.subr.mxu0 0.0
        %4336 = vmatpush2.msra.mxu0 0.0
        %4337 = vmatprep.subr.mxu0 0.0
        %4338 = vmatpush2.msra.mxu0 0.0
        %4339 = vmatprep.subr.mxu0 0.0
        %4340 = vmatpush2.msra.mxu0 0.0
        %4341 = vmatprep.subr.mxu0 0.0
        %4342 = vmatpush2.msra.mxu0 0.0
        %4343 = vmatprep.subr.mxu0 0.0
        %4344 = vmatpush2.msra.mxu0 0.0
        %4345 = vmatprep.subr.mxu0 0.0
        %4346 = vmatpush2.msra.mxu0 0.0
        %4347 = vmatprep.subr.mxu0 0.0
        %4348 = vmatpush2.msra.mxu0 0.0
        %4349 = vmatprep.subr.mxu0 0.0
        %4350 = vmatpush2.msra.mxu0 0.0
        %4351 = vmatprep.subr.mxu0 0.0
        %4352 = vmatpush2.msra.mxu0 0.0
        %4353 = vmatprep.subr.mxu0 0.0
        %4354 = vmatpush2.msra.mxu0 0.0
        %4355 = vmatprep.subr.mxu0 0.0
        %4356 = vmatpush2.msra.mxu0 0.0
        %4357 = vmatprep.subr.mxu0 0.0
        %4358 = vmatpush2.msra.mxu0 0.0
        %4359 = vmatprep.mubr.f32.mxu0 0.0
        %v4360 = vand.u32 %v3396, 4294901760
        %4361 = vmatmul.mubr.f32.gmra.mxu0 %v4360
        %v4362 = vpop.f32.mrf.mxu0
        %v4363 = vadd.f32 %v4148, %v4362
        %v4364 = vpop.f32.mrf.mxu0
        %4365 = vmatprep.mubr.f32.mxu0 0.0
        %v4366 = vand.u32 %v3399, 4294901760
        %4367 = vmatmul.mubr.f32.gmra.mxu0 %v4366
        %v4368 = vpop.f32.mrf.mxu0
        %v4369 = vadd.f32 %v4156, %v4368
        %v4370 = vpop.f32.mrf.mxu0
        %4371 = vmatprep.mubr.f32.mxu0 0.0
        %v4372 = vand.u32 %v3402, 4294901760
        %4373 = vmatmul.mubr.f32.gmra.mxu0 %v4372
        %v4374 = vpop.f32.mrf.mxu0
        %v4375 = vadd.f32 %v4164, %v4374
        %v4376 = vpop.f32.mrf.mxu0
        %4377 = vmatprep.mubr.f32.mxu0 0.0
        %v4378 = vand.u32 %v3405, 4294901760
        %4379 = vmatmul.mubr.f32.gmra.mxu0 %v4378
        %v4380 = vpop.f32.mrf.mxu0
        %v4381 = vadd.f32 %v4172, %v4380
        %v4382 = vpop.f32.mrf.mxu0
        %4383 = vmatprep.mubr.f32.mxu0 0.0
        %v4384 = vand.u32 %v3408, 4294901760
        %4385 = vmatmul.mubr.f32.gmra.mxu0 %v4384
        %v4386 = vpop.f32.mrf.mxu0
        %v4387 = vadd.f32 %v4180, %v4386
        %v4388 = vpop.f32.mrf.mxu0
        %4389 = vmatprep.mubr.f32.mxu0 0.0
        %v4390 = vand.u32 %v3411, 4294901760
        %4391 = vmatmul.mubr.f32.gmra.mxu0 %v4390
        %v4392 = vpop.f32.mrf.mxu0
        %v4393 = vadd.f32 %v4188, %v4392
        %v4394 = vpop.f32.mrf.mxu0
        %4395 = vmatprep.mubr.f32.mxu0 0.0
        %v4396 = vand.u32 %v3414, 4294901760
        %4397 = vmatmul.mubr.f32.gmra.mxu0 %v4396
        %v4398 = vpop.f32.mrf.mxu0
        %v4399 = vadd.f32 %v4196, %v4398
        %v4400 = vpop.f32.mrf.mxu0
        %4401 = vmatprep.mubr.f32.mxu0 0.0
        %v4402 = vand.u32 %v3417, 4294901760
        %4403 = vmatmul.mubr.f32.gmra.mxu0 %v4402
        %v4404 = vpop.f32.mrf.mxu0
        %v4405 = vadd.f32 %v4204, %v4404
        %v4406 = vpop.f32.mrf.mxu0
        %4407 = vmatprep.mubr.f32.mxu0 0.0
        %v4408 = vand.u32 %v3420, 4294901760
        %4409 = vmatmul.mubr.f32.gmra.mxu0 %v4408
        %v4410 = vpop.f32.mrf.mxu0
        %v4411 = vadd.f32 %v4212, %v4410
        %v4412 = vpop.f32.mrf.mxu0
        %4413 = vmatprep.mubr.f32.mxu0 0.0
        %v4414 = vand.u32 %v3423, 4294901760
        %4415 = vmatmul.mubr.f32.gmra.mxu0 %v4414
        %v4416 = vpop.f32.mrf.mxu0
        %v4417 = vadd.f32 %v4220, %v4416
        %v4418 = vpop.f32.mrf.mxu0
        %4419 = vmatprep.mubr.f32.mxu0 0.0
        %v4420 = vand.u32 %v3426, 4294901760
        %4421 = vmatmul.mubr.f32.gmra.mxu0 %v4420
        %v4422 = vpop.f32.mrf.mxu0
        %v4423 = vadd.f32 %v4228, %v4422
        %v4424 = vpop.f32.mrf.mxu0
        %4425 = vmatprep.mubr.f32.mxu0 0.0
        %v4426 = vand.u32 %v3429, 4294901760
        %4427 = vmatmul.mubr.f32.gmra.mxu0 %v4426
        %v4428 = vpop.f32.mrf.mxu0
        %v4429 = vadd.f32 %v4236, %v4428
        %v4430 = vpop.f32.mrf.mxu0
        %4431 = vmatprep.mubr.f32.mxu0 0.0
        %v4432 = vand.u32 %v3432, 4294901760
        %4433 = vmatmul.mubr.f32.gmra.mxu0 %v4432
        %v4434 = vpop.f32.mrf.mxu0
        %v4435 = vadd.f32 %v4244, %v4434
        %v4436 = vpop.f32.mrf.mxu0
        %4437 = vmatprep.mubr.f32.mxu0 0.0
        %v4438 = vand.u32 %v3435, 4294901760
        %4439 = vmatmul.mubr.f32.gmra.mxu0 %v4438
        %v4440 = vpop.f32.mrf.mxu0
        %v4441 = vadd.f32 %v4252, %v4440
        %v4442 = vpop.f32.mrf.mxu0
        %4443 = vmatprep.mubr.f32.mxu0 0.0
        %v4444 = vand.u32 %v3438, 4294901760
        %4445 = vmatmul.mubr.f32.gmra.mxu0 %v4444
        %v4446 = vpop.f32.mrf.mxu0
        %v4447 = vadd.f32 %v4260, %v4446
        %v4448 = vpop.f32.mrf.mxu0
        %4449 = vmatprep.mubr.f32.mxu0 0.0
        %v4450 = vand.u32 %v3441, 4294901760
        %4451 = vmatmul.mubr.f32.gmra.mxu0 %v4450
        %v4452 = vpop.f32.mrf.mxu0
        %v4453 = vadd.f32 %v4268, %v4452
        %v4454 = vpop.f32.mrf.mxu0
        %4455 = vdwg.mxu0
        %4456 = vmatprep.subr.mxu0 0.0
        %4457 = vmatpush1.msra.mxu0 0.0
        %4458 = vmatprep.subr.mxu0 0.0
        %4459 = vmatpush1.msra.mxu0 0.0
        %4460 = vmatprep.subr.mxu0 0.0
        %4461 = vmatpush1.msra.mxu0 0.0
        %4462 = vmatprep.subr.mxu0 0.0
        %4463 = vmatpush1.msra.mxu0 0.0
        %4464 = vmatprep.subr.mxu0 0.0
        %4465 = vmatpush1.msra.mxu0 0.0
        %4466 = vmatprep.subr.mxu0 0.0
        %4467 = vmatpush1.msra.mxu0 0.0
        %4468 = vmatprep.subr.mxu0 0.0
        %4469 = vmatpush1.msra.mxu0 0.0
        %4470 = vmatprep.subr.mxu0 0.0
        %4471 = vmatpush1.msra.mxu0 0.0
        %4472 = vmatprep.subr.mxu0 0.0
        %v4473 = vand.u32 %v3394, 4294901760
        %4474 = vmatpush1.msra.mxu0 %v4473
        %4475 = vmatprep.subr.mxu0 0.0
        %v4476 = vand.u32 %v3393, 4294901760
        %4477 = vmatpush1.msra.mxu0 %v4476
        %4478 = vmatprep.subr.mxu0 0.0
        %v4479 = vand.u32 %v3392, 4294901760
        %4480 = vmatpush1.msra.mxu0 %v4479
        %4481 = vmatprep.subr.mxu0 0.0
        %v4482 = vand.u32 %v3391, 4294901760
        %4483 = vmatpush1.msra.mxu0 %v4482
        %4484 = vmatprep.subr.mxu0 0.0
        %v4485 = vand.u32 %v3390, 4294901760
        %4486 = vmatpush1.msra.mxu0 %v4485
        %4487 = vmatprep.subr.mxu0 0.0
        %v4488 = vand.u32 %v3389, 4294901760
        %4489 = vmatpush1.msra.mxu0 %v4488
        %4490 = vmatprep.subr.mxu0 0.0
        %v4491 = vand.u32 %v3388, 4294901760
        %4492 = vmatpush1.msra.mxu0 %v4491
        %4493 = vmatprep.subr.mxu0 0.0
        %v4494 = vand.u32 %v3387, 4294901760
        %4495 = vmatpush1.msra.mxu0 %v4494
        %4496 = vmatprep.subr.mxu0 0.0
        %4497 = vmatpush2.msra.mxu0 0.0
        %4498 = vmatprep.subr.mxu0 0.0
        %4499 = vmatpush2.msra.mxu0 0.0
        %4500 = vmatprep.subr.mxu0 0.0
        %4501 = vmatpush2.msra.mxu0 0.0
        %4502 = vmatprep.subr.mxu0 0.0
        %4503 = vmatpush2.msra.mxu0 0.0
        %4504 = vmatprep.subr.mxu0 0.0
        %4505 = vmatpush2.msra.mxu0 0.0
        %4506 = vmatprep.subr.mxu0 0.0
        %4507 = vmatpush2.msra.mxu0 0.0
        %4508 = vmatprep.subr.mxu0 0.0
        %4509 = vmatpush2.msra.mxu0 0.0
        %4510 = vmatprep.subr.mxu0 0.0
        %4511 = vmatpush2.msra.mxu0 0.0
        %4512 = vmatprep.subr.mxu0 0.0
        %4513 = vmatpush2.msra.mxu0 0.0
        %4514 = vmatprep.subr.mxu0 0.0
        %4515 = vmatpush2.msra.mxu0 0.0
        %4516 = vmatprep.subr.mxu0 0.0
        %4517 = vmatpush2.msra.mxu0 0.0
        %4518 = vmatprep.subr.mxu0 0.0
        %4519 = vmatpush2.msra.mxu0 0.0
        %4520 = vmatprep.subr.mxu0 0.0
        %4521 = vmatpush2.msra.mxu0 0.0
        %4522 = vmatprep.subr.mxu0 0.0
        %4523 = vmatpush2.msra.mxu0 0.0
        %4524 = vmatprep.subr.mxu0 0.0
        %4525 = vmatpush2.msra.mxu0 0.0
        %4526 = vmatprep.subr.mxu0 0.0
        %4527 = vmatpush2.msra.mxu0 0.0
        %4528 = vmatprep.mubr.f32.mxu0 0.0
        %v4529 = vand.u32 %v3396, 4294901760
        %4530 = vmatmul.mubr.f32.gmra.mxu0 %v4529
        %v4531 = vpop.f32.mrf.mxu0
        %v4532 = vadd.f32 %v4363, %v4531
        %v4533 = vpop.f32.mrf.mxu0
        %4534 = vmatprep.mubr.f32.mxu0 0.0
        %v4535 = vand.u32 %v3399, 4294901760
        %4536 = vmatmul.mubr.f32.gmra.mxu0 %v4535
        %v4537 = vpop.f32.mrf.mxu0
        %v4538 = vadd.f32 %v4369, %v4537
        %v4539 = vpop.f32.mrf.mxu0
        %4540 = vmatprep.mubr.f32.mxu0 0.0
        %v4541 = vand.u32 %v3402, 4294901760
        %4542 = vmatmul.mubr.f32.gmra.mxu0 %v4541
        %v4543 = vpop.f32.mrf.mxu0
        %v4544 = vadd.f32 %v4375, %v4543
        %v4545 = vpop.f32.mrf.mxu0
        %4546 = vmatprep.mubr.f32.mxu0 0.0
        %v4547 = vand.u32 %v3405, 4294901760
        %4548 = vmatmul.mubr.f32.gmra.mxu0 %v4547
        %v4549 = vpop.f32.mrf.mxu0
        %v4550 = vadd.f32 %v4381, %v4549
        %v4551 = vpop.f32.mrf.mxu0
        %4552 = vmatprep.mubr.f32.mxu0 0.0
        %v4553 = vand.u32 %v3408, 4294901760
        %4554 = vmatmul.mubr.f32.gmra.mxu0 %v4553
        %v4555 = vpop.f32.mrf.mxu0
        %v4556 = vadd.f32 %v4387, %v4555
        %v4557 = vpop.f32.mrf.mxu0
        %4558 = vmatprep.mubr.f32.mxu0 0.0
        %v4559 = vand.u32 %v3411, 4294901760
        %4560 = vmatmul.mubr.f32.gmra.mxu0 %v4559
        %v4561 = vpop.f32.mrf.mxu0
        %v4562 = vadd.f32 %v4393, %v4561
        %v4563 = vpop.f32.mrf.mxu0
        %4564 = vmatprep.mubr.f32.mxu0 0.0
        %v4565 = vand.u32 %v3414, 4294901760
        %4566 = vmatmul.mubr.f32.gmra.mxu0 %v4565
        %v4567 = vpop.f32.mrf.mxu0
        %v4568 = vadd.f32 %v4399, %v4567
        %v4569 = vpop.f32.mrf.mxu0
        %4570 = vmatprep.mubr.f32.mxu0 0.0
        %v4571 = vand.u32 %v3417, 4294901760
        %4572 = vmatmul.mubr.f32.gmra.mxu0 %v4571
        %v4573 = vpop.f32.mrf.mxu0
        %v4574 = vadd.f32 %v4405, %v4573
        %v4575 = vpop.f32.mrf.mxu0
        %4576 = vmatprep.mubr.f32.mxu0 0.0
        %v4577 = vand.u32 %v3420, 4294901760
        %4578 = vmatmul.mubr.f32.gmra.mxu0 %v4577
        %v4579 = vpop.f32.mrf.mxu0
        %v4580 = vadd.f32 %v4411, %v4579
        %v4581 = vpop.f32.mrf.mxu0
        %4582 = vmatprep.mubr.f32.mxu0 0.0
        %v4583 = vand.u32 %v3423, 4294901760
        %4584 = vmatmul.mubr.f32.gmra.mxu0 %v4583
        %v4585 = vpop.f32.mrf.mxu0
        %v4586 = vadd.f32 %v4417, %v4585
        %v4587 = vpop.f32.mrf.mxu0
        %4588 = vmatprep.mubr.f32.mxu0 0.0
        %v4589 = vand.u32 %v3426, 4294901760
        %4590 = vmatmul.mubr.f32.gmra.mxu0 %v4589
        %v4591 = vpop.f32.mrf.mxu0
        %v4592 = vadd.f32 %v4423, %v4591
        %v4593 = vpop.f32.mrf.mxu0
        %4594 = vmatprep.mubr.f32.mxu0 0.0
        %v4595 = vand.u32 %v3429, 4294901760
        %4596 = vmatmul.mubr.f32.gmra.mxu0 %v4595
        %v4597 = vpop.f32.mrf.mxu0
        %v4598 = vadd.f32 %v4429, %v4597
        %v4599 = vpop.f32.mrf.mxu0
        %4600 = vmatprep.mubr.f32.mxu0 0.0
        %v4601 = vand.u32 %v3432, 4294901760
        %4602 = vmatmul.mubr.f32.gmra.mxu0 %v4601
        %v4603 = vpop.f32.mrf.mxu0
        %v4604 = vadd.f32 %v4435, %v4603
        %v4605 = vpop.f32.mrf.mxu0
        %4606 = vmatprep.mubr.f32.mxu0 0.0
        %v4607 = vand.u32 %v3435, 4294901760
        %4608 = vmatmul.mubr.f32.gmra.mxu0 %v4607
        %v4609 = vpop.f32.mrf.mxu0
        %v4610 = vadd.f32 %v4441, %v4609
        %v4611 = vpop.f32.mrf.mxu0
        %4612 = vmatprep.mubr.f32.mxu0 0.0
        %v4613 = vand.u32 %v3438, 4294901760
        %4614 = vmatmul.mubr.f32.gmra.mxu0 %v4613
        %v4615 = vpop.f32.mrf.mxu0
        %v4616 = vadd.f32 %v4447, %v4615
        %v4617 = vpop.f32.mrf.mxu0
        %4618 = vmatprep.mubr.f32.mxu0 0.0
        %v4619 = vand.u32 %v3441, 4294901760
        %4620 = vmatmul.mubr.f32.gmra.mxu0 %v4619
        %v4621 = vpop.f32.mrf.mxu0
        %v4622 = vadd.f32 %v4453, %v4621
        %v4623 = vpop.f32.mrf.mxu0
        %4624 = vdwg.mxu0
        %v4625 = vadd.f32 %v1592, %v4532
        %v4626 = vadd.f32 %v1598, %v4538
        %v4627 = vadd.f32 %v1604, %v4544
        %v4628 = vadd.f32 %v1610, %v4550
        %v4629 = vadd.f32 %v1616, %v4556
        %v4630 = vadd.f32 %v1622, %v4562
        %v4631 = vadd.f32 %v1628, %v4568
        %v4632 = vadd.f32 %v1634, %v4574
        %v4633 = vadd.f32 %v1640, %v4580
        %v4634 = vadd.f32 %v1646, %v4586
        %v4635 = vadd.f32 %v1652, %v4592
        %v4636 = vadd.f32 %v1658, %v4598
        %v4637 = vadd.f32 %v1664, %v4604
        %v4638 = vadd.f32 %v1670, %v4610
        %v4639 = vadd.f32 %v1676, %v4616
        %v4640 = vadd.f32 %v1682, %v4622
        %4641 = vmatprep.subr.mxu0 0.0
        %v4642 = vand.u32 %v310, 4294901760
        %4643 = vmatpush1.msra.mxu0 %v4642
        %4644 = vmatprep.subr.mxu0 0.0
        %v4645 = vand.u32 %v309, 4294901760
        %4646 = vmatpush1.msra.mxu0 %v4645
        %4647 = vmatprep.subr.mxu0 0.0
        %v4648 = vand.u32 %v308, 4294901760
        %4649 = vmatpush1.msra.mxu0 %v4648
        %4650 = vmatprep.subr.mxu0 0.0
        %v4651 = vand.u32 %v307, 4294901760
        %4652 = vmatpush1.msra.mxu0 %v4651
        %4653 = vmatprep.subr.mxu0 0.0
        %v4654 = vand.u32 %v306, 4294901760
        %4655 = vmatpush1.msra.mxu0 %v4654
        %4656 = vmatprep.subr.mxu0 0.0
        %v4657 = vand.u32 %v305, 4294901760
        %4658 = vmatpush1.msra.mxu0 %v4657
        %4659 = vmatprep.subr.mxu0 0.0
        %v4660 = vand.u32 %v304, 4294901760
        %4661 = vmatpush1.msra.mxu0 %v4660
        %4662 = vmatprep.subr.mxu0 0.0
        %v4663 = vand.u32 %v303, 4294901760
        %4664 = vmatpush1.msra.mxu0 %v4663
        %4665 = vmatprep.subr.mxu0 0.0
        %v4666 = vand.u32 %v302, 4294901760
        %4667 = vmatpush1.msra.mxu0 %v4666
        %4668 = vmatprep.subr.mxu0 0.0
        %v4669 = vand.u32 %v301, 4294901760
        %4670 = vmatpush1.msra.mxu0 %v4669
        %4671 = vmatprep.subr.mxu0 0.0
        %v4672 = vand.u32 %v300, 4294901760
        %4673 = vmatpush1.msra.mxu0 %v4672
        %4674 = vmatprep.subr.mxu0 0.0
        %v4675 = vand.u32 %v299, 4294901760
        %4676 = vmatpush1.msra.mxu0 %v4675
        %4677 = vmatprep.subr.mxu0 0.0
        %v4678 = vand.u32 %v298, 4294901760
        %4679 = vmatpush1.msra.mxu0 %v4678
        %4680 = vmatprep.subr.mxu0 0.0
        %v4681 = vand.u32 %v297, 4294901760
        %4682 = vmatpush1.msra.mxu0 %v4681
        %4683 = vmatprep.subr.mxu0 0.0
        %v4684 = vand.u32 %v296, 4294901760
        %4685 = vmatpush1.msra.mxu0 %v4684
        %4686 = vmatprep.subr.mxu0 0.0
        %v4687 = vand.u32 %v295, 4294901760
        %4688 = vmatpush1.msra.mxu0 %v4687
        %4689 = vmatprep.subr.mxu0 0.0
        %v4690 = vand.u32 %v326, 4294901760
        %4691 = vmatpush2.msra.mxu0 %v4690
        %4692 = vmatprep.subr.mxu0 0.0
        %v4693 = vand.u32 %v325, 4294901760
        %4694 = vmatpush2.msra.mxu0 %v4693
        %4695 = vmatprep.subr.mxu0 0.0
        %v4696 = vand.u32 %v324, 4294901760
        %4697 = vmatpush2.msra.mxu0 %v4696
        %4698 = vmatprep.subr.mxu0 0.0
        %v4699 = vand.u32 %v323, 4294901760
        %4700 = vmatpush2.msra.mxu0 %v4699
        %4701 = vmatprep.subr.mxu0 0.0
        %v4702 = vand.u32 %v322, 4294901760
        %4703 = vmatpush2.msra.mxu0 %v4702
        %4704 = vmatprep.subr.mxu0 0.0
        %v4705 = vand.u32 %v321, 4294901760
        %4706 = vmatpush2.msra.mxu0 %v4705
        %4707 = vmatprep.subr.mxu0 0.0
        %v4708 = vand.u32 %v320, 4294901760
        %4709 = vmatpush2.msra.mxu0 %v4708
        %4710 = vmatprep.subr.mxu0 0.0
        %v4711 = vand.u32 %v319, 4294901760
        %4712 = vmatpush2.msra.mxu0 %v4711
        %4713 = vmatprep.subr.mxu0 0.0
        %v4714 = vand.u32 %v318, 4294901760
        %4715 = vmatpush2.msra.mxu0 %v4714
        %4716 = vmatprep.subr.mxu0 0.0
        %v4717 = vand.u32 %v317, 4294901760
        %4718 = vmatpush2.msra.mxu0 %v4717
        %4719 = vmatprep.subr.mxu0 0.0
        %v4720 = vand.u32 %v316, 4294901760
        %4721 = vmatpush2.msra.mxu0 %v4720
        %4722 = vmatprep.subr.mxu0 0.0
        %v4723 = vand.u32 %v315, 4294901760
        %4724 = vmatpush2.msra.mxu0 %v4723
        %4725 = vmatprep.subr.mxu0 0.0
        %v4726 = vand.u32 %v314, 4294901760
        %4727 = vmatpush2.msra.mxu0 %v4726
        %4728 = vmatprep.subr.mxu0 0.0
        %v4729 = vand.u32 %v313, 4294901760
        %4730 = vmatpush2.msra.mxu0 %v4729
        %4731 = vmatprep.subr.mxu0 0.0
        %v4732 = vand.u32 %v312, 4294901760
        %4733 = vmatpush2.msra.mxu0 %v4732
        %4734 = vmatprep.subr.mxu0 0.0
        %v4735 = vand.u32 %v311, 4294901760
        %4736 = vmatpush2.msra.mxu0 %v4735
        %v4737 = vand.u32 %v330, 4294901760
        %v4738 = vsub.f32 %v330, %v4737
        %v4739 = vand.u32 %v4738, 4294901760
        %v4740 = vsub.f32 %v4738, %v4739
        %v4741 = vand.u32 %v4740, 4294901760
        %4742 = vmatprep.mubr.f32.mxu0 %v4741
        %v4743 = vand.u32 %v329, 4294901760
        %v4744 = vsub.f32 %v329, %v4743
        %v4745 = vand.u32 %v4744, 4294901760
        %v4746 = vsub.f32 %v4744, %v4745
        %v4747 = vand.u32 %v4746, 4294901760
        %4748 = vmatmul.mubr.f32.gmra.mxu0 %v4747
        %v4749 = vpop.f32.mrf.mxu0
        %v4750 = vadd.f32 0.0, %v4749
        %v4751 = vpop.f32.mrf.mxu0
        %v4752 = vand.u32 %v336, 4294901760
        %v4753 = vsub.f32 %v336, %v4752
        %v4754 = vand.u32 %v4753, 4294901760
        %v4755 = vsub.f32 %v4753, %v4754
        %v4756 = vand.u32 %v4755, 4294901760
        %4757 = vmatprep.mubr.f32.mxu0 %v4756
        %v4758 = vand.u32 %v335, 4294901760
        %v4759 = vsub.f32 %v335, %v4758
        %v4760 = vand.u32 %v4759, 4294901760
        %v4761 = vsub.f32 %v4759, %v4760
        %v4762 = vand.u32 %v4761, 4294901760
        %4763 = vmatmul.mubr.f32.gmra.mxu0 %v4762
        %v4764 = vpop.f32.mrf.mxu0
        %v4765 = vadd.f32 0.0, %v4764
        %v4766 = vpop.f32.mrf.mxu0
        %v4767 = vand.u32 %v342, 4294901760
        %v4768 = vsub.f32 %v342, %v4767
        %v4769 = vand.u32 %v4768, 4294901760
        %v4770 = vsub.f32 %v4768, %v4769
        %v4771 = vand.u32 %v4770, 4294901760
        %4772 = vmatprep.mubr.f32.mxu0 %v4771
        %v4773 = vand.u32 %v341, 4294901760
        %v4774 = vsub.f32 %v341, %v4773
        %v4775 = vand.u32 %v4774, 4294901760
        %v4776 = vsub.f32 %v4774, %v4775
        %v4777 = vand.u32 %v4776, 4294901760
        %4778 = vmatmul.mubr.f32.gmra.mxu0 %v4777
        %v4779 = vpop.f32.mrf.mxu0
        %v4780 = vadd.f32 0.0, %v4779
        %v4781 = vpop.f32.mrf.mxu0
        %v4782 = vand.u32 %v348, 4294901760
        %v4783 = vsub.f32 %v348, %v4782
        %v4784 = vand.u32 %v4783, 4294901760
        %v4785 = vsub.f32 %v4783, %v4784
        %v4786 = vand.u32 %v4785, 4294901760
        %4787 = vmatprep.mubr.f32.mxu0 %v4786
        %v4788 = vand.u32 %v347, 4294901760
        %v4789 = vsub.f32 %v347, %v4788
        %v4790 = vand.u32 %v4789, 4294901760
        %v4791 = vsub.f32 %v4789, %v4790
        %v4792 = vand.u32 %v4791, 4294901760
        %4793 = vmatmul.mubr.f32.gmra.mxu0 %v4792
        %v4794 = vpop.f32.mrf.mxu0
        %v4795 = vadd.f32 0.0, %v4794
        %v4796 = vpop.f32.mrf.mxu0
        %v4797 = vand.u32 %v354, 4294901760
        %v4798 = vsub.f32 %v354, %v4797
        %v4799 = vand.u32 %v4798, 4294901760
        %v4800 = vsub.f32 %v4798, %v4799
        %v4801 = vand.u32 %v4800, 4294901760
        %4802 = vmatprep.mubr.f32.mxu0 %v4801
        %v4803 = vand.u32 %v353, 4294901760
        %v4804 = vsub.f32 %v353, %v4803
        %v4805 = vand.u32 %v4804, 4294901760
        %v4806 = vsub.f32 %v4804, %v4805
        %v4807 = vand.u32 %v4806, 4294901760
        %4808 = vmatmul.mubr.f32.gmra.mxu0 %v4807
        %v4809 = vpop.f32.mrf.mxu0
        %v4810 = vadd.f32 0.0, %v4809
        %v4811 = vpop.f32.mrf.mxu0
        %v4812 = vand.u32 %v360, 4294901760
        %v4813 = vsub.f32 %v360, %v4812
        %v4814 = vand.u32 %v4813, 4294901760
        %v4815 = vsub.f32 %v4813, %v4814
        %v4816 = vand.u32 %v4815, 4294901760
        %4817 = vmatprep.mubr.f32.mxu0 %v4816
        %v4818 = vand.u32 %v359, 4294901760
        %v4819 = vsub.f32 %v359, %v4818
        %v4820 = vand.u32 %v4819, 4294901760
        %v4821 = vsub.f32 %v4819, %v4820
        %v4822 = vand.u32 %v4821, 4294901760
        %4823 = vmatmul.mubr.f32.gmra.mxu0 %v4822
        %v4824 = vpop.f32.mrf.mxu0
        %v4825 = vadd.f32 0.0, %v4824
        %v4826 = vpop.f32.mrf.mxu0
        %v4827 = vand.u32 %v366, 4294901760
        %v4828 = vsub.f32 %v366, %v4827
        %v4829 = vand.u32 %v4828, 4294901760
        %v4830 = vsub.f32 %v4828, %v4829
        %v4831 = vand.u32 %v4830, 4294901760
        %4832 = vmatprep.mubr.f32.mxu0 %v4831
        %v4833 = vand.u32 %v365, 4294901760
        %v4834 = vsub.f32 %v365, %v4833
        %v4835 = vand.u32 %v4834, 4294901760
        %v4836 = vsub.f32 %v4834, %v4835
        %v4837 = vand.u32 %v4836, 4294901760
        %4838 = vmatmul.mubr.f32.gmra.mxu0 %v4837
        %v4839 = vpop.f32.mrf.mxu0
        %v4840 = vadd.f32 0.0, %v4839
        %v4841 = vpop.f32.mrf.mxu0
        %v4842 = vand.u32 %v372, 4294901760
        %v4843 = vsub.f32 %v372, %v4842
        %v4844 = vand.u32 %v4843, 4294901760
        %v4845 = vsub.f32 %v4843, %v4844
        %v4846 = vand.u32 %v4845, 4294901760
        %4847 = vmatprep.mubr.f32.mxu0 %v4846
        %v4848 = vand.u32 %v371, 4294901760
        %v4849 = vsub.f32 %v371, %v4848
        %v4850 = vand.u32 %v4849, 4294901760
        %v4851 = vsub.f32 %v4849, %v4850
        %v4852 = vand.u32 %v4851, 4294901760
        %4853 = vmatmul.mubr.f32.gmra.mxu0 %v4852
        %v4854 = vpop.f32.mrf.mxu0
        %v4855 = vadd.f32 0.0, %v4854
        %v4856 = vpop.f32.mrf.mxu0
        %v4857 = vand.u32 %v378, 4294901760
        %v4858 = vsub.f32 %v378, %v4857
        %v4859 = vand.u32 %v4858, 4294901760
        %v4860 = vsub.f32 %v4858, %v4859
        %v4861 = vand.u32 %v4860, 4294901760
        %4862 = vmatprep.mubr.f32.mxu0 %v4861
        %v4863 = vand.u32 %v377, 4294901760
        %v4864 = vsub.f32 %v377, %v4863
        %v4865 = vand.u32 %v4864, 4294901760
        %v4866 = vsub.f32 %v4864, %v4865
        %v4867 = vand.u32 %v4866, 4294901760
        %4868 = vmatmul.mubr.f32.gmra.mxu0 %v4867
        %v4869 = vpop.f32.mrf.mxu0
        %v4870 = vadd.f32 0.0, %v4869
        %v4871 = vpop.f32.mrf.mxu0
        %v4872 = vand.u32 %v384, 4294901760
        %v4873 = vsub.f32 %v384, %v4872
        %v4874 = vand.u32 %v4873, 4294901760
        %v4875 = vsub.f32 %v4873, %v4874
        %v4876 = vand.u32 %v4875, 4294901760
        %4877 = vmatprep.mubr.f32.mxu0 %v4876
        %v4878 = vand.u32 %v383, 4294901760
        %v4879 = vsub.f32 %v383, %v4878
        %v4880 = vand.u32 %v4879, 4294901760
        %v4881 = vsub.f32 %v4879, %v4880
        %v4882 = vand.u32 %v4881, 4294901760
        %4883 = vmatmul.mubr.f32.gmra.mxu0 %v4882
        %v4884 = vpop.f32.mrf.mxu0
        %v4885 = vadd.f32 0.0, %v4884
        %v4886 = vpop.f32.mrf.mxu0
        %v4887 = vand.u32 %v390, 4294901760
        %v4888 = vsub.f32 %v390, %v4887
        %v4889 = vand.u32 %v4888, 4294901760
        %v4890 = vsub.f32 %v4888, %v4889
        %v4891 = vand.u32 %v4890, 4294901760
        %4892 = vmatprep.mubr.f32.mxu0 %v4891
        %v4893 = vand.u32 %v389, 4294901760
        %v4894 = vsub.f32 %v389, %v4893
        %v4895 = vand.u32 %v4894, 4294901760
        %v4896 = vsub.f32 %v4894, %v4895
        %v4897 = vand.u32 %v4896, 4294901760
        %4898 = vmatmul.mubr.f32.gmra.mxu0 %v4897
        %v4899 = vpop.f32.mrf.mxu0
        %v4900 = vadd.f32 0.0, %v4899
        %v4901 = vpop.f32.mrf.mxu0
        %v4902 = vand.u32 %v396, 4294901760
        %v4903 = vsub.f32 %v396, %v4902
        %v4904 = vand.u32 %v4903, 4294901760
        %v4905 = vsub.f32 %v4903, %v4904
        %v4906 = vand.u32 %v4905, 4294901760
        %4907 = vmatprep.mubr.f32.mxu0 %v4906
        %v4908 = vand.u32 %v395, 4294901760
        %v4909 = vsub.f32 %v395, %v4908
        %v4910 = vand.u32 %v4909, 4294901760
        %v4911 = vsub.f32 %v4909, %v4910
        %v4912 = vand.u32 %v4911, 4294901760
        %4913 = vmatmul.mubr.f32.gmra.mxu0 %v4912
        %v4914 = vpop.f32.mrf.mxu0
        %v4915 = vadd.f32 0.0, %v4914
        %v4916 = vpop.f32.mrf.mxu0
        %v4917 = vand.u32 %v402, 4294901760
        %v4918 = vsub.f32 %v402, %v4917
        %v4919 = vand.u32 %v4918, 4294901760
        %v4920 = vsub.f32 %v4918, %v4919
        %v4921 = vand.u32 %v4920, 4294901760
        %4922 = vmatprep.mubr.f32.mxu0 %v4921
        %v4923 = vand.u32 %v401, 4294901760
        %v4924 = vsub.f32 %v401, %v4923
        %v4925 = vand.u32 %v4924, 4294901760
        %v4926 = vsub.f32 %v4924, %v4925
        %v4927 = vand.u32 %v4926, 4294901760
        %4928 = vmatmul.mubr.f32.gmra.mxu0 %v4927
        %v4929 = vpop.f32.mrf.mxu0
        %v4930 = vadd.f32 0.0, %v4929
        %v4931 = vpop.f32.mrf.mxu0
        %v4932 = vand.u32 %v408, 4294901760
        %v4933 = vsub.f32 %v408, %v4932
        %v4934 = vand.u32 %v4933, 4294901760
        %v4935 = vsub.f32 %v4933, %v4934
        %v4936 = vand.u32 %v4935, 4294901760
        %4937 = vmatprep.mubr.f32.mxu0 %v4936
        %v4938 = vand.u32 %v407, 4294901760
        %v4939 = vsub.f32 %v407, %v4938
        %v4940 = vand.u32 %v4939, 4294901760
        %v4941 = vsub.f32 %v4939, %v4940
        %v4942 = vand.u32 %v4941, 4294901760
        %4943 = vmatmul.mubr.f32.gmra.mxu0 %v4942
        %v4944 = vpop.f32.mrf.mxu0
        %v4945 = vadd.f32 0.0, %v4944
        %v4946 = vpop.f32.mrf.mxu0
        %v4947 = vand.u32 %v414, 4294901760
        %v4948 = vsub.f32 %v414, %v4947
        %v4949 = vand.u32 %v4948, 4294901760
        %v4950 = vsub.f32 %v4948, %v4949
        %v4951 = vand.u32 %v4950, 4294901760
        %4952 = vmatprep.mubr.f32.mxu0 %v4951
        %v4953 = vand.u32 %v413, 4294901760
        %v4954 = vsub.f32 %v413, %v4953
        %v4955 = vand.u32 %v4954, 4294901760
        %v4956 = vsub.f32 %v4954, %v4955
        %v4957 = vand.u32 %v4956, 4294901760
        %4958 = vmatmul.mubr.f32.gmra.mxu0 %v4957
        %v4959 = vpop.f32.mrf.mxu0
        %v4960 = vadd.f32 0.0, %v4959
        %v4961 = vpop.f32.mrf.mxu0
        %v4962 = vand.u32 %v420, 4294901760
        %v4963 = vsub.f32 %v420, %v4962
        %v4964 = vand.u32 %v4963, 4294901760
        %v4965 = vsub.f32 %v4963, %v4964
        %v4966 = vand.u32 %v4965, 4294901760
        %4967 = vmatprep.mubr.f32.mxu0 %v4966
        %v4968 = vand.u32 %v419, 4294901760
        %v4969 = vsub.f32 %v419, %v4968
        %v4970 = vand.u32 %v4969, 4294901760
        %v4971 = vsub.f32 %v4969, %v4970
        %v4972 = vand.u32 %v4971, 4294901760
        %4973 = vmatmul.mubr.f32.gmra.mxu0 %v4972
        %v4974 = vpop.f32.mrf.mxu0
        %v4975 = vadd.f32 0.0, %v4974
        %v4976 = vpop.f32.mrf.mxu0
        %4977 = vdwg.mxu0
        %4978 = vmatprep.subr.mxu0 0.0
        %v4979 = vand.u32 %v310, 4294901760
        %v4980 = vsub.f32 %v310, %v4979
        %v4981 = vand.u32 %v4980, 4294901760
        %v4982 = vsub.f32 %v4980, %v4981
        %v4983 = vand.u32 %v4982, 4294901760
        %4984 = vmatpush1.msra.mxu0 %v4983
        %4985 = vmatprep.subr.mxu0 0.0
        %v4986 = vand.u32 %v309, 4294901760
        %v4987 = vsub.f32 %v309, %v4986
        %v4988 = vand.u32 %v4987, 4294901760
        %v4989 = vsub.f32 %v4987, %v4988
        %v4990 = vand.u32 %v4989, 4294901760
        %4991 = vmatpush1.msra.mxu0 %v4990
        %4992 = vmatprep.subr.mxu0 0.0
        %v4993 = vand.u32 %v308, 4294901760
        %v4994 = vsub.f32 %v308, %v4993
        %v4995 = vand.u32 %v4994, 4294901760
        %v4996 = vsub.f32 %v4994, %v4995
        %v4997 = vand.u32 %v4996, 4294901760
        %4998 = vmatpush1.msra.mxu0 %v4997
        %4999 = vmatprep.subr.mxu0 0.0
        %v5000 = vand.u32 %v307, 4294901760
        %v5001 = vsub.f32 %v307, %v5000
        %v5002 = vand.u32 %v5001, 4294901760
        %v5003 = vsub.f32 %v5001, %v5002
        %v5004 = vand.u32 %v5003, 4294901760
        %5005 = vmatpush1.msra.mxu0 %v5004
        %5006 = vmatprep.subr.mxu0 0.0
        %v5007 = vand.u32 %v306, 4294901760
        %v5008 = vsub.f32 %v306, %v5007
        %v5009 = vand.u32 %v5008, 4294901760
        %v5010 = vsub.f32 %v5008, %v5009
        %v5011 = vand.u32 %v5010, 4294901760
        %5012 = vmatpush1.msra.mxu0 %v5011
        %5013 = vmatprep.subr.mxu0 0.0
        %v5014 = vand.u32 %v305, 4294901760
        %v5015 = vsub.f32 %v305, %v5014
        %v5016 = vand.u32 %v5015, 4294901760
        %v5017 = vsub.f32 %v5015, %v5016
        %v5018 = vand.u32 %v5017, 4294901760
        %5019 = vmatpush1.msra.mxu0 %v5018
        %5020 = vmatprep.subr.mxu0 0.0
        %v5021 = vand.u32 %v304, 4294901760
        %v5022 = vsub.f32 %v304, %v5021
        %v5023 = vand.u32 %v5022, 4294901760
        %v5024 = vsub.f32 %v5022, %v5023
        %v5025 = vand.u32 %v5024, 4294901760
        %5026 = vmatpush1.msra.mxu0 %v5025
        %5027 = vmatprep.subr.mxu0 0.0
        %v5028 = vand.u32 %v303, 4294901760
        %v5029 = vsub.f32 %v303, %v5028
        %v5030 = vand.u32 %v5029, 4294901760
        %v5031 = vsub.f32 %v5029, %v5030
        %v5032 = vand.u32 %v5031, 4294901760
        %5033 = vmatpush1.msra.mxu0 %v5032
        %5034 = vmatprep.subr.mxu0 0.0
        %v5035 = vand.u32 %v302, 4294901760
        %v5036 = vsub.f32 %v302, %v5035
        %v5037 = vand.u32 %v5036, 4294901760
        %v5038 = vsub.f32 %v5036, %v5037
        %v5039 = vand.u32 %v5038, 4294901760
        %5040 = vmatpush1.msra.mxu0 %v5039
        %5041 = vmatprep.subr.mxu0 0.0
        %v5042 = vand.u32 %v301, 4294901760
        %v5043 = vsub.f32 %v301, %v5042
        %v5044 = vand.u32 %v5043, 4294901760
        %v5045 = vsub.f32 %v5043, %v5044
        %v5046 = vand.u32 %v5045, 4294901760
        %5047 = vmatpush1.msra.mxu0 %v5046
        %5048 = vmatprep.subr.mxu0 0.0
        %v5049 = vand.u32 %v300, 4294901760
        %v5050 = vsub.f32 %v300, %v5049
        %v5051 = vand.u32 %v5050, 4294901760
        %v5052 = vsub.f32 %v5050, %v5051
        %v5053 = vand.u32 %v5052, 4294901760
        %5054 = vmatpush1.msra.mxu0 %v5053
        %5055 = vmatprep.subr.mxu0 0.0
        %v5056 = vand.u32 %v299, 4294901760
        %v5057 = vsub.f32 %v299, %v5056
        %v5058 = vand.u32 %v5057, 4294901760
        %v5059 = vsub.f32 %v5057, %v5058
        %v5060 = vand.u32 %v5059, 4294901760
        %5061 = vmatpush1.msra.mxu0 %v5060
        %5062 = vmatprep.subr.mxu0 0.0
        %v5063 = vand.u32 %v298, 4294901760
        %v5064 = vsub.f32 %v298, %v5063
        %v5065 = vand.u32 %v5064, 4294901760
        %v5066 = vsub.f32 %v5064, %v5065
        %v5067 = vand.u32 %v5066, 4294901760
        %5068 = vmatpush1.msra.mxu0 %v5067
        %5069 = vmatprep.subr.mxu0 0.0
        %v5070 = vand.u32 %v297, 4294901760
        %v5071 = vsub.f32 %v297, %v5070
        %v5072 = vand.u32 %v5071, 4294901760
        %v5073 = vsub.f32 %v5071, %v5072
        %v5074 = vand.u32 %v5073, 4294901760
        %5075 = vmatpush1.msra.mxu0 %v5074
        %5076 = vmatprep.subr.mxu0 0.0
        %v5077 = vand.u32 %v296, 4294901760
        %v5078 = vsub.f32 %v296, %v5077
        %v5079 = vand.u32 %v5078, 4294901760
        %v5080 = vsub.f32 %v5078, %v5079
        %v5081 = vand.u32 %v5080, 4294901760
        %5082 = vmatpush1.msra.mxu0 %v5081
        %5083 = vmatprep.subr.mxu0 0.0
        %v5084 = vand.u32 %v295, 4294901760
        %v5085 = vsub.f32 %v295, %v5084
        %v5086 = vand.u32 %v5085, 4294901760
        %v5087 = vsub.f32 %v5085, %v5086
        %v5088 = vand.u32 %v5087, 4294901760
        %5089 = vmatpush1.msra.mxu0 %v5088
        %5090 = vmatprep.subr.mxu0 0.0
        %v5091 = vand.u32 %v326, 4294901760
        %v5092 = vsub.f32 %v326, %v5091
        %v5093 = vand.u32 %v5092, 4294901760
        %v5094 = vsub.f32 %v5092, %v5093
        %v5095 = vand.u32 %v5094, 4294901760
        %5096 = vmatpush2.msra.mxu0 %v5095
        %5097 = vmatprep.subr.mxu0 0.0
        %v5098 = vand.u32 %v325, 4294901760
        %v5099 = vsub.f32 %v325, %v5098
        %v5100 = vand.u32 %v5099, 4294901760
        %v5101 = vsub.f32 %v5099, %v5100
        %v5102 = vand.u32 %v5101, 4294901760
        %5103 = vmatpush2.msra.mxu0 %v5102
        %5104 = vmatprep.subr.mxu0 0.0
        %v5105 = vand.u32 %v324, 4294901760
        %v5106 = vsub.f32 %v324, %v5105
        %v5107 = vand.u32 %v5106, 4294901760
        %v5108 = vsub.f32 %v5106, %v5107
        %v5109 = vand.u32 %v5108, 4294901760
        %5110 = vmatpush2.msra.mxu0 %v5109
        %5111 = vmatprep.subr.mxu0 0.0
        %v5112 = vand.u32 %v323, 4294901760
        %v5113 = vsub.f32 %v323, %v5112
        %v5114 = vand.u32 %v5113, 4294901760
        %v5115 = vsub.f32 %v5113, %v5114
        %v5116 = vand.u32 %v5115, 4294901760
        %5117 = vmatpush2.msra.mxu0 %v5116
        %5118 = vmatprep.subr.mxu0 0.0
        %v5119 = vand.u32 %v322, 4294901760
        %v5120 = vsub.f32 %v322, %v5119
        %v5121 = vand.u32 %v5120, 4294901760
        %v5122 = vsub.f32 %v5120, %v5121
        %v5123 = vand.u32 %v5122, 4294901760
        %5124 = vmatpush2.msra.mxu0 %v5123
        %5125 = vmatprep.subr.mxu0 0.0
        %v5126 = vand.u32 %v321, 4294901760
        %v5127 = vsub.f32 %v321, %v5126
        %v5128 = vand.u32 %v5127, 4294901760
        %v5129 = vsub.f32 %v5127, %v5128
        %v5130 = vand.u32 %v5129, 4294901760
        %5131 = vmatpush2.msra.mxu0 %v5130
        %5132 = vmatprep.subr.mxu0 0.0
        %v5133 = vand.u32 %v320, 4294901760
        %v5134 = vsub.f32 %v320, %v5133
        %v5135 = vand.u32 %v5134, 4294901760
        %v5136 = vsub.f32 %v5134, %v5135
        %v5137 = vand.u32 %v5136, 4294901760
        %5138 = vmatpush2.msra.mxu0 %v5137
        %5139 = vmatprep.subr.mxu0 0.0
        %v5140 = vand.u32 %v319, 4294901760
        %v5141 = vsub.f32 %v319, %v5140
        %v5142 = vand.u32 %v5141, 4294901760
        %v5143 = vsub.f32 %v5141, %v5142
        %v5144 = vand.u32 %v5143, 4294901760
        %5145 = vmatpush2.msra.mxu0 %v5144
        %5146 = vmatprep.subr.mxu0 0.0
        %v5147 = vand.u32 %v318, 4294901760
        %v5148 = vsub.f32 %v318, %v5147
        %v5149 = vand.u32 %v5148, 4294901760
        %v5150 = vsub.f32 %v5148, %v5149
        %v5151 = vand.u32 %v5150, 4294901760
        %5152 = vmatpush2.msra.mxu0 %v5151
        %5153 = vmatprep.subr.mxu0 0.0
        %v5154 = vand.u32 %v317, 4294901760
        %v5155 = vsub.f32 %v317, %v5154
        %v5156 = vand.u32 %v5155, 4294901760
        %v5157 = vsub.f32 %v5155, %v5156
        %v5158 = vand.u32 %v5157, 4294901760
        %5159 = vmatpush2.msra.mxu0 %v5158
        %5160 = vmatprep.subr.mxu0 0.0
        %v5161 = vand.u32 %v316, 4294901760
        %v5162 = vsub.f32 %v316, %v5161
        %v5163 = vand.u32 %v5162, 4294901760
        %v5164 = vsub.f32 %v5162, %v5163
        %v5165 = vand.u32 %v5164, 4294901760
        %5166 = vmatpush2.msra.mxu0 %v5165
        %5167 = vmatprep.subr.mxu0 0.0
        %v5168 = vand.u32 %v315, 4294901760
        %v5169 = vsub.f32 %v315, %v5168
        %v5170 = vand.u32 %v5169, 4294901760
        %v5171 = vsub.f32 %v5169, %v5170
        %v5172 = vand.u32 %v5171, 4294901760
        %5173 = vmatpush2.msra.mxu0 %v5172
        %5174 = vmatprep.subr.mxu0 0.0
        %v5175 = vand.u32 %v314, 4294901760
        %v5176 = vsub.f32 %v314, %v5175
        %v5177 = vand.u32 %v5176, 4294901760
        %v5178 = vsub.f32 %v5176, %v5177
        %v5179 = vand.u32 %v5178, 4294901760
        %5180 = vmatpush2.msra.mxu0 %v5179
        %5181 = vmatprep.subr.mxu0 0.0
        %v5182 = vand.u32 %v313, 4294901760
        %v5183 = vsub.f32 %v313, %v5182
        %v5184 = vand.u32 %v5183, 4294901760
        %v5185 = vsub.f32 %v5183, %v5184
        %v5186 = vand.u32 %v5185, 4294901760
        %5187 = vmatpush2.msra.mxu0 %v5186
        %5188 = vmatprep.subr.mxu0 0.0
        %v5189 = vand.u32 %v312, 4294901760
        %v5190 = vsub.f32 %v312, %v5189
        %v5191 = vand.u32 %v5190, 4294901760
        %v5192 = vsub.f32 %v5190, %v5191
        %v5193 = vand.u32 %v5192, 4294901760
        %5194 = vmatpush2.msra.mxu0 %v5193
        %5195 = vmatprep.subr.mxu0 0.0
        %v5196 = vand.u32 %v311, 4294901760
        %v5197 = vsub.f32 %v311, %v5196
        %v5198 = vand.u32 %v5197, 4294901760
        %v5199 = vsub.f32 %v5197, %v5198
        %v5200 = vand.u32 %v5199, 4294901760
        %5201 = vmatpush2.msra.mxu0 %v5200
        %v5202 = vand.u32 %v330, 4294901760
        %5203 = vmatprep.mubr.f32.mxu0 %v5202
        %v5204 = vand.u32 %v329, 4294901760
        %5205 = vmatmul.mubr.f32.gmra.mxu0 %v5204
        %v5206 = vpop.f32.mrf.mxu0
        %v5207 = vadd.f32 %v4750, %v5206
        %v5208 = vpop.f32.mrf.mxu0
        %v5209 = vand.u32 %v336, 4294901760
        %5210 = vmatprep.mubr.f32.mxu0 %v5209
        %v5211 = vand.u32 %v335, 4294901760
        %5212 = vmatmul.mubr.f32.gmra.mxu0 %v5211
        %v5213 = vpop.f32.mrf.mxu0
        %v5214 = vadd.f32 %v4765, %v5213
        %v5215 = vpop.f32.mrf.mxu0
        %v5216 = vand.u32 %v342, 4294901760
        %5217 = vmatprep.mubr.f32.mxu0 %v5216
        %v5218 = vand.u32 %v341, 4294901760
        %5219 = vmatmul.mubr.f32.gmra.mxu0 %v5218
        %v5220 = vpop.f32.mrf.mxu0
        %v5221 = vadd.f32 %v4780, %v5220
        %v5222 = vpop.f32.mrf.mxu0
        %v5223 = vand.u32 %v348, 4294901760
        %5224 = vmatprep.mubr.f32.mxu0 %v5223
        %v5225 = vand.u32 %v347, 4294901760
        %5226 = vmatmul.mubr.f32.gmra.mxu0 %v5225
        %v5227 = vpop.f32.mrf.mxu0
        %v5228 = vadd.f32 %v4795, %v5227
        %v5229 = vpop.f32.mrf.mxu0
        %v5230 = vand.u32 %v354, 4294901760
        %5231 = vmatprep.mubr.f32.mxu0 %v5230
        %v5232 = vand.u32 %v353, 4294901760
        %5233 = vmatmul.mubr.f32.gmra.mxu0 %v5232
        %v5234 = vpop.f32.mrf.mxu0
        %v5235 = vadd.f32 %v4810, %v5234
        %v5236 = vpop.f32.mrf.mxu0
        %v5237 = vand.u32 %v360, 4294901760
        %5238 = vmatprep.mubr.f32.mxu0 %v5237
        %v5239 = vand.u32 %v359, 4294901760
        %5240 = vmatmul.mubr.f32.gmra.mxu0 %v5239
        %v5241 = vpop.f32.mrf.mxu0
        %v5242 = vadd.f32 %v4825, %v5241
        %v5243 = vpop.f32.mrf.mxu0
        %v5244 = vand.u32 %v366, 4294901760
        %5245 = vmatprep.mubr.f32.mxu0 %v5244
        %v5246 = vand.u32 %v365, 4294901760
        %5247 = vmatmul.mubr.f32.gmra.mxu0 %v5246
        %v5248 = vpop.f32.mrf.mxu0
        %v5249 = vadd.f32 %v4840, %v5248
        %v5250 = vpop.f32.mrf.mxu0
        %v5251 = vand.u32 %v372, 4294901760
        %5252 = vmatprep.mubr.f32.mxu0 %v5251
        %v5253 = vand.u32 %v371, 4294901760
        %5254 = vmatmul.mubr.f32.gmra.mxu0 %v5253
        %v5255 = vpop.f32.mrf.mxu0
        %v5256 = vadd.f32 %v4855, %v5255
        %v5257 = vpop.f32.mrf.mxu0
        %v5258 = vand.u32 %v378, 4294901760
        %5259 = vmatprep.mubr.f32.mxu0 %v5258
        %v5260 = vand.u32 %v377, 4294901760
        %5261 = vmatmul.mubr.f32.gmra.mxu0 %v5260
        %v5262 = vpop.f32.mrf.mxu0
        %v5263 = vadd.f32 %v4870, %v5262
        %v5264 = vpop.f32.mrf.mxu0
        %v5265 = vand.u32 %v384, 4294901760
        %5266 = vmatprep.mubr.f32.mxu0 %v5265
        %v5267 = vand.u32 %v383, 4294901760
        %5268 = vmatmul.mubr.f32.gmra.mxu0 %v5267
        %v5269 = vpop.f32.mrf.mxu0
        %v5270 = vadd.f32 %v4885, %v5269
        %v5271 = vpop.f32.mrf.mxu0
        %v5272 = vand.u32 %v390, 4294901760
        %5273 = vmatprep.mubr.f32.mxu0 %v5272
        %v5274 = vand.u32 %v389, 4294901760
        %5275 = vmatmul.mubr.f32.gmra.mxu0 %v5274
        %v5276 = vpop.f32.mrf.mxu0
        %v5277 = vadd.f32 %v4900, %v5276
        %v5278 = vpop.f32.mrf.mxu0
        %v5279 = vand.u32 %v396, 4294901760
        %5280 = vmatprep.mubr.f32.mxu0 %v5279
        %v5281 = vand.u32 %v395, 4294901760
        %5282 = vmatmul.mubr.f32.gmra.mxu0 %v5281
        %v5283 = vpop.f32.mrf.mxu0
        %v5284 = vadd.f32 %v4915, %v5283
        %v5285 = vpop.f32.mrf.mxu0
        %v5286 = vand.u32 %v402, 4294901760
        %5287 = vmatprep.mubr.f32.mxu0 %v5286
        %v5288 = vand.u32 %v401, 4294901760
        %5289 = vmatmul.mubr.f32.gmra.mxu0 %v5288
        %v5290 = vpop.f32.mrf.mxu0
        %v5291 = vadd.f32 %v4930, %v5290
        %v5292 = vpop.f32.mrf.mxu0
        %v5293 = vand.u32 %v408, 4294901760
        %5294 = vmatprep.mubr.f32.mxu0 %v5293
        %v5295 = vand.u32 %v407, 4294901760
        %5296 = vmatmul.mubr.f32.gmra.mxu0 %v5295
        %v5297 = vpop.f32.mrf.mxu0
        %v5298 = vadd.f32 %v4945, %v5297
        %v5299 = vpop.f32.mrf.mxu0
        %v5300 = vand.u32 %v414, 4294901760
        %5301 = vmatprep.mubr.f32.mxu0 %v5300
        %v5302 = vand.u32 %v413, 4294901760
        %5303 = vmatmul.mubr.f32.gmra.mxu0 %v5302
        %v5304 = vpop.f32.mrf.mxu0
        %v5305 = vadd.f32 %v4960, %v5304
        %v5306 = vpop.f32.mrf.mxu0
        %v5307 = vand.u32 %v420, 4294901760
        %5308 = vmatprep.mubr.f32.mxu0 %v5307
        %v5309 = vand.u32 %v419, 4294901760
        %5310 = vmatmul.mubr.f32.gmra.mxu0 %v5309
        %v5311 = vpop.f32.mrf.mxu0
        %v5312 = vadd.f32 %v4975, %v5311
        %v5313 = vpop.f32.mrf.mxu0
        %5314 = vdwg.mxu0
        %5315 = vmatprep.subr.mxu0 0.0
        %v5316 = vand.u32 %v310, 4294901760
        %v5317 = vsub.f32 %v310, %v5316
        %5318 = vmatpush1.msra.mxu0 %v5317
        %5319 = vmatprep.subr.mxu0 0.0
        %v5320 = vand.u32 %v309, 4294901760
        %v5321 = vsub.f32 %v309, %v5320
        %5322 = vmatpush1.msra.mxu0 %v5321
        %5323 = vmatprep.subr.mxu0 0.0
        %v5324 = vand.u32 %v308, 4294901760
        %v5325 = vsub.f32 %v308, %v5324
        %5326 = vmatpush1.msra.mxu0 %v5325
        %5327 = vmatprep.subr.mxu0 0.0
        %v5328 = vand.u32 %v307, 4294901760
        %v5329 = vsub.f32 %v307, %v5328
        %5330 = vmatpush1.msra.mxu0 %v5329
        %5331 = vmatprep.subr.mxu0 0.0
        %v5332 = vand.u32 %v306, 4294901760
        %v5333 = vsub.f32 %v306, %v5332
        %5334 = vmatpush1.msra.mxu0 %v5333
        %5335 = vmatprep.subr.mxu0 0.0
        %v5336 = vand.u32 %v305, 4294901760
        %v5337 = vsub.f32 %v305, %v5336
        %5338 = vmatpush1.msra.mxu0 %v5337
        %5339 = vmatprep.subr.mxu0 0.0
        %v5340 = vand.u32 %v304, 4294901760
        %v5341 = vsub.f32 %v304, %v5340
        %5342 = vmatpush1.msra.mxu0 %v5341
        %5343 = vmatprep.subr.mxu0 0.0
        %v5344 = vand.u32 %v303, 4294901760
        %v5345 = vsub.f32 %v303, %v5344
        %5346 = vmatpush1.msra.mxu0 %v5345
        %5347 = vmatprep.subr.mxu0 0.0
        %v5348 = vand.u32 %v302, 4294901760
        %v5349 = vsub.f32 %v302, %v5348
        %5350 = vmatpush1.msra.mxu0 %v5349
        %5351 = vmatprep.subr.mxu0 0.0
        %v5352 = vand.u32 %v301, 4294901760
        %v5353 = vsub.f32 %v301, %v5352
        %5354 = vmatpush1.msra.mxu0 %v5353
        %5355 = vmatprep.subr.mxu0 0.0
        %v5356 = vand.u32 %v300, 4294901760
        %v5357 = vsub.f32 %v300, %v5356
        %5358 = vmatpush1.msra.mxu0 %v5357
        %5359 = vmatprep.subr.mxu0 0.0
        %v5360 = vand.u32 %v299, 4294901760
        %v5361 = vsub.f32 %v299, %v5360
        %5362 = vmatpush1.msra.mxu0 %v5361
        %5363 = vmatprep.subr.mxu0 0.0
        %v5364 = vand.u32 %v298, 4294901760
        %v5365 = vsub.f32 %v298, %v5364
        %5366 = vmatpush1.msra.mxu0 %v5365
        %5367 = vmatprep.subr.mxu0 0.0
        %v5368 = vand.u32 %v297, 4294901760
        %v5369 = vsub.f32 %v297, %v5368
        %5370 = vmatpush1.msra.mxu0 %v5369
        %5371 = vmatprep.subr.mxu0 0.0
        %v5372 = vand.u32 %v296, 4294901760
        %v5373 = vsub.f32 %v296, %v5372
        %5374 = vmatpush1.msra.mxu0 %v5373
        %5375 = vmatprep.subr.mxu0 0.0
        %v5376 = vand.u32 %v295, 4294901760
        %v5377 = vsub.f32 %v295, %v5376
        %5378 = vmatpush1.msra.mxu0 %v5377
        %5379 = vmatprep.subr.mxu0 0.0
        %v5380 = vand.u32 %v326, 4294901760
        %v5381 = vsub.f32 %v326, %v5380
        %5382 = vmatpush2.msra.mxu0 %v5381
        %5383 = vmatprep.subr.mxu0 0.0
        %v5384 = vand.u32 %v325, 4294901760
        %v5385 = vsub.f32 %v325, %v5384
        %5386 = vmatpush2.msra.mxu0 %v5385
        %5387 = vmatprep.subr.mxu0 0.0
        %v5388 = vand.u32 %v324, 4294901760
        %v5389 = vsub.f32 %v324, %v5388
        %5390 = vmatpush2.msra.mxu0 %v5389
        %5391 = vmatprep.subr.mxu0 0.0
        %v5392 = vand.u32 %v323, 4294901760
        %v5393 = vsub.f32 %v323, %v5392
        %5394 = vmatpush2.msra.mxu0 %v5393
        %5395 = vmatprep.subr.mxu0 0.0
        %v5396 = vand.u32 %v322, 4294901760
        %v5397 = vsub.f32 %v322, %v5396
        %5398 = vmatpush2.msra.mxu0 %v5397
        %5399 = vmatprep.subr.mxu0 0.0
        %v5400 = vand.u32 %v321, 4294901760
        %v5401 = vsub.f32 %v321, %v5400
        %5402 = vmatpush2.msra.mxu0 %v5401
        %5403 = vmatprep.subr.mxu0 0.0
        %v5404 = vand.u32 %v320, 4294901760
        %v5405 = vsub.f32 %v320, %v5404
        %5406 = vmatpush2.msra.mxu0 %v5405
        %5407 = vmatprep.subr.mxu0 0.0
        %v5408 = vand.u32 %v319, 4294901760
        %v5409 = vsub.f32 %v319, %v5408
        %5410 = vmatpush2.msra.mxu0 %v5409
        %5411 = vmatprep.subr.mxu0 0.0
        %v5412 = vand.u32 %v318, 4294901760
        %v5413 = vsub.f32 %v318, %v5412
        %5414 = vmatpush2.msra.mxu0 %v5413
        %5415 = vmatprep.subr.mxu0 0.0
        %v5416 = vand.u32 %v317, 4294901760
        %v5417 = vsub.f32 %v317, %v5416
        %5418 = vmatpush2.msra.mxu0 %v5417
        %5419 = vmatprep.subr.mxu0 0.0
        %v5420 = vand.u32 %v316, 4294901760
        %v5421 = vsub.f32 %v316, %v5420
        %5422 = vmatpush2.msra.mxu0 %v5421
        %5423 = vmatprep.subr.mxu0 0.0
        %v5424 = vand.u32 %v315, 4294901760
        %v5425 = vsub.f32 %v315, %v5424
        %5426 = vmatpush2.msra.mxu0 %v5425
        %5427 = vmatprep.subr.mxu0 0.0
        %v5428 = vand.u32 %v314, 4294901760
        %v5429 = vsub.f32 %v314, %v5428
        %5430 = vmatpush2.msra.mxu0 %v5429
        %5431 = vmatprep.subr.mxu0 0.0
        %v5432 = vand.u32 %v313, 4294901760
        %v5433 = vsub.f32 %v313, %v5432
        %5434 = vmatpush2.msra.mxu0 %v5433
        %5435 = vmatprep.subr.mxu0 0.0
        %v5436 = vand.u32 %v312, 4294901760
        %v5437 = vsub.f32 %v312, %v5436
        %5438 = vmatpush2.msra.mxu0 %v5437
        %5439 = vmatprep.subr.mxu0 0.0
        %v5440 = vand.u32 %v311, 4294901760
        %v5441 = vsub.f32 %v311, %v5440
        %5442 = vmatpush2.msra.mxu0 %v5441
        %v5443 = vand.u32 %v330, 4294901760
        %v5444 = vsub.f32 %v330, %v5443
        %5445 = vmatprep.mubr.f32.mxu0 %v5444
        %v5446 = vand.u32 %v329, 4294901760
        %v5447 = vsub.f32 %v329, %v5446
        %5448 = vmatmul.mubr.f32.gmra.mxu0 %v5447
        %v5449 = vpop.f32.mrf.mxu0
        %v5450 = vadd.f32 %v5207, %v5449
        %v5451 = vpop.f32.mrf.mxu0
        %v5452 = vand.u32 %v336, 4294901760
        %v5453 = vsub.f32 %v336, %v5452
        %5454 = vmatprep.mubr.f32.mxu0 %v5453
        %v5455 = vand.u32 %v335, 4294901760
        %v5456 = vsub.f32 %v335, %v5455
        %5457 = vmatmul.mubr.f32.gmra.mxu0 %v5456
        %v5458 = vpop.f32.mrf.mxu0
        %v5459 = vadd.f32 %v5214, %v5458
        %v5460 = vpop.f32.mrf.mxu0
        %v5461 = vand.u32 %v342, 4294901760
        %v5462 = vsub.f32 %v342, %v5461
        %5463 = vmatprep.mubr.f32.mxu0 %v5462
        %v5464 = vand.u32 %v341, 4294901760
        %v5465 = vsub.f32 %v341, %v5464
        %5466 = vmatmul.mubr.f32.gmra.mxu0 %v5465
        %v5467 = vpop.f32.mrf.mxu0
        %v5468 = vadd.f32 %v5221, %v5467
        %v5469 = vpop.f32.mrf.mxu0
        %v5470 = vand.u32 %v348, 4294901760
        %v5471 = vsub.f32 %v348, %v5470
        %5472 = vmatprep.mubr.f32.mxu0 %v5471
        %v5473 = vand.u32 %v347, 4294901760
        %v5474 = vsub.f32 %v347, %v5473
        %5475 = vmatmul.mubr.f32.gmra.mxu0 %v5474
        %v5476 = vpop.f32.mrf.mxu0
        %v5477 = vadd.f32 %v5228, %v5476
        %v5478 = vpop.f32.mrf.mxu0
        %v5479 = vand.u32 %v354, 4294901760
        %v5480 = vsub.f32 %v354, %v5479
        %5481 = vmatprep.mubr.f32.mxu0 %v5480
        %v5482 = vand.u32 %v353, 4294901760
        %v5483 = vsub.f32 %v353, %v5482
        %5484 = vmatmul.mubr.f32.gmra.mxu0 %v5483
        %v5485 = vpop.f32.mrf.mxu0
        %v5486 = vadd.f32 %v5235, %v5485
        %v5487 = vpop.f32.mrf.mxu0
        %v5488 = vand.u32 %v360, 4294901760
        %v5489 = vsub.f32 %v360, %v5488
        %5490 = vmatprep.mubr.f32.mxu0 %v5489
        %v5491 = vand.u32 %v359, 4294901760
        %v5492 = vsub.f32 %v359, %v5491
        %5493 = vmatmul.mubr.f32.gmra.mxu0 %v5492
        %v5494 = vpop.f32.mrf.mxu0
        %v5495 = vadd.f32 %v5242, %v5494
        %v5496 = vpop.f32.mrf.mxu0
        %v5497 = vand.u32 %v366, 4294901760
        %v5498 = vsub.f32 %v366, %v5497
        %5499 = vmatprep.mubr.f32.mxu0 %v5498
        %v5500 = vand.u32 %v365, 4294901760
        %v5501 = vsub.f32 %v365, %v5500
        %5502 = vmatmul.mubr.f32.gmra.mxu0 %v5501
        %v5503 = vpop.f32.mrf.mxu0
        %v5504 = vadd.f32 %v5249, %v5503
        %v5505 = vpop.f32.mrf.mxu0
        %v5506 = vand.u32 %v372, 4294901760
        %v5507 = vsub.f32 %v372, %v5506
        %5508 = vmatprep.mubr.f32.mxu0 %v5507
        %v5509 = vand.u32 %v371, 4294901760
        %v5510 = vsub.f32 %v371, %v5509
        %5511 = vmatmul.mubr.f32.gmra.mxu0 %v5510
        %v5512 = vpop.f32.mrf.mxu0
        %v5513 = vadd.f32 %v5256, %v5512
        %v5514 = vpop.f32.mrf.mxu0
        %v5515 = vand.u32 %v378, 4294901760
        %v5516 = vsub.f32 %v378, %v5515
        %5517 = vmatprep.mubr.f32.mxu0 %v5516
        %v5518 = vand.u32 %v377, 4294901760
        %v5519 = vsub.f32 %v377, %v5518
        %5520 = vmatmul.mubr.f32.gmra.mxu0 %v5519
        %v5521 = vpop.f32.mrf.mxu0
        %v5522 = vadd.f32 %v5263, %v5521
        %v5523 = vpop.f32.mrf.mxu0
        %v5524 = vand.u32 %v384, 4294901760
        %v5525 = vsub.f32 %v384, %v5524
        %5526 = vmatprep.mubr.f32.mxu0 %v5525
        %v5527 = vand.u32 %v383, 4294901760
        %v5528 = vsub.f32 %v383, %v5527
        %5529 = vmatmul.mubr.f32.gmra.mxu0 %v5528
        %v5530 = vpop.f32.mrf.mxu0
        %v5531 = vadd.f32 %v5270, %v5530
        %v5532 = vpop.f32.mrf.mxu0
        %v5533 = vand.u32 %v390, 4294901760
        %v5534 = vsub.f32 %v390, %v5533
        %5535 = vmatprep.mubr.f32.mxu0 %v5534
        %v5536 = vand.u32 %v389, 4294901760
        %v5537 = vsub.f32 %v389, %v5536
        %5538 = vmatmul.mubr.f32.gmra.mxu0 %v5537
        %v5539 = vpop.f32.mrf.mxu0
        %v5540 = vadd.f32 %v5277, %v5539
        %v5541 = vpop.f32.mrf.mxu0
        %v5542 = vand.u32 %v396, 4294901760
        %v5543 = vsub.f32 %v396, %v5542
        %5544 = vmatprep.mubr.f32.mxu0 %v5543
        %v5545 = vand.u32 %v395, 4294901760
        %v5546 = vsub.f32 %v395, %v5545
        %5547 = vmatmul.mubr.f32.gmra.mxu0 %v5546
        %v5548 = vpop.f32.mrf.mxu0
        %v5549 = vadd.f32 %v5284, %v5548
        %v5550 = vpop.f32.mrf.mxu0
        %v5551 = vand.u32 %v402, 4294901760
        %v5552 = vsub.f32 %v402, %v5551
        %5553 = vmatprep.mubr.f32.mxu0 %v5552
        %v5554 = vand.u32 %v401, 4294901760
        %v5555 = vsub.f32 %v401, %v5554
        %5556 = vmatmul.mubr.f32.gmra.mxu0 %v5555
        %v5557 = vpop.f32.mrf.mxu0
        %v5558 = vadd.f32 %v5291, %v5557
        %v5559 = vpop.f32.mrf.mxu0
        %v5560 = vand.u32 %v408, 4294901760
        %v5561 = vsub.f32 %v408, %v5560
        %5562 = vmatprep.mubr.f32.mxu0 %v5561
        %v5563 = vand.u32 %v407, 4294901760
        %v5564 = vsub.f32 %v407, %v5563
        %5565 = vmatmul.mubr.f32.gmra.mxu0 %v5564
        %v5566 = vpop.f32.mrf.mxu0
        %v5567 = vadd.f32 %v5298, %v5566
        %v5568 = vpop.f32.mrf.mxu0
        %v5569 = vand.u32 %v414, 4294901760
        %v5570 = vsub.f32 %v414, %v5569
        %5571 = vmatprep.mubr.f32.mxu0 %v5570
        %v5572 = vand.u32 %v413, 4294901760
        %v5573 = vsub.f32 %v413, %v5572
        %5574 = vmatmul.mubr.f32.gmra.mxu0 %v5573
        %v5575 = vpop.f32.mrf.mxu0
        %v5576 = vadd.f32 %v5305, %v5575
        %v5577 = vpop.f32.mrf.mxu0
        %v5578 = vand.u32 %v420, 4294901760
        %v5579 = vsub.f32 %v420, %v5578
        %5580 = vmatprep.mubr.f32.mxu0 %v5579
        %v5581 = vand.u32 %v419, 4294901760
        %v5582 = vsub.f32 %v419, %v5581
        %5583 = vmatmul.mubr.f32.gmra.mxu0 %v5582
        %v5584 = vpop.f32.mrf.mxu0
        %v5585 = vadd.f32 %v5312, %v5584
        %v5586 = vpop.f32.mrf.mxu0
        %5587 = vdwg.mxu0
        %5588 = vmatprep.subr.mxu0 0.0
        %v5589 = vand.u32 %v310, 4294901760
        %5590 = vmatpush1.msra.mxu0 %v5589
        %5591 = vmatprep.subr.mxu0 0.0
        %v5592 = vand.u32 %v309, 4294901760
        %5593 = vmatpush1.msra.mxu0 %v5592
        %5594 = vmatprep.subr.mxu0 0.0
        %v5595 = vand.u32 %v308, 4294901760
        %5596 = vmatpush1.msra.mxu0 %v5595
        %5597 = vmatprep.subr.mxu0 0.0
        %v5598 = vand.u32 %v307, 4294901760
        %5599 = vmatpush1.msra.mxu0 %v5598
        %5600 = vmatprep.subr.mxu0 0.0
        %v5601 = vand.u32 %v306, 4294901760
        %5602 = vmatpush1.msra.mxu0 %v5601
        %5603 = vmatprep.subr.mxu0 0.0
        %v5604 = vand.u32 %v305, 4294901760
        %5605 = vmatpush1.msra.mxu0 %v5604
        %5606 = vmatprep.subr.mxu0 0.0
        %v5607 = vand.u32 %v304, 4294901760
        %5608 = vmatpush1.msra.mxu0 %v5607
        %5609 = vmatprep.subr.mxu0 0.0
        %v5610 = vand.u32 %v303, 4294901760
        %5611 = vmatpush1.msra.mxu0 %v5610
        %5612 = vmatprep.subr.mxu0 0.0
        %v5613 = vand.u32 %v302, 4294901760
        %5614 = vmatpush1.msra.mxu0 %v5613
        %5615 = vmatprep.subr.mxu0 0.0
        %v5616 = vand.u32 %v301, 4294901760
        %5617 = vmatpush1.msra.mxu0 %v5616
        %5618 = vmatprep.subr.mxu0 0.0
        %v5619 = vand.u32 %v300, 4294901760
        %5620 = vmatpush1.msra.mxu0 %v5619
        %5621 = vmatprep.subr.mxu0 0.0
        %v5622 = vand.u32 %v299, 4294901760
        %5623 = vmatpush1.msra.mxu0 %v5622
        %5624 = vmatprep.subr.mxu0 0.0
        %v5625 = vand.u32 %v298, 4294901760
        %5626 = vmatpush1.msra.mxu0 %v5625
        %5627 = vmatprep.subr.mxu0 0.0
        %v5628 = vand.u32 %v297, 4294901760
        %5629 = vmatpush1.msra.mxu0 %v5628
        %5630 = vmatprep.subr.mxu0 0.0
        %v5631 = vand.u32 %v296, 4294901760
        %5632 = vmatpush1.msra.mxu0 %v5631
        %5633 = vmatprep.subr.mxu0 0.0
        %v5634 = vand.u32 %v295, 4294901760
        %5635 = vmatpush1.msra.mxu0 %v5634
        %5636 = vmatprep.subr.mxu0 0.0
        %v5637 = vand.u32 %v326, 4294901760
        %5638 = vmatpush2.msra.mxu0 %v5637
        %5639 = vmatprep.subr.mxu0 0.0
        %v5640 = vand.u32 %v325, 4294901760
        %5641 = vmatpush2.msra.mxu0 %v5640
        %5642 = vmatprep.subr.mxu0 0.0
        %v5643 = vand.u32 %v324, 4294901760
        %5644 = vmatpush2.msra.mxu0 %v5643
        %5645 = vmatprep.subr.mxu0 0.0
        %v5646 = vand.u32 %v323, 4294901760
        %5647 = vmatpush2.msra.mxu0 %v5646
        %5648 = vmatprep.subr.mxu0 0.0
        %v5649 = vand.u32 %v322, 4294901760
        %5650 = vmatpush2.msra.mxu0 %v5649
        %5651 = vmatprep.subr.mxu0 0.0
        %v5652 = vand.u32 %v321, 4294901760
        %5653 = vmatpush2.msra.mxu0 %v5652
        %5654 = vmatprep.subr.mxu0 0.0
        %v5655 = vand.u32 %v320, 4294901760
        %5656 = vmatpush2.msra.mxu0 %v5655
        %5657 = vmatprep.subr.mxu0 0.0
        %v5658 = vand.u32 %v319, 4294901760
        %5659 = vmatpush2.msra.mxu0 %v5658
        %5660 = vmatprep.subr.mxu0 0.0
        %v5661 = vand.u32 %v318, 4294901760
        %5662 = vmatpush2.msra.mxu0 %v5661
        %5663 = vmatprep.subr.mxu0 0.0
        %v5664 = vand.u32 %v317, 4294901760
        %5665 = vmatpush2.msra.mxu0 %v5664
        %5666 = vmatprep.subr.mxu0 0.0
        %v5667 = vand.u32 %v316, 4294901760
        %5668 = vmatpush2.msra.mxu0 %v5667
        %5669 = vmatprep.subr.mxu0 0.0
        %v5670 = vand.u32 %v315, 4294901760
        %5671 = vmatpush2.msra.mxu0 %v5670
        %5672 = vmatprep.subr.mxu0 0.0
        %v5673 = vand.u32 %v314, 4294901760
        %5674 = vmatpush2.msra.mxu0 %v5673
        %5675 = vmatprep.subr.mxu0 0.0
        %v5676 = vand.u32 %v313, 4294901760
        %5677 = vmatpush2.msra.mxu0 %v5676
        %5678 = vmatprep.subr.mxu0 0.0
        %v5679 = vand.u32 %v312, 4294901760
        %5680 = vmatpush2.msra.mxu0 %v5679
        %5681 = vmatprep.subr.mxu0 0.0
        %v5682 = vand.u32 %v311, 4294901760
        %5683 = vmatpush2.msra.mxu0 %v5682
        %v5684 = vand.u32 %v330, 4294901760
        %v5685 = vsub.f32 %v330, %v5684
        %v5686 = vand.u32 %v5685, 4294901760
        %5687 = vmatprep.mubr.f32.mxu0 %v5686
        %v5688 = vand.u32 %v329, 4294901760
        %v5689 = vsub.f32 %v329, %v5688
        %v5690 = vand.u32 %v5689, 4294901760
        %5691 = vmatmul.mubr.f32.gmra.mxu0 %v5690
        %v5692 = vpop.f32.mrf.mxu0
        %v5693 = vadd.f32 %v5450, %v5692
        %v5694 = vpop.f32.mrf.mxu0
        %v5695 = vand.u32 %v336, 4294901760
        %v5696 = vsub.f32 %v336, %v5695
        %v5697 = vand.u32 %v5696, 4294901760
        %5698 = vmatprep.mubr.f32.mxu0 %v5697
        %v5699 = vand.u32 %v335, 4294901760
        %v5700 = vsub.f32 %v335, %v5699
        %v5701 = vand.u32 %v5700, 4294901760
        %5702 = vmatmul.mubr.f32.gmra.mxu0 %v5701
        %v5703 = vpop.f32.mrf.mxu0
        %v5704 = vadd.f32 %v5459, %v5703
        %v5705 = vpop.f32.mrf.mxu0
        %v5706 = vand.u32 %v342, 4294901760
        %v5707 = vsub.f32 %v342, %v5706
        %v5708 = vand.u32 %v5707, 4294901760
        %5709 = vmatprep.mubr.f32.mxu0 %v5708
        %v5710 = vand.u32 %v341, 4294901760
        %v5711 = vsub.f32 %v341, %v5710
        %v5712 = vand.u32 %v5711, 4294901760
        %5713 = vmatmul.mubr.f32.gmra.mxu0 %v5712
        %v5714 = vpop.f32.mrf.mxu0
        %v5715 = vadd.f32 %v5468, %v5714
        %v5716 = vpop.f32.mrf.mxu0
        %v5717 = vand.u32 %v348, 4294901760
        %v5718 = vsub.f32 %v348, %v5717
        %v5719 = vand.u32 %v5718, 4294901760
        %5720 = vmatprep.mubr.f32.mxu0 %v5719
        %v5721 = vand.u32 %v347, 4294901760
        %v5722 = vsub.f32 %v347, %v5721
        %v5723 = vand.u32 %v5722, 4294901760
        %5724 = vmatmul.mubr.f32.gmra.mxu0 %v5723
        %v5725 = vpop.f32.mrf.mxu0
        %v5726 = vadd.f32 %v5477, %v5725
        %v5727 = vpop.f32.mrf.mxu0
        %v5728 = vand.u32 %v354, 4294901760
        %v5729 = vsub.f32 %v354, %v5728
        %v5730 = vand.u32 %v5729, 4294901760
        %5731 = vmatprep.mubr.f32.mxu0 %v5730
        %v5732 = vand.u32 %v353, 4294901760
        %v5733 = vsub.f32 %v353, %v5732
        %v5734 = vand.u32 %v5733, 4294901760
        %5735 = vmatmul.mubr.f32.gmra.mxu0 %v5734
        %v5736 = vpop.f32.mrf.mxu0
        %v5737 = vadd.f32 %v5486, %v5736
        %v5738 = vpop.f32.mrf.mxu0
        %v5739 = vand.u32 %v360, 4294901760
        %v5740 = vsub.f32 %v360, %v5739
        %v5741 = vand.u32 %v5740, 4294901760
        %5742 = vmatprep.mubr.f32.mxu0 %v5741
        %v5743 = vand.u32 %v359, 4294901760
        %v5744 = vsub.f32 %v359, %v5743
        %v5745 = vand.u32 %v5744, 4294901760
        %5746 = vmatmul.mubr.f32.gmra.mxu0 %v5745
        %v5747 = vpop.f32.mrf.mxu0
        %v5748 = vadd.f32 %v5495, %v5747
        %v5749 = vpop.f32.mrf.mxu0
        %v5750 = vand.u32 %v366, 4294901760
        %v5751 = vsub.f32 %v366, %v5750
        %v5752 = vand.u32 %v5751, 4294901760
        %5753 = vmatprep.mubr.f32.mxu0 %v5752
        %v5754 = vand.u32 %v365, 4294901760
        %v5755 = vsub.f32 %v365, %v5754
        %v5756 = vand.u32 %v5755, 4294901760
        %5757 = vmatmul.mubr.f32.gmra.mxu0 %v5756
        %v5758 = vpop.f32.mrf.mxu0
        %v5759 = vadd.f32 %v5504, %v5758
        %v5760 = vpop.f32.mrf.mxu0
        %v5761 = vand.u32 %v372, 4294901760
        %v5762 = vsub.f32 %v372, %v5761
        %v5763 = vand.u32 %v5762, 4294901760
        %5764 = vmatprep.mubr.f32.mxu0 %v5763
        %v5765 = vand.u32 %v371, 4294901760
        %v5766 = vsub.f32 %v371, %v5765
        %v5767 = vand.u32 %v5766, 4294901760
        %5768 = vmatmul.mubr.f32.gmra.mxu0 %v5767
        %v5769 = vpop.f32.mrf.mxu0
        %v5770 = vadd.f32 %v5513, %v5769
        %v5771 = vpop.f32.mrf.mxu0
        %v5772 = vand.u32 %v378, 4294901760
        %v5773 = vsub.f32 %v378, %v5772
        %v5774 = vand.u32 %v5773, 4294901760
        %5775 = vmatprep.mubr.f32.mxu0 %v5774
        %v5776 = vand.u32 %v377, 4294901760
        %v5777 = vsub.f32 %v377, %v5776
        %v5778 = vand.u32 %v5777, 4294901760
        %5779 = vmatmul.mubr.f32.gmra.mxu0 %v5778
        %v5780 = vpop.f32.mrf.mxu0
        %v5781 = vadd.f32 %v5522, %v5780
        %v5782 = vpop.f32.mrf.mxu0
        %v5783 = vand.u32 %v384, 4294901760
        %v5784 = vsub.f32 %v384, %v5783
        %v5785 = vand.u32 %v5784, 4294901760
        %5786 = vmatprep.mubr.f32.mxu0 %v5785
        %v5787 = vand.u32 %v383, 4294901760
        %v5788 = vsub.f32 %v383, %v5787
        %v5789 = vand.u32 %v5788, 4294901760
        %5790 = vmatmul.mubr.f32.gmra.mxu0 %v5789
        %v5791 = vpop.f32.mrf.mxu0
        %v5792 = vadd.f32 %v5531, %v5791
        %v5793 = vpop.f32.mrf.mxu0
        %v5794 = vand.u32 %v390, 4294901760
        %v5795 = vsub.f32 %v390, %v5794
        %v5796 = vand.u32 %v5795, 4294901760
        %5797 = vmatprep.mubr.f32.mxu0 %v5796
        %v5798 = vand.u32 %v389, 4294901760
        %v5799 = vsub.f32 %v389, %v5798
        %v5800 = vand.u32 %v5799, 4294901760
        %5801 = vmatmul.mubr.f32.gmra.mxu0 %v5800
        %v5802 = vpop.f32.mrf.mxu0
        %v5803 = vadd.f32 %v5540, %v5802
        %v5804 = vpop.f32.mrf.mxu0
        %v5805 = vand.u32 %v396, 4294901760
        %v5806 = vsub.f32 %v396, %v5805
        %v5807 = vand.u32 %v5806, 4294901760
        %5808 = vmatprep.mubr.f32.mxu0 %v5807
        %v5809 = vand.u32 %v395, 4294901760
        %v5810 = vsub.f32 %v395, %v5809
        %v5811 = vand.u32 %v5810, 4294901760
        %5812 = vmatmul.mubr.f32.gmra.mxu0 %v5811
        %v5813 = vpop.f32.mrf.mxu0
        %v5814 = vadd.f32 %v5549, %v5813
        %v5815 = vpop.f32.mrf.mxu0
        %v5816 = vand.u32 %v402, 4294901760
        %v5817 = vsub.f32 %v402, %v5816
        %v5818 = vand.u32 %v5817, 4294901760
        %5819 = vmatprep.mubr.f32.mxu0 %v5818
        %v5820 = vand.u32 %v401, 4294901760
        %v5821 = vsub.f32 %v401, %v5820
        %v5822 = vand.u32 %v5821, 4294901760
        %5823 = vmatmul.mubr.f32.gmra.mxu0 %v5822
        %v5824 = vpop.f32.mrf.mxu0
        %v5825 = vadd.f32 %v5558, %v5824
        %v5826 = vpop.f32.mrf.mxu0
        %v5827 = vand.u32 %v408, 4294901760
        %v5828 = vsub.f32 %v408, %v5827
        %v5829 = vand.u32 %v5828, 4294901760
        %5830 = vmatprep.mubr.f32.mxu0 %v5829
        %v5831 = vand.u32 %v407, 4294901760
        %v5832 = vsub.f32 %v407, %v5831
        %v5833 = vand.u32 %v5832, 4294901760
        %5834 = vmatmul.mubr.f32.gmra.mxu0 %v5833
        %v5835 = vpop.f32.mrf.mxu0
        %v5836 = vadd.f32 %v5567, %v5835
        %v5837 = vpop.f32.mrf.mxu0
        %v5838 = vand.u32 %v414, 4294901760
        %v5839 = vsub.f32 %v414, %v5838
        %v5840 = vand.u32 %v5839, 4294901760
        %5841 = vmatprep.mubr.f32.mxu0 %v5840
        %v5842 = vand.u32 %v413, 4294901760
        %v5843 = vsub.f32 %v413, %v5842
        %v5844 = vand.u32 %v5843, 4294901760
        %5845 = vmatmul.mubr.f32.gmra.mxu0 %v5844
        %v5846 = vpop.f32.mrf.mxu0
        %v5847 = vadd.f32 %v5576, %v5846
        %v5848 = vpop.f32.mrf.mxu0
        %v5849 = vand.u32 %v420, 4294901760
        %v5850 = vsub.f32 %v420, %v5849
        %v5851 = vand.u32 %v5850, 4294901760
        %5852 = vmatprep.mubr.f32.mxu0 %v5851
        %v5853 = vand.u32 %v419, 4294901760
        %v5854 = vsub.f32 %v419, %v5853
        %v5855 = vand.u32 %v5854, 4294901760
        %5856 = vmatmul.mubr.f32.gmra.mxu0 %v5855
        %v5857 = vpop.f32.mrf.mxu0
        %v5858 = vadd.f32 %v5585, %v5857
        %v5859 = vpop.f32.mrf.mxu0
        %5860 = vdwg.mxu0
        %5861 = vmatprep.subr.mxu0 0.0
        %v5862 = vand.u32 %v310, 4294901760
        %v5863 = vsub.f32 %v310, %v5862
        %v5864 = vand.u32 %v5863, 4294901760
        %5865 = vmatpush1.msra.mxu0 %v5864
        %5866 = vmatprep.subr.mxu0 0.0
        %v5867 = vand.u32 %v309, 4294901760
        %v5868 = vsub.f32 %v309, %v5867
        %v5869 = vand.u32 %v5868, 4294901760
        %5870 = vmatpush1.msra.mxu0 %v5869
        %5871 = vmatprep.subr.mxu0 0.0
        %v5872 = vand.u32 %v308, 4294901760
        %v5873 = vsub.f32 %v308, %v5872
        %v5874 = vand.u32 %v5873, 4294901760
        %5875 = vmatpush1.msra.mxu0 %v5874
        %5876 = vmatprep.subr.mxu0 0.0
        %v5877 = vand.u32 %v307, 4294901760
        %v5878 = vsub.f32 %v307, %v5877
        %v5879 = vand.u32 %v5878, 4294901760
        %5880 = vmatpush1.msra.mxu0 %v5879
        %5881 = vmatprep.subr.mxu0 0.0
        %v5882 = vand.u32 %v306, 4294901760
        %v5883 = vsub.f32 %v306, %v5882
        %v5884 = vand.u32 %v5883, 4294901760
        %5885 = vmatpush1.msra.mxu0 %v5884
        %5886 = vmatprep.subr.mxu0 0.0
        %v5887 = vand.u32 %v305, 4294901760
        %v5888 = vsub.f32 %v305, %v5887
        %v5889 = vand.u32 %v5888, 4294901760
        %5890 = vmatpush1.msra.mxu0 %v5889
        %5891 = vmatprep.subr.mxu0 0.0
        %v5892 = vand.u32 %v304, 4294901760
        %v5893 = vsub.f32 %v304, %v5892
        %v5894 = vand.u32 %v5893, 4294901760
        %5895 = vmatpush1.msra.mxu0 %v5894
        %5896 = vmatprep.subr.mxu0 0.0
        %v5897 = vand.u32 %v303, 4294901760
        %v5898 = vsub.f32 %v303, %v5897
        %v5899 = vand.u32 %v5898, 4294901760
        %5900 = vmatpush1.msra.mxu0 %v5899
        %5901 = vmatprep.subr.mxu0 0.0
        %v5902 = vand.u32 %v302, 4294901760
        %v5903 = vsub.f32 %v302, %v5902
        %v5904 = vand.u32 %v5903, 4294901760
        %5905 = vmatpush1.msra.mxu0 %v5904
        %5906 = vmatprep.subr.mxu0 0.0
        %v5907 = vand.u32 %v301, 4294901760
        %v5908 = vsub.f32 %v301, %v5907
        %v5909 = vand.u32 %v5908, 4294901760
        %5910 = vmatpush1.msra.mxu0 %v5909
        %5911 = vmatprep.subr.mxu0 0.0
        %v5912 = vand.u32 %v300, 4294901760
        %v5913 = vsub.f32 %v300, %v5912
        %v5914 = vand.u32 %v5913, 4294901760
        %5915 = vmatpush1.msra.mxu0 %v5914
        %5916 = vmatprep.subr.mxu0 0.0
        %v5917 = vand.u32 %v299, 4294901760
        %v5918 = vsub.f32 %v299, %v5917
        %v5919 = vand.u32 %v5918, 4294901760
        %5920 = vmatpush1.msra.mxu0 %v5919
        %5921 = vmatprep.subr.mxu0 0.0
        %v5922 = vand.u32 %v298, 4294901760
        %v5923 = vsub.f32 %v298, %v5922
        %v5924 = vand.u32 %v5923, 4294901760
        %5925 = vmatpush1.msra.mxu0 %v5924
        %5926 = vmatprep.subr.mxu0 0.0
        %v5927 = vand.u32 %v297, 4294901760
        %v5928 = vsub.f32 %v297, %v5927
        %v5929 = vand.u32 %v5928, 4294901760
        %5930 = vmatpush1.msra.mxu0 %v5929
        %5931 = vmatprep.subr.mxu0 0.0
        %v5932 = vand.u32 %v296, 4294901760
        %v5933 = vsub.f32 %v296, %v5932
        %v5934 = vand.u32 %v5933, 4294901760
        %5935 = vmatpush1.msra.mxu0 %v5934
        %5936 = vmatprep.subr.mxu0 0.0
        %v5937 = vand.u32 %v295, 4294901760
        %v5938 = vsub.f32 %v295, %v5937
        %v5939 = vand.u32 %v5938, 4294901760
        %5940 = vmatpush1.msra.mxu0 %v5939
        %5941 = vmatprep.subr.mxu0 0.0
        %v5942 = vand.u32 %v326, 4294901760
        %v5943 = vsub.f32 %v326, %v5942
        %v5944 = vand.u32 %v5943, 4294901760
        %5945 = vmatpush2.msra.mxu0 %v5944
        %5946 = vmatprep.subr.mxu0 0.0
        %v5947 = vand.u32 %v325, 4294901760
        %v5948 = vsub.f32 %v325, %v5947
        %v5949 = vand.u32 %v5948, 4294901760
        %5950 = vmatpush2.msra.mxu0 %v5949
        %5951 = vmatprep.subr.mxu0 0.0
        %v5952 = vand.u32 %v324, 4294901760
        %v5953 = vsub.f32 %v324, %v5952
        %v5954 = vand.u32 %v5953, 4294901760
        %5955 = vmatpush2.msra.mxu0 %v5954
        %5956 = vmatprep.subr.mxu0 0.0
        %v5957 = vand.u32 %v323, 4294901760
        %v5958 = vsub.f32 %v323, %v5957
        %v5959 = vand.u32 %v5958, 4294901760
        %5960 = vmatpush2.msra.mxu0 %v5959
        %5961 = vmatprep.subr.mxu0 0.0
        %v5962 = vand.u32 %v322, 4294901760
        %v5963 = vsub.f32 %v322, %v5962
        %v5964 = vand.u32 %v5963, 4294901760
        %5965 = vmatpush2.msra.mxu0 %v5964
        %5966 = vmatprep.subr.mxu0 0.0
        %v5967 = vand.u32 %v321, 4294901760
        %v5968 = vsub.f32 %v321, %v5967
        %v5969 = vand.u32 %v5968, 4294901760
        %5970 = vmatpush2.msra.mxu0 %v5969
        %5971 = vmatprep.subr.mxu0 0.0
        %v5972 = vand.u32 %v320, 4294901760
        %v5973 = vsub.f32 %v320, %v5972
        %v5974 = vand.u32 %v5973, 4294901760
        %5975 = vmatpush2.msra.mxu0 %v5974
        %5976 = vmatprep.subr.mxu0 0.0
        %v5977 = vand.u32 %v319, 4294901760
        %v5978 = vsub.f32 %v319, %v5977
        %v5979 = vand.u32 %v5978, 4294901760
        %5980 = vmatpush2.msra.mxu0 %v5979
        %5981 = vmatprep.subr.mxu0 0.0
        %v5982 = vand.u32 %v318, 4294901760
        %v5983 = vsub.f32 %v318, %v5982
        %v5984 = vand.u32 %v5983, 4294901760
        %5985 = vmatpush2.msra.mxu0 %v5984
        %5986 = vmatprep.subr.mxu0 0.0
        %v5987 = vand.u32 %v317, 4294901760
        %v5988 = vsub.f32 %v317, %v5987
        %v5989 = vand.u32 %v5988, 4294901760
        %5990 = vmatpush2.msra.mxu0 %v5989
        %5991 = vmatprep.subr.mxu0 0.0
        %v5992 = vand.u32 %v316, 4294901760
        %v5993 = vsub.f32 %v316, %v5992
        %v5994 = vand.u32 %v5993, 4294901760
        %5995 = vmatpush2.msra.mxu0 %v5994
        %5996 = vmatprep.subr.mxu0 0.0
        %v5997 = vand.u32 %v315, 4294901760
        %v5998 = vsub.f32 %v315, %v5997
        %v5999 = vand.u32 %v5998, 4294901760
        %6000 = vmatpush2.msra.mxu0 %v5999
        %6001 = vmatprep.subr.mxu0 0.0
        %v6002 = vand.u32 %v314, 4294901760
        %v6003 = vsub.f32 %v314, %v6002
        %v6004 = vand.u32 %v6003, 4294901760
        %6005 = vmatpush2.msra.mxu0 %v6004
        %6006 = vmatprep.subr.mxu0 0.0
        %v6007 = vand.u32 %v313, 4294901760
        %v6008 = vsub.f32 %v313, %v6007
        %v6009 = vand.u32 %v6008, 4294901760
        %6010 = vmatpush2.msra.mxu0 %v6009
        %6011 = vmatprep.subr.mxu0 0.0
        %v6012 = vand.u32 %v312, 4294901760
        %v6013 = vsub.f32 %v312, %v6012
        %v6014 = vand.u32 %v6013, 4294901760
        %6015 = vmatpush2.msra.mxu0 %v6014
        %6016 = vmatprep.subr.mxu0 0.0
        %v6017 = vand.u32 %v311, 4294901760
        %v6018 = vsub.f32 %v311, %v6017
        %v6019 = vand.u32 %v6018, 4294901760
        %6020 = vmatpush2.msra.mxu0 %v6019
        %v6021 = vand.u32 %v330, 4294901760
        %6022 = vmatprep.mubr.f32.mxu0 %v6021
        %v6023 = vand.u32 %v329, 4294901760
        %6024 = vmatmul.mubr.f32.gmra.mxu0 %v6023
        %v6025 = vpop.f32.mrf.mxu0
        %v6026 = vadd.f32 %v5693, %v6025
        %v6027 = vpop.f32.mrf.mxu0
        %v6028 = vand.u32 %v336, 4294901760
        %6029 = vmatprep.mubr.f32.mxu0 %v6028
        %v6030 = vand.u32 %v335, 4294901760
        %6031 = vmatmul.mubr.f32.gmra.mxu0 %v6030
        %v6032 = vpop.f32.mrf.mxu0
        %v6033 = vadd.f32 %v5704, %v6032
        %v6034 = vpop.f32.mrf.mxu0
        %v6035 = vand.u32 %v342, 4294901760
        %6036 = vmatprep.mubr.f32.mxu0 %v6035
        %v6037 = vand.u32 %v341, 4294901760
        %6038 = vmatmul.mubr.f32.gmra.mxu0 %v6037
        %v6039 = vpop.f32.mrf.mxu0
        %v6040 = vadd.f32 %v5715, %v6039
        %v6041 = vpop.f32.mrf.mxu0
        %v6042 = vand.u32 %v348, 4294901760
        %6043 = vmatprep.mubr.f32.mxu0 %v6042
        %v6044 = vand.u32 %v347, 4294901760
        %6045 = vmatmul.mubr.f32.gmra.mxu0 %v6044
        %v6046 = vpop.f32.mrf.mxu0
        %v6047 = vadd.f32 %v5726, %v6046
        %v6048 = vpop.f32.mrf.mxu0
        %v6049 = vand.u32 %v354, 4294901760
        %6050 = vmatprep.mubr.f32.mxu0 %v6049
        %v6051 = vand.u32 %v353, 4294901760
        %6052 = vmatmul.mubr.f32.gmra.mxu0 %v6051
        %v6053 = vpop.f32.mrf.mxu0
        %v6054 = vadd.f32 %v5737, %v6053
        %v6055 = vpop.f32.mrf.mxu0
        %v6056 = vand.u32 %v360, 4294901760
        %6057 = vmatprep.mubr.f32.mxu0 %v6056
        %v6058 = vand.u32 %v359, 4294901760
        %6059 = vmatmul.mubr.f32.gmra.mxu0 %v6058
        %v6060 = vpop.f32.mrf.mxu0
        %v6061 = vadd.f32 %v5748, %v6060
        %v6062 = vpop.f32.mrf.mxu0
        %v6063 = vand.u32 %v366, 4294901760
        %6064 = vmatprep.mubr.f32.mxu0 %v6063
        %v6065 = vand.u32 %v365, 4294901760
        %6066 = vmatmul.mubr.f32.gmra.mxu0 %v6065
        %v6067 = vpop.f32.mrf.mxu0
        %v6068 = vadd.f32 %v5759, %v6067
        %v6069 = vpop.f32.mrf.mxu0
        %v6070 = vand.u32 %v372, 4294901760
        %6071 = vmatprep.mubr.f32.mxu0 %v6070
        %v6072 = vand.u32 %v371, 4294901760
        %6073 = vmatmul.mubr.f32.gmra.mxu0 %v6072
        %v6074 = vpop.f32.mrf.mxu0
        %v6075 = vadd.f32 %v5770, %v6074
        %v6076 = vpop.f32.mrf.mxu0
        %v6077 = vand.u32 %v378, 4294901760
        %6078 = vmatprep.mubr.f32.mxu0 %v6077
        %v6079 = vand.u32 %v377, 4294901760
        %6080 = vmatmul.mubr.f32.gmra.mxu0 %v6079
        %v6081 = vpop.f32.mrf.mxu0
        %v6082 = vadd.f32 %v5781, %v6081
        %v6083 = vpop.f32.mrf.mxu0
        %v6084 = vand.u32 %v384, 4294901760
        %6085 = vmatprep.mubr.f32.mxu0 %v6084
        %v6086 = vand.u32 %v383, 4294901760
        %6087 = vmatmul.mubr.f32.gmra.mxu0 %v6086
        %v6088 = vpop.f32.mrf.mxu0
        %v6089 = vadd.f32 %v5792, %v6088
        %v6090 = vpop.f32.mrf.mxu0
        %v6091 = vand.u32 %v390, 4294901760
        %6092 = vmatprep.mubr.f32.mxu0 %v6091
        %v6093 = vand.u32 %v389, 4294901760
        %6094 = vmatmul.mubr.f32.gmra.mxu0 %v6093
        %v6095 = vpop.f32.mrf.mxu0
        %v6096 = vadd.f32 %v5803, %v6095
        %v6097 = vpop.f32.mrf.mxu0
        %v6098 = vand.u32 %v396, 4294901760
        %6099 = vmatprep.mubr.f32.mxu0 %v6098
        %v6100 = vand.u32 %v395, 4294901760
        %6101 = vmatmul.mubr.f32.gmra.mxu0 %v6100
        %v6102 = vpop.f32.mrf.mxu0
        %v6103 = vadd.f32 %v5814, %v6102
        %v6104 = vpop.f32.mrf.mxu0
        %v6105 = vand.u32 %v402, 4294901760
        %6106 = vmatprep.mubr.f32.mxu0 %v6105
        %v6107 = vand.u32 %v401, 4294901760
        %6108 = vmatmul.mubr.f32.gmra.mxu0 %v6107
        %v6109 = vpop.f32.mrf.mxu0
        %v6110 = vadd.f32 %v5825, %v6109
        %v6111 = vpop.f32.mrf.mxu0
        %v6112 = vand.u32 %v408, 4294901760
        %6113 = vmatprep.mubr.f32.mxu0 %v6112
        %v6114 = vand.u32 %v407, 4294901760
        %6115 = vmatmul.mubr.f32.gmra.mxu0 %v6114
        %v6116 = vpop.f32.mrf.mxu0
        %v6117 = vadd.f32 %v5836, %v6116
        %v6118 = vpop.f32.mrf.mxu0
        %v6119 = vand.u32 %v414, 4294901760
        %6120 = vmatprep.mubr.f32.mxu0 %v6119
        %v6121 = vand.u32 %v413, 4294901760
        %6122 = vmatmul.mubr.f32.gmra.mxu0 %v6121
        %v6123 = vpop.f32.mrf.mxu0
        %v6124 = vadd.f32 %v5847, %v6123
        %v6125 = vpop.f32.mrf.mxu0
        %v6126 = vand.u32 %v420, 4294901760
        %6127 = vmatprep.mubr.f32.mxu0 %v6126
        %v6128 = vand.u32 %v419, 4294901760
        %6129 = vmatmul.mubr.f32.gmra.mxu0 %v6128
        %v6130 = vpop.f32.mrf.mxu0
        %v6131 = vadd.f32 %v5858, %v6130
        %v6132 = vpop.f32.mrf.mxu0
        %6133 = vdwg.mxu0
        %6134 = vmatprep.subr.mxu0 0.0
        %v6135 = vand.u32 %v310, 4294901760
        %6136 = vmatpush1.msra.mxu0 %v6135
        %6137 = vmatprep.subr.mxu0 0.0
        %v6138 = vand.u32 %v309, 4294901760
        %6139 = vmatpush1.msra.mxu0 %v6138
        %6140 = vmatprep.subr.mxu0 0.0
        %v6141 = vand.u32 %v308, 4294901760
        %6142 = vmatpush1.msra.mxu0 %v6141
        %6143 = vmatprep.subr.mxu0 0.0
        %v6144 = vand.u32 %v307, 4294901760
        %6145 = vmatpush1.msra.mxu0 %v6144
        %6146 = vmatprep.subr.mxu0 0.0
        %v6147 = vand.u32 %v306, 4294901760
        %6148 = vmatpush1.msra.mxu0 %v6147
        %6149 = vmatprep.subr.mxu0 0.0
        %v6150 = vand.u32 %v305, 4294901760
        %6151 = vmatpush1.msra.mxu0 %v6150
        %6152 = vmatprep.subr.mxu0 0.0
        %v6153 = vand.u32 %v304, 4294901760
        %6154 = vmatpush1.msra.mxu0 %v6153
        %6155 = vmatprep.subr.mxu0 0.0
        %v6156 = vand.u32 %v303, 4294901760
        %6157 = vmatpush1.msra.mxu0 %v6156
        %6158 = vmatprep.subr.mxu0 0.0
        %v6159 = vand.u32 %v302, 4294901760
        %6160 = vmatpush1.msra.mxu0 %v6159
        %6161 = vmatprep.subr.mxu0 0.0
        %v6162 = vand.u32 %v301, 4294901760
        %6163 = vmatpush1.msra.mxu0 %v6162
        %6164 = vmatprep.subr.mxu0 0.0
        %v6165 = vand.u32 %v300, 4294901760
        %6166 = vmatpush1.msra.mxu0 %v6165
        %6167 = vmatprep.subr.mxu0 0.0
        %v6168 = vand.u32 %v299, 4294901760
        %6169 = vmatpush1.msra.mxu0 %v6168
        %6170 = vmatprep.subr.mxu0 0.0
        %v6171 = vand.u32 %v298, 4294901760
        %6172 = vmatpush1.msra.mxu0 %v6171
        %6173 = vmatprep.subr.mxu0 0.0
        %v6174 = vand.u32 %v297, 4294901760
        %6175 = vmatpush1.msra.mxu0 %v6174
        %6176 = vmatprep.subr.mxu0 0.0
        %v6177 = vand.u32 %v296, 4294901760
        %6178 = vmatpush1.msra.mxu0 %v6177
        %6179 = vmatprep.subr.mxu0 0.0
        %v6180 = vand.u32 %v295, 4294901760
        %6181 = vmatpush1.msra.mxu0 %v6180
        %6182 = vmatprep.subr.mxu0 0.0
        %v6183 = vand.u32 %v326, 4294901760
        %6184 = vmatpush2.msra.mxu0 %v6183
        %6185 = vmatprep.subr.mxu0 0.0
        %v6186 = vand.u32 %v325, 4294901760
        %6187 = vmatpush2.msra.mxu0 %v6186
        %6188 = vmatprep.subr.mxu0 0.0
        %v6189 = vand.u32 %v324, 4294901760
        %6190 = vmatpush2.msra.mxu0 %v6189
        %6191 = vmatprep.subr.mxu0 0.0
        %v6192 = vand.u32 %v323, 4294901760
        %6193 = vmatpush2.msra.mxu0 %v6192
        %6194 = vmatprep.subr.mxu0 0.0
        %v6195 = vand.u32 %v322, 4294901760
        %6196 = vmatpush2.msra.mxu0 %v6195
        %6197 = vmatprep.subr.mxu0 0.0
        %v6198 = vand.u32 %v321, 4294901760
        %6199 = vmatpush2.msra.mxu0 %v6198
        %6200 = vmatprep.subr.mxu0 0.0
        %v6201 = vand.u32 %v320, 4294901760
        %6202 = vmatpush2.msra.mxu0 %v6201
        %6203 = vmatprep.subr.mxu0 0.0
        %v6204 = vand.u32 %v319, 4294901760
        %6205 = vmatpush2.msra.mxu0 %v6204
        %6206 = vmatprep.subr.mxu0 0.0
        %v6207 = vand.u32 %v318, 4294901760
        %6208 = vmatpush2.msra.mxu0 %v6207
        %6209 = vmatprep.subr.mxu0 0.0
        %v6210 = vand.u32 %v317, 4294901760
        %6211 = vmatpush2.msra.mxu0 %v6210
        %6212 = vmatprep.subr.mxu0 0.0
        %v6213 = vand.u32 %v316, 4294901760
        %6214 = vmatpush2.msra.mxu0 %v6213
        %6215 = vmatprep.subr.mxu0 0.0
        %v6216 = vand.u32 %v315, 4294901760
        %6217 = vmatpush2.msra.mxu0 %v6216
        %6218 = vmatprep.subr.mxu0 0.0
        %v6219 = vand.u32 %v314, 4294901760
        %6220 = vmatpush2.msra.mxu0 %v6219
        %6221 = vmatprep.subr.mxu0 0.0
        %v6222 = vand.u32 %v313, 4294901760
        %6223 = vmatpush2.msra.mxu0 %v6222
        %6224 = vmatprep.subr.mxu0 0.0
        %v6225 = vand.u32 %v312, 4294901760
        %6226 = vmatpush2.msra.mxu0 %v6225
        %6227 = vmatprep.subr.mxu0 0.0
        %v6228 = vand.u32 %v311, 4294901760
        %6229 = vmatpush2.msra.mxu0 %v6228
        %v6230 = vand.u32 %v330, 4294901760
        %6231 = vmatprep.mubr.f32.mxu0 %v6230
        %v6232 = vand.u32 %v329, 4294901760
        %6233 = vmatmul.mubr.f32.gmra.mxu0 %v6232
        %v6234 = vpop.f32.mrf.mxu0
        %v6235 = vadd.f32 %v6026, %v6234
        %v6236 = vpop.f32.mrf.mxu0
        %v6237 = vand.u32 %v336, 4294901760
        %6238 = vmatprep.mubr.f32.mxu0 %v6237
        %v6239 = vand.u32 %v335, 4294901760
        %6240 = vmatmul.mubr.f32.gmra.mxu0 %v6239
        %v6241 = vpop.f32.mrf.mxu0
        %v6242 = vadd.f32 %v6033, %v6241
        %v6243 = vpop.f32.mrf.mxu0
        %v6244 = vand.u32 %v342, 4294901760
        %6245 = vmatprep.mubr.f32.mxu0 %v6244
        %v6246 = vand.u32 %v341, 4294901760
        %6247 = vmatmul.mubr.f32.gmra.mxu0 %v6246
        %v6248 = vpop.f32.mrf.mxu0
        %v6249 = vadd.f32 %v6040, %v6248
        %v6250 = vpop.f32.mrf.mxu0
        %v6251 = vand.u32 %v348, 4294901760
        %6252 = vmatprep.mubr.f32.mxu0 %v6251
        %v6253 = vand.u32 %v347, 4294901760
        %6254 = vmatmul.mubr.f32.gmra.mxu0 %v6253
        %v6255 = vpop.f32.mrf.mxu0
        %v6256 = vadd.f32 %v6047, %v6255
        %v6257 = vpop.f32.mrf.mxu0
        %v6258 = vand.u32 %v354, 4294901760
        %6259 = vmatprep.mubr.f32.mxu0 %v6258
        %v6260 = vand.u32 %v353, 4294901760
        %6261 = vmatmul.mubr.f32.gmra.mxu0 %v6260
        %v6262 = vpop.f32.mrf.mxu0
        %v6263 = vadd.f32 %v6054, %v6262
        %v6264 = vpop.f32.mrf.mxu0
        %v6265 = vand.u32 %v360, 4294901760
        %6266 = vmatprep.mubr.f32.mxu0 %v6265
        %v6267 = vand.u32 %v359, 4294901760
        %6268 = vmatmul.mubr.f32.gmra.mxu0 %v6267
        %v6269 = vpop.f32.mrf.mxu0
        %v6270 = vadd.f32 %v6061, %v6269
        %v6271 = vpop.f32.mrf.mxu0
        %v6272 = vand.u32 %v366, 4294901760
        %6273 = vmatprep.mubr.f32.mxu0 %v6272
        %v6274 = vand.u32 %v365, 4294901760
        %6275 = vmatmul.mubr.f32.gmra.mxu0 %v6274
        %v6276 = vpop.f32.mrf.mxu0
        %v6277 = vadd.f32 %v6068, %v6276
        %v6278 = vpop.f32.mrf.mxu0
        %v6279 = vand.u32 %v372, 4294901760
        %6280 = vmatprep.mubr.f32.mxu0 %v6279
        %v6281 = vand.u32 %v371, 4294901760
        %6282 = vmatmul.mubr.f32.gmra.mxu0 %v6281
        %v6283 = vpop.f32.mrf.mxu0
        %v6284 = vadd.f32 %v6075, %v6283
        %v6285 = vpop.f32.mrf.mxu0
        %v6286 = vand.u32 %v378, 4294901760
        %6287 = vmatprep.mubr.f32.mxu0 %v6286
        %v6288 = vand.u32 %v377, 4294901760
        %6289 = vmatmul.mubr.f32.gmra.mxu0 %v6288
        %v6290 = vpop.f32.mrf.mxu0
        %v6291 = vadd.f32 %v6082, %v6290
        %v6292 = vpop.f32.mrf.mxu0
        %v6293 = vand.u32 %v384, 4294901760
        %6294 = vmatprep.mubr.f32.mxu0 %v6293
        %v6295 = vand.u32 %v383, 4294901760
        %6296 = vmatmul.mubr.f32.gmra.mxu0 %v6295
        %v6297 = vpop.f32.mrf.mxu0
        %v6298 = vadd.f32 %v6089, %v6297
        %v6299 = vpop.f32.mrf.mxu0
        %v6300 = vand.u32 %v390, 4294901760
        %6301 = vmatprep.mubr.f32.mxu0 %v6300
        %v6302 = vand.u32 %v389, 4294901760
        %6303 = vmatmul.mubr.f32.gmra.mxu0 %v6302
        %v6304 = vpop.f32.mrf.mxu0
        %v6305 = vadd.f32 %v6096, %v6304
        %v6306 = vpop.f32.mrf.mxu0
        %v6307 = vand.u32 %v396, 4294901760
        %6308 = vmatprep.mubr.f32.mxu0 %v6307
        %v6309 = vand.u32 %v395, 4294901760
        %6310 = vmatmul.mubr.f32.gmra.mxu0 %v6309
        %v6311 = vpop.f32.mrf.mxu0
        %v6312 = vadd.f32 %v6103, %v6311
        %v6313 = vpop.f32.mrf.mxu0
        %v6314 = vand.u32 %v402, 4294901760
        %6315 = vmatprep.mubr.f32.mxu0 %v6314
        %v6316 = vand.u32 %v401, 4294901760
        %6317 = vmatmul.mubr.f32.gmra.mxu0 %v6316
        %v6318 = vpop.f32.mrf.mxu0
        %v6319 = vadd.f32 %v6110, %v6318
        %v6320 = vpop.f32.mrf.mxu0
        %v6321 = vand.u32 %v408, 4294901760
        %6322 = vmatprep.mubr.f32.mxu0 %v6321
        %v6323 = vand.u32 %v407, 4294901760
        %6324 = vmatmul.mubr.f32.gmra.mxu0 %v6323
        %v6325 = vpop.f32.mrf.mxu0
        %v6326 = vadd.f32 %v6117, %v6325
        %v6327 = vpop.f32.mrf.mxu0
        %v6328 = vand.u32 %v414, 4294901760
        %6329 = vmatprep.mubr.f32.mxu0 %v6328
        %v6330 = vand.u32 %v413, 4294901760
        %6331 = vmatmul.mubr.f32.gmra.mxu0 %v6330
        %v6332 = vpop.f32.mrf.mxu0
        %v6333 = vadd.f32 %v6124, %v6332
        %v6334 = vpop.f32.mrf.mxu0
        %v6335 = vand.u32 %v420, 4294901760
        %6336 = vmatprep.mubr.f32.mxu0 %v6335
        %v6337 = vand.u32 %v419, 4294901760
        %6338 = vmatmul.mubr.f32.gmra.mxu0 %v6337
        %v6339 = vpop.f32.mrf.mxu0
        %v6340 = vadd.f32 %v6131, %v6339
        %v6341 = vpop.f32.mrf.mxu0
        %6342 = vdwg.mxu0
        %s6343 = scalar_lea.vmem %s3, 64
        %v6344 = vld [vmem:[%s6343] sm:$0xff]
        %v6345 = vld [vmem:[%s6343 + $0x8] sm:$0xff]
        %v6346 = vld [vmem:[%s6343 + $0x10] sm:$0xff]
        %v6347 = vld [vmem:[%s6343 + $0x18] sm:$0xff]
        %v6348 = vld [vmem:[%s6343 + $0x20] sm:$0xff]
        %v6349 = vld [vmem:[%s6343 + $0x28] sm:$0xff]
        %v6350 = vld [vmem:[%s6343 + $0x30] sm:$0xff]
        %v6351 = vld [vmem:[%s6343 + $0x38] sm:$0xff]
        %v6353 = vsel %vm454, %v6235, 0
        %v6356 = vsel %vm454, %v6242, 0
        %v6359 = vsel %vm454, %v6249, 0
        %v6362 = vsel %vm454, %v6256, 0
        %v6365 = vsel %vm454, %v6263, 0
        %v6368 = vsel %vm454, %v6270, 0
        %v6371 = vsel %vm454, %v6277, 0
        %v6374 = vsel %vm454, %v6284, 0
        %v6377 = vsel %vm454, %v6291, 0
        %v6380 = vsel %vm454, %v6298, 0
        %v6383 = vsel %vm454, %v6305, 0
        %v6386 = vsel %vm454, %v6312, 0
        %v6389 = vsel %vm454, %v6319, 0
        %v6392 = vsel %vm454, %v6326, 0
        %v6395 = vsel %vm454, %v6333, 0
        %v6398 = vsel %vm454, %v6340, 0
        %6400 = vmatprep.subr.mxu0 0.0
        %6401 = vmatpush1.msra.mxu0 0.0
        %6402 = vmatprep.subr.mxu0 0.0
        %6403 = vmatpush1.msra.mxu0 0.0
        %6404 = vmatprep.subr.mxu0 0.0
        %6405 = vmatpush1.msra.mxu0 0.0
        %6406 = vmatprep.subr.mxu0 0.0
        %6407 = vmatpush1.msra.mxu0 0.0
        %6408 = vmatprep.subr.mxu0 0.0
        %6409 = vmatpush1.msra.mxu0 0.0
        %6410 = vmatprep.subr.mxu0 0.0
        %6411 = vmatpush1.msra.mxu0 0.0
        %6412 = vmatprep.subr.mxu0 0.0
        %6413 = vmatpush1.msra.mxu0 0.0
        %6414 = vmatprep.subr.mxu0 0.0
        %6415 = vmatpush1.msra.mxu0 0.0
        %6416 = vmatprep.subr.mxu0 0.0
        %v6417 = vand.u32 %v6351, 4294901760
        %6418 = vmatpush1.msra.mxu0 %v6417
        %6419 = vmatprep.subr.mxu0 0.0
        %v6420 = vand.u32 %v6350, 4294901760
        %6421 = vmatpush1.msra.mxu0 %v6420
        %6422 = vmatprep.subr.mxu0 0.0
        %v6423 = vand.u32 %v6349, 4294901760
        %6424 = vmatpush1.msra.mxu0 %v6423
        %6425 = vmatprep.subr.mxu0 0.0
        %v6426 = vand.u32 %v6348, 4294901760
        %6427 = vmatpush1.msra.mxu0 %v6426
        %6428 = vmatprep.subr.mxu0 0.0
        %v6429 = vand.u32 %v6347, 4294901760
        %6430 = vmatpush1.msra.mxu0 %v6429
        %6431 = vmatprep.subr.mxu0 0.0
        %v6432 = vand.u32 %v6346, 4294901760
        %6433 = vmatpush1.msra.mxu0 %v6432
        %6434 = vmatprep.subr.mxu0 0.0
        %v6435 = vand.u32 %v6345, 4294901760
        %6436 = vmatpush1.msra.mxu0 %v6435
        %6437 = vmatprep.subr.mxu0 0.0
        %v6438 = vand.u32 %v6344, 4294901760
        %6439 = vmatpush1.msra.mxu0 %v6438
        %6440 = vmatprep.subr.mxu0 0.0
        %6441 = vmatpush2.msra.mxu0 0.0
        %6442 = vmatprep.subr.mxu0 0.0
        %6443 = vmatpush2.msra.mxu0 0.0
        %6444 = vmatprep.subr.mxu0 0.0
        %6445 = vmatpush2.msra.mxu0 0.0
        %6446 = vmatprep.subr.mxu0 0.0
        %6447 = vmatpush2.msra.mxu0 0.0
        %6448 = vmatprep.subr.mxu0 0.0
        %6449 = vmatpush2.msra.mxu0 0.0
        %6450 = vmatprep.subr.mxu0 0.0
        %6451 = vmatpush2.msra.mxu0 0.0
        %6452 = vmatprep.subr.mxu0 0.0
        %6453 = vmatpush2.msra.mxu0 0.0
        %6454 = vmatprep.subr.mxu0 0.0
        %6455 = vmatpush2.msra.mxu0 0.0
        %6456 = vmatprep.subr.mxu0 0.0
        %6457 = vmatpush2.msra.mxu0 0.0
        %6458 = vmatprep.subr.mxu0 0.0
        %6459 = vmatpush2.msra.mxu0 0.0
        %6460 = vmatprep.subr.mxu0 0.0
        %6461 = vmatpush2.msra.mxu0 0.0
        %6462 = vmatprep.subr.mxu0 0.0
        %6463 = vmatpush2.msra.mxu0 0.0
        %6464 = vmatprep.subr.mxu0 0.0
        %6465 = vmatpush2.msra.mxu0 0.0
        %6466 = vmatprep.subr.mxu0 0.0
        %6467 = vmatpush2.msra.mxu0 0.0
        %6468 = vmatprep.subr.mxu0 0.0
        %6469 = vmatpush2.msra.mxu0 0.0
        %6470 = vmatprep.subr.mxu0 0.0
        %6471 = vmatpush2.msra.mxu0 0.0
        %6472 = vmatprep.mubr.f32.mxu0 0.0
        %v6473 = vand.u32 %v6353, 4294901760
        %v6474 = vsub.f32 %v6353, %v6473
        %v6475 = vand.u32 %v6474, 4294901760
        %v6476 = vsub.f32 %v6474, %v6475
        %v6477 = vand.u32 %v6476, 4294901760
        %6478 = vmatmul.mubr.f32.gmra.mxu0 %v6477
        %v6479 = vpop.f32.mrf.mxu0
        %v6480 = vadd.f32 0.0, %v6479
        %v6481 = vpop.f32.mrf.mxu0
        %6482 = vmatprep.mubr.f32.mxu0 0.0
        %v6483 = vand.u32 %v6356, 4294901760
        %v6484 = vsub.f32 %v6356, %v6483
        %v6485 = vand.u32 %v6484, 4294901760
        %v6486 = vsub.f32 %v6484, %v6485
        %v6487 = vand.u32 %v6486, 4294901760
        %6488 = vmatmul.mubr.f32.gmra.mxu0 %v6487
        %v6489 = vpop.f32.mrf.mxu0
        %v6490 = vadd.f32 0.0, %v6489
        %v6491 = vpop.f32.mrf.mxu0
        %6492 = vmatprep.mubr.f32.mxu0 0.0
        %v6493 = vand.u32 %v6359, 4294901760
        %v6494 = vsub.f32 %v6359, %v6493
        %v6495 = vand.u32 %v6494, 4294901760
        %v6496 = vsub.f32 %v6494, %v6495
        %v6497 = vand.u32 %v6496, 4294901760
        %6498 = vmatmul.mubr.f32.gmra.mxu0 %v6497
        %v6499 = vpop.f32.mrf.mxu0
        %v6500 = vadd.f32 0.0, %v6499
        %v6501 = vpop.f32.mrf.mxu0
        %6502 = vmatprep.mubr.f32.mxu0 0.0
        %v6503 = vand.u32 %v6362, 4294901760
        %v6504 = vsub.f32 %v6362, %v6503
        %v6505 = vand.u32 %v6504, 4294901760
        %v6506 = vsub.f32 %v6504, %v6505
        %v6507 = vand.u32 %v6506, 4294901760
        %6508 = vmatmul.mubr.f32.gmra.mxu0 %v6507
        %v6509 = vpop.f32.mrf.mxu0
        %v6510 = vadd.f32 0.0, %v6509
        %v6511 = vpop.f32.mrf.mxu0
        %6512 = vmatprep.mubr.f32.mxu0 0.0
        %v6513 = vand.u32 %v6365, 4294901760
        %v6514 = vsub.f32 %v6365, %v6513
        %v6515 = vand.u32 %v6514, 4294901760
        %v6516 = vsub.f32 %v6514, %v6515
        %v6517 = vand.u32 %v6516, 4294901760
        %6518 = vmatmul.mubr.f32.gmra.mxu0 %v6517
        %v6519 = vpop.f32.mrf.mxu0
        %v6520 = vadd.f32 0.0, %v6519
        %v6521 = vpop.f32.mrf.mxu0
        %6522 = vmatprep.mubr.f32.mxu0 0.0
        %v6523 = vand.u32 %v6368, 4294901760
        %v6524 = vsub.f32 %v6368, %v6523
        %v6525 = vand.u32 %v6524, 4294901760
        %v6526 = vsub.f32 %v6524, %v6525
        %v6527 = vand.u32 %v6526, 4294901760
        %6528 = vmatmul.mubr.f32.gmra.mxu0 %v6527
        %v6529 = vpop.f32.mrf.mxu0
        %v6530 = vadd.f32 0.0, %v6529
        %v6531 = vpop.f32.mrf.mxu0
        %6532 = vmatprep.mubr.f32.mxu0 0.0
        %v6533 = vand.u32 %v6371, 4294901760
        %v6534 = vsub.f32 %v6371, %v6533
        %v6535 = vand.u32 %v6534, 4294901760
        %v6536 = vsub.f32 %v6534, %v6535
        %v6537 = vand.u32 %v6536, 4294901760
        %6538 = vmatmul.mubr.f32.gmra.mxu0 %v6537
        %v6539 = vpop.f32.mrf.mxu0
        %v6540 = vadd.f32 0.0, %v6539
        %v6541 = vpop.f32.mrf.mxu0
        %6542 = vmatprep.mubr.f32.mxu0 0.0
        %v6543 = vand.u32 %v6374, 4294901760
        %v6544 = vsub.f32 %v6374, %v6543
        %v6545 = vand.u32 %v6544, 4294901760
        %v6546 = vsub.f32 %v6544, %v6545
        %v6547 = vand.u32 %v6546, 4294901760
        %6548 = vmatmul.mubr.f32.gmra.mxu0 %v6547
        %v6549 = vpop.f32.mrf.mxu0
        %v6550 = vadd.f32 0.0, %v6549
        %v6551 = vpop.f32.mrf.mxu0
        %6552 = vmatprep.mubr.f32.mxu0 0.0
        %v6553 = vand.u32 %v6377, 4294901760
        %v6554 = vsub.f32 %v6377, %v6553
        %v6555 = vand.u32 %v6554, 4294901760
        %v6556 = vsub.f32 %v6554, %v6555
        %v6557 = vand.u32 %v6556, 4294901760
        %6558 = vmatmul.mubr.f32.gmra.mxu0 %v6557
        %v6559 = vpop.f32.mrf.mxu0
        %v6560 = vadd.f32 0.0, %v6559
        %v6561 = vpop.f32.mrf.mxu0
        %6562 = vmatprep.mubr.f32.mxu0 0.0
        %v6563 = vand.u32 %v6380, 4294901760
        %v6564 = vsub.f32 %v6380, %v6563
        %v6565 = vand.u32 %v6564, 4294901760
        %v6566 = vsub.f32 %v6564, %v6565
        %v6567 = vand.u32 %v6566, 4294901760
        %6568 = vmatmul.mubr.f32.gmra.mxu0 %v6567
        %v6569 = vpop.f32.mrf.mxu0
        %v6570 = vadd.f32 0.0, %v6569
        %v6571 = vpop.f32.mrf.mxu0
        %6572 = vmatprep.mubr.f32.mxu0 0.0
        %v6573 = vand.u32 %v6383, 4294901760
        %v6574 = vsub.f32 %v6383, %v6573
        %v6575 = vand.u32 %v6574, 4294901760
        %v6576 = vsub.f32 %v6574, %v6575
        %v6577 = vand.u32 %v6576, 4294901760
        %6578 = vmatmul.mubr.f32.gmra.mxu0 %v6577
        %v6579 = vpop.f32.mrf.mxu0
        %v6580 = vadd.f32 0.0, %v6579
        %v6581 = vpop.f32.mrf.mxu0
        %6582 = vmatprep.mubr.f32.mxu0 0.0
        %v6583 = vand.u32 %v6386, 4294901760
        %v6584 = vsub.f32 %v6386, %v6583
        %v6585 = vand.u32 %v6584, 4294901760
        %v6586 = vsub.f32 %v6584, %v6585
        %v6587 = vand.u32 %v6586, 4294901760
        %6588 = vmatmul.mubr.f32.gmra.mxu0 %v6587
        %v6589 = vpop.f32.mrf.mxu0
        %v6590 = vadd.f32 0.0, %v6589
        %v6591 = vpop.f32.mrf.mxu0
        %6592 = vmatprep.mubr.f32.mxu0 0.0
        %v6593 = vand.u32 %v6389, 4294901760
        %v6594 = vsub.f32 %v6389, %v6593
        %v6595 = vand.u32 %v6594, 4294901760
        %v6596 = vsub.f32 %v6594, %v6595
        %v6597 = vand.u32 %v6596, 4294901760
        %6598 = vmatmul.mubr.f32.gmra.mxu0 %v6597
        %v6599 = vpop.f32.mrf.mxu0
        %v6600 = vadd.f32 0.0, %v6599
        %v6601 = vpop.f32.mrf.mxu0
        %6602 = vmatprep.mubr.f32.mxu0 0.0
        %v6603 = vand.u32 %v6392, 4294901760
        %v6604 = vsub.f32 %v6392, %v6603
        %v6605 = vand.u32 %v6604, 4294901760
        %v6606 = vsub.f32 %v6604, %v6605
        %v6607 = vand.u32 %v6606, 4294901760
        %6608 = vmatmul.mubr.f32.gmra.mxu0 %v6607
        %v6609 = vpop.f32.mrf.mxu0
        %v6610 = vadd.f32 0.0, %v6609
        %v6611 = vpop.f32.mrf.mxu0
        %6612 = vmatprep.mubr.f32.mxu0 0.0
        %v6613 = vand.u32 %v6395, 4294901760
        %v6614 = vsub.f32 %v6395, %v6613
        %v6615 = vand.u32 %v6614, 4294901760
        %v6616 = vsub.f32 %v6614, %v6615
        %v6617 = vand.u32 %v6616, 4294901760
        %6618 = vmatmul.mubr.f32.gmra.mxu0 %v6617
        %v6619 = vpop.f32.mrf.mxu0
        %v6620 = vadd.f32 0.0, %v6619
        %v6621 = vpop.f32.mrf.mxu0
        %6622 = vmatprep.mubr.f32.mxu0 0.0
        %v6623 = vand.u32 %v6398, 4294901760
        %v6624 = vsub.f32 %v6398, %v6623
        %v6625 = vand.u32 %v6624, 4294901760
        %v6626 = vsub.f32 %v6624, %v6625
        %v6627 = vand.u32 %v6626, 4294901760
        %6628 = vmatmul.mubr.f32.gmra.mxu0 %v6627
        %v6629 = vpop.f32.mrf.mxu0
        %v6630 = vadd.f32 0.0, %v6629
        %v6631 = vpop.f32.mrf.mxu0
        %6632 = vdwg.mxu0
        %6633 = vmatprep.subr.mxu0 0.0
        %6634 = vmatpush1.msra.mxu0 0.0
        %6635 = vmatprep.subr.mxu0 0.0
        %6636 = vmatpush1.msra.mxu0 0.0
        %6637 = vmatprep.subr.mxu0 0.0
        %6638 = vmatpush1.msra.mxu0 0.0
        %6639 = vmatprep.subr.mxu0 0.0
        %6640 = vmatpush1.msra.mxu0 0.0
        %6641 = vmatprep.subr.mxu0 0.0
        %6642 = vmatpush1.msra.mxu0 0.0
        %6643 = vmatprep.subr.mxu0 0.0
        %6644 = vmatpush1.msra.mxu0 0.0
        %6645 = vmatprep.subr.mxu0 0.0
        %6646 = vmatpush1.msra.mxu0 0.0
        %6647 = vmatprep.subr.mxu0 0.0
        %6648 = vmatpush1.msra.mxu0 0.0
        %6649 = vmatprep.subr.mxu0 0.0
        %v6650 = vand.u32 %v6351, 4294901760
        %v6651 = vsub.f32 %v6351, %v6650
        %v6652 = vand.u32 %v6651, 4294901760
        %v6653 = vsub.f32 %v6651, %v6652
        %v6654 = vand.u32 %v6653, 4294901760
        %6655 = vmatpush1.msra.mxu0 %v6654
        %6656 = vmatprep.subr.mxu0 0.0
        %v6657 = vand.u32 %v6350, 4294901760
        %v6658 = vsub.f32 %v6350, %v6657
        %v6659 = vand.u32 %v6658, 4294901760
        %v6660 = vsub.f32 %v6658, %v6659
        %v6661 = vand.u32 %v6660, 4294901760
        %6662 = vmatpush1.msra.mxu0 %v6661
        %6663 = vmatprep.subr.mxu0 0.0
        %v6664 = vand.u32 %v6349, 4294901760
        %v6665 = vsub.f32 %v6349, %v6664
        %v6666 = vand.u32 %v6665, 4294901760
        %v6667 = vsub.f32 %v6665, %v6666
        %v6668 = vand.u32 %v6667, 4294901760
        %6669 = vmatpush1.msra.mxu0 %v6668
        %6670 = vmatprep.subr.mxu0 0.0
        %v6671 = vand.u32 %v6348, 4294901760
        %v6672 = vsub.f32 %v6348, %v6671
        %v6673 = vand.u32 %v6672, 4294901760
        %v6674 = vsub.f32 %v6672, %v6673
        %v6675 = vand.u32 %v6674, 4294901760
        %6676 = vmatpush1.msra.mxu0 %v6675
        %6677 = vmatprep.subr.mxu0 0.0
        %v6678 = vand.u32 %v6347, 4294901760
        %v6679 = vsub.f32 %v6347, %v6678
        %v6680 = vand.u32 %v6679, 4294901760
        %v6681 = vsub.f32 %v6679, %v6680
        %v6682 = vand.u32 %v6681, 4294901760
        %6683 = vmatpush1.msra.mxu0 %v6682
        %6684 = vmatprep.subr.mxu0 0.0
        %v6685 = vand.u32 %v6346, 4294901760
        %v6686 = vsub.f32 %v6346, %v6685
        %v6687 = vand.u32 %v6686, 4294901760
        %v6688 = vsub.f32 %v6686, %v6687
        %v6689 = vand.u32 %v6688, 4294901760
        %6690 = vmatpush1.msra.mxu0 %v6689
        %6691 = vmatprep.subr.mxu0 0.0
        %v6692 = vand.u32 %v6345, 4294901760
        %v6693 = vsub.f32 %v6345, %v6692
        %v6694 = vand.u32 %v6693, 4294901760
        %v6695 = vsub.f32 %v6693, %v6694
        %v6696 = vand.u32 %v6695, 4294901760
        %6697 = vmatpush1.msra.mxu0 %v6696
        %6698 = vmatprep.subr.mxu0 0.0
        %v6699 = vand.u32 %v6344, 4294901760
        %v6700 = vsub.f32 %v6344, %v6699
        %v6701 = vand.u32 %v6700, 4294901760
        %v6702 = vsub.f32 %v6700, %v6701
        %v6703 = vand.u32 %v6702, 4294901760
        %6704 = vmatpush1.msra.mxu0 %v6703
        %6705 = vmatprep.subr.mxu0 0.0
        %6706 = vmatpush2.msra.mxu0 0.0
        %6707 = vmatprep.subr.mxu0 0.0
        %6708 = vmatpush2.msra.mxu0 0.0
        %6709 = vmatprep.subr.mxu0 0.0
        %6710 = vmatpush2.msra.mxu0 0.0
        %6711 = vmatprep.subr.mxu0 0.0
        %6712 = vmatpush2.msra.mxu0 0.0
        %6713 = vmatprep.subr.mxu0 0.0
        %6714 = vmatpush2.msra.mxu0 0.0
        %6715 = vmatprep.subr.mxu0 0.0
        %6716 = vmatpush2.msra.mxu0 0.0
        %6717 = vmatprep.subr.mxu0 0.0
        %6718 = vmatpush2.msra.mxu0 0.0
        %6719 = vmatprep.subr.mxu0 0.0
        %6720 = vmatpush2.msra.mxu0 0.0
        %6721 = vmatprep.subr.mxu0 0.0
        %6722 = vmatpush2.msra.mxu0 0.0
        %6723 = vmatprep.subr.mxu0 0.0
        %6724 = vmatpush2.msra.mxu0 0.0
        %6725 = vmatprep.subr.mxu0 0.0
        %6726 = vmatpush2.msra.mxu0 0.0
        %6727 = vmatprep.subr.mxu0 0.0
        %6728 = vmatpush2.msra.mxu0 0.0
        %6729 = vmatprep.subr.mxu0 0.0
        %6730 = vmatpush2.msra.mxu0 0.0
        %6731 = vmatprep.subr.mxu0 0.0
        %6732 = vmatpush2.msra.mxu0 0.0
        %6733 = vmatprep.subr.mxu0 0.0
        %6734 = vmatpush2.msra.mxu0 0.0
        %6735 = vmatprep.subr.mxu0 0.0
        %6736 = vmatpush2.msra.mxu0 0.0
        %6737 = vmatprep.mubr.f32.mxu0 0.0
        %v6738 = vand.u32 %v6353, 4294901760
        %6739 = vmatmul.mubr.f32.gmra.mxu0 %v6738
        %v6740 = vpop.f32.mrf.mxu0
        %v6741 = vadd.f32 %v6480, %v6740
        %v6742 = vpop.f32.mrf.mxu0
        %6743 = vmatprep.mubr.f32.mxu0 0.0
        %v6744 = vand.u32 %v6356, 4294901760
        %6745 = vmatmul.mubr.f32.gmra.mxu0 %v6744
        %v6746 = vpop.f32.mrf.mxu0
        %v6747 = vadd.f32 %v6490, %v6746
        %v6748 = vpop.f32.mrf.mxu0
        %6749 = vmatprep.mubr.f32.mxu0 0.0
        %v6750 = vand.u32 %v6359, 4294901760
        %6751 = vmatmul.mubr.f32.gmra.mxu0 %v6750
        %v6752 = vpop.f32.mrf.mxu0
        %v6753 = vadd.f32 %v6500, %v6752
        %v6754 = vpop.f32.mrf.mxu0
        %6755 = vmatprep.mubr.f32.mxu0 0.0
        %v6756 = vand.u32 %v6362, 4294901760
        %6757 = vmatmul.mubr.f32.gmra.mxu0 %v6756
        %v6758 = vpop.f32.mrf.mxu0
        %v6759 = vadd.f32 %v6510, %v6758
        %v6760 = vpop.f32.mrf.mxu0
        %6761 = vmatprep.mubr.f32.mxu0 0.0
        %v6762 = vand.u32 %v6365, 4294901760
        %6763 = vmatmul.mubr.f32.gmra.mxu0 %v6762
        %v6764 = vpop.f32.mrf.mxu0
        %v6765 = vadd.f32 %v6520, %v6764
        %v6766 = vpop.f32.mrf.mxu0
        %6767 = vmatprep.mubr.f32.mxu0 0.0
        %v6768 = vand.u32 %v6368, 4294901760
        %6769 = vmatmul.mubr.f32.gmra.mxu0 %v6768
        %v6770 = vpop.f32.mrf.mxu0
        %v6771 = vadd.f32 %v6530, %v6770
        %v6772 = vpop.f32.mrf.mxu0
        %6773 = vmatprep.mubr.f32.mxu0 0.0
        %v6774 = vand.u32 %v6371, 4294901760
        %6775 = vmatmul.mubr.f32.gmra.mxu0 %v6774
        %v6776 = vpop.f32.mrf.mxu0
        %v6777 = vadd.f32 %v6540, %v6776
        %v6778 = vpop.f32.mrf.mxu0
        %6779 = vmatprep.mubr.f32.mxu0 0.0
        %v6780 = vand.u32 %v6374, 4294901760
        %6781 = vmatmul.mubr.f32.gmra.mxu0 %v6780
        %v6782 = vpop.f32.mrf.mxu0
        %v6783 = vadd.f32 %v6550, %v6782
        %v6784 = vpop.f32.mrf.mxu0
        %6785 = vmatprep.mubr.f32.mxu0 0.0
        %v6786 = vand.u32 %v6377, 4294901760
        %6787 = vmatmul.mubr.f32.gmra.mxu0 %v6786
        %v6788 = vpop.f32.mrf.mxu0
        %v6789 = vadd.f32 %v6560, %v6788
        %v6790 = vpop.f32.mrf.mxu0
        %6791 = vmatprep.mubr.f32.mxu0 0.0
        %v6792 = vand.u32 %v6380, 4294901760
        %6793 = vmatmul.mubr.f32.gmra.mxu0 %v6792
        %v6794 = vpop.f32.mrf.mxu0
        %v6795 = vadd.f32 %v6570, %v6794
        %v6796 = vpop.f32.mrf.mxu0
        %6797 = vmatprep.mubr.f32.mxu0 0.0
        %v6798 = vand.u32 %v6383, 4294901760
        %6799 = vmatmul.mubr.f32.gmra.mxu0 %v6798
        %v6800 = vpop.f32.mrf.mxu0
        %v6801 = vadd.f32 %v6580, %v6800
        %v6802 = vpop.f32.mrf.mxu0
        %6803 = vmatprep.mubr.f32.mxu0 0.0
        %v6804 = vand.u32 %v6386, 4294901760
        %6805 = vmatmul.mubr.f32.gmra.mxu0 %v6804
        %v6806 = vpop.f32.mrf.mxu0
        %v6807 = vadd.f32 %v6590, %v6806
        %v6808 = vpop.f32.mrf.mxu0
        %6809 = vmatprep.mubr.f32.mxu0 0.0
        %v6810 = vand.u32 %v6389, 4294901760
        %6811 = vmatmul.mubr.f32.gmra.mxu0 %v6810
        %v6812 = vpop.f32.mrf.mxu0
        %v6813 = vadd.f32 %v6600, %v6812
        %v6814 = vpop.f32.mrf.mxu0
        %6815 = vmatprep.mubr.f32.mxu0 0.0
        %v6816 = vand.u32 %v6392, 4294901760
        %6817 = vmatmul.mubr.f32.gmra.mxu0 %v6816
        %v6818 = vpop.f32.mrf.mxu0
        %v6819 = vadd.f32 %v6610, %v6818
        %v6820 = vpop.f32.mrf.mxu0
        %6821 = vmatprep.mubr.f32.mxu0 0.0
        %v6822 = vand.u32 %v6395, 4294901760
        %6823 = vmatmul.mubr.f32.gmra.mxu0 %v6822
        %v6824 = vpop.f32.mrf.mxu0
        %v6825 = vadd.f32 %v6620, %v6824
        %v6826 = vpop.f32.mrf.mxu0
        %6827 = vmatprep.mubr.f32.mxu0 0.0
        %v6828 = vand.u32 %v6398, 4294901760
        %6829 = vmatmul.mubr.f32.gmra.mxu0 %v6828
        %v6830 = vpop.f32.mrf.mxu0
        %v6831 = vadd.f32 %v6630, %v6830
        %v6832 = vpop.f32.mrf.mxu0
        %6833 = vdwg.mxu0
        %6834 = vmatprep.subr.mxu0 0.0
        %6835 = vmatpush1.msra.mxu0 0.0
        %6836 = vmatprep.subr.mxu0 0.0
        %6837 = vmatpush1.msra.mxu0 0.0
        %6838 = vmatprep.subr.mxu0 0.0
        %6839 = vmatpush1.msra.mxu0 0.0
        %6840 = vmatprep.subr.mxu0 0.0
        %6841 = vmatpush1.msra.mxu0 0.0
        %6842 = vmatprep.subr.mxu0 0.0
        %6843 = vmatpush1.msra.mxu0 0.0
        %6844 = vmatprep.subr.mxu0 0.0
        %6845 = vmatpush1.msra.mxu0 0.0
        %6846 = vmatprep.subr.mxu0 0.0
        %6847 = vmatpush1.msra.mxu0 0.0
        %6848 = vmatprep.subr.mxu0 0.0
        %6849 = vmatpush1.msra.mxu0 0.0
        %6850 = vmatprep.subr.mxu0 0.0
        %v6851 = vand.u32 %v6351, 4294901760
        %v6852 = vsub.f32 %v6351, %v6851
        %6853 = vmatpush1.msra.mxu0 %v6852
        %6854 = vmatprep.subr.mxu0 0.0
        %v6855 = vand.u32 %v6350, 4294901760
        %v6856 = vsub.f32 %v6350, %v6855
        %6857 = vmatpush1.msra.mxu0 %v6856
        %6858 = vmatprep.subr.mxu0 0.0
        %v6859 = vand.u32 %v6349, 4294901760
        %v6860 = vsub.f32 %v6349, %v6859
        %6861 = vmatpush1.msra.mxu0 %v6860
        %6862 = vmatprep.subr.mxu0 0.0
        %v6863 = vand.u32 %v6348, 4294901760
        %v6864 = vsub.f32 %v6348, %v6863
        %6865 = vmatpush1.msra.mxu0 %v6864
        %6866 = vmatprep.subr.mxu0 0.0
        %v6867 = vand.u32 %v6347, 4294901760
        %v6868 = vsub.f32 %v6347, %v6867
        %6869 = vmatpush1.msra.mxu0 %v6868
        %6870 = vmatprep.subr.mxu0 0.0
        %v6871 = vand.u32 %v6346, 4294901760
        %v6872 = vsub.f32 %v6346, %v6871
        %6873 = vmatpush1.msra.mxu0 %v6872
        %6874 = vmatprep.subr.mxu0 0.0
        %v6875 = vand.u32 %v6345, 4294901760
        %v6876 = vsub.f32 %v6345, %v6875
        %6877 = vmatpush1.msra.mxu0 %v6876
        %6878 = vmatprep.subr.mxu0 0.0
        %v6879 = vand.u32 %v6344, 4294901760
        %v6880 = vsub.f32 %v6344, %v6879
        %6881 = vmatpush1.msra.mxu0 %v6880
        %6882 = vmatprep.subr.mxu0 0.0
        %6883 = vmatpush2.msra.mxu0 0.0
        %6884 = vmatprep.subr.mxu0 0.0
        %6885 = vmatpush2.msra.mxu0 0.0
        %6886 = vmatprep.subr.mxu0 0.0
        %6887 = vmatpush2.msra.mxu0 0.0
        %6888 = vmatprep.subr.mxu0 0.0
        %6889 = vmatpush2.msra.mxu0 0.0
        %6890 = vmatprep.subr.mxu0 0.0
        %6891 = vmatpush2.msra.mxu0 0.0
        %6892 = vmatprep.subr.mxu0 0.0
        %6893 = vmatpush2.msra.mxu0 0.0
        %6894 = vmatprep.subr.mxu0 0.0
        %6895 = vmatpush2.msra.mxu0 0.0
        %6896 = vmatprep.subr.mxu0 0.0
        %6897 = vmatpush2.msra.mxu0 0.0
        %6898 = vmatprep.subr.mxu0 0.0
        %6899 = vmatpush2.msra.mxu0 0.0
        %6900 = vmatprep.subr.mxu0 0.0
        %6901 = vmatpush2.msra.mxu0 0.0
        %6902 = vmatprep.subr.mxu0 0.0
        %6903 = vmatpush2.msra.mxu0 0.0
        %6904 = vmatprep.subr.mxu0 0.0
        %6905 = vmatpush2.msra.mxu0 0.0
        %6906 = vmatprep.subr.mxu0 0.0
        %6907 = vmatpush2.msra.mxu0 0.0
        %6908 = vmatprep.subr.mxu0 0.0
        %6909 = vmatpush2.msra.mxu0 0.0
        %6910 = vmatprep.subr.mxu0 0.0
        %6911 = vmatpush2.msra.mxu0 0.0
        %6912 = vmatprep.subr.mxu0 0.0
        %6913 = vmatpush2.msra.mxu0 0.0
        %6914 = vmatprep.mubr.f32.mxu0 0.0
        %v6915 = vand.u32 %v6353, 4294901760
        %v6916 = vsub.f32 %v6353, %v6915
        %6917 = vmatmul.mubr.f32.gmra.mxu0 %v6916
        %v6918 = vpop.f32.mrf.mxu0
        %v6919 = vadd.f32 %v6741, %v6918
        %v6920 = vpop.f32.mrf.mxu0
        %6921 = vmatprep.mubr.f32.mxu0 0.0
        %v6922 = vand.u32 %v6356, 4294901760
        %v6923 = vsub.f32 %v6356, %v6922
        %6924 = vmatmul.mubr.f32.gmra.mxu0 %v6923
        %v6925 = vpop.f32.mrf.mxu0
        %v6926 = vadd.f32 %v6747, %v6925
        %v6927 = vpop.f32.mrf.mxu0
        %6928 = vmatprep.mubr.f32.mxu0 0.0
        %v6929 = vand.u32 %v6359, 4294901760
        %v6930 = vsub.f32 %v6359, %v6929
        %6931 = vmatmul.mubr.f32.gmra.mxu0 %v6930
        %v6932 = vpop.f32.mrf.mxu0
        %v6933 = vadd.f32 %v6753, %v6932
        %v6934 = vpop.f32.mrf.mxu0
        %6935 = vmatprep.mubr.f32.mxu0 0.0
        %v6936 = vand.u32 %v6362, 4294901760
        %v6937 = vsub.f32 %v6362, %v6936
        %6938 = vmatmul.mubr.f32.gmra.mxu0 %v6937
        %v6939 = vpop.f32.mrf.mxu0
        %v6940 = vadd.f32 %v6759, %v6939
        %v6941 = vpop.f32.mrf.mxu0
        %6942 = vmatprep.mubr.f32.mxu0 0.0
        %v6943 = vand.u32 %v6365, 4294901760
        %v6944 = vsub.f32 %v6365, %v6943
        %6945 = vmatmul.mubr.f32.gmra.mxu0 %v6944
        %v6946 = vpop.f32.mrf.mxu0
        %v6947 = vadd.f32 %v6765, %v6946
        %v6948 = vpop.f32.mrf.mxu0
        %6949 = vmatprep.mubr.f32.mxu0 0.0
        %v6950 = vand.u32 %v6368, 4294901760
        %v6951 = vsub.f32 %v6368, %v6950
        %6952 = vmatmul.mubr.f32.gmra.mxu0 %v6951
        %v6953 = vpop.f32.mrf.mxu0
        %v6954 = vadd.f32 %v6771, %v6953
        %v6955 = vpop.f32.mrf.mxu0
        %6956 = vmatprep.mubr.f32.mxu0 0.0
        %v6957 = vand.u32 %v6371, 4294901760
        %v6958 = vsub.f32 %v6371, %v6957
        %6959 = vmatmul.mubr.f32.gmra.mxu0 %v6958
        %v6960 = vpop.f32.mrf.mxu0
        %v6961 = vadd.f32 %v6777, %v6960
        %v6962 = vpop.f32.mrf.mxu0
        %6963 = vmatprep.mubr.f32.mxu0 0.0
        %v6964 = vand.u32 %v6374, 4294901760
        %v6965 = vsub.f32 %v6374, %v6964
        %6966 = vmatmul.mubr.f32.gmra.mxu0 %v6965
        %v6967 = vpop.f32.mrf.mxu0
        %v6968 = vadd.f32 %v6783, %v6967
        %v6969 = vpop.f32.mrf.mxu0
        %6970 = vmatprep.mubr.f32.mxu0 0.0
        %v6971 = vand.u32 %v6377, 4294901760
        %v6972 = vsub.f32 %v6377, %v6971
        %6973 = vmatmul.mubr.f32.gmra.mxu0 %v6972
        %v6974 = vpop.f32.mrf.mxu0
        %v6975 = vadd.f32 %v6789, %v6974
        %v6976 = vpop.f32.mrf.mxu0
        %6977 = vmatprep.mubr.f32.mxu0 0.0
        %v6978 = vand.u32 %v6380, 4294901760
        %v6979 = vsub.f32 %v6380, %v6978
        %6980 = vmatmul.mubr.f32.gmra.mxu0 %v6979
        %v6981 = vpop.f32.mrf.mxu0
        %v6982 = vadd.f32 %v6795, %v6981
        %v6983 = vpop.f32.mrf.mxu0
        %6984 = vmatprep.mubr.f32.mxu0 0.0
        %v6985 = vand.u32 %v6383, 4294901760
        %v6986 = vsub.f32 %v6383, %v6985
        %6987 = vmatmul.mubr.f32.gmra.mxu0 %v6986
        %v6988 = vpop.f32.mrf.mxu0
        %v6989 = vadd.f32 %v6801, %v6988
        %v6990 = vpop.f32.mrf.mxu0
        %6991 = vmatprep.mubr.f32.mxu0 0.0
        %v6992 = vand.u32 %v6386, 4294901760
        %v6993 = vsub.f32 %v6386, %v6992
        %6994 = vmatmul.mubr.f32.gmra.mxu0 %v6993
        %v6995 = vpop.f32.mrf.mxu0
        %v6996 = vadd.f32 %v6807, %v6995
        %v6997 = vpop.f32.mrf.mxu0
        %6998 = vmatprep.mubr.f32.mxu0 0.0
        %v6999 = vand.u32 %v6389, 4294901760
        %v7000 = vsub.f32 %v6389, %v6999
        %7001 = vmatmul.mubr.f32.gmra.mxu0 %v7000
        %v7002 = vpop.f32.mrf.mxu0
        %v7003 = vadd.f32 %v6813, %v7002
        %v7004 = vpop.f32.mrf.mxu0
        %7005 = vmatprep.mubr.f32.mxu0 0.0
        %v7006 = vand.u32 %v6392, 4294901760
        %v7007 = vsub.f32 %v6392, %v7006
        %7008 = vmatmul.mubr.f32.gmra.mxu0 %v7007
        %v7009 = vpop.f32.mrf.mxu0
        %v7010 = vadd.f32 %v6819, %v7009
        %v7011 = vpop.f32.mrf.mxu0
        %7012 = vmatprep.mubr.f32.mxu0 0.0
        %v7013 = vand.u32 %v6395, 4294901760
        %v7014 = vsub.f32 %v6395, %v7013
        %7015 = vmatmul.mubr.f32.gmra.mxu0 %v7014
        %v7016 = vpop.f32.mrf.mxu0
        %v7017 = vadd.f32 %v6825, %v7016
        %v7018 = vpop.f32.mrf.mxu0
        %7019 = vmatprep.mubr.f32.mxu0 0.0
        %v7020 = vand.u32 %v6398, 4294901760
        %v7021 = vsub.f32 %v6398, %v7020
        %7022 = vmatmul.mubr.f32.gmra.mxu0 %v7021
        %v7023 = vpop.f32.mrf.mxu0
        %v7024 = vadd.f32 %v6831, %v7023
        %v7025 = vpop.f32.mrf.mxu0
        %7026 = vdwg.mxu0
        %7027 = vmatprep.subr.mxu0 0.0
        %7028 = vmatpush1.msra.mxu0 0.0
        %7029 = vmatprep.subr.mxu0 0.0
        %7030 = vmatpush1.msra.mxu0 0.0
        %7031 = vmatprep.subr.mxu0 0.0
        %7032 = vmatpush1.msra.mxu0 0.0
        %7033 = vmatprep.subr.mxu0 0.0
        %7034 = vmatpush1.msra.mxu0 0.0
        %7035 = vmatprep.subr.mxu0 0.0
        %7036 = vmatpush1.msra.mxu0 0.0
        %7037 = vmatprep.subr.mxu0 0.0
        %7038 = vmatpush1.msra.mxu0 0.0
        %7039 = vmatprep.subr.mxu0 0.0
        %7040 = vmatpush1.msra.mxu0 0.0
        %7041 = vmatprep.subr.mxu0 0.0
        %7042 = vmatpush1.msra.mxu0 0.0
        %7043 = vmatprep.subr.mxu0 0.0
        %v7044 = vand.u32 %v6351, 4294901760
        %7045 = vmatpush1.msra.mxu0 %v7044
        %7046 = vmatprep.subr.mxu0 0.0
        %v7047 = vand.u32 %v6350, 4294901760
        %7048 = vmatpush1.msra.mxu0 %v7047
        %7049 = vmatprep.subr.mxu0 0.0
        %v7050 = vand.u32 %v6349, 4294901760
        %7051 = vmatpush1.msra.mxu0 %v7050
        %7052 = vmatprep.subr.mxu0 0.0
        %v7053 = vand.u32 %v6348, 4294901760
        %7054 = vmatpush1.msra.mxu0 %v7053
        %7055 = vmatprep.subr.mxu0 0.0
        %v7056 = vand.u32 %v6347, 4294901760
        %7057 = vmatpush1.msra.mxu0 %v7056
        %7058 = vmatprep.subr.mxu0 0.0
        %v7059 = vand.u32 %v6346, 4294901760
        %7060 = vmatpush1.msra.mxu0 %v7059
        %7061 = vmatprep.subr.mxu0 0.0
        %v7062 = vand.u32 %v6345, 4294901760
        %7063 = vmatpush1.msra.mxu0 %v7062
        %7064 = vmatprep.subr.mxu0 0.0
        %v7065 = vand.u32 %v6344, 4294901760
        %7066 = vmatpush1.msra.mxu0 %v7065
        %7067 = vmatprep.subr.mxu0 0.0
        %7068 = vmatpush2.msra.mxu0 0.0
        %7069 = vmatprep.subr.mxu0 0.0
        %7070 = vmatpush2.msra.mxu0 0.0
        %7071 = vmatprep.subr.mxu0 0.0
        %7072 = vmatpush2.msra.mxu0 0.0
        %7073 = vmatprep.subr.mxu0 0.0
        %7074 = vmatpush2.msra.mxu0 0.0
        %7075 = vmatprep.subr.mxu0 0.0
        %7076 = vmatpush2.msra.mxu0 0.0
        %7077 = vmatprep.subr.mxu0 0.0
        %7078 = vmatpush2.msra.mxu0 0.0
        %7079 = vmatprep.subr.mxu0 0.0
        %7080 = vmatpush2.msra.mxu0 0.0
        %7081 = vmatprep.subr.mxu0 0.0
        %7082 = vmatpush2.msra.mxu0 0.0
        %7083 = vmatprep.subr.mxu0 0.0
        %7084 = vmatpush2.msra.mxu0 0.0
        %7085 = vmatprep.subr.mxu0 0.0
        %7086 = vmatpush2.msra.mxu0 0.0
        %7087 = vmatprep.subr.mxu0 0.0
        %7088 = vmatpush2.msra.mxu0 0.0
        %7089 = vmatprep.subr.mxu0 0.0
        %7090 = vmatpush2.msra.mxu0 0.0
        %7091 = vmatprep.subr.mxu0 0.0
        %7092 = vmatpush2.msra.mxu0 0.0
        %7093 = vmatprep.subr.mxu0 0.0
        %7094 = vmatpush2.msra.mxu0 0.0
        %7095 = vmatprep.subr.mxu0 0.0
        %7096 = vmatpush2.msra.mxu0 0.0
        %7097 = vmatprep.subr.mxu0 0.0
        %7098 = vmatpush2.msra.mxu0 0.0
        %7099 = vmatprep.mubr.f32.mxu0 0.0
        %v7100 = vand.u32 %v6353, 4294901760
        %v7101 = vsub.f32 %v6353, %v7100
        %v7102 = vand.u32 %v7101, 4294901760
        %7103 = vmatmul.mubr.f32.gmra.mxu0 %v7102
        %v7104 = vpop.f32.mrf.mxu0
        %v7105 = vadd.f32 %v6919, %v7104
        %v7106 = vpop.f32.mrf.mxu0
        %7107 = vmatprep.mubr.f32.mxu0 0.0
        %v7108 = vand.u32 %v6356, 4294901760
        %v7109 = vsub.f32 %v6356, %v7108
        %v7110 = vand.u32 %v7109, 4294901760
        %7111 = vmatmul.mubr.f32.gmra.mxu0 %v7110
        %v7112 = vpop.f32.mrf.mxu0
        %v7113 = vadd.f32 %v6926, %v7112
        %v7114 = vpop.f32.mrf.mxu0
        %7115 = vmatprep.mubr.f32.mxu0 0.0
        %v7116 = vand.u32 %v6359, 4294901760
        %v7117 = vsub.f32 %v6359, %v7116
        %v7118 = vand.u32 %v7117, 4294901760
        %7119 = vmatmul.mubr.f32.gmra.mxu0 %v7118
        %v7120 = vpop.f32.mrf.mxu0
        %v7121 = vadd.f32 %v6933, %v7120
        %v7122 = vpop.f32.mrf.mxu0
        %7123 = vmatprep.mubr.f32.mxu0 0.0
        %v7124 = vand.u32 %v6362, 4294901760
        %v7125 = vsub.f32 %v6362, %v7124
        %v7126 = vand.u32 %v7125, 4294901760
        %7127 = vmatmul.mubr.f32.gmra.mxu0 %v7126
        %v7128 = vpop.f32.mrf.mxu0
        %v7129 = vadd.f32 %v6940, %v7128
        %v7130 = vpop.f32.mrf.mxu0
        %7131 = vmatprep.mubr.f32.mxu0 0.0
        %v7132 = vand.u32 %v6365, 4294901760
        %v7133 = vsub.f32 %v6365, %v7132
        %v7134 = vand.u32 %v7133, 4294901760
        %7135 = vmatmul.mubr.f32.gmra.mxu0 %v7134
        %v7136 = vpop.f32.mrf.mxu0
        %v7137 = vadd.f32 %v6947, %v7136
        %v7138 = vpop.f32.mrf.mxu0
        %7139 = vmatprep.mubr.f32.mxu0 0.0
        %v7140 = vand.u32 %v6368, 4294901760
        %v7141 = vsub.f32 %v6368, %v7140
        %v7142 = vand.u32 %v7141, 4294901760
        %7143 = vmatmul.mubr.f32.gmra.mxu0 %v7142
        %v7144 = vpop.f32.mrf.mxu0
        %v7145 = vadd.f32 %v6954, %v7144
        %v7146 = vpop.f32.mrf.mxu0
        %7147 = vmatprep.mubr.f32.mxu0 0.0
        %v7148 = vand.u32 %v6371, 4294901760
        %v7149 = vsub.f32 %v6371, %v7148
        %v7150 = vand.u32 %v7149, 4294901760
        %7151 = vmatmul.mubr.f32.gmra.mxu0 %v7150
        %v7152 = vpop.f32.mrf.mxu0
        %v7153 = vadd.f32 %v6961, %v7152
        %v7154 = vpop.f32.mrf.mxu0
        %7155 = vmatprep.mubr.f32.mxu0 0.0
        %v7156 = vand.u32 %v6374, 4294901760
        %v7157 = vsub.f32 %v6374, %v7156
        %v7158 = vand.u32 %v7157, 4294901760
        %7159 = vmatmul.mubr.f32.gmra.mxu0 %v7158
        %v7160 = vpop.f32.mrf.mxu0
        %v7161 = vadd.f32 %v6968, %v7160
        %v7162 = vpop.f32.mrf.mxu0
        %7163 = vmatprep.mubr.f32.mxu0 0.0
        %v7164 = vand.u32 %v6377, 4294901760
        %v7165 = vsub.f32 %v6377, %v7164
        %v7166 = vand.u32 %v7165, 4294901760
        %7167 = vmatmul.mubr.f32.gmra.mxu0 %v7166
        %v7168 = vpop.f32.mrf.mxu0
        %v7169 = vadd.f32 %v6975, %v7168
        %v7170 = vpop.f32.mrf.mxu0
        %7171 = vmatprep.mubr.f32.mxu0 0.0
        %v7172 = vand.u32 %v6380, 4294901760
        %v7173 = vsub.f32 %v6380, %v7172
        %v7174 = vand.u32 %v7173, 4294901760
        %7175 = vmatmul.mubr.f32.gmra.mxu0 %v7174
        %v7176 = vpop.f32.mrf.mxu0
        %v7177 = vadd.f32 %v6982, %v7176
        %v7178 = vpop.f32.mrf.mxu0
        %7179 = vmatprep.mubr.f32.mxu0 0.0
        %v7180 = vand.u32 %v6383, 4294901760
        %v7181 = vsub.f32 %v6383, %v7180
        %v7182 = vand.u32 %v7181, 4294901760
        %7183 = vmatmul.mubr.f32.gmra.mxu0 %v7182
        %v7184 = vpop.f32.mrf.mxu0
        %v7185 = vadd.f32 %v6989, %v7184
        %v7186 = vpop.f32.mrf.mxu0
        %7187 = vmatprep.mubr.f32.mxu0 0.0
        %v7188 = vand.u32 %v6386, 4294901760
        %v7189 = vsub.f32 %v6386, %v7188
        %v7190 = vand.u32 %v7189, 4294901760
        %7191 = vmatmul.mubr.f32.gmra.mxu0 %v7190
        %v7192 = vpop.f32.mrf.mxu0
        %v7193 = vadd.f32 %v6996, %v7192
        %v7194 = vpop.f32.mrf.mxu0
        %7195 = vmatprep.mubr.f32.mxu0 0.0
        %v7196 = vand.u32 %v6389, 4294901760
        %v7197 = vsub.f32 %v6389, %v7196
        %v7198 = vand.u32 %v7197, 4294901760
        %7199 = vmatmul.mubr.f32.gmra.mxu0 %v7198
        %v7200 = vpop.f32.mrf.mxu0
        %v7201 = vadd.f32 %v7003, %v7200
        %v7202 = vpop.f32.mrf.mxu0
        %7203 = vmatprep.mubr.f32.mxu0 0.0
        %v7204 = vand.u32 %v6392, 4294901760
        %v7205 = vsub.f32 %v6392, %v7204
        %v7206 = vand.u32 %v7205, 4294901760
        %7207 = vmatmul.mubr.f32.gmra.mxu0 %v7206
        %v7208 = vpop.f32.mrf.mxu0
        %v7209 = vadd.f32 %v7010, %v7208
        %v7210 = vpop.f32.mrf.mxu0
        %7211 = vmatprep.mubr.f32.mxu0 0.0
        %v7212 = vand.u32 %v6395, 4294901760
        %v7213 = vsub.f32 %v6395, %v7212
        %v7214 = vand.u32 %v7213, 4294901760
        %7215 = vmatmul.mubr.f32.gmra.mxu0 %v7214
        %v7216 = vpop.f32.mrf.mxu0
        %v7217 = vadd.f32 %v7017, %v7216
        %v7218 = vpop.f32.mrf.mxu0
        %7219 = vmatprep.mubr.f32.mxu0 0.0
        %v7220 = vand.u32 %v6398, 4294901760
        %v7221 = vsub.f32 %v6398, %v7220
        %v7222 = vand.u32 %v7221, 4294901760
        %7223 = vmatmul.mubr.f32.gmra.mxu0 %v7222
        %v7224 = vpop.f32.mrf.mxu0
        %v7225 = vadd.f32 %v7024, %v7224
        %v7226 = vpop.f32.mrf.mxu0
        %7227 = vdwg.mxu0
        %7228 = vmatprep.subr.mxu0 0.0
        %7229 = vmatpush1.msra.mxu0 0.0
        %7230 = vmatprep.subr.mxu0 0.0
        %7231 = vmatpush1.msra.mxu0 0.0
        %7232 = vmatprep.subr.mxu0 0.0
        %7233 = vmatpush1.msra.mxu0 0.0
        %7234 = vmatprep.subr.mxu0 0.0
        %7235 = vmatpush1.msra.mxu0 0.0
        %7236 = vmatprep.subr.mxu0 0.0
        %7237 = vmatpush1.msra.mxu0 0.0
        %7238 = vmatprep.subr.mxu0 0.0
        %7239 = vmatpush1.msra.mxu0 0.0
        %7240 = vmatprep.subr.mxu0 0.0
        %7241 = vmatpush1.msra.mxu0 0.0
        %7242 = vmatprep.subr.mxu0 0.0
        %7243 = vmatpush1.msra.mxu0 0.0
        %7244 = vmatprep.subr.mxu0 0.0
        %v7245 = vand.u32 %v6351, 4294901760
        %v7246 = vsub.f32 %v6351, %v7245
        %v7247 = vand.u32 %v7246, 4294901760
        %7248 = vmatpush1.msra.mxu0 %v7247
        %7249 = vmatprep.subr.mxu0 0.0
        %v7250 = vand.u32 %v6350, 4294901760
        %v7251 = vsub.f32 %v6350, %v7250
        %v7252 = vand.u32 %v7251, 4294901760
        %7253 = vmatpush1.msra.mxu0 %v7252
        %7254 = vmatprep.subr.mxu0 0.0
        %v7255 = vand.u32 %v6349, 4294901760
        %v7256 = vsub.f32 %v6349, %v7255
        %v7257 = vand.u32 %v7256, 4294901760
        %7258 = vmatpush1.msra.mxu0 %v7257
        %7259 = vmatprep.subr.mxu0 0.0
        %v7260 = vand.u32 %v6348, 4294901760
        %v7261 = vsub.f32 %v6348, %v7260
        %v7262 = vand.u32 %v7261, 4294901760
        %7263 = vmatpush1.msra.mxu0 %v7262
        %7264 = vmatprep.subr.mxu0 0.0
        %v7265 = vand.u32 %v6347, 4294901760
        %v7266 = vsub.f32 %v6347, %v7265
        %v7267 = vand.u32 %v7266, 4294901760
        %7268 = vmatpush1.msra.mxu0 %v7267
        %7269 = vmatprep.subr.mxu0 0.0
        %v7270 = vand.u32 %v6346, 4294901760
        %v7271 = vsub.f32 %v6346, %v7270
        %v7272 = vand.u32 %v7271, 4294901760
        %7273 = vmatpush1.msra.mxu0 %v7272
        %7274 = vmatprep.subr.mxu0 0.0
        %v7275 = vand.u32 %v6345, 4294901760
        %v7276 = vsub.f32 %v6345, %v7275
        %v7277 = vand.u32 %v7276, 4294901760
        %7278 = vmatpush1.msra.mxu0 %v7277
        %7279 = vmatprep.subr.mxu0 0.0
        %v7280 = vand.u32 %v6344, 4294901760
        %v7281 = vsub.f32 %v6344, %v7280
        %v7282 = vand.u32 %v7281, 4294901760
        %7283 = vmatpush1.msra.mxu0 %v7282
        %7284 = vmatprep.subr.mxu0 0.0
        %7285 = vmatpush2.msra.mxu0 0.0
        %7286 = vmatprep.subr.mxu0 0.0
        %7287 = vmatpush2.msra.mxu0 0.0
        %7288 = vmatprep.subr.mxu0 0.0
        %7289 = vmatpush2.msra.mxu0 0.0
        %7290 = vmatprep.subr.mxu0 0.0
        %7291 = vmatpush2.msra.mxu0 0.0
        %7292 = vmatprep.subr.mxu0 0.0
        %7293 = vmatpush2.msra.mxu0 0.0
        %7294 = vmatprep.subr.mxu0 0.0
        %7295 = vmatpush2.msra.mxu0 0.0
        %7296 = vmatprep.subr.mxu0 0.0
        %7297 = vmatpush2.msra.mxu0 0.0
        %7298 = vmatprep.subr.mxu0 0.0
        %7299 = vmatpush2.msra.mxu0 0.0
        %7300 = vmatprep.subr.mxu0 0.0
        %7301 = vmatpush2.msra.mxu0 0.0
        %7302 = vmatprep.subr.mxu0 0.0
        %7303 = vmatpush2.msra.mxu0 0.0
        %7304 = vmatprep.subr.mxu0 0.0
        %7305 = vmatpush2.msra.mxu0 0.0
        %7306 = vmatprep.subr.mxu0 0.0
        %7307 = vmatpush2.msra.mxu0 0.0
        %7308 = vmatprep.subr.mxu0 0.0
        %7309 = vmatpush2.msra.mxu0 0.0
        %7310 = vmatprep.subr.mxu0 0.0
        %7311 = vmatpush2.msra.mxu0 0.0
        %7312 = vmatprep.subr.mxu0 0.0
        %7313 = vmatpush2.msra.mxu0 0.0
        %7314 = vmatprep.subr.mxu0 0.0
        %7315 = vmatpush2.msra.mxu0 0.0
        %7316 = vmatprep.mubr.f32.mxu0 0.0
        %v7317 = vand.u32 %v6353, 4294901760
        %7318 = vmatmul.mubr.f32.gmra.mxu0 %v7317
        %v7319 = vpop.f32.mrf.mxu0
        %v7320 = vadd.f32 %v7105, %v7319
        %v7321 = vpop.f32.mrf.mxu0
        %7322 = vmatprep.mubr.f32.mxu0 0.0
        %v7323 = vand.u32 %v6356, 4294901760
        %7324 = vmatmul.mubr.f32.gmra.mxu0 %v7323
        %v7325 = vpop.f32.mrf.mxu0
        %v7326 = vadd.f32 %v7113, %v7325
        %v7327 = vpop.f32.mrf.mxu0
        %7328 = vmatprep.mubr.f32.mxu0 0.0
        %v7329 = vand.u32 %v6359, 4294901760
        %7330 = vmatmul.mubr.f32.gmra.mxu0 %v7329
        %v7331 = vpop.f32.mrf.mxu0
        %v7332 = vadd.f32 %v7121, %v7331
        %v7333 = vpop.f32.mrf.mxu0
        %7334 = vmatprep.mubr.f32.mxu0 0.0
        %v7335 = vand.u32 %v6362, 4294901760
        %7336 = vmatmul.mubr.f32.gmra.mxu0 %v7335
        %v7337 = vpop.f32.mrf.mxu0
        %v7338 = vadd.f32 %v7129, %v7337
        %v7339 = vpop.f32.mrf.mxu0
        %7340 = vmatprep.mubr.f32.mxu0 0.0
        %v7341 = vand.u32 %v6365, 4294901760
        %7342 = vmatmul.mubr.f32.gmra.mxu0 %v7341
        %v7343 = vpop.f32.mrf.mxu0
        %v7344 = vadd.f32 %v7137, %v7343
        %v7345 = vpop.f32.mrf.mxu0
        %7346 = vmatprep.mubr.f32.mxu0 0.0
        %v7347 = vand.u32 %v6368, 4294901760
        %7348 = vmatmul.mubr.f32.gmra.mxu0 %v7347
        %v7349 = vpop.f32.mrf.mxu0
        %v7350 = vadd.f32 %v7145, %v7349
        %v7351 = vpop.f32.mrf.mxu0
        %7352 = vmatprep.mubr.f32.mxu0 0.0
        %v7353 = vand.u32 %v6371, 4294901760
        %7354 = vmatmul.mubr.f32.gmra.mxu0 %v7353
        %v7355 = vpop.f32.mrf.mxu0
        %v7356 = vadd.f32 %v7153, %v7355
        %v7357 = vpop.f32.mrf.mxu0
        %7358 = vmatprep.mubr.f32.mxu0 0.0
        %v7359 = vand.u32 %v6374, 4294901760
        %7360 = vmatmul.mubr.f32.gmra.mxu0 %v7359
        %v7361 = vpop.f32.mrf.mxu0
        %v7362 = vadd.f32 %v7161, %v7361
        %v7363 = vpop.f32.mrf.mxu0
        %7364 = vmatprep.mubr.f32.mxu0 0.0
        %v7365 = vand.u32 %v6377, 4294901760
        %7366 = vmatmul.mubr.f32.gmra.mxu0 %v7365
        %v7367 = vpop.f32.mrf.mxu0
        %v7368 = vadd.f32 %v7169, %v7367
        %v7369 = vpop.f32.mrf.mxu0
        %7370 = vmatprep.mubr.f32.mxu0 0.0
        %v7371 = vand.u32 %v6380, 4294901760
        %7372 = vmatmul.mubr.f32.gmra.mxu0 %v7371
        %v7373 = vpop.f32.mrf.mxu0
        %v7374 = vadd.f32 %v7177, %v7373
        %v7375 = vpop.f32.mrf.mxu0
        %7376 = vmatprep.mubr.f32.mxu0 0.0
        %v7377 = vand.u32 %v6383, 4294901760
        %7378 = vmatmul.mubr.f32.gmra.mxu0 %v7377
        %v7379 = vpop.f32.mrf.mxu0
        %v7380 = vadd.f32 %v7185, %v7379
        %v7381 = vpop.f32.mrf.mxu0
        %7382 = vmatprep.mubr.f32.mxu0 0.0
        %v7383 = vand.u32 %v6386, 4294901760
        %7384 = vmatmul.mubr.f32.gmra.mxu0 %v7383
        %v7385 = vpop.f32.mrf.mxu0
        %v7386 = vadd.f32 %v7193, %v7385
        %v7387 = vpop.f32.mrf.mxu0
        %7388 = vmatprep.mubr.f32.mxu0 0.0
        %v7389 = vand.u32 %v6389, 4294901760
        %7390 = vmatmul.mubr.f32.gmra.mxu0 %v7389
        %v7391 = vpop.f32.mrf.mxu0
        %v7392 = vadd.f32 %v7201, %v7391
        %v7393 = vpop.f32.mrf.mxu0
        %7394 = vmatprep.mubr.f32.mxu0 0.0
        %v7395 = vand.u32 %v6392, 4294901760
        %7396 = vmatmul.mubr.f32.gmra.mxu0 %v7395
        %v7397 = vpop.f32.mrf.mxu0
        %v7398 = vadd.f32 %v7209, %v7397
        %v7399 = vpop.f32.mrf.mxu0
        %7400 = vmatprep.mubr.f32.mxu0 0.0
        %v7401 = vand.u32 %v6395, 4294901760
        %7402 = vmatmul.mubr.f32.gmra.mxu0 %v7401
        %v7403 = vpop.f32.mrf.mxu0
        %v7404 = vadd.f32 %v7217, %v7403
        %v7405 = vpop.f32.mrf.mxu0
        %7406 = vmatprep.mubr.f32.mxu0 0.0
        %v7407 = vand.u32 %v6398, 4294901760
        %7408 = vmatmul.mubr.f32.gmra.mxu0 %v7407
        %v7409 = vpop.f32.mrf.mxu0
        %v7410 = vadd.f32 %v7225, %v7409
        %v7411 = vpop.f32.mrf.mxu0
        %7412 = vdwg.mxu0
        %7413 = vmatprep.subr.mxu0 0.0
        %7414 = vmatpush1.msra.mxu0 0.0
        %7415 = vmatprep.subr.mxu0 0.0
        %7416 = vmatpush1.msra.mxu0 0.0
        %7417 = vmatprep.subr.mxu0 0.0
        %7418 = vmatpush1.msra.mxu0 0.0
        %7419 = vmatprep.subr.mxu0 0.0
        %7420 = vmatpush1.msra.mxu0 0.0
        %7421 = vmatprep.subr.mxu0 0.0
        %7422 = vmatpush1.msra.mxu0 0.0
        %7423 = vmatprep.subr.mxu0 0.0
        %7424 = vmatpush1.msra.mxu0 0.0
        %7425 = vmatprep.subr.mxu0 0.0
        %7426 = vmatpush1.msra.mxu0 0.0
        %7427 = vmatprep.subr.mxu0 0.0
        %7428 = vmatpush1.msra.mxu0 0.0
        %7429 = vmatprep.subr.mxu0 0.0
        %v7430 = vand.u32 %v6351, 4294901760
        %7431 = vmatpush1.msra.mxu0 %v7430
        %7432 = vmatprep.subr.mxu0 0.0
        %v7433 = vand.u32 %v6350, 4294901760
        %7434 = vmatpush1.msra.mxu0 %v7433
        %7435 = vmatprep.subr.mxu0 0.0
        %v7436 = vand.u32 %v6349, 4294901760
        %7437 = vmatpush1.msra.mxu0 %v7436
        %7438 = vmatprep.subr.mxu0 0.0
        %v7439 = vand.u32 %v6348, 4294901760
        %7440 = vmatpush1.msra.mxu0 %v7439
        %7441 = vmatprep.subr.mxu0 0.0
        %v7442 = vand.u32 %v6347, 4294901760
        %7443 = vmatpush1.msra.mxu0 %v7442
        %7444 = vmatprep.subr.mxu0 0.0
        %v7445 = vand.u32 %v6346, 4294901760
        %7446 = vmatpush1.msra.mxu0 %v7445
        %7447 = vmatprep.subr.mxu0 0.0
        %v7448 = vand.u32 %v6345, 4294901760
        %7449 = vmatpush1.msra.mxu0 %v7448
        %7450 = vmatprep.subr.mxu0 0.0
        %v7451 = vand.u32 %v6344, 4294901760
        %7452 = vmatpush1.msra.mxu0 %v7451
        %7453 = vmatprep.subr.mxu0 0.0
        %7454 = vmatpush2.msra.mxu0 0.0
        %7455 = vmatprep.subr.mxu0 0.0
        %7456 = vmatpush2.msra.mxu0 0.0
        %7457 = vmatprep.subr.mxu0 0.0
        %7458 = vmatpush2.msra.mxu0 0.0
        %7459 = vmatprep.subr.mxu0 0.0
        %7460 = vmatpush2.msra.mxu0 0.0
        %7461 = vmatprep.subr.mxu0 0.0
        %7462 = vmatpush2.msra.mxu0 0.0
        %7463 = vmatprep.subr.mxu0 0.0
        %7464 = vmatpush2.msra.mxu0 0.0
        %7465 = vmatprep.subr.mxu0 0.0
        %7466 = vmatpush2.msra.mxu0 0.0
        %7467 = vmatprep.subr.mxu0 0.0
        %7468 = vmatpush2.msra.mxu0 0.0
        %7469 = vmatprep.subr.mxu0 0.0
        %7470 = vmatpush2.msra.mxu0 0.0
        %7471 = vmatprep.subr.mxu0 0.0
        %7472 = vmatpush2.msra.mxu0 0.0
        %7473 = vmatprep.subr.mxu0 0.0
        %7474 = vmatpush2.msra.mxu0 0.0
        %7475 = vmatprep.subr.mxu0 0.0
        %7476 = vmatpush2.msra.mxu0 0.0
        %7477 = vmatprep.subr.mxu0 0.0
        %7478 = vmatpush2.msra.mxu0 0.0
        %7479 = vmatprep.subr.mxu0 0.0
        %7480 = vmatpush2.msra.mxu0 0.0
        %7481 = vmatprep.subr.mxu0 0.0
        %7482 = vmatpush2.msra.mxu0 0.0
        %7483 = vmatprep.subr.mxu0 0.0
        %7484 = vmatpush2.msra.mxu0 0.0
        %7485 = vmatprep.mubr.f32.mxu0 0.0
        %v7486 = vand.u32 %v6353, 4294901760
        %7487 = vmatmul.mubr.f32.gmra.mxu0 %v7486
        %v7488 = vpop.f32.mrf.mxu0
        %v7489 = vadd.f32 %v7320, %v7488
        %v7490 = vpop.f32.mrf.mxu0
        %7491 = vmatprep.mubr.f32.mxu0 0.0
        %v7492 = vand.u32 %v6356, 4294901760
        %7493 = vmatmul.mubr.f32.gmra.mxu0 %v7492
        %v7494 = vpop.f32.mrf.mxu0
        %v7495 = vadd.f32 %v7326, %v7494
        %v7496 = vpop.f32.mrf.mxu0
        %7497 = vmatprep.mubr.f32.mxu0 0.0
        %v7498 = vand.u32 %v6359, 4294901760
        %7499 = vmatmul.mubr.f32.gmra.mxu0 %v7498
        %v7500 = vpop.f32.mrf.mxu0
        %v7501 = vadd.f32 %v7332, %v7500
        %v7502 = vpop.f32.mrf.mxu0
        %7503 = vmatprep.mubr.f32.mxu0 0.0
        %v7504 = vand.u32 %v6362, 4294901760
        %7505 = vmatmul.mubr.f32.gmra.mxu0 %v7504
        %v7506 = vpop.f32.mrf.mxu0
        %v7507 = vadd.f32 %v7338, %v7506
        %v7508 = vpop.f32.mrf.mxu0
        %7509 = vmatprep.mubr.f32.mxu0 0.0
        %v7510 = vand.u32 %v6365, 4294901760
        %7511 = vmatmul.mubr.f32.gmra.mxu0 %v7510
        %v7512 = vpop.f32.mrf.mxu0
        %v7513 = vadd.f32 %v7344, %v7512
        %v7514 = vpop.f32.mrf.mxu0
        %7515 = vmatprep.mubr.f32.mxu0 0.0
        %v7516 = vand.u32 %v6368, 4294901760
        %7517 = vmatmul.mubr.f32.gmra.mxu0 %v7516
        %v7518 = vpop.f32.mrf.mxu0
        %v7519 = vadd.f32 %v7350, %v7518
        %v7520 = vpop.f32.mrf.mxu0
        %7521 = vmatprep.mubr.f32.mxu0 0.0
        %v7522 = vand.u32 %v6371, 4294901760
        %7523 = vmatmul.mubr.f32.gmra.mxu0 %v7522
        %v7524 = vpop.f32.mrf.mxu0
        %v7525 = vadd.f32 %v7356, %v7524
        %v7526 = vpop.f32.mrf.mxu0
        %7527 = vmatprep.mubr.f32.mxu0 0.0
        %v7528 = vand.u32 %v6374, 4294901760
        %7529 = vmatmul.mubr.f32.gmra.mxu0 %v7528
        %v7530 = vpop.f32.mrf.mxu0
        %v7531 = vadd.f32 %v7362, %v7530
        %v7532 = vpop.f32.mrf.mxu0
        %7533 = vmatprep.mubr.f32.mxu0 0.0
        %v7534 = vand.u32 %v6377, 4294901760
        %7535 = vmatmul.mubr.f32.gmra.mxu0 %v7534
        %v7536 = vpop.f32.mrf.mxu0
        %v7537 = vadd.f32 %v7368, %v7536
        %v7538 = vpop.f32.mrf.mxu0
        %7539 = vmatprep.mubr.f32.mxu0 0.0
        %v7540 = vand.u32 %v6380, 4294901760
        %7541 = vmatmul.mubr.f32.gmra.mxu0 %v7540
        %v7542 = vpop.f32.mrf.mxu0
        %v7543 = vadd.f32 %v7374, %v7542
        %v7544 = vpop.f32.mrf.mxu0
        %7545 = vmatprep.mubr.f32.mxu0 0.0
        %v7546 = vand.u32 %v6383, 4294901760
        %7547 = vmatmul.mubr.f32.gmra.mxu0 %v7546
        %v7548 = vpop.f32.mrf.mxu0
        %v7549 = vadd.f32 %v7380, %v7548
        %v7550 = vpop.f32.mrf.mxu0
        %7551 = vmatprep.mubr.f32.mxu0 0.0
        %v7552 = vand.u32 %v6386, 4294901760
        %7553 = vmatmul.mubr.f32.gmra.mxu0 %v7552
        %v7554 = vpop.f32.mrf.mxu0
        %v7555 = vadd.f32 %v7386, %v7554
        %v7556 = vpop.f32.mrf.mxu0
        %7557 = vmatprep.mubr.f32.mxu0 0.0
        %v7558 = vand.u32 %v6389, 4294901760
        %7559 = vmatmul.mubr.f32.gmra.mxu0 %v7558
        %v7560 = vpop.f32.mrf.mxu0
        %v7561 = vadd.f32 %v7392, %v7560
        %v7562 = vpop.f32.mrf.mxu0
        %7563 = vmatprep.mubr.f32.mxu0 0.0
        %v7564 = vand.u32 %v6392, 4294901760
        %7565 = vmatmul.mubr.f32.gmra.mxu0 %v7564
        %v7566 = vpop.f32.mrf.mxu0
        %v7567 = vadd.f32 %v7398, %v7566
        %v7568 = vpop.f32.mrf.mxu0
        %7569 = vmatprep.mubr.f32.mxu0 0.0
        %v7570 = vand.u32 %v6395, 4294901760
        %7571 = vmatmul.mubr.f32.gmra.mxu0 %v7570
        %v7572 = vpop.f32.mrf.mxu0
        %v7573 = vadd.f32 %v7404, %v7572
        %v7574 = vpop.f32.mrf.mxu0
        %7575 = vmatprep.mubr.f32.mxu0 0.0
        %v7576 = vand.u32 %v6398, 4294901760
        %7577 = vmatmul.mubr.f32.gmra.mxu0 %v7576
        %v7578 = vpop.f32.mrf.mxu0
        %v7579 = vadd.f32 %v7410, %v7578
        %v7580 = vpop.f32.mrf.mxu0
        %7581 = vdwg.mxu0
        %v7582 = vadd.f32 %v4625, %v7489
        %v7583 = vadd.f32 %v4626, %v7495
        %v7584 = vadd.f32 %v4627, %v7501
        %v7585 = vadd.f32 %v4628, %v7507
        %v7586 = vadd.f32 %v4629, %v7513
        %v7587 = vadd.f32 %v4630, %v7519
        %v7588 = vadd.f32 %v4631, %v7525
        %v7589 = vadd.f32 %v4632, %v7531
        %v7590 = vadd.f32 %v4633, %v7537
        %v7591 = vadd.f32 %v4634, %v7543
        %v7592 = vadd.f32 %v4635, %v7549
        %v7593 = vadd.f32 %v4636, %v7555
        %v7594 = vadd.f32 %v4637, %v7561
        %v7595 = vadd.f32 %v4638, %v7567
        %v7596 = vadd.f32 %v4639, %v7573
        %v7597 = vadd.f32 %v4640, %v7579
        %7598 = vmatprep.subr.mxu0 0.0
        %v7599 = vand.u32 %v310, 4294901760
        %7600 = vmatpush1.msra.mxu0 %v7599
        %7601 = vmatprep.subr.mxu0 0.0
        %v7602 = vand.u32 %v309, 4294901760
        %7603 = vmatpush1.msra.mxu0 %v7602
        %7604 = vmatprep.subr.mxu0 0.0
        %v7605 = vand.u32 %v308, 4294901760
        %7606 = vmatpush1.msra.mxu0 %v7605
        %7607 = vmatprep.subr.mxu0 0.0
        %v7608 = vand.u32 %v307, 4294901760
        %7609 = vmatpush1.msra.mxu0 %v7608
        %7610 = vmatprep.subr.mxu0 0.0
        %v7611 = vand.u32 %v306, 4294901760
        %7612 = vmatpush1.msra.mxu0 %v7611
        %7613 = vmatprep.subr.mxu0 0.0
        %v7614 = vand.u32 %v305, 4294901760
        %7615 = vmatpush1.msra.mxu0 %v7614
        %7616 = vmatprep.subr.mxu0 0.0
        %v7617 = vand.u32 %v304, 4294901760
        %7618 = vmatpush1.msra.mxu0 %v7617
        %7619 = vmatprep.subr.mxu0 0.0
        %v7620 = vand.u32 %v303, 4294901760
        %7621 = vmatpush1.msra.mxu0 %v7620
        %7622 = vmatprep.subr.mxu0 0.0
        %v7623 = vand.u32 %v302, 4294901760
        %7624 = vmatpush1.msra.mxu0 %v7623
        %7625 = vmatprep.subr.mxu0 0.0
        %v7626 = vand.u32 %v301, 4294901760
        %7627 = vmatpush1.msra.mxu0 %v7626
        %7628 = vmatprep.subr.mxu0 0.0
        %v7629 = vand.u32 %v300, 4294901760
        %7630 = vmatpush1.msra.mxu0 %v7629
        %7631 = vmatprep.subr.mxu0 0.0
        %v7632 = vand.u32 %v299, 4294901760
        %7633 = vmatpush1.msra.mxu0 %v7632
        %7634 = vmatprep.subr.mxu0 0.0
        %v7635 = vand.u32 %v298, 4294901760
        %7636 = vmatpush1.msra.mxu0 %v7635
        %7637 = vmatprep.subr.mxu0 0.0
        %v7638 = vand.u32 %v297, 4294901760
        %7639 = vmatpush1.msra.mxu0 %v7638
        %7640 = vmatprep.subr.mxu0 0.0
        %v7641 = vand.u32 %v296, 4294901760
        %7642 = vmatpush1.msra.mxu0 %v7641
        %7643 = vmatprep.subr.mxu0 0.0
        %v7644 = vand.u32 %v295, 4294901760
        %7645 = vmatpush1.msra.mxu0 %v7644
        %7646 = vmatprep.subr.mxu0 0.0
        %v7647 = vand.u32 %v326, 4294901760
        %7648 = vmatpush2.msra.mxu0 %v7647
        %7649 = vmatprep.subr.mxu0 0.0
        %v7650 = vand.u32 %v325, 4294901760
        %7651 = vmatpush2.msra.mxu0 %v7650
        %7652 = vmatprep.subr.mxu0 0.0
        %v7653 = vand.u32 %v324, 4294901760
        %7654 = vmatpush2.msra.mxu0 %v7653
        %7655 = vmatprep.subr.mxu0 0.0
        %v7656 = vand.u32 %v323, 4294901760
        %7657 = vmatpush2.msra.mxu0 %v7656
        %7658 = vmatprep.subr.mxu0 0.0
        %v7659 = vand.u32 %v322, 4294901760
        %7660 = vmatpush2.msra.mxu0 %v7659
        %7661 = vmatprep.subr.mxu0 0.0
        %v7662 = vand.u32 %v321, 4294901760
        %7663 = vmatpush2.msra.mxu0 %v7662
        %7664 = vmatprep.subr.mxu0 0.0
        %v7665 = vand.u32 %v320, 4294901760
        %7666 = vmatpush2.msra.mxu0 %v7665
        %7667 = vmatprep.subr.mxu0 0.0
        %v7668 = vand.u32 %v319, 4294901760
        %7669 = vmatpush2.msra.mxu0 %v7668
        %7670 = vmatprep.subr.mxu0 0.0
        %v7671 = vand.u32 %v318, 4294901760
        %7672 = vmatpush2.msra.mxu0 %v7671
        %7673 = vmatprep.subr.mxu0 0.0
        %v7674 = vand.u32 %v317, 4294901760
        %7675 = vmatpush2.msra.mxu0 %v7674
        %7676 = vmatprep.subr.mxu0 0.0
        %v7677 = vand.u32 %v316, 4294901760
        %7678 = vmatpush2.msra.mxu0 %v7677
        %7679 = vmatprep.subr.mxu0 0.0
        %v7680 = vand.u32 %v315, 4294901760
        %7681 = vmatpush2.msra.mxu0 %v7680
        %7682 = vmatprep.subr.mxu0 0.0
        %v7683 = vand.u32 %v314, 4294901760
        %7684 = vmatpush2.msra.mxu0 %v7683
        %7685 = vmatprep.subr.mxu0 0.0
        %v7686 = vand.u32 %v313, 4294901760
        %7687 = vmatpush2.msra.mxu0 %v7686
        %7688 = vmatprep.subr.mxu0 0.0
        %v7689 = vand.u32 %v312, 4294901760
        %7690 = vmatpush2.msra.mxu0 %v7689
        %7691 = vmatprep.subr.mxu0 0.0
        %v7692 = vand.u32 %v311, 4294901760
        %7693 = vmatpush2.msra.mxu0 %v7692
        %v7694 = vand.u32 %v332, 4294901760
        %v7695 = vsub.f32 %v332, %v7694
        %v7696 = vand.u32 %v7695, 4294901760
        %v7697 = vsub.f32 %v7695, %v7696
        %v7698 = vand.u32 %v7697, 4294901760
        %7699 = vmatprep.mubr.f32.mxu0 %v7698
        %v7700 = vand.u32 %v331, 4294901760
        %v7701 = vsub.f32 %v331, %v7700
        %v7702 = vand.u32 %v7701, 4294901760
        %v7703 = vsub.f32 %v7701, %v7702
        %v7704 = vand.u32 %v7703, 4294901760
        %7705 = vmatmul.mubr.f32.gmra.mxu0 %v7704
        %v7706 = vpop.f32.mrf.mxu0
        %v7707 = vadd.f32 0.0, %v7706
        %v7708 = vpop.f32.mrf.mxu0
        %v7709 = vand.u32 %v338, 4294901760
        %v7710 = vsub.f32 %v338, %v7709
        %v7711 = vand.u32 %v7710, 4294901760
        %v7712 = vsub.f32 %v7710, %v7711
        %v7713 = vand.u32 %v7712, 4294901760
        %7714 = vmatprep.mubr.f32.mxu0 %v7713
        %v7715 = vand.u32 %v337, 4294901760
        %v7716 = vsub.f32 %v337, %v7715
        %v7717 = vand.u32 %v7716, 4294901760
        %v7718 = vsub.f32 %v7716, %v7717
        %v7719 = vand.u32 %v7718, 4294901760
        %7720 = vmatmul.mubr.f32.gmra.mxu0 %v7719
        %v7721 = vpop.f32.mrf.mxu0
        %v7722 = vadd.f32 0.0, %v7721
        %v7723 = vpop.f32.mrf.mxu0
        %v7724 = vand.u32 %v344, 4294901760
        %v7725 = vsub.f32 %v344, %v7724
        %v7726 = vand.u32 %v7725, 4294901760
        %v7727 = vsub.f32 %v7725, %v7726
        %v7728 = vand.u32 %v7727, 4294901760
        %7729 = vmatprep.mubr.f32.mxu0 %v7728
        %v7730 = vand.u32 %v343, 4294901760
        %v7731 = vsub.f32 %v343, %v7730
        %v7732 = vand.u32 %v7731, 4294901760
        %v7733 = vsub.f32 %v7731, %v7732
        %v7734 = vand.u32 %v7733, 4294901760
        %7735 = vmatmul.mubr.f32.gmra.mxu0 %v7734
        %v7736 = vpop.f32.mrf.mxu0
        %v7737 = vadd.f32 0.0, %v7736
        %v7738 = vpop.f32.mrf.mxu0
        %v7739 = vand.u32 %v350, 4294901760
        %v7740 = vsub.f32 %v350, %v7739
        %v7741 = vand.u32 %v7740, 4294901760
        %v7742 = vsub.f32 %v7740, %v7741
        %v7743 = vand.u32 %v7742, 4294901760
        %7744 = vmatprep.mubr.f32.mxu0 %v7743
        %v7745 = vand.u32 %v349, 4294901760
        %v7746 = vsub.f32 %v349, %v7745
        %v7747 = vand.u32 %v7746, 4294901760
        %v7748 = vsub.f32 %v7746, %v7747
        %v7749 = vand.u32 %v7748, 4294901760
        %7750 = vmatmul.mubr.f32.gmra.mxu0 %v7749
        %v7751 = vpop.f32.mrf.mxu0
        %v7752 = vadd.f32 0.0, %v7751
        %v7753 = vpop.f32.mrf.mxu0
        %v7754 = vand.u32 %v356, 4294901760
        %v7755 = vsub.f32 %v356, %v7754
        %v7756 = vand.u32 %v7755, 4294901760
        %v7757 = vsub.f32 %v7755, %v7756
        %v7758 = vand.u32 %v7757, 4294901760
        %7759 = vmatprep.mubr.f32.mxu0 %v7758
        %v7760 = vand.u32 %v355, 4294901760
        %v7761 = vsub.f32 %v355, %v7760
        %v7762 = vand.u32 %v7761, 4294901760
        %v7763 = vsub.f32 %v7761, %v7762
        %v7764 = vand.u32 %v7763, 4294901760
        %7765 = vmatmul.mubr.f32.gmra.mxu0 %v7764
        %v7766 = vpop.f32.mrf.mxu0
        %v7767 = vadd.f32 0.0, %v7766
        %v7768 = vpop.f32.mrf.mxu0
        %v7769 = vand.u32 %v362, 4294901760
        %v7770 = vsub.f32 %v362, %v7769
        %v7771 = vand.u32 %v7770, 4294901760
        %v7772 = vsub.f32 %v7770, %v7771
        %v7773 = vand.u32 %v7772, 4294901760
        %7774 = vmatprep.mubr.f32.mxu0 %v7773
        %v7775 = vand.u32 %v361, 4294901760
        %v7776 = vsub.f32 %v361, %v7775
        %v7777 = vand.u32 %v7776, 4294901760
        %v7778 = vsub.f32 %v7776, %v7777
        %v7779 = vand.u32 %v7778, 4294901760
        %7780 = vmatmul.mubr.f32.gmra.mxu0 %v7779
        %v7781 = vpop.f32.mrf.mxu0
        %v7782 = vadd.f32 0.0, %v7781
        %v7783 = vpop.f32.mrf.mxu0
        %v7784 = vand.u32 %v368, 4294901760
        %v7785 = vsub.f32 %v368, %v7784
        %v7786 = vand.u32 %v7785, 4294901760
        %v7787 = vsub.f32 %v7785, %v7786
        %v7788 = vand.u32 %v7787, 4294901760
        %7789 = vmatprep.mubr.f32.mxu0 %v7788
        %v7790 = vand.u32 %v367, 4294901760
        %v7791 = vsub.f32 %v367, %v7790
        %v7792 = vand.u32 %v7791, 4294901760
        %v7793 = vsub.f32 %v7791, %v7792
        %v7794 = vand.u32 %v7793, 4294901760
        %7795 = vmatmul.mubr.f32.gmra.mxu0 %v7794
        %v7796 = vpop.f32.mrf.mxu0
        %v7797 = vadd.f32 0.0, %v7796
        %v7798 = vpop.f32.mrf.mxu0
        %v7799 = vand.u32 %v374, 4294901760
        %v7800 = vsub.f32 %v374, %v7799
        %v7801 = vand.u32 %v7800, 4294901760
        %v7802 = vsub.f32 %v7800, %v7801
        %v7803 = vand.u32 %v7802, 4294901760
        %7804 = vmatprep.mubr.f32.mxu0 %v7803
        %v7805 = vand.u32 %v373, 4294901760
        %v7806 = vsub.f32 %v373, %v7805
        %v7807 = vand.u32 %v7806, 4294901760
        %v7808 = vsub.f32 %v7806, %v7807
        %v7809 = vand.u32 %v7808, 4294901760
        %7810 = vmatmul.mubr.f32.gmra.mxu0 %v7809
        %v7811 = vpop.f32.mrf.mxu0
        %v7812 = vadd.f32 0.0, %v7811
        %v7813 = vpop.f32.mrf.mxu0
        %v7814 = vand.u32 %v380, 4294901760
        %v7815 = vsub.f32 %v380, %v7814
        %v7816 = vand.u32 %v7815, 4294901760
        %v7817 = vsub.f32 %v7815, %v7816
        %v7818 = vand.u32 %v7817, 4294901760
        %7819 = vmatprep.mubr.f32.mxu0 %v7818
        %v7820 = vand.u32 %v379, 4294901760
        %v7821 = vsub.f32 %v379, %v7820
        %v7822 = vand.u32 %v7821, 4294901760
        %v7823 = vsub.f32 %v7821, %v7822
        %v7824 = vand.u32 %v7823, 4294901760
        %7825 = vmatmul.mubr.f32.gmra.mxu0 %v7824
        %v7826 = vpop.f32.mrf.mxu0
        %v7827 = vadd.f32 0.0, %v7826
        %v7828 = vpop.f32.mrf.mxu0
        %v7829 = vand.u32 %v386, 4294901760
        %v7830 = vsub.f32 %v386, %v7829
        %v7831 = vand.u32 %v7830, 4294901760
        %v7832 = vsub.f32 %v7830, %v7831
        %v7833 = vand.u32 %v7832, 4294901760
        %7834 = vmatprep.mubr.f32.mxu0 %v7833
        %v7835 = vand.u32 %v385, 4294901760
        %v7836 = vsub.f32 %v385, %v7835
        %v7837 = vand.u32 %v7836, 4294901760
        %v7838 = vsub.f32 %v7836, %v7837
        %v7839 = vand.u32 %v7838, 4294901760
        %7840 = vmatmul.mubr.f32.gmra.mxu0 %v7839
        %v7841 = vpop.f32.mrf.mxu0
        %v7842 = vadd.f32 0.0, %v7841
        %v7843 = vpop.f32.mrf.mxu0
        %v7844 = vand.u32 %v392, 4294901760
        %v7845 = vsub.f32 %v392, %v7844
        %v7846 = vand.u32 %v7845, 4294901760
        %v7847 = vsub.f32 %v7845, %v7846
        %v7848 = vand.u32 %v7847, 4294901760
        %7849 = vmatprep.mubr.f32.mxu0 %v7848
        %v7850 = vand.u32 %v391, 4294901760
        %v7851 = vsub.f32 %v391, %v7850
        %v7852 = vand.u32 %v7851, 4294901760
        %v7853 = vsub.f32 %v7851, %v7852
        %v7854 = vand.u32 %v7853, 4294901760
        %7855 = vmatmul.mubr.f32.gmra.mxu0 %v7854
        %v7856 = vpop.f32.mrf.mxu0
        %v7857 = vadd.f32 0.0, %v7856
        %v7858 = vpop.f32.mrf.mxu0
        %v7859 = vand.u32 %v398, 4294901760
        %v7860 = vsub.f32 %v398, %v7859
        %v7861 = vand.u32 %v7860, 4294901760
        %v7862 = vsub.f32 %v7860, %v7861
        %v7863 = vand.u32 %v7862, 4294901760
        %7864 = vmatprep.mubr.f32.mxu0 %v7863
        %v7865 = vand.u32 %v397, 4294901760
        %v7866 = vsub.f32 %v397, %v7865
        %v7867 = vand.u32 %v7866, 4294901760
        %v7868 = vsub.f32 %v7866, %v7867
        %v7869 = vand.u32 %v7868, 4294901760
        %7870 = vmatmul.mubr.f32.gmra.mxu0 %v7869
        %v7871 = vpop.f32.mrf.mxu0
        %v7872 = vadd.f32 0.0, %v7871
        %v7873 = vpop.f32.mrf.mxu0
        %v7874 = vand.u32 %v404, 4294901760
        %v7875 = vsub.f32 %v404, %v7874
        %v7876 = vand.u32 %v7875, 4294901760
        %v7877 = vsub.f32 %v7875, %v7876
        %v7878 = vand.u32 %v7877, 4294901760
        %7879 = vmatprep.mubr.f32.mxu0 %v7878
        %v7880 = vand.u32 %v403, 4294901760
        %v7881 = vsub.f32 %v403, %v7880
        %v7882 = vand.u32 %v7881, 4294901760
        %v7883 = vsub.f32 %v7881, %v7882
        %v7884 = vand.u32 %v7883, 4294901760
        %7885 = vmatmul.mubr.f32.gmra.mxu0 %v7884
        %v7886 = vpop.f32.mrf.mxu0
        %v7887 = vadd.f32 0.0, %v7886
        %v7888 = vpop.f32.mrf.mxu0
        %v7889 = vand.u32 %v410, 4294901760
        %v7890 = vsub.f32 %v410, %v7889
        %v7891 = vand.u32 %v7890, 4294901760
        %v7892 = vsub.f32 %v7890, %v7891
        %v7893 = vand.u32 %v7892, 4294901760
        %7894 = vmatprep.mubr.f32.mxu0 %v7893
        %v7895 = vand.u32 %v409, 4294901760
        %v7896 = vsub.f32 %v409, %v7895
        %v7897 = vand.u32 %v7896, 4294901760
        %v7898 = vsub.f32 %v7896, %v7897
        %v7899 = vand.u32 %v7898, 4294901760
        %7900 = vmatmul.mubr.f32.gmra.mxu0 %v7899
        %v7901 = vpop.f32.mrf.mxu0
        %v7902 = vadd.f32 0.0, %v7901
        %v7903 = vpop.f32.mrf.mxu0
        %v7904 = vand.u32 %v416, 4294901760
        %v7905 = vsub.f32 %v416, %v7904
        %v7906 = vand.u32 %v7905, 4294901760
        %v7907 = vsub.f32 %v7905, %v7906
        %v7908 = vand.u32 %v7907, 4294901760
        %7909 = vmatprep.mubr.f32.mxu0 %v7908
        %v7910 = vand.u32 %v415, 4294901760
        %v7911 = vsub.f32 %v415, %v7910
        %v7912 = vand.u32 %v7911, 4294901760
        %v7913 = vsub.f32 %v7911, %v7912
        %v7914 = vand.u32 %v7913, 4294901760
        %7915 = vmatmul.mubr.f32.gmra.mxu0 %v7914
        %v7916 = vpop.f32.mrf.mxu0
        %v7917 = vadd.f32 0.0, %v7916
        %v7918 = vpop.f32.mrf.mxu0
        %v7919 = vand.u32 %v422, 4294901760
        %v7920 = vsub.f32 %v422, %v7919
        %v7921 = vand.u32 %v7920, 4294901760
        %v7922 = vsub.f32 %v7920, %v7921
        %v7923 = vand.u32 %v7922, 4294901760
        %7924 = vmatprep.mubr.f32.mxu0 %v7923
        %v7925 = vand.u32 %v421, 4294901760
        %v7926 = vsub.f32 %v421, %v7925
        %v7927 = vand.u32 %v7926, 4294901760
        %v7928 = vsub.f32 %v7926, %v7927
        %v7929 = vand.u32 %v7928, 4294901760
        %7930 = vmatmul.mubr.f32.gmra.mxu0 %v7929
        %v7931 = vpop.f32.mrf.mxu0
        %v7932 = vadd.f32 0.0, %v7931
        %v7933 = vpop.f32.mrf.mxu0
        %7934 = vdwg.mxu0
        %7935 = vmatprep.subr.mxu0 0.0
        %v7936 = vand.u32 %v310, 4294901760
        %v7937 = vsub.f32 %v310, %v7936
        %v7938 = vand.u32 %v7937, 4294901760
        %v7939 = vsub.f32 %v7937, %v7938
        %v7940 = vand.u32 %v7939, 4294901760
        %7941 = vmatpush1.msra.mxu0 %v7940
        %7942 = vmatprep.subr.mxu0 0.0
        %v7943 = vand.u32 %v309, 4294901760
        %v7944 = vsub.f32 %v309, %v7943
        %v7945 = vand.u32 %v7944, 4294901760
        %v7946 = vsub.f32 %v7944, %v7945
        %v7947 = vand.u32 %v7946, 4294901760
        %7948 = vmatpush1.msra.mxu0 %v7947
        %7949 = vmatprep.subr.mxu0 0.0
        %v7950 = vand.u32 %v308, 4294901760
        %v7951 = vsub.f32 %v308, %v7950
        %v7952 = vand.u32 %v7951, 4294901760
        %v7953 = vsub.f32 %v7951, %v7952
        %v7954 = vand.u32 %v7953, 4294901760
        %7955 = vmatpush1.msra.mxu0 %v7954
        %7956 = vmatprep.subr.mxu0 0.0
        %v7957 = vand.u32 %v307, 4294901760
        %v7958 = vsub.f32 %v307, %v7957
        %v7959 = vand.u32 %v7958, 4294901760
        %v7960 = vsub.f32 %v7958, %v7959
        %v7961 = vand.u32 %v7960, 4294901760
        %7962 = vmatpush1.msra.mxu0 %v7961
        %7963 = vmatprep.subr.mxu0 0.0
        %v7964 = vand.u32 %v306, 4294901760
        %v7965 = vsub.f32 %v306, %v7964
        %v7966 = vand.u32 %v7965, 4294901760
        %v7967 = vsub.f32 %v7965, %v7966
        %v7968 = vand.u32 %v7967, 4294901760
        %7969 = vmatpush1.msra.mxu0 %v7968
        %7970 = vmatprep.subr.mxu0 0.0
        %v7971 = vand.u32 %v305, 4294901760
        %v7972 = vsub.f32 %v305, %v7971
        %v7973 = vand.u32 %v7972, 4294901760
        %v7974 = vsub.f32 %v7972, %v7973
        %v7975 = vand.u32 %v7974, 4294901760
        %7976 = vmatpush1.msra.mxu0 %v7975
        %7977 = vmatprep.subr.mxu0 0.0
        %v7978 = vand.u32 %v304, 4294901760
        %v7979 = vsub.f32 %v304, %v7978
        %v7980 = vand.u32 %v7979, 4294901760
        %v7981 = vsub.f32 %v7979, %v7980
        %v7982 = vand.u32 %v7981, 4294901760
        %7983 = vmatpush1.msra.mxu0 %v7982
        %7984 = vmatprep.subr.mxu0 0.0
        %v7985 = vand.u32 %v303, 4294901760
        %v7986 = vsub.f32 %v303, %v7985
        %v7987 = vand.u32 %v7986, 4294901760
        %v7988 = vsub.f32 %v7986, %v7987
        %v7989 = vand.u32 %v7988, 4294901760
        %7990 = vmatpush1.msra.mxu0 %v7989
        %7991 = vmatprep.subr.mxu0 0.0
        %v7992 = vand.u32 %v302, 4294901760
        %v7993 = vsub.f32 %v302, %v7992
        %v7994 = vand.u32 %v7993, 4294901760
        %v7995 = vsub.f32 %v7993, %v7994
        %v7996 = vand.u32 %v7995, 4294901760
        %7997 = vmatpush1.msra.mxu0 %v7996
        %7998 = vmatprep.subr.mxu0 0.0
        %v7999 = vand.u32 %v301, 4294901760
        %v8000 = vsub.f32 %v301, %v7999
        %v8001 = vand.u32 %v8000, 4294901760
        %v8002 = vsub.f32 %v8000, %v8001
        %v8003 = vand.u32 %v8002, 4294901760
        %8004 = vmatpush1.msra.mxu0 %v8003
        %8005 = vmatprep.subr.mxu0 0.0
        %v8006 = vand.u32 %v300, 4294901760
        %v8007 = vsub.f32 %v300, %v8006
        %v8008 = vand.u32 %v8007, 4294901760
        %v8009 = vsub.f32 %v8007, %v8008
        %v8010 = vand.u32 %v8009, 4294901760
        %8011 = vmatpush1.msra.mxu0 %v8010
        %8012 = vmatprep.subr.mxu0 0.0
        %v8013 = vand.u32 %v299, 4294901760
        %v8014 = vsub.f32 %v299, %v8013
        %v8015 = vand.u32 %v8014, 4294901760
        %v8016 = vsub.f32 %v8014, %v8015
        %v8017 = vand.u32 %v8016, 4294901760
        %8018 = vmatpush1.msra.mxu0 %v8017
        %8019 = vmatprep.subr.mxu0 0.0
        %v8020 = vand.u32 %v298, 4294901760
        %v8021 = vsub.f32 %v298, %v8020
        %v8022 = vand.u32 %v8021, 4294901760
        %v8023 = vsub.f32 %v8021, %v8022
        %v8024 = vand.u32 %v8023, 4294901760
        %8025 = vmatpush1.msra.mxu0 %v8024
        %8026 = vmatprep.subr.mxu0 0.0
        %v8027 = vand.u32 %v297, 4294901760
        %v8028 = vsub.f32 %v297, %v8027
        %v8029 = vand.u32 %v8028, 4294901760
        %v8030 = vsub.f32 %v8028, %v8029
        %v8031 = vand.u32 %v8030, 4294901760
        %8032 = vmatpush1.msra.mxu0 %v8031
        %8033 = vmatprep.subr.mxu0 0.0
        %v8034 = vand.u32 %v296, 4294901760
        %v8035 = vsub.f32 %v296, %v8034
        %v8036 = vand.u32 %v8035, 4294901760
        %v8037 = vsub.f32 %v8035, %v8036
        %v8038 = vand.u32 %v8037, 4294901760
        %8039 = vmatpush1.msra.mxu0 %v8038
        %8040 = vmatprep.subr.mxu0 0.0
        %v8041 = vand.u32 %v295, 4294901760
        %v8042 = vsub.f32 %v295, %v8041
        %v8043 = vand.u32 %v8042, 4294901760
        %v8044 = vsub.f32 %v8042, %v8043
        %v8045 = vand.u32 %v8044, 4294901760
        %8046 = vmatpush1.msra.mxu0 %v8045
        %8047 = vmatprep.subr.mxu0 0.0
        %v8048 = vand.u32 %v326, 4294901760
        %v8049 = vsub.f32 %v326, %v8048
        %v8050 = vand.u32 %v8049, 4294901760
        %v8051 = vsub.f32 %v8049, %v8050
        %v8052 = vand.u32 %v8051, 4294901760
        %8053 = vmatpush2.msra.mxu0 %v8052
        %8054 = vmatprep.subr.mxu0 0.0
        %v8055 = vand.u32 %v325, 4294901760
        %v8056 = vsub.f32 %v325, %v8055
        %v8057 = vand.u32 %v8056, 4294901760
        %v8058 = vsub.f32 %v8056, %v8057
        %v8059 = vand.u32 %v8058, 4294901760
        %8060 = vmatpush2.msra.mxu0 %v8059
        %8061 = vmatprep.subr.mxu0 0.0
        %v8062 = vand.u32 %v324, 4294901760
        %v8063 = vsub.f32 %v324, %v8062
        %v8064 = vand.u32 %v8063, 4294901760
        %v8065 = vsub.f32 %v8063, %v8064
        %v8066 = vand.u32 %v8065, 4294901760
        %8067 = vmatpush2.msra.mxu0 %v8066
        %8068 = vmatprep.subr.mxu0 0.0
        %v8069 = vand.u32 %v323, 4294901760
        %v8070 = vsub.f32 %v323, %v8069
        %v8071 = vand.u32 %v8070, 4294901760
        %v8072 = vsub.f32 %v8070, %v8071
        %v8073 = vand.u32 %v8072, 4294901760
        %8074 = vmatpush2.msra.mxu0 %v8073
        %8075 = vmatprep.subr.mxu0 0.0
        %v8076 = vand.u32 %v322, 4294901760
        %v8077 = vsub.f32 %v322, %v8076
        %v8078 = vand.u32 %v8077, 4294901760
        %v8079 = vsub.f32 %v8077, %v8078
        %v8080 = vand.u32 %v8079, 4294901760
        %8081 = vmatpush2.msra.mxu0 %v8080
        %8082 = vmatprep.subr.mxu0 0.0
        %v8083 = vand.u32 %v321, 4294901760
        %v8084 = vsub.f32 %v321, %v8083
        %v8085 = vand.u32 %v8084, 4294901760
        %v8086 = vsub.f32 %v8084, %v8085
        %v8087 = vand.u32 %v8086, 4294901760
        %8088 = vmatpush2.msra.mxu0 %v8087
        %8089 = vmatprep.subr.mxu0 0.0
        %v8090 = vand.u32 %v320, 4294901760
        %v8091 = vsub.f32 %v320, %v8090
        %v8092 = vand.u32 %v8091, 4294901760
        %v8093 = vsub.f32 %v8091, %v8092
        %v8094 = vand.u32 %v8093, 4294901760
        %8095 = vmatpush2.msra.mxu0 %v8094
        %8096 = vmatprep.subr.mxu0 0.0
        %v8097 = vand.u32 %v319, 4294901760
        %v8098 = vsub.f32 %v319, %v8097
        %v8099 = vand.u32 %v8098, 4294901760
        %v8100 = vsub.f32 %v8098, %v8099
        %v8101 = vand.u32 %v8100, 4294901760
        %8102 = vmatpush2.msra.mxu0 %v8101
        %8103 = vmatprep.subr.mxu0 0.0
        %v8104 = vand.u32 %v318, 4294901760
        %v8105 = vsub.f32 %v318, %v8104
        %v8106 = vand.u32 %v8105, 4294901760
        %v8107 = vsub.f32 %v8105, %v8106
        %v8108 = vand.u32 %v8107, 4294901760
        %8109 = vmatpush2.msra.mxu0 %v8108
        %8110 = vmatprep.subr.mxu0 0.0
        %v8111 = vand.u32 %v317, 4294901760
        %v8112 = vsub.f32 %v317, %v8111
        %v8113 = vand.u32 %v8112, 4294901760
        %v8114 = vsub.f32 %v8112, %v8113
        %v8115 = vand.u32 %v8114, 4294901760
        %8116 = vmatpush2.msra.mxu0 %v8115
        %8117 = vmatprep.subr.mxu0 0.0
        %v8118 = vand.u32 %v316, 4294901760
        %v8119 = vsub.f32 %v316, %v8118
        %v8120 = vand.u32 %v8119, 4294901760
        %v8121 = vsub.f32 %v8119, %v8120
        %v8122 = vand.u32 %v8121, 4294901760
        %8123 = vmatpush2.msra.mxu0 %v8122
        %8124 = vmatprep.subr.mxu0 0.0
        %v8125 = vand.u32 %v315, 4294901760
        %v8126 = vsub.f32 %v315, %v8125
        %v8127 = vand.u32 %v8126, 4294901760
        %v8128 = vsub.f32 %v8126, %v8127
        %v8129 = vand.u32 %v8128, 4294901760
        %8130 = vmatpush2.msra.mxu0 %v8129
        %8131 = vmatprep.subr.mxu0 0.0
        %v8132 = vand.u32 %v314, 4294901760
        %v8133 = vsub.f32 %v314, %v8132
        %v8134 = vand.u32 %v8133, 4294901760
        %v8135 = vsub.f32 %v8133, %v8134
        %v8136 = vand.u32 %v8135, 4294901760
        %8137 = vmatpush2.msra.mxu0 %v8136
        %8138 = vmatprep.subr.mxu0 0.0
        %v8139 = vand.u32 %v313, 4294901760
        %v8140 = vsub.f32 %v313, %v8139
        %v8141 = vand.u32 %v8140, 4294901760
        %v8142 = vsub.f32 %v8140, %v8141
        %v8143 = vand.u32 %v8142, 4294901760
        %8144 = vmatpush2.msra.mxu0 %v8143
        %8145 = vmatprep.subr.mxu0 0.0
        %v8146 = vand.u32 %v312, 4294901760
        %v8147 = vsub.f32 %v312, %v8146
        %v8148 = vand.u32 %v8147, 4294901760
        %v8149 = vsub.f32 %v8147, %v8148
        %v8150 = vand.u32 %v8149, 4294901760
        %8151 = vmatpush2.msra.mxu0 %v8150
        %8152 = vmatprep.subr.mxu0 0.0
        %v8153 = vand.u32 %v311, 4294901760
        %v8154 = vsub.f32 %v311, %v8153
        %v8155 = vand.u32 %v8154, 4294901760
        %v8156 = vsub.f32 %v8154, %v8155
        %v8157 = vand.u32 %v8156, 4294901760
        %8158 = vmatpush2.msra.mxu0 %v8157
        %v8159 = vand.u32 %v332, 4294901760
        %8160 = vmatprep.mubr.f32.mxu0 %v8159
        %v8161 = vand.u32 %v331, 4294901760
        %8162 = vmatmul.mubr.f32.gmra.mxu0 %v8161
        %v8163 = vpop.f32.mrf.mxu0
        %v8164 = vadd.f32 %v7707, %v8163
        %v8165 = vpop.f32.mrf.mxu0
        %v8166 = vand.u32 %v338, 4294901760
        %8167 = vmatprep.mubr.f32.mxu0 %v8166
        %v8168 = vand.u32 %v337, 4294901760
        %8169 = vmatmul.mubr.f32.gmra.mxu0 %v8168
        %v8170 = vpop.f32.mrf.mxu0
        %v8171 = vadd.f32 %v7722, %v8170
        %v8172 = vpop.f32.mrf.mxu0
        %v8173 = vand.u32 %v344, 4294901760
        %8174 = vmatprep.mubr.f32.mxu0 %v8173
        %v8175 = vand.u32 %v343, 4294901760
        %8176 = vmatmul.mubr.f32.gmra.mxu0 %v8175
        %v8177 = vpop.f32.mrf.mxu0
        %v8178 = vadd.f32 %v7737, %v8177
        %v8179 = vpop.f32.mrf.mxu0
        %v8180 = vand.u32 %v350, 4294901760
        %8181 = vmatprep.mubr.f32.mxu0 %v8180
        %v8182 = vand.u32 %v349, 4294901760
        %8183 = vmatmul.mubr.f32.gmra.mxu0 %v8182
        %v8184 = vpop.f32.mrf.mxu0
        %v8185 = vadd.f32 %v7752, %v8184
        %v8186 = vpop.f32.mrf.mxu0
        %v8187 = vand.u32 %v356, 4294901760
        %8188 = vmatprep.mubr.f32.mxu0 %v8187
        %v8189 = vand.u32 %v355, 4294901760
        %8190 = vmatmul.mubr.f32.gmra.mxu0 %v8189
        %v8191 = vpop.f32.mrf.mxu0
        %v8192 = vadd.f32 %v7767, %v8191
        %v8193 = vpop.f32.mrf.mxu0
        %v8194 = vand.u32 %v362, 4294901760
        %8195 = vmatprep.mubr.f32.mxu0 %v8194
        %v8196 = vand.u32 %v361, 4294901760
        %8197 = vmatmul.mubr.f32.gmra.mxu0 %v8196
        %v8198 = vpop.f32.mrf.mxu0
        %v8199 = vadd.f32 %v7782, %v8198
        %v8200 = vpop.f32.mrf.mxu0
        %v8201 = vand.u32 %v368, 4294901760
        %8202 = vmatprep.mubr.f32.mxu0 %v8201
        %v8203 = vand.u32 %v367, 4294901760
        %8204 = vmatmul.mubr.f32.gmra.mxu0 %v8203
        %v8205 = vpop.f32.mrf.mxu0
        %v8206 = vadd.f32 %v7797, %v8205
        %v8207 = vpop.f32.mrf.mxu0
        %v8208 = vand.u32 %v374, 4294901760
        %8209 = vmatprep.mubr.f32.mxu0 %v8208
        %v8210 = vand.u32 %v373, 4294901760
        %8211 = vmatmul.mubr.f32.gmra.mxu0 %v8210
        %v8212 = vpop.f32.mrf.mxu0
        %v8213 = vadd.f32 %v7812, %v8212
        %v8214 = vpop.f32.mrf.mxu0
        %v8215 = vand.u32 %v380, 4294901760
        %8216 = vmatprep.mubr.f32.mxu0 %v8215
        %v8217 = vand.u32 %v379, 4294901760
        %8218 = vmatmul.mubr.f32.gmra.mxu0 %v8217
        %v8219 = vpop.f32.mrf.mxu0
        %v8220 = vadd.f32 %v7827, %v8219
        %v8221 = vpop.f32.mrf.mxu0
        %v8222 = vand.u32 %v386, 4294901760
        %8223 = vmatprep.mubr.f32.mxu0 %v8222
        %v8224 = vand.u32 %v385, 4294901760
        %8225 = vmatmul.mubr.f32.gmra.mxu0 %v8224
        %v8226 = vpop.f32.mrf.mxu0
        %v8227 = vadd.f32 %v7842, %v8226
        %v8228 = vpop.f32.mrf.mxu0
        %v8229 = vand.u32 %v392, 4294901760
        %8230 = vmatprep.mubr.f32.mxu0 %v8229
        %v8231 = vand.u32 %v391, 4294901760
        %8232 = vmatmul.mubr.f32.gmra.mxu0 %v8231
        %v8233 = vpop.f32.mrf.mxu0
        %v8234 = vadd.f32 %v7857, %v8233
        %v8235 = vpop.f32.mrf.mxu0
        %v8236 = vand.u32 %v398, 4294901760
        %8237 = vmatprep.mubr.f32.mxu0 %v8236
        %v8238 = vand.u32 %v397, 4294901760
        %8239 = vmatmul.mubr.f32.gmra.mxu0 %v8238
        %v8240 = vpop.f32.mrf.mxu0
        %v8241 = vadd.f32 %v7872, %v8240
        %v8242 = vpop.f32.mrf.mxu0
        %v8243 = vand.u32 %v404, 4294901760
        %8244 = vmatprep.mubr.f32.mxu0 %v8243
        %v8245 = vand.u32 %v403, 4294901760
        %8246 = vmatmul.mubr.f32.gmra.mxu0 %v8245
        %v8247 = vpop.f32.mrf.mxu0
        %v8248 = vadd.f32 %v7887, %v8247
        %v8249 = vpop.f32.mrf.mxu0
        %v8250 = vand.u32 %v410, 4294901760
        %8251 = vmatprep.mubr.f32.mxu0 %v8250
        %v8252 = vand.u32 %v409, 4294901760
        %8253 = vmatmul.mubr.f32.gmra.mxu0 %v8252
        %v8254 = vpop.f32.mrf.mxu0
        %v8255 = vadd.f32 %v7902, %v8254
        %v8256 = vpop.f32.mrf.mxu0
        %v8257 = vand.u32 %v416, 4294901760
        %8258 = vmatprep.mubr.f32.mxu0 %v8257
        %v8259 = vand.u32 %v415, 4294901760
        %8260 = vmatmul.mubr.f32.gmra.mxu0 %v8259
        %v8261 = vpop.f32.mrf.mxu0
        %v8262 = vadd.f32 %v7917, %v8261
        %v8263 = vpop.f32.mrf.mxu0
        %v8264 = vand.u32 %v422, 4294901760
        %8265 = vmatprep.mubr.f32.mxu0 %v8264
        %v8266 = vand.u32 %v421, 4294901760
        %8267 = vmatmul.mubr.f32.gmra.mxu0 %v8266
        %v8268 = vpop.f32.mrf.mxu0
        %v8269 = vadd.f32 %v7932, %v8268
        %v8270 = vpop.f32.mrf.mxu0
        %8271 = vdwg.mxu0
        %8272 = vmatprep.subr.mxu0 0.0
        %v8273 = vand.u32 %v310, 4294901760
        %v8274 = vsub.f32 %v310, %v8273
        %8275 = vmatpush1.msra.mxu0 %v8274
        %8276 = vmatprep.subr.mxu0 0.0
        %v8277 = vand.u32 %v309, 4294901760
        %v8278 = vsub.f32 %v309, %v8277
        %8279 = vmatpush1.msra.mxu0 %v8278
        %8280 = vmatprep.subr.mxu0 0.0
        %v8281 = vand.u32 %v308, 4294901760
        %v8282 = vsub.f32 %v308, %v8281
        %8283 = vmatpush1.msra.mxu0 %v8282
        %8284 = vmatprep.subr.mxu0 0.0
        %v8285 = vand.u32 %v307, 4294901760
        %v8286 = vsub.f32 %v307, %v8285
        %8287 = vmatpush1.msra.mxu0 %v8286
        %8288 = vmatprep.subr.mxu0 0.0
        %v8289 = vand.u32 %v306, 4294901760
        %v8290 = vsub.f32 %v306, %v8289
        %8291 = vmatpush1.msra.mxu0 %v8290
        %8292 = vmatprep.subr.mxu0 0.0
        %v8293 = vand.u32 %v305, 4294901760
        %v8294 = vsub.f32 %v305, %v8293
        %8295 = vmatpush1.msra.mxu0 %v8294
        %8296 = vmatprep.subr.mxu0 0.0
        %v8297 = vand.u32 %v304, 4294901760
        %v8298 = vsub.f32 %v304, %v8297
        %8299 = vmatpush1.msra.mxu0 %v8298
        %8300 = vmatprep.subr.mxu0 0.0
        %v8301 = vand.u32 %v303, 4294901760
        %v8302 = vsub.f32 %v303, %v8301
        %8303 = vmatpush1.msra.mxu0 %v8302
        %8304 = vmatprep.subr.mxu0 0.0
        %v8305 = vand.u32 %v302, 4294901760
        %v8306 = vsub.f32 %v302, %v8305
        %8307 = vmatpush1.msra.mxu0 %v8306
        %8308 = vmatprep.subr.mxu0 0.0
        %v8309 = vand.u32 %v301, 4294901760
        %v8310 = vsub.f32 %v301, %v8309
        %8311 = vmatpush1.msra.mxu0 %v8310
        %8312 = vmatprep.subr.mxu0 0.0
        %v8313 = vand.u32 %v300, 4294901760
        %v8314 = vsub.f32 %v300, %v8313
        %8315 = vmatpush1.msra.mxu0 %v8314
        %8316 = vmatprep.subr.mxu0 0.0
        %v8317 = vand.u32 %v299, 4294901760
        %v8318 = vsub.f32 %v299, %v8317
        %8319 = vmatpush1.msra.mxu0 %v8318
        %8320 = vmatprep.subr.mxu0 0.0
        %v8321 = vand.u32 %v298, 4294901760
        %v8322 = vsub.f32 %v298, %v8321
        %8323 = vmatpush1.msra.mxu0 %v8322
        %8324 = vmatprep.subr.mxu0 0.0
        %v8325 = vand.u32 %v297, 4294901760
        %v8326 = vsub.f32 %v297, %v8325
        %8327 = vmatpush1.msra.mxu0 %v8326
        %8328 = vmatprep.subr.mxu0 0.0
        %v8329 = vand.u32 %v296, 4294901760
        %v8330 = vsub.f32 %v296, %v8329
        %8331 = vmatpush1.msra.mxu0 %v8330
        %8332 = vmatprep.subr.mxu0 0.0
        %v8333 = vand.u32 %v295, 4294901760
        %v8334 = vsub.f32 %v295, %v8333
        %8335 = vmatpush1.msra.mxu0 %v8334
        %8336 = vmatprep.subr.mxu0 0.0
        %v8337 = vand.u32 %v326, 4294901760
        %v8338 = vsub.f32 %v326, %v8337
        %8339 = vmatpush2.msra.mxu0 %v8338
        %8340 = vmatprep.subr.mxu0 0.0
        %v8341 = vand.u32 %v325, 4294901760
        %v8342 = vsub.f32 %v325, %v8341
        %8343 = vmatpush2.msra.mxu0 %v8342
        %8344 = vmatprep.subr.mxu0 0.0
        %v8345 = vand.u32 %v324, 4294901760
        %v8346 = vsub.f32 %v324, %v8345
        %8347 = vmatpush2.msra.mxu0 %v8346
        %8348 = vmatprep.subr.mxu0 0.0
        %v8349 = vand.u32 %v323, 4294901760
        %v8350 = vsub.f32 %v323, %v8349
        %8351 = vmatpush2.msra.mxu0 %v8350
        %8352 = vmatprep.subr.mxu0 0.0
        %v8353 = vand.u32 %v322, 4294901760
        %v8354 = vsub.f32 %v322, %v8353
        %8355 = vmatpush2.msra.mxu0 %v8354
        %8356 = vmatprep.subr.mxu0 0.0
        %v8357 = vand.u32 %v321, 4294901760
        %v8358 = vsub.f32 %v321, %v8357
        %8359 = vmatpush2.msra.mxu0 %v8358
        %8360 = vmatprep.subr.mxu0 0.0
        %v8361 = vand.u32 %v320, 4294901760
        %v8362 = vsub.f32 %v320, %v8361
        %8363 = vmatpush2.msra.mxu0 %v8362
        %8364 = vmatprep.subr.mxu0 0.0
        %v8365 = vand.u32 %v319, 4294901760
        %v8366 = vsub.f32 %v319, %v8365
        %8367 = vmatpush2.msra.mxu0 %v8366
        %8368 = vmatprep.subr.mxu0 0.0
        %v8369 = vand.u32 %v318, 4294901760
        %v8370 = vsub.f32 %v318, %v8369
        %8371 = vmatpush2.msra.mxu0 %v8370
        %8372 = vmatprep.subr.mxu0 0.0
        %v8373 = vand.u32 %v317, 4294901760
        %v8374 = vsub.f32 %v317, %v8373
        %8375 = vmatpush2.msra.mxu0 %v8374
        %8376 = vmatprep.subr.mxu0 0.0
        %v8377 = vand.u32 %v316, 4294901760
        %v8378 = vsub.f32 %v316, %v8377
        %8379 = vmatpush2.msra.mxu0 %v8378
        %8380 = vmatprep.subr.mxu0 0.0
        %v8381 = vand.u32 %v315, 4294901760
        %v8382 = vsub.f32 %v315, %v8381
        %8383 = vmatpush2.msra.mxu0 %v8382
        %8384 = vmatprep.subr.mxu0 0.0
        %v8385 = vand.u32 %v314, 4294901760
        %v8386 = vsub.f32 %v314, %v8385
        %8387 = vmatpush2.msra.mxu0 %v8386
        %8388 = vmatprep.subr.mxu0 0.0
        %v8389 = vand.u32 %v313, 4294901760
        %v8390 = vsub.f32 %v313, %v8389
        %8391 = vmatpush2.msra.mxu0 %v8390
        %8392 = vmatprep.subr.mxu0 0.0
        %v8393 = vand.u32 %v312, 4294901760
        %v8394 = vsub.f32 %v312, %v8393
        %8395 = vmatpush2.msra.mxu0 %v8394
        %8396 = vmatprep.subr.mxu0 0.0
        %v8397 = vand.u32 %v311, 4294901760
        %v8398 = vsub.f32 %v311, %v8397
        %8399 = vmatpush2.msra.mxu0 %v8398
        %v8400 = vand.u32 %v332, 4294901760
        %v8401 = vsub.f32 %v332, %v8400
        %8402 = vmatprep.mubr.f32.mxu0 %v8401
        %v8403 = vand.u32 %v331, 4294901760
        %v8404 = vsub.f32 %v331, %v8403
        %8405 = vmatmul.mubr.f32.gmra.mxu0 %v8404
        %v8406 = vpop.f32.mrf.mxu0
        %v8407 = vadd.f32 %v8164, %v8406
        %v8408 = vpop.f32.mrf.mxu0
        %v8409 = vand.u32 %v338, 4294901760
        %v8410 = vsub.f32 %v338, %v8409
        %8411 = vmatprep.mubr.f32.mxu0 %v8410
        %v8412 = vand.u32 %v337, 4294901760
        %v8413 = vsub.f32 %v337, %v8412
        %8414 = vmatmul.mubr.f32.gmra.mxu0 %v8413
        %v8415 = vpop.f32.mrf.mxu0
        %v8416 = vadd.f32 %v8171, %v8415
        %v8417 = vpop.f32.mrf.mxu0
        %v8418 = vand.u32 %v344, 4294901760
        %v8419 = vsub.f32 %v344, %v8418
        %8420 = vmatprep.mubr.f32.mxu0 %v8419
        %v8421 = vand.u32 %v343, 4294901760
        %v8422 = vsub.f32 %v343, %v8421
        %8423 = vmatmul.mubr.f32.gmra.mxu0 %v8422
        %v8424 = vpop.f32.mrf.mxu0
        %v8425 = vadd.f32 %v8178, %v8424
        %v8426 = vpop.f32.mrf.mxu0
        %v8427 = vand.u32 %v350, 4294901760
        %v8428 = vsub.f32 %v350, %v8427
        %8429 = vmatprep.mubr.f32.mxu0 %v8428
        %v8430 = vand.u32 %v349, 4294901760
        %v8431 = vsub.f32 %v349, %v8430
        %8432 = vmatmul.mubr.f32.gmra.mxu0 %v8431
        %v8433 = vpop.f32.mrf.mxu0
        %v8434 = vadd.f32 %v8185, %v8433
        %v8435 = vpop.f32.mrf.mxu0
        %v8436 = vand.u32 %v356, 4294901760
        %v8437 = vsub.f32 %v356, %v8436
        %8438 = vmatprep.mubr.f32.mxu0 %v8437
        %v8439 = vand.u32 %v355, 4294901760
        %v8440 = vsub.f32 %v355, %v8439
        %8441 = vmatmul.mubr.f32.gmra.mxu0 %v8440
        %v8442 = vpop.f32.mrf.mxu0
        %v8443 = vadd.f32 %v8192, %v8442
        %v8444 = vpop.f32.mrf.mxu0
        %v8445 = vand.u32 %v362, 4294901760
        %v8446 = vsub.f32 %v362, %v8445
        %8447 = vmatprep.mubr.f32.mxu0 %v8446
        %v8448 = vand.u32 %v361, 4294901760
        %v8449 = vsub.f32 %v361, %v8448
        %8450 = vmatmul.mubr.f32.gmra.mxu0 %v8449
        %v8451 = vpop.f32.mrf.mxu0
        %v8452 = vadd.f32 %v8199, %v8451
        %v8453 = vpop.f32.mrf.mxu0
        %v8454 = vand.u32 %v368, 4294901760
        %v8455 = vsub.f32 %v368, %v8454
        %8456 = vmatprep.mubr.f32.mxu0 %v8455
        %v8457 = vand.u32 %v367, 4294901760
        %v8458 = vsub.f32 %v367, %v8457
        %8459 = vmatmul.mubr.f32.gmra.mxu0 %v8458
        %v8460 = vpop.f32.mrf.mxu0
        %v8461 = vadd.f32 %v8206, %v8460
        %v8462 = vpop.f32.mrf.mxu0
        %v8463 = vand.u32 %v374, 4294901760
        %v8464 = vsub.f32 %v374, %v8463
        %8465 = vmatprep.mubr.f32.mxu0 %v8464
        %v8466 = vand.u32 %v373, 4294901760
        %v8467 = vsub.f32 %v373, %v8466
        %8468 = vmatmul.mubr.f32.gmra.mxu0 %v8467
        %v8469 = vpop.f32.mrf.mxu0
        %v8470 = vadd.f32 %v8213, %v8469
        %v8471 = vpop.f32.mrf.mxu0
        %v8472 = vand.u32 %v380, 4294901760
        %v8473 = vsub.f32 %v380, %v8472
        %8474 = vmatprep.mubr.f32.mxu0 %v8473
        %v8475 = vand.u32 %v379, 4294901760
        %v8476 = vsub.f32 %v379, %v8475
        %8477 = vmatmul.mubr.f32.gmra.mxu0 %v8476
        %v8478 = vpop.f32.mrf.mxu0
        %v8479 = vadd.f32 %v8220, %v8478
        %v8480 = vpop.f32.mrf.mxu0
        %v8481 = vand.u32 %v386, 4294901760
        %v8482 = vsub.f32 %v386, %v8481
        %8483 = vmatprep.mubr.f32.mxu0 %v8482
        %v8484 = vand.u32 %v385, 4294901760
        %v8485 = vsub.f32 %v385, %v8484
        %8486 = vmatmul.mubr.f32.gmra.mxu0 %v8485
        %v8487 = vpop.f32.mrf.mxu0
        %v8488 = vadd.f32 %v8227, %v8487
        %v8489 = vpop.f32.mrf.mxu0
        %v8490 = vand.u32 %v392, 4294901760
        %v8491 = vsub.f32 %v392, %v8490
        %8492 = vmatprep.mubr.f32.mxu0 %v8491
        %v8493 = vand.u32 %v391, 4294901760
        %v8494 = vsub.f32 %v391, %v8493
        %8495 = vmatmul.mubr.f32.gmra.mxu0 %v8494
        %v8496 = vpop.f32.mrf.mxu0
        %v8497 = vadd.f32 %v8234, %v8496
        %v8498 = vpop.f32.mrf.mxu0
        %v8499 = vand.u32 %v398, 4294901760
        %v8500 = vsub.f32 %v398, %v8499
        %8501 = vmatprep.mubr.f32.mxu0 %v8500
        %v8502 = vand.u32 %v397, 4294901760
        %v8503 = vsub.f32 %v397, %v8502
        %8504 = vmatmul.mubr.f32.gmra.mxu0 %v8503
        %v8505 = vpop.f32.mrf.mxu0
        %v8506 = vadd.f32 %v8241, %v8505
        %v8507 = vpop.f32.mrf.mxu0
        %v8508 = vand.u32 %v404, 4294901760
        %v8509 = vsub.f32 %v404, %v8508
        %8510 = vmatprep.mubr.f32.mxu0 %v8509
        %v8511 = vand.u32 %v403, 4294901760
        %v8512 = vsub.f32 %v403, %v8511
        %8513 = vmatmul.mubr.f32.gmra.mxu0 %v8512
        %v8514 = vpop.f32.mrf.mxu0
        %v8515 = vadd.f32 %v8248, %v8514
        %v8516 = vpop.f32.mrf.mxu0
        %v8517 = vand.u32 %v410, 4294901760
        %v8518 = vsub.f32 %v410, %v8517
        %8519 = vmatprep.mubr.f32.mxu0 %v8518
        %v8520 = vand.u32 %v409, 4294901760
        %v8521 = vsub.f32 %v409, %v8520
        %8522 = vmatmul.mubr.f32.gmra.mxu0 %v8521
        %v8523 = vpop.f32.mrf.mxu0
        %v8524 = vadd.f32 %v8255, %v8523
        %v8525 = vpop.f32.mrf.mxu0
        %v8526 = vand.u32 %v416, 4294901760
        %v8527 = vsub.f32 %v416, %v8526
        %8528 = vmatprep.mubr.f32.mxu0 %v8527
        %v8529 = vand.u32 %v415, 4294901760
        %v8530 = vsub.f32 %v415, %v8529
        %8531 = vmatmul.mubr.f32.gmra.mxu0 %v8530
        %v8532 = vpop.f32.mrf.mxu0
        %v8533 = vadd.f32 %v8262, %v8532
        %v8534 = vpop.f32.mrf.mxu0
        %v8535 = vand.u32 %v422, 4294901760
        %v8536 = vsub.f32 %v422, %v8535
        %8537 = vmatprep.mubr.f32.mxu0 %v8536
        %v8538 = vand.u32 %v421, 4294901760
        %v8539 = vsub.f32 %v421, %v8538
        %8540 = vmatmul.mubr.f32.gmra.mxu0 %v8539
        %v8541 = vpop.f32.mrf.mxu0
        %v8542 = vadd.f32 %v8269, %v8541
        %v8543 = vpop.f32.mrf.mxu0
        %8544 = vdwg.mxu0
        %8545 = vmatprep.subr.mxu0 0.0
        %v8546 = vand.u32 %v310, 4294901760
        %8547 = vmatpush1.msra.mxu0 %v8546
        %8548 = vmatprep.subr.mxu0 0.0
        %v8549 = vand.u32 %v309, 4294901760
        %8550 = vmatpush1.msra.mxu0 %v8549
        %8551 = vmatprep.subr.mxu0 0.0
        %v8552 = vand.u32 %v308, 4294901760
        %8553 = vmatpush1.msra.mxu0 %v8552
        %8554 = vmatprep.subr.mxu0 0.0
        %v8555 = vand.u32 %v307, 4294901760
        %8556 = vmatpush1.msra.mxu0 %v8555
        %8557 = vmatprep.subr.mxu0 0.0
        %v8558 = vand.u32 %v306, 4294901760
        %8559 = vmatpush1.msra.mxu0 %v8558
        %8560 = vmatprep.subr.mxu0 0.0
        %v8561 = vand.u32 %v305, 4294901760
        %8562 = vmatpush1.msra.mxu0 %v8561
        %8563 = vmatprep.subr.mxu0 0.0
        %v8564 = vand.u32 %v304, 4294901760
        %8565 = vmatpush1.msra.mxu0 %v8564
        %8566 = vmatprep.subr.mxu0 0.0
        %v8567 = vand.u32 %v303, 4294901760
        %8568 = vmatpush1.msra.mxu0 %v8567
        %8569 = vmatprep.subr.mxu0 0.0
        %v8570 = vand.u32 %v302, 4294901760
        %8571 = vmatpush1.msra.mxu0 %v8570
        %8572 = vmatprep.subr.mxu0 0.0
        %v8573 = vand.u32 %v301, 4294901760
        %8574 = vmatpush1.msra.mxu0 %v8573
        %8575 = vmatprep.subr.mxu0 0.0
        %v8576 = vand.u32 %v300, 4294901760
        %8577 = vmatpush1.msra.mxu0 %v8576
        %8578 = vmatprep.subr.mxu0 0.0
        %v8579 = vand.u32 %v299, 4294901760
        %8580 = vmatpush1.msra.mxu0 %v8579
        %8581 = vmatprep.subr.mxu0 0.0
        %v8582 = vand.u32 %v298, 4294901760
        %8583 = vmatpush1.msra.mxu0 %v8582
        %8584 = vmatprep.subr.mxu0 0.0
        %v8585 = vand.u32 %v297, 4294901760
        %8586 = vmatpush1.msra.mxu0 %v8585
        %8587 = vmatprep.subr.mxu0 0.0
        %v8588 = vand.u32 %v296, 4294901760
        %8589 = vmatpush1.msra.mxu0 %v8588
        %8590 = vmatprep.subr.mxu0 0.0
        %v8591 = vand.u32 %v295, 4294901760
        %8592 = vmatpush1.msra.mxu0 %v8591
        %8593 = vmatprep.subr.mxu0 0.0
        %v8594 = vand.u32 %v326, 4294901760
        %8595 = vmatpush2.msra.mxu0 %v8594
        %8596 = vmatprep.subr.mxu0 0.0
        %v8597 = vand.u32 %v325, 4294901760
        %8598 = vmatpush2.msra.mxu0 %v8597
        %8599 = vmatprep.subr.mxu0 0.0
        %v8600 = vand.u32 %v324, 4294901760
        %8601 = vmatpush2.msra.mxu0 %v8600
        %8602 = vmatprep.subr.mxu0 0.0
        %v8603 = vand.u32 %v323, 4294901760
        %8604 = vmatpush2.msra.mxu0 %v8603
        %8605 = vmatprep.subr.mxu0 0.0
        %v8606 = vand.u32 %v322, 4294901760
        %8607 = vmatpush2.msra.mxu0 %v8606
        %8608 = vmatprep.subr.mxu0 0.0
        %v8609 = vand.u32 %v321, 4294901760
        %8610 = vmatpush2.msra.mxu0 %v8609
        %8611 = vmatprep.subr.mxu0 0.0
        %v8612 = vand.u32 %v320, 4294901760
        %8613 = vmatpush2.msra.mxu0 %v8612
        %8614 = vmatprep.subr.mxu0 0.0
        %v8615 = vand.u32 %v319, 4294901760
        %8616 = vmatpush2.msra.mxu0 %v8615
        %8617 = vmatprep.subr.mxu0 0.0
        %v8618 = vand.u32 %v318, 4294901760
        %8619 = vmatpush2.msra.mxu0 %v8618
        %8620 = vmatprep.subr.mxu0 0.0
        %v8621 = vand.u32 %v317, 4294901760
        %8622 = vmatpush2.msra.mxu0 %v8621
        %8623 = vmatprep.subr.mxu0 0.0
        %v8624 = vand.u32 %v316, 4294901760
        %8625 = vmatpush2.msra.mxu0 %v8624
        %8626 = vmatprep.subr.mxu0 0.0
        %v8627 = vand.u32 %v315, 4294901760
        %8628 = vmatpush2.msra.mxu0 %v8627
        %8629 = vmatprep.subr.mxu0 0.0
        %v8630 = vand.u32 %v314, 4294901760
        %8631 = vmatpush2.msra.mxu0 %v8630
        %8632 = vmatprep.subr.mxu0 0.0
        %v8633 = vand.u32 %v313, 4294901760
        %8634 = vmatpush2.msra.mxu0 %v8633
        %8635 = vmatprep.subr.mxu0 0.0
        %v8636 = vand.u32 %v312, 4294901760
        %8637 = vmatpush2.msra.mxu0 %v8636
        %8638 = vmatprep.subr.mxu0 0.0
        %v8639 = vand.u32 %v311, 4294901760
        %8640 = vmatpush2.msra.mxu0 %v8639
        %v8641 = vand.u32 %v332, 4294901760
        %v8642 = vsub.f32 %v332, %v8641
        %v8643 = vand.u32 %v8642, 4294901760
        %8644 = vmatprep.mubr.f32.mxu0 %v8643
        %v8645 = vand.u32 %v331, 4294901760
        %v8646 = vsub.f32 %v331, %v8645
        %v8647 = vand.u32 %v8646, 4294901760
        %8648 = vmatmul.mubr.f32.gmra.mxu0 %v8647
        %v8649 = vpop.f32.mrf.mxu0
        %v8650 = vadd.f32 %v8407, %v8649
        %v8651 = vpop.f32.mrf.mxu0
        %v8652 = vand.u32 %v338, 4294901760
        %v8653 = vsub.f32 %v338, %v8652
        %v8654 = vand.u32 %v8653, 4294901760
        %8655 = vmatprep.mubr.f32.mxu0 %v8654
        %v8656 = vand.u32 %v337, 4294901760
        %v8657 = vsub.f32 %v337, %v8656
        %v8658 = vand.u32 %v8657, 4294901760
        %8659 = vmatmul.mubr.f32.gmra.mxu0 %v8658
        %v8660 = vpop.f32.mrf.mxu0
        %v8661 = vadd.f32 %v8416, %v8660
        %v8662 = vpop.f32.mrf.mxu0
        %v8663 = vand.u32 %v344, 4294901760
        %v8664 = vsub.f32 %v344, %v8663
        %v8665 = vand.u32 %v8664, 4294901760
        %8666 = vmatprep.mubr.f32.mxu0 %v8665
        %v8667 = vand.u32 %v343, 4294901760
        %v8668 = vsub.f32 %v343, %v8667
        %v8669 = vand.u32 %v8668, 4294901760
        %8670 = vmatmul.mubr.f32.gmra.mxu0 %v8669
        %v8671 = vpop.f32.mrf.mxu0
        %v8672 = vadd.f32 %v8425, %v8671
        %v8673 = vpop.f32.mrf.mxu0
        %v8674 = vand.u32 %v350, 4294901760
        %v8675 = vsub.f32 %v350, %v8674
        %v8676 = vand.u32 %v8675, 4294901760
        %8677 = vmatprep.mubr.f32.mxu0 %v8676
        %v8678 = vand.u32 %v349, 4294901760
        %v8679 = vsub.f32 %v349, %v8678
        %v8680 = vand.u32 %v8679, 4294901760
        %8681 = vmatmul.mubr.f32.gmra.mxu0 %v8680
        %v8682 = vpop.f32.mrf.mxu0
        %v8683 = vadd.f32 %v8434, %v8682
        %v8684 = vpop.f32.mrf.mxu0
        %v8685 = vand.u32 %v356, 4294901760
        %v8686 = vsub.f32 %v356, %v8685
        %v8687 = vand.u32 %v8686, 4294901760
        %8688 = vmatprep.mubr.f32.mxu0 %v8687
        %v8689 = vand.u32 %v355, 4294901760
        %v8690 = vsub.f32 %v355, %v8689
        %v8691 = vand.u32 %v8690, 4294901760
        %8692 = vmatmul.mubr.f32.gmra.mxu0 %v8691
        %v8693 = vpop.f32.mrf.mxu0
        %v8694 = vadd.f32 %v8443, %v8693
        %v8695 = vpop.f32.mrf.mxu0
        %v8696 = vand.u32 %v362, 4294901760
        %v8697 = vsub.f32 %v362, %v8696
        %v8698 = vand.u32 %v8697, 4294901760
        %8699 = vmatprep.mubr.f32.mxu0 %v8698
        %v8700 = vand.u32 %v361, 4294901760
        %v8701 = vsub.f32 %v361, %v8700
        %v8702 = vand.u32 %v8701, 4294901760
        %8703 = vmatmul.mubr.f32.gmra.mxu0 %v8702
        %v8704 = vpop.f32.mrf.mxu0
        %v8705 = vadd.f32 %v8452, %v8704
        %v8706 = vpop.f32.mrf.mxu0
        %v8707 = vand.u32 %v368, 4294901760
        %v8708 = vsub.f32 %v368, %v8707
        %v8709 = vand.u32 %v8708, 4294901760
        %8710 = vmatprep.mubr.f32.mxu0 %v8709
        %v8711 = vand.u32 %v367, 4294901760
        %v8712 = vsub.f32 %v367, %v8711
        %v8713 = vand.u32 %v8712, 4294901760
        %8714 = vmatmul.mubr.f32.gmra.mxu0 %v8713
        %v8715 = vpop.f32.mrf.mxu0
        %v8716 = vadd.f32 %v8461, %v8715
        %v8717 = vpop.f32.mrf.mxu0
        %v8718 = vand.u32 %v374, 4294901760
        %v8719 = vsub.f32 %v374, %v8718
        %v8720 = vand.u32 %v8719, 4294901760
        %8721 = vmatprep.mubr.f32.mxu0 %v8720
        %v8722 = vand.u32 %v373, 4294901760
        %v8723 = vsub.f32 %v373, %v8722
        %v8724 = vand.u32 %v8723, 4294901760
        %8725 = vmatmul.mubr.f32.gmra.mxu0 %v8724
        %v8726 = vpop.f32.mrf.mxu0
        %v8727 = vadd.f32 %v8470, %v8726
        %v8728 = vpop.f32.mrf.mxu0
        %v8729 = vand.u32 %v380, 4294901760
        %v8730 = vsub.f32 %v380, %v8729
        %v8731 = vand.u32 %v8730, 4294901760
        %8732 = vmatprep.mubr.f32.mxu0 %v8731
        %v8733 = vand.u32 %v379, 4294901760
        %v8734 = vsub.f32 %v379, %v8733
        %v8735 = vand.u32 %v8734, 4294901760
        %8736 = vmatmul.mubr.f32.gmra.mxu0 %v8735
        %v8737 = vpop.f32.mrf.mxu0
        %v8738 = vadd.f32 %v8479, %v8737
        %v8739 = vpop.f32.mrf.mxu0
        %v8740 = vand.u32 %v386, 4294901760
        %v8741 = vsub.f32 %v386, %v8740
        %v8742 = vand.u32 %v8741, 4294901760
        %8743 = vmatprep.mubr.f32.mxu0 %v8742
        %v8744 = vand.u32 %v385, 4294901760
        %v8745 = vsub.f32 %v385, %v8744
        %v8746 = vand.u32 %v8745, 4294901760
        %8747 = vmatmul.mubr.f32.gmra.mxu0 %v8746
        %v8748 = vpop.f32.mrf.mxu0
        %v8749 = vadd.f32 %v8488, %v8748
        %v8750 = vpop.f32.mrf.mxu0
        %v8751 = vand.u32 %v392, 4294901760
        %v8752 = vsub.f32 %v392, %v8751
        %v8753 = vand.u32 %v8752, 4294901760
        %8754 = vmatprep.mubr.f32.mxu0 %v8753
        %v8755 = vand.u32 %v391, 4294901760
        %v8756 = vsub.f32 %v391, %v8755
        %v8757 = vand.u32 %v8756, 4294901760
        %8758 = vmatmul.mubr.f32.gmra.mxu0 %v8757
        %v8759 = vpop.f32.mrf.mxu0
        %v8760 = vadd.f32 %v8497, %v8759
        %v8761 = vpop.f32.mrf.mxu0
        %v8762 = vand.u32 %v398, 4294901760
        %v8763 = vsub.f32 %v398, %v8762
        %v8764 = vand.u32 %v8763, 4294901760
        %8765 = vmatprep.mubr.f32.mxu0 %v8764
        %v8766 = vand.u32 %v397, 4294901760
        %v8767 = vsub.f32 %v397, %v8766
        %v8768 = vand.u32 %v8767, 4294901760
        %8769 = vmatmul.mubr.f32.gmra.mxu0 %v8768
        %v8770 = vpop.f32.mrf.mxu0
        %v8771 = vadd.f32 %v8506, %v8770
        %v8772 = vpop.f32.mrf.mxu0
        %v8773 = vand.u32 %v404, 4294901760
        %v8774 = vsub.f32 %v404, %v8773
        %v8775 = vand.u32 %v8774, 4294901760
        %8776 = vmatprep.mubr.f32.mxu0 %v8775
        %v8777 = vand.u32 %v403, 4294901760
        %v8778 = vsub.f32 %v403, %v8777
        %v8779 = vand.u32 %v8778, 4294901760
        %8780 = vmatmul.mubr.f32.gmra.mxu0 %v8779
        %v8781 = vpop.f32.mrf.mxu0
        %v8782 = vadd.f32 %v8515, %v8781
        %v8783 = vpop.f32.mrf.mxu0
        %v8784 = vand.u32 %v410, 4294901760
        %v8785 = vsub.f32 %v410, %v8784
        %v8786 = vand.u32 %v8785, 4294901760
        %8787 = vmatprep.mubr.f32.mxu0 %v8786
        %v8788 = vand.u32 %v409, 4294901760
        %v8789 = vsub.f32 %v409, %v8788
        %v8790 = vand.u32 %v8789, 4294901760
        %8791 = vmatmul.mubr.f32.gmra.mxu0 %v8790
        %v8792 = vpop.f32.mrf.mxu0
        %v8793 = vadd.f32 %v8524, %v8792
        %v8794 = vpop.f32.mrf.mxu0
        %v8795 = vand.u32 %v416, 4294901760
        %v8796 = vsub.f32 %v416, %v8795
        %v8797 = vand.u32 %v8796, 4294901760
        %8798 = vmatprep.mubr.f32.mxu0 %v8797
        %v8799 = vand.u32 %v415, 4294901760
        %v8800 = vsub.f32 %v415, %v8799
        %v8801 = vand.u32 %v8800, 4294901760
        %8802 = vmatmul.mubr.f32.gmra.mxu0 %v8801
        %v8803 = vpop.f32.mrf.mxu0
        %v8804 = vadd.f32 %v8533, %v8803
        %v8805 = vpop.f32.mrf.mxu0
        %v8806 = vand.u32 %v422, 4294901760
        %v8807 = vsub.f32 %v422, %v8806
        %v8808 = vand.u32 %v8807, 4294901760
        %8809 = vmatprep.mubr.f32.mxu0 %v8808
        %v8810 = vand.u32 %v421, 4294901760
        %v8811 = vsub.f32 %v421, %v8810
        %v8812 = vand.u32 %v8811, 4294901760
        %8813 = vmatmul.mubr.f32.gmra.mxu0 %v8812
        %v8814 = vpop.f32.mrf.mxu0
        %v8815 = vadd.f32 %v8542, %v8814
        %v8816 = vpop.f32.mrf.mxu0
        %8817 = vdwg.mxu0
        %8818 = vmatprep.subr.mxu0 0.0
        %v8819 = vand.u32 %v310, 4294901760
        %v8820 = vsub.f32 %v310, %v8819
        %v8821 = vand.u32 %v8820, 4294901760
        %8822 = vmatpush1.msra.mxu0 %v8821
        %8823 = vmatprep.subr.mxu0 0.0
        %v8824 = vand.u32 %v309, 4294901760
        %v8825 = vsub.f32 %v309, %v8824
        %v8826 = vand.u32 %v8825, 4294901760
        %8827 = vmatpush1.msra.mxu0 %v8826
        %8828 = vmatprep.subr.mxu0 0.0
        %v8829 = vand.u32 %v308, 4294901760
        %v8830 = vsub.f32 %v308, %v8829
        %v8831 = vand.u32 %v8830, 4294901760
        %8832 = vmatpush1.msra.mxu0 %v8831
        %8833 = vmatprep.subr.mxu0 0.0
        %v8834 = vand.u32 %v307, 4294901760
        %v8835 = vsub.f32 %v307, %v8834
        %v8836 = vand.u32 %v8835, 4294901760
        %8837 = vmatpush1.msra.mxu0 %v8836
        %8838 = vmatprep.subr.mxu0 0.0
        %v8839 = vand.u32 %v306, 4294901760
        %v8840 = vsub.f32 %v306, %v8839
        %v8841 = vand.u32 %v8840, 4294901760
        %8842 = vmatpush1.msra.mxu0 %v8841
        %8843 = vmatprep.subr.mxu0 0.0
        %v8844 = vand.u32 %v305, 4294901760
        %v8845 = vsub.f32 %v305, %v8844
        %v8846 = vand.u32 %v8845, 4294901760
        %8847 = vmatpush1.msra.mxu0 %v8846
        %8848 = vmatprep.subr.mxu0 0.0
        %v8849 = vand.u32 %v304, 4294901760
        %v8850 = vsub.f32 %v304, %v8849
        %v8851 = vand.u32 %v8850, 4294901760
        %8852 = vmatpush1.msra.mxu0 %v8851
        %8853 = vmatprep.subr.mxu0 0.0
        %v8854 = vand.u32 %v303, 4294901760
        %v8855 = vsub.f32 %v303, %v8854
        %v8856 = vand.u32 %v8855, 4294901760
        %8857 = vmatpush1.msra.mxu0 %v8856
        %8858 = vmatprep.subr.mxu0 0.0
        %v8859 = vand.u32 %v302, 4294901760
        %v8860 = vsub.f32 %v302, %v8859
        %v8861 = vand.u32 %v8860, 4294901760
        %8862 = vmatpush1.msra.mxu0 %v8861
        %8863 = vmatprep.subr.mxu0 0.0
        %v8864 = vand.u32 %v301, 4294901760
        %v8865 = vsub.f32 %v301, %v8864
        %v8866 = vand.u32 %v8865, 4294901760
        %8867 = vmatpush1.msra.mxu0 %v8866
        %8868 = vmatprep.subr.mxu0 0.0
        %v8869 = vand.u32 %v300, 4294901760
        %v8870 = vsub.f32 %v300, %v8869
        %v8871 = vand.u32 %v8870, 4294901760
        %8872 = vmatpush1.msra.mxu0 %v8871
        %8873 = vmatprep.subr.mxu0 0.0
        %v8874 = vand.u32 %v299, 4294901760
        %v8875 = vsub.f32 %v299, %v8874
        %v8876 = vand.u32 %v8875, 4294901760
        %8877 = vmatpush1.msra.mxu0 %v8876
        %8878 = vmatprep.subr.mxu0 0.0
        %v8879 = vand.u32 %v298, 4294901760
        %v8880 = vsub.f32 %v298, %v8879
        %v8881 = vand.u32 %v8880, 4294901760
        %8882 = vmatpush1.msra.mxu0 %v8881
        %8883 = vmatprep.subr.mxu0 0.0
        %v8884 = vand.u32 %v297, 4294901760
        %v8885 = vsub.f32 %v297, %v8884
        %v8886 = vand.u32 %v8885, 4294901760
        %8887 = vmatpush1.msra.mxu0 %v8886
        %8888 = vmatprep.subr.mxu0 0.0
        %v8889 = vand.u32 %v296, 4294901760
        %v8890 = vsub.f32 %v296, %v8889
        %v8891 = vand.u32 %v8890, 4294901760
        %8892 = vmatpush1.msra.mxu0 %v8891
        %8893 = vmatprep.subr.mxu0 0.0
        %v8894 = vand.u32 %v295, 4294901760
        %v8895 = vsub.f32 %v295, %v8894
        %v8896 = vand.u32 %v8895, 4294901760
        %8897 = vmatpush1.msra.mxu0 %v8896
        %8898 = vmatprep.subr.mxu0 0.0
        %v8899 = vand.u32 %v326, 4294901760
        %v8900 = vsub.f32 %v326, %v8899
        %v8901 = vand.u32 %v8900, 4294901760
        %8902 = vmatpush2.msra.mxu0 %v8901
        %8903 = vmatprep.subr.mxu0 0.0
        %v8904 = vand.u32 %v325, 4294901760
        %v8905 = vsub.f32 %v325, %v8904
        %v8906 = vand.u32 %v8905, 4294901760
        %8907 = vmatpush2.msra.mxu0 %v8906
        %8908 = vmatprep.subr.mxu0 0.0
        %v8909 = vand.u32 %v324, 4294901760
        %v8910 = vsub.f32 %v324, %v8909
        %v8911 = vand.u32 %v8910, 4294901760
        %8912 = vmatpush2.msra.mxu0 %v8911
        %8913 = vmatprep.subr.mxu0 0.0
        %v8914 = vand.u32 %v323, 4294901760
        %v8915 = vsub.f32 %v323, %v8914
        %v8916 = vand.u32 %v8915, 4294901760
        %8917 = vmatpush2.msra.mxu0 %v8916
        %8918 = vmatprep.subr.mxu0 0.0
        %v8919 = vand.u32 %v322, 4294901760
        %v8920 = vsub.f32 %v322, %v8919
        %v8921 = vand.u32 %v8920, 4294901760
        %8922 = vmatpush2.msra.mxu0 %v8921
        %8923 = vmatprep.subr.mxu0 0.0
        %v8924 = vand.u32 %v321, 4294901760
        %v8925 = vsub.f32 %v321, %v8924
        %v8926 = vand.u32 %v8925, 4294901760
        %8927 = vmatpush2.msra.mxu0 %v8926
        %8928 = vmatprep.subr.mxu0 0.0
        %v8929 = vand.u32 %v320, 4294901760
        %v8930 = vsub.f32 %v320, %v8929
        %v8931 = vand.u32 %v8930, 4294901760
        %8932 = vmatpush2.msra.mxu0 %v8931
        %8933 = vmatprep.subr.mxu0 0.0
        %v8934 = vand.u32 %v319, 4294901760
        %v8935 = vsub.f32 %v319, %v8934
        %v8936 = vand.u32 %v8935, 4294901760
        %8937 = vmatpush2.msra.mxu0 %v8936
        %8938 = vmatprep.subr.mxu0 0.0
        %v8939 = vand.u32 %v318, 4294901760
        %v8940 = vsub.f32 %v318, %v8939
        %v8941 = vand.u32 %v8940, 4294901760
        %8942 = vmatpush2.msra.mxu0 %v8941
        %8943 = vmatprep.subr.mxu0 0.0
        %v8944 = vand.u32 %v317, 4294901760
        %v8945 = vsub.f32 %v317, %v8944
        %v8946 = vand.u32 %v8945, 4294901760
        %8947 = vmatpush2.msra.mxu0 %v8946
        %8948 = vmatprep.subr.mxu0 0.0
        %v8949 = vand.u32 %v316, 4294901760
        %v8950 = vsub.f32 %v316, %v8949
        %v8951 = vand.u32 %v8950, 4294901760
        %8952 = vmatpush2.msra.mxu0 %v8951
        %8953 = vmatprep.subr.mxu0 0.0
        %v8954 = vand.u32 %v315, 4294901760
        %v8955 = vsub.f32 %v315, %v8954
        %v8956 = vand.u32 %v8955, 4294901760
        %8957 = vmatpush2.msra.mxu0 %v8956
        %8958 = vmatprep.subr.mxu0 0.0
        %v8959 = vand.u32 %v314, 4294901760
        %v8960 = vsub.f32 %v314, %v8959
        %v8961 = vand.u32 %v8960, 4294901760
        %8962 = vmatpush2.msra.mxu0 %v8961
        %8963 = vmatprep.subr.mxu0 0.0
        %v8964 = vand.u32 %v313, 4294901760
        %v8965 = vsub.f32 %v313, %v8964
        %v8966 = vand.u32 %v8965, 4294901760
        %8967 = vmatpush2.msra.mxu0 %v8966
        %8968 = vmatprep.subr.mxu0 0.0
        %v8969 = vand.u32 %v312, 4294901760
        %v8970 = vsub.f32 %v312, %v8969
        %v8971 = vand.u32 %v8970, 4294901760
        %8972 = vmatpush2.msra.mxu0 %v8971
        %8973 = vmatprep.subr.mxu0 0.0
        %v8974 = vand.u32 %v311, 4294901760
        %v8975 = vsub.f32 %v311, %v8974
        %v8976 = vand.u32 %v8975, 4294901760
        %8977 = vmatpush2.msra.mxu0 %v8976
        %v8978 = vand.u32 %v332, 4294901760
        %8979 = vmatprep.mubr.f32.mxu0 %v8978
        %v8980 = vand.u32 %v331, 4294901760
        %8981 = vmatmul.mubr.f32.gmra.mxu0 %v8980
        %v8982 = vpop.f32.mrf.mxu0
        %v8983 = vadd.f32 %v8650, %v8982
        %v8984 = vpop.f32.mrf.mxu0
        %v8985 = vand.u32 %v338, 4294901760
        %8986 = vmatprep.mubr.f32.mxu0 %v8985
        %v8987 = vand.u32 %v337, 4294901760
        %8988 = vmatmul.mubr.f32.gmra.mxu0 %v8987
        %v8989 = vpop.f32.mrf.mxu0
        %v8990 = vadd.f32 %v8661, %v8989
        %v8991 = vpop.f32.mrf.mxu0
        %v8992 = vand.u32 %v344, 4294901760
        %8993 = vmatprep.mubr.f32.mxu0 %v8992
        %v8994 = vand.u32 %v343, 4294901760
        %8995 = vmatmul.mubr.f32.gmra.mxu0 %v8994
        %v8996 = vpop.f32.mrf.mxu0
        %v8997 = vadd.f32 %v8672, %v8996
        %v8998 = vpop.f32.mrf.mxu0
        %v8999 = vand.u32 %v350, 4294901760
        %9000 = vmatprep.mubr.f32.mxu0 %v8999
        %v9001 = vand.u32 %v349, 4294901760
        %9002 = vmatmul.mubr.f32.gmra.mxu0 %v9001
        %v9003 = vpop.f32.mrf.mxu0
        %v9004 = vadd.f32 %v8683, %v9003
        %v9005 = vpop.f32.mrf.mxu0
        %v9006 = vand.u32 %v356, 4294901760
        %9007 = vmatprep.mubr.f32.mxu0 %v9006
        %v9008 = vand.u32 %v355, 4294901760
        %9009 = vmatmul.mubr.f32.gmra.mxu0 %v9008
        %v9010 = vpop.f32.mrf.mxu0
        %v9011 = vadd.f32 %v8694, %v9010
        %v9012 = vpop.f32.mrf.mxu0
        %v9013 = vand.u32 %v362, 4294901760
        %9014 = vmatprep.mubr.f32.mxu0 %v9013
        %v9015 = vand.u32 %v361, 4294901760
        %9016 = vmatmul.mubr.f32.gmra.mxu0 %v9015
        %v9017 = vpop.f32.mrf.mxu0
        %v9018 = vadd.f32 %v8705, %v9017
        %v9019 = vpop.f32.mrf.mxu0
        %v9020 = vand.u32 %v368, 4294901760
        %9021 = vmatprep.mubr.f32.mxu0 %v9020
        %v9022 = vand.u32 %v367, 4294901760
        %9023 = vmatmul.mubr.f32.gmra.mxu0 %v9022
        %v9024 = vpop.f32.mrf.mxu0
        %v9025 = vadd.f32 %v8716, %v9024
        %v9026 = vpop.f32.mrf.mxu0
        %v9027 = vand.u32 %v374, 4294901760
        %9028 = vmatprep.mubr.f32.mxu0 %v9027
        %v9029 = vand.u32 %v373, 4294901760
        %9030 = vmatmul.mubr.f32.gmra.mxu0 %v9029
        %v9031 = vpop.f32.mrf.mxu0
        %v9032 = vadd.f32 %v8727, %v9031
        %v9033 = vpop.f32.mrf.mxu0
        %v9034 = vand.u32 %v380, 4294901760
        %9035 = vmatprep.mubr.f32.mxu0 %v9034
        %v9036 = vand.u32 %v379, 4294901760
        %9037 = vmatmul.mubr.f32.gmra.mxu0 %v9036
        %v9038 = vpop.f32.mrf.mxu0
        %v9039 = vadd.f32 %v8738, %v9038
        %v9040 = vpop.f32.mrf.mxu0
        %v9041 = vand.u32 %v386, 4294901760
        %9042 = vmatprep.mubr.f32.mxu0 %v9041
        %v9043 = vand.u32 %v385, 4294901760
        %9044 = vmatmul.mubr.f32.gmra.mxu0 %v9043
        %v9045 = vpop.f32.mrf.mxu0
        %v9046 = vadd.f32 %v8749, %v9045
        %v9047 = vpop.f32.mrf.mxu0
        %v9048 = vand.u32 %v392, 4294901760
        %9049 = vmatprep.mubr.f32.mxu0 %v9048
        %v9050 = vand.u32 %v391, 4294901760
        %9051 = vmatmul.mubr.f32.gmra.mxu0 %v9050
        %v9052 = vpop.f32.mrf.mxu0
        %v9053 = vadd.f32 %v8760, %v9052
        %v9054 = vpop.f32.mrf.mxu0
        %v9055 = vand.u32 %v398, 4294901760
        %9056 = vmatprep.mubr.f32.mxu0 %v9055
        %v9057 = vand.u32 %v397, 4294901760
        %9058 = vmatmul.mubr.f32.gmra.mxu0 %v9057
        %v9059 = vpop.f32.mrf.mxu0
        %v9060 = vadd.f32 %v8771, %v9059
        %v9061 = vpop.f32.mrf.mxu0
        %v9062 = vand.u32 %v404, 4294901760
        %9063 = vmatprep.mubr.f32.mxu0 %v9062
        %v9064 = vand.u32 %v403, 4294901760
        %9065 = vmatmul.mubr.f32.gmra.mxu0 %v9064
        %v9066 = vpop.f32.mrf.mxu0
        %v9067 = vadd.f32 %v8782, %v9066
        %v9068 = vpop.f32.mrf.mxu0
        %v9069 = vand.u32 %v410, 4294901760
        %9070 = vmatprep.mubr.f32.mxu0 %v9069
        %v9071 = vand.u32 %v409, 4294901760
        %9072 = vmatmul.mubr.f32.gmra.mxu0 %v9071
        %v9073 = vpop.f32.mrf.mxu0
        %v9074 = vadd.f32 %v8793, %v9073
        %v9075 = vpop.f32.mrf.mxu0
        %v9076 = vand.u32 %v416, 4294901760
        %9077 = vmatprep.mubr.f32.mxu0 %v9076
        %v9078 = vand.u32 %v415, 4294901760
        %9079 = vmatmul.mubr.f32.gmra.mxu0 %v9078
        %v9080 = vpop.f32.mrf.mxu0
        %v9081 = vadd.f32 %v8804, %v9080
        %v9082 = vpop.f32.mrf.mxu0
        %v9083 = vand.u32 %v422, 4294901760
        %9084 = vmatprep.mubr.f32.mxu0 %v9083
        %v9085 = vand.u32 %v421, 4294901760
        %9086 = vmatmul.mubr.f32.gmra.mxu0 %v9085
        %v9087 = vpop.f32.mrf.mxu0
        %v9088 = vadd.f32 %v8815, %v9087
        %v9089 = vpop.f32.mrf.mxu0
        %9090 = vdwg.mxu0
        %9091 = vmatprep.subr.mxu0 0.0
        %v9092 = vand.u32 %v310, 4294901760
        %9093 = vmatpush1.msra.mxu0 %v9092
        %9094 = vmatprep.subr.mxu0 0.0
        %v9095 = vand.u32 %v309, 4294901760
        %9096 = vmatpush1.msra.mxu0 %v9095
        %9097 = vmatprep.subr.mxu0 0.0
        %v9098 = vand.u32 %v308, 4294901760
        %9099 = vmatpush1.msra.mxu0 %v9098
        %9100 = vmatprep.subr.mxu0 0.0
        %v9101 = vand.u32 %v307, 4294901760
        %9102 = vmatpush1.msra.mxu0 %v9101
        %9103 = vmatprep.subr.mxu0 0.0
        %v9104 = vand.u32 %v306, 4294901760
        %9105 = vmatpush1.msra.mxu0 %v9104
        %9106 = vmatprep.subr.mxu0 0.0
        %v9107 = vand.u32 %v305, 4294901760
        %9108 = vmatpush1.msra.mxu0 %v9107
        %9109 = vmatprep.subr.mxu0 0.0
        %v9110 = vand.u32 %v304, 4294901760
        %9111 = vmatpush1.msra.mxu0 %v9110
        %9112 = vmatprep.subr.mxu0 0.0
        %v9113 = vand.u32 %v303, 4294901760
        %9114 = vmatpush1.msra.mxu0 %v9113
        %9115 = vmatprep.subr.mxu0 0.0
        %v9116 = vand.u32 %v302, 4294901760
        %9117 = vmatpush1.msra.mxu0 %v9116
        %9118 = vmatprep.subr.mxu0 0.0
        %v9119 = vand.u32 %v301, 4294901760
        %9120 = vmatpush1.msra.mxu0 %v9119
        %9121 = vmatprep.subr.mxu0 0.0
        %v9122 = vand.u32 %v300, 4294901760
        %9123 = vmatpush1.msra.mxu0 %v9122
        %9124 = vmatprep.subr.mxu0 0.0
        %v9125 = vand.u32 %v299, 4294901760
        %9126 = vmatpush1.msra.mxu0 %v9125
        %9127 = vmatprep.subr.mxu0 0.0
        %v9128 = vand.u32 %v298, 4294901760
        %9129 = vmatpush1.msra.mxu0 %v9128
        %9130 = vmatprep.subr.mxu0 0.0
        %v9131 = vand.u32 %v297, 4294901760
        %9132 = vmatpush1.msra.mxu0 %v9131
        %9133 = vmatprep.subr.mxu0 0.0
        %v9134 = vand.u32 %v296, 4294901760
        %9135 = vmatpush1.msra.mxu0 %v9134
        %9136 = vmatprep.subr.mxu0 0.0
        %v9137 = vand.u32 %v295, 4294901760
        %9138 = vmatpush1.msra.mxu0 %v9137
        %9139 = vmatprep.subr.mxu0 0.0
        %v9140 = vand.u32 %v326, 4294901760
        %9141 = vmatpush2.msra.mxu0 %v9140
        %9142 = vmatprep.subr.mxu0 0.0
        %v9143 = vand.u32 %v325, 4294901760
        %9144 = vmatpush2.msra.mxu0 %v9143
        %9145 = vmatprep.subr.mxu0 0.0
        %v9146 = vand.u32 %v324, 4294901760
        %9147 = vmatpush2.msra.mxu0 %v9146
        %9148 = vmatprep.subr.mxu0 0.0
        %v9149 = vand.u32 %v323, 4294901760
        %9150 = vmatpush2.msra.mxu0 %v9149
        %9151 = vmatprep.subr.mxu0 0.0
        %v9152 = vand.u32 %v322, 4294901760
        %9153 = vmatpush2.msra.mxu0 %v9152
        %9154 = vmatprep.subr.mxu0 0.0
        %v9155 = vand.u32 %v321, 4294901760
        %9156 = vmatpush2.msra.mxu0 %v9155
        %9157 = vmatprep.subr.mxu0 0.0
        %v9158 = vand.u32 %v320, 4294901760
        %9159 = vmatpush2.msra.mxu0 %v9158
        %9160 = vmatprep.subr.mxu0 0.0
        %v9161 = vand.u32 %v319, 4294901760
        %9162 = vmatpush2.msra.mxu0 %v9161
        %9163 = vmatprep.subr.mxu0 0.0
        %v9164 = vand.u32 %v318, 4294901760
        %9165 = vmatpush2.msra.mxu0 %v9164
        %9166 = vmatprep.subr.mxu0 0.0
        %v9167 = vand.u32 %v317, 4294901760
        %9168 = vmatpush2.msra.mxu0 %v9167
        %9169 = vmatprep.subr.mxu0 0.0
        %v9170 = vand.u32 %v316, 4294901760
        %9171 = vmatpush2.msra.mxu0 %v9170
        %9172 = vmatprep.subr.mxu0 0.0
        %v9173 = vand.u32 %v315, 4294901760
        %9174 = vmatpush2.msra.mxu0 %v9173
        %9175 = vmatprep.subr.mxu0 0.0
        %v9176 = vand.u32 %v314, 4294901760
        %9177 = vmatpush2.msra.mxu0 %v9176
        %9178 = vmatprep.subr.mxu0 0.0
        %v9179 = vand.u32 %v313, 4294901760
        %9180 = vmatpush2.msra.mxu0 %v9179
        %9181 = vmatprep.subr.mxu0 0.0
        %v9182 = vand.u32 %v312, 4294901760
        %9183 = vmatpush2.msra.mxu0 %v9182
        %9184 = vmatprep.subr.mxu0 0.0
        %v9185 = vand.u32 %v311, 4294901760
        %9186 = vmatpush2.msra.mxu0 %v9185
        %v9187 = vand.u32 %v332, 4294901760
        %9188 = vmatprep.mubr.f32.mxu0 %v9187
        %v9189 = vand.u32 %v331, 4294901760
        %9190 = vmatmul.mubr.f32.gmra.mxu0 %v9189
        %v9191 = vpop.f32.mrf.mxu0
        %v9192 = vadd.f32 %v8983, %v9191
        %v9193 = vpop.f32.mrf.mxu0
        %v9194 = vand.u32 %v338, 4294901760
        %9195 = vmatprep.mubr.f32.mxu0 %v9194
        %v9196 = vand.u32 %v337, 4294901760
        %9197 = vmatmul.mubr.f32.gmra.mxu0 %v9196
        %v9198 = vpop.f32.mrf.mxu0
        %v9199 = vadd.f32 %v8990, %v9198
        %v9200 = vpop.f32.mrf.mxu0
        %v9201 = vand.u32 %v344, 4294901760
        %9202 = vmatprep.mubr.f32.mxu0 %v9201
        %v9203 = vand.u32 %v343, 4294901760
        %9204 = vmatmul.mubr.f32.gmra.mxu0 %v9203
        %v9205 = vpop.f32.mrf.mxu0
        %v9206 = vadd.f32 %v8997, %v9205
        %v9207 = vpop.f32.mrf.mxu0
        %v9208 = vand.u32 %v350, 4294901760
        %9209 = vmatprep.mubr.f32.mxu0 %v9208
        %v9210 = vand.u32 %v349, 4294901760
        %9211 = vmatmul.mubr.f32.gmra.mxu0 %v9210
        %v9212 = vpop.f32.mrf.mxu0
        %v9213 = vadd.f32 %v9004, %v9212
        %v9214 = vpop.f32.mrf.mxu0
        %v9215 = vand.u32 %v356, 4294901760
        %9216 = vmatprep.mubr.f32.mxu0 %v9215
        %v9217 = vand.u32 %v355, 4294901760
        %9218 = vmatmul.mubr.f32.gmra.mxu0 %v9217
        %v9219 = vpop.f32.mrf.mxu0
        %v9220 = vadd.f32 %v9011, %v9219
        %v9221 = vpop.f32.mrf.mxu0
        %v9222 = vand.u32 %v362, 4294901760
        %9223 = vmatprep.mubr.f32.mxu0 %v9222
        %v9224 = vand.u32 %v361, 4294901760
        %9225 = vmatmul.mubr.f32.gmra.mxu0 %v9224
        %v9226 = vpop.f32.mrf.mxu0
        %v9227 = vadd.f32 %v9018, %v9226
        %v9228 = vpop.f32.mrf.mxu0
        %v9229 = vand.u32 %v368, 4294901760
        %9230 = vmatprep.mubr.f32.mxu0 %v9229
        %v9231 = vand.u32 %v367, 4294901760
        %9232 = vmatmul.mubr.f32.gmra.mxu0 %v9231
        %v9233 = vpop.f32.mrf.mxu0
        %v9234 = vadd.f32 %v9025, %v9233
        %v9235 = vpop.f32.mrf.mxu0
        %v9236 = vand.u32 %v374, 4294901760
        %9237 = vmatprep.mubr.f32.mxu0 %v9236
        %v9238 = vand.u32 %v373, 4294901760
        %9239 = vmatmul.mubr.f32.gmra.mxu0 %v9238
        %v9240 = vpop.f32.mrf.mxu0
        %v9241 = vadd.f32 %v9032, %v9240
        %v9242 = vpop.f32.mrf.mxu0
        %v9243 = vand.u32 %v380, 4294901760
        %9244 = vmatprep.mubr.f32.mxu0 %v9243
        %v9245 = vand.u32 %v379, 4294901760
        %9246 = vmatmul.mubr.f32.gmra.mxu0 %v9245
        %v9247 = vpop.f32.mrf.mxu0
        %v9248 = vadd.f32 %v9039, %v9247
        %v9249 = vpop.f32.mrf.mxu0
        %v9250 = vand.u32 %v386, 4294901760
        %9251 = vmatprep.mubr.f32.mxu0 %v9250
        %v9252 = vand.u32 %v385, 4294901760
        %9253 = vmatmul.mubr.f32.gmra.mxu0 %v9252
        %v9254 = vpop.f32.mrf.mxu0
        %v9255 = vadd.f32 %v9046, %v9254
        %v9256 = vpop.f32.mrf.mxu0
        %v9257 = vand.u32 %v392, 4294901760
        %9258 = vmatprep.mubr.f32.mxu0 %v9257
        %v9259 = vand.u32 %v391, 4294901760
        %9260 = vmatmul.mubr.f32.gmra.mxu0 %v9259
        %v9261 = vpop.f32.mrf.mxu0
        %v9262 = vadd.f32 %v9053, %v9261
        %v9263 = vpop.f32.mrf.mxu0
        %v9264 = vand.u32 %v398, 4294901760
        %9265 = vmatprep.mubr.f32.mxu0 %v9264
        %v9266 = vand.u32 %v397, 4294901760
        %9267 = vmatmul.mubr.f32.gmra.mxu0 %v9266
        %v9268 = vpop.f32.mrf.mxu0
        %v9269 = vadd.f32 %v9060, %v9268
        %v9270 = vpop.f32.mrf.mxu0
        %v9271 = vand.u32 %v404, 4294901760
        %9272 = vmatprep.mubr.f32.mxu0 %v9271
        %v9273 = vand.u32 %v403, 4294901760
        %9274 = vmatmul.mubr.f32.gmra.mxu0 %v9273
        %v9275 = vpop.f32.mrf.mxu0
        %v9276 = vadd.f32 %v9067, %v9275
        %v9277 = vpop.f32.mrf.mxu0
        %v9278 = vand.u32 %v410, 4294901760
        %9279 = vmatprep.mubr.f32.mxu0 %v9278
        %v9280 = vand.u32 %v409, 4294901760
        %9281 = vmatmul.mubr.f32.gmra.mxu0 %v9280
        %v9282 = vpop.f32.mrf.mxu0
        %v9283 = vadd.f32 %v9074, %v9282
        %v9284 = vpop.f32.mrf.mxu0
        %v9285 = vand.u32 %v416, 4294901760
        %9286 = vmatprep.mubr.f32.mxu0 %v9285
        %v9287 = vand.u32 %v415, 4294901760
        %9288 = vmatmul.mubr.f32.gmra.mxu0 %v9287
        %v9289 = vpop.f32.mrf.mxu0
        %v9290 = vadd.f32 %v9081, %v9289
        %v9291 = vpop.f32.mrf.mxu0
        %v9292 = vand.u32 %v422, 4294901760
        %9293 = vmatprep.mubr.f32.mxu0 %v9292
        %v9294 = vand.u32 %v421, 4294901760
        %9295 = vmatmul.mubr.f32.gmra.mxu0 %v9294
        %v9296 = vpop.f32.mrf.mxu0
        %v9297 = vadd.f32 %v9088, %v9296
        %v9298 = vpop.f32.mrf.mxu0
        %9299 = vdwg.mxu0
        %s9300 = scalar_lea.vmem %s3, 128
        %v9301 = vld [vmem:[%s9300] sm:$0xff]
        %v9302 = vld [vmem:[%s9300 + $0x8] sm:$0xff]
        %v9303 = vld [vmem:[%s9300 + $0x10] sm:$0xff]
        %v9304 = vld [vmem:[%s9300 + $0x18] sm:$0xff]
        %v9305 = vld [vmem:[%s9300 + $0x20] sm:$0xff]
        %v9306 = vld [vmem:[%s9300 + $0x28] sm:$0xff]
        %v9307 = vld [vmem:[%s9300 + $0x30] sm:$0xff]
        %v9308 = vld [vmem:[%s9300 + $0x38] sm:$0xff]
        %v9310 = vsel %vm454, %v9192, 0
        %v9313 = vsel %vm454, %v9199, 0
        %v9316 = vsel %vm454, %v9206, 0
        %v9319 = vsel %vm454, %v9213, 0
        %v9322 = vsel %vm454, %v9220, 0
        %v9325 = vsel %vm454, %v9227, 0
        %v9328 = vsel %vm454, %v9234, 0
        %v9331 = vsel %vm454, %v9241, 0
        %v9334 = vsel %vm454, %v9248, 0
        %v9337 = vsel %vm454, %v9255, 0
        %v9340 = vsel %vm454, %v9262, 0
        %v9343 = vsel %vm454, %v9269, 0
        %v9346 = vsel %vm454, %v9276, 0
        %v9349 = vsel %vm454, %v9283, 0
        %v9352 = vsel %vm454, %v9290, 0
        %v9355 = vsel %vm454, %v9297, 0
        %9357 = vmatprep.subr.mxu0 0.0
        %9358 = vmatpush1.msra.mxu0 0.0
        %9359 = vmatprep.subr.mxu0 0.0
        %9360 = vmatpush1.msra.mxu0 0.0
        %9361 = vmatprep.subr.mxu0 0.0
        %9362 = vmatpush1.msra.mxu0 0.0
        %9363 = vmatprep.subr.mxu0 0.0
        %9364 = vmatpush1.msra.mxu0 0.0
        %9365 = vmatprep.subr.mxu0 0.0
        %9366 = vmatpush1.msra.mxu0 0.0
        %9367 = vmatprep.subr.mxu0 0.0
        %9368 = vmatpush1.msra.mxu0 0.0
        %9369 = vmatprep.subr.mxu0 0.0
        %9370 = vmatpush1.msra.mxu0 0.0
        %9371 = vmatprep.subr.mxu0 0.0
        %9372 = vmatpush1.msra.mxu0 0.0
        %9373 = vmatprep.subr.mxu0 0.0
        %v9374 = vand.u32 %v9308, 4294901760
        %9375 = vmatpush1.msra.mxu0 %v9374
        %9376 = vmatprep.subr.mxu0 0.0
        %v9377 = vand.u32 %v9307, 4294901760
        %9378 = vmatpush1.msra.mxu0 %v9377
        %9379 = vmatprep.subr.mxu0 0.0
        %v9380 = vand.u32 %v9306, 4294901760
        %9381 = vmatpush1.msra.mxu0 %v9380
        %9382 = vmatprep.subr.mxu0 0.0
        %v9383 = vand.u32 %v9305, 4294901760
        %9384 = vmatpush1.msra.mxu0 %v9383
        %9385 = vmatprep.subr.mxu0 0.0
        %v9386 = vand.u32 %v9304, 4294901760
        %9387 = vmatpush1.msra.mxu0 %v9386
        %9388 = vmatprep.subr.mxu0 0.0
        %v9389 = vand.u32 %v9303, 4294901760
        %9390 = vmatpush1.msra.mxu0 %v9389
        %9391 = vmatprep.subr.mxu0 0.0
        %v9392 = vand.u32 %v9302, 4294901760
        %9393 = vmatpush1.msra.mxu0 %v9392
        %9394 = vmatprep.subr.mxu0 0.0
        %v9395 = vand.u32 %v9301, 4294901760
        %9396 = vmatpush1.msra.mxu0 %v9395
        %9397 = vmatprep.subr.mxu0 0.0
        %9398 = vmatpush2.msra.mxu0 0.0
        %9399 = vmatprep.subr.mxu0 0.0
        %9400 = vmatpush2.msra.mxu0 0.0
        %9401 = vmatprep.subr.mxu0 0.0
        %9402 = vmatpush2.msra.mxu0 0.0
        %9403 = vmatprep.subr.mxu0 0.0
        %9404 = vmatpush2.msra.mxu0 0.0
        %9405 = vmatprep.subr.mxu0 0.0
        %9406 = vmatpush2.msra.mxu0 0.0
        %9407 = vmatprep.subr.mxu0 0.0
        %9408 = vmatpush2.msra.mxu0 0.0
        %9409 = vmatprep.subr.mxu0 0.0
        %9410 = vmatpush2.msra.mxu0 0.0
        %9411 = vmatprep.subr.mxu0 0.0
        %9412 = vmatpush2.msra.mxu0 0.0
        %9413 = vmatprep.subr.mxu0 0.0
        %9414 = vmatpush2.msra.mxu0 0.0
        %9415 = vmatprep.subr.mxu0 0.0
        %9416 = vmatpush2.msra.mxu0 0.0
        %9417 = vmatprep.subr.mxu0 0.0
        %9418 = vmatpush2.msra.mxu0 0.0
        %9419 = vmatprep.subr.mxu0 0.0
        %9420 = vmatpush2.msra.mxu0 0.0
        %9421 = vmatprep.subr.mxu0 0.0
        %9422 = vmatpush2.msra.mxu0 0.0
        %9423 = vmatprep.subr.mxu0 0.0
        %9424 = vmatpush2.msra.mxu0 0.0
        %9425 = vmatprep.subr.mxu0 0.0
        %9426 = vmatpush2.msra.mxu0 0.0
        %9427 = vmatprep.subr.mxu0 0.0
        %9428 = vmatpush2.msra.mxu0 0.0
        %9429 = vmatprep.mubr.f32.mxu0 0.0
        %v9430 = vand.u32 %v9310, 4294901760
        %v9431 = vsub.f32 %v9310, %v9430
        %v9432 = vand.u32 %v9431, 4294901760
        %v9433 = vsub.f32 %v9431, %v9432
        %v9434 = vand.u32 %v9433, 4294901760
        %9435 = vmatmul.mubr.f32.gmra.mxu0 %v9434
        %v9436 = vpop.f32.mrf.mxu0
        %v9437 = vadd.f32 0.0, %v9436
        %v9438 = vpop.f32.mrf.mxu0
        %9439 = vmatprep.mubr.f32.mxu0 0.0
        %v9440 = vand.u32 %v9313, 4294901760
        %v9441 = vsub.f32 %v9313, %v9440
        %v9442 = vand.u32 %v9441, 4294901760
        %v9443 = vsub.f32 %v9441, %v9442
        %v9444 = vand.u32 %v9443, 4294901760
        %9445 = vmatmul.mubr.f32.gmra.mxu0 %v9444
        %v9446 = vpop.f32.mrf.mxu0
        %v9447 = vadd.f32 0.0, %v9446
        %v9448 = vpop.f32.mrf.mxu0
        %9449 = vmatprep.mubr.f32.mxu0 0.0
        %v9450 = vand.u32 %v9316, 4294901760
        %v9451 = vsub.f32 %v9316, %v9450
        %v9452 = vand.u32 %v9451, 4294901760
        %v9453 = vsub.f32 %v9451, %v9452
        %v9454 = vand.u32 %v9453, 4294901760
        %9455 = vmatmul.mubr.f32.gmra.mxu0 %v9454
        %v9456 = vpop.f32.mrf.mxu0
        %v9457 = vadd.f32 0.0, %v9456
        %v9458 = vpop.f32.mrf.mxu0
        %9459 = vmatprep.mubr.f32.mxu0 0.0
        %v9460 = vand.u32 %v9319, 4294901760
        %v9461 = vsub.f32 %v9319, %v9460
        %v9462 = vand.u32 %v9461, 4294901760
        %v9463 = vsub.f32 %v9461, %v9462
        %v9464 = vand.u32 %v9463, 4294901760
        %9465 = vmatmul.mubr.f32.gmra.mxu0 %v9464
        %v9466 = vpop.f32.mrf.mxu0
        %v9467 = vadd.f32 0.0, %v9466
        %v9468 = vpop.f32.mrf.mxu0
        %9469 = vmatprep.mubr.f32.mxu0 0.0
        %v9470 = vand.u32 %v9322, 4294901760
        %v9471 = vsub.f32 %v9322, %v9470
        %v9472 = vand.u32 %v9471, 4294901760
        %v9473 = vsub.f32 %v9471, %v9472
        %v9474 = vand.u32 %v9473, 4294901760
        %9475 = vmatmul.mubr.f32.gmra.mxu0 %v9474
        %v9476 = vpop.f32.mrf.mxu0
        %v9477 = vadd.f32 0.0, %v9476
        %v9478 = vpop.f32.mrf.mxu0
        %9479 = vmatprep.mubr.f32.mxu0 0.0
        %v9480 = vand.u32 %v9325, 4294901760
        %v9481 = vsub.f32 %v9325, %v9480
        %v9482 = vand.u32 %v9481, 4294901760
        %v9483 = vsub.f32 %v9481, %v9482
        %v9484 = vand.u32 %v9483, 4294901760
        %9485 = vmatmul.mubr.f32.gmra.mxu0 %v9484
        %v9486 = vpop.f32.mrf.mxu0
        %v9487 = vadd.f32 0.0, %v9486
        %v9488 = vpop.f32.mrf.mxu0
        %9489 = vmatprep.mubr.f32.mxu0 0.0
        %v9490 = vand.u32 %v9328, 4294901760
        %v9491 = vsub.f32 %v9328, %v9490
        %v9492 = vand.u32 %v9491, 4294901760
        %v9493 = vsub.f32 %v9491, %v9492
        %v9494 = vand.u32 %v9493, 4294901760
        %9495 = vmatmul.mubr.f32.gmra.mxu0 %v9494
        %v9496 = vpop.f32.mrf.mxu0
        %v9497 = vadd.f32 0.0, %v9496
        %v9498 = vpop.f32.mrf.mxu0
        %9499 = vmatprep.mubr.f32.mxu0 0.0
        %v9500 = vand.u32 %v9331, 4294901760
        %v9501 = vsub.f32 %v9331, %v9500
        %v9502 = vand.u32 %v9501, 4294901760
        %v9503 = vsub.f32 %v9501, %v9502
        %v9504 = vand.u32 %v9503, 4294901760
        %9505 = vmatmul.mubr.f32.gmra.mxu0 %v9504
        %v9506 = vpop.f32.mrf.mxu0
        %v9507 = vadd.f32 0.0, %v9506
        %v9508 = vpop.f32.mrf.mxu0
        %9509 = vmatprep.mubr.f32.mxu0 0.0
        %v9510 = vand.u32 %v9334, 4294901760
        %v9511 = vsub.f32 %v9334, %v9510
        %v9512 = vand.u32 %v9511, 4294901760
        %v9513 = vsub.f32 %v9511, %v9512
        %v9514 = vand.u32 %v9513, 4294901760
        %9515 = vmatmul.mubr.f32.gmra.mxu0 %v9514
        %v9516 = vpop.f32.mrf.mxu0
        %v9517 = vadd.f32 0.0, %v9516
        %v9518 = vpop.f32.mrf.mxu0
        %9519 = vmatprep.mubr.f32.mxu0 0.0
        %v9520 = vand.u32 %v9337, 4294901760
        %v9521 = vsub.f32 %v9337, %v9520
        %v9522 = vand.u32 %v9521, 4294901760
        %v9523 = vsub.f32 %v9521, %v9522
        %v9524 = vand.u32 %v9523, 4294901760
        %9525 = vmatmul.mubr.f32.gmra.mxu0 %v9524
        %v9526 = vpop.f32.mrf.mxu0
        %v9527 = vadd.f32 0.0, %v9526
        %v9528 = vpop.f32.mrf.mxu0
        %9529 = vmatprep.mubr.f32.mxu0 0.0
        %v9530 = vand.u32 %v9340, 4294901760
        %v9531 = vsub.f32 %v9340, %v9530
        %v9532 = vand.u32 %v9531, 4294901760
        %v9533 = vsub.f32 %v9531, %v9532
        %v9534 = vand.u32 %v9533, 4294901760
        %9535 = vmatmul.mubr.f32.gmra.mxu0 %v9534
        %v9536 = vpop.f32.mrf.mxu0
        %v9537 = vadd.f32 0.0, %v9536
        %v9538 = vpop.f32.mrf.mxu0
        %9539 = vmatprep.mubr.f32.mxu0 0.0
        %v9540 = vand.u32 %v9343, 4294901760
        %v9541 = vsub.f32 %v9343, %v9540
        %v9542 = vand.u32 %v9541, 4294901760
        %v9543 = vsub.f32 %v9541, %v9542
        %v9544 = vand.u32 %v9543, 4294901760
        %9545 = vmatmul.mubr.f32.gmra.mxu0 %v9544
        %v9546 = vpop.f32.mrf.mxu0
        %v9547 = vadd.f32 0.0, %v9546
        %v9548 = vpop.f32.mrf.mxu0
        %9549 = vmatprep.mubr.f32.mxu0 0.0
        %v9550 = vand.u32 %v9346, 4294901760
        %v9551 = vsub.f32 %v9346, %v9550
        %v9552 = vand.u32 %v9551, 4294901760
        %v9553 = vsub.f32 %v9551, %v9552
        %v9554 = vand.u32 %v9553, 4294901760
        %9555 = vmatmul.mubr.f32.gmra.mxu0 %v9554
        %v9556 = vpop.f32.mrf.mxu0
        %v9557 = vadd.f32 0.0, %v9556
        %v9558 = vpop.f32.mrf.mxu0
        %9559 = vmatprep.mubr.f32.mxu0 0.0
        %v9560 = vand.u32 %v9349, 4294901760
        %v9561 = vsub.f32 %v9349, %v9560
        %v9562 = vand.u32 %v9561, 4294901760
        %v9563 = vsub.f32 %v9561, %v9562
        %v9564 = vand.u32 %v9563, 4294901760
        %9565 = vmatmul.mubr.f32.gmra.mxu0 %v9564
        %v9566 = vpop.f32.mrf.mxu0
        %v9567 = vadd.f32 0.0, %v9566
        %v9568 = vpop.f32.mrf.mxu0
        %9569 = vmatprep.mubr.f32.mxu0 0.0
        %v9570 = vand.u32 %v9352, 4294901760
        %v9571 = vsub.f32 %v9352, %v9570
        %v9572 = vand.u32 %v9571, 4294901760
        %v9573 = vsub.f32 %v9571, %v9572
        %v9574 = vand.u32 %v9573, 4294901760
        %9575 = vmatmul.mubr.f32.gmra.mxu0 %v9574
        %v9576 = vpop.f32.mrf.mxu0
        %v9577 = vadd.f32 0.0, %v9576
        %v9578 = vpop.f32.mrf.mxu0
        %9579 = vmatprep.mubr.f32.mxu0 0.0
        %v9580 = vand.u32 %v9355, 4294901760
        %v9581 = vsub.f32 %v9355, %v9580
        %v9582 = vand.u32 %v9581, 4294901760
        %v9583 = vsub.f32 %v9581, %v9582
        %v9584 = vand.u32 %v9583, 4294901760
        %9585 = vmatmul.mubr.f32.gmra.mxu0 %v9584
        %v9586 = vpop.f32.mrf.mxu0
        %v9587 = vadd.f32 0.0, %v9586
        %v9588 = vpop.f32.mrf.mxu0
        %9589 = vdwg.mxu0
        %9590 = vmatprep.subr.mxu0 0.0
        %9591 = vmatpush1.msra.mxu0 0.0
        %9592 = vmatprep.subr.mxu0 0.0
        %9593 = vmatpush1.msra.mxu0 0.0
        %9594 = vmatprep.subr.mxu0 0.0
        %9595 = vmatpush1.msra.mxu0 0.0
        %9596 = vmatprep.subr.mxu0 0.0
        %9597 = vmatpush1.msra.mxu0 0.0
        %9598 = vmatprep.subr.mxu0 0.0
        %9599 = vmatpush1.msra.mxu0 0.0
        %9600 = vmatprep.subr.mxu0 0.0
        %9601 = vmatpush1.msra.mxu0 0.0
        %9602 = vmatprep.subr.mxu0 0.0
        %9603 = vmatpush1.msra.mxu0 0.0
        %9604 = vmatprep.subr.mxu0 0.0
        %9605 = vmatpush1.msra.mxu0 0.0
        %9606 = vmatprep.subr.mxu0 0.0
        %v9607 = vand.u32 %v9308, 4294901760
        %v9608 = vsub.f32 %v9308, %v9607
        %v9609 = vand.u32 %v9608, 4294901760
        %v9610 = vsub.f32 %v9608, %v9609
        %v9611 = vand.u32 %v9610, 4294901760
        %9612 = vmatpush1.msra.mxu0 %v9611
        %9613 = vmatprep.subr.mxu0 0.0
        %v9614 = vand.u32 %v9307, 4294901760
        %v9615 = vsub.f32 %v9307, %v9614
        %v9616 = vand.u32 %v9615, 4294901760
        %v9617 = vsub.f32 %v9615, %v9616
        %v9618 = vand.u32 %v9617, 4294901760
        %9619 = vmatpush1.msra.mxu0 %v9618
        %9620 = vmatprep.subr.mxu0 0.0
        %v9621 = vand.u32 %v9306, 4294901760
        %v9622 = vsub.f32 %v9306, %v9621
        %v9623 = vand.u32 %v9622, 4294901760
        %v9624 = vsub.f32 %v9622, %v9623
        %v9625 = vand.u32 %v9624, 4294901760
        %9626 = vmatpush1.msra.mxu0 %v9625
        %9627 = vmatprep.subr.mxu0 0.0
        %v9628 = vand.u32 %v9305, 4294901760
        %v9629 = vsub.f32 %v9305, %v9628
        %v9630 = vand.u32 %v9629, 4294901760
        %v9631 = vsub.f32 %v9629, %v9630
        %v9632 = vand.u32 %v9631, 4294901760
        %9633 = vmatpush1.msra.mxu0 %v9632
        %9634 = vmatprep.subr.mxu0 0.0
        %v9635 = vand.u32 %v9304, 4294901760
        %v9636 = vsub.f32 %v9304, %v9635
        %v9637 = vand.u32 %v9636, 4294901760
        %v9638 = vsub.f32 %v9636, %v9637
        %v9639 = vand.u32 %v9638, 4294901760
        %9640 = vmatpush1.msra.mxu0 %v9639
        %9641 = vmatprep.subr.mxu0 0.0
        %v9642 = vand.u32 %v9303, 4294901760
        %v9643 = vsub.f32 %v9303, %v9642
        %v9644 = vand.u32 %v9643, 4294901760
        %v9645 = vsub.f32 %v9643, %v9644
        %v9646 = vand.u32 %v9645, 4294901760
        %9647 = vmatpush1.msra.mxu0 %v9646
        %9648 = vmatprep.subr.mxu0 0.0
        %v9649 = vand.u32 %v9302, 4294901760
        %v9650 = vsub.f32 %v9302, %v9649
        %v9651 = vand.u32 %v9650, 4294901760
        %v9652 = vsub.f32 %v9650, %v9651
        %v9653 = vand.u32 %v9652, 4294901760
        %9654 = vmatpush1.msra.mxu0 %v9653
        %9655 = vmatprep.subr.mxu0 0.0
        %v9656 = vand.u32 %v9301, 4294901760
        %v9657 = vsub.f32 %v9301, %v9656
        %v9658 = vand.u32 %v9657, 4294901760
        %v9659 = vsub.f32 %v9657, %v9658
        %v9660 = vand.u32 %v9659, 4294901760
        %9661 = vmatpush1.msra.mxu0 %v9660
        %9662 = vmatprep.subr.mxu0 0.0
        %9663 = vmatpush2.msra.mxu0 0.0
        %9664 = vmatprep.subr.mxu0 0.0
        %9665 = vmatpush2.msra.mxu0 0.0
        %9666 = vmatprep.subr.mxu0 0.0
        %9667 = vmatpush2.msra.mxu0 0.0
        %9668 = vmatprep.subr.mxu0 0.0
        %9669 = vmatpush2.msra.mxu0 0.0
        %9670 = vmatprep.subr.mxu0 0.0
        %9671 = vmatpush2.msra.mxu0 0.0
        %9672 = vmatprep.subr.mxu0 0.0
        %9673 = vmatpush2.msra.mxu0 0.0
        %9674 = vmatprep.subr.mxu0 0.0
        %9675 = vmatpush2.msra.mxu0 0.0
        %9676 = vmatprep.subr.mxu0 0.0
        %9677 = vmatpush2.msra.mxu0 0.0
        %9678 = vmatprep.subr.mxu0 0.0
        %9679 = vmatpush2.msra.mxu0 0.0
        %9680 = vmatprep.subr.mxu0 0.0
        %9681 = vmatpush2.msra.mxu0 0.0
        %9682 = vmatprep.subr.mxu0 0.0
        %9683 = vmatpush2.msra.mxu0 0.0
        %9684 = vmatprep.subr.mxu0 0.0
        %9685 = vmatpush2.msra.mxu0 0.0
        %9686 = vmatprep.subr.mxu0 0.0
        %9687 = vmatpush2.msra.mxu0 0.0
        %9688 = vmatprep.subr.mxu0 0.0
        %9689 = vmatpush2.msra.mxu0 0.0
        %9690 = vmatprep.subr.mxu0 0.0
        %9691 = vmatpush2.msra.mxu0 0.0
        %9692 = vmatprep.subr.mxu0 0.0
        %9693 = vmatpush2.msra.mxu0 0.0
        %9694 = vmatprep.mubr.f32.mxu0 0.0
        %v9695 = vand.u32 %v9310, 4294901760
        %9696 = vmatmul.mubr.f32.gmra.mxu0 %v9695
        %v9697 = vpop.f32.mrf.mxu0
        %v9698 = vadd.f32 %v9437, %v9697
        %v9699 = vpop.f32.mrf.mxu0
        %9700 = vmatprep.mubr.f32.mxu0 0.0
        %v9701 = vand.u32 %v9313, 4294901760
        %9702 = vmatmul.mubr.f32.gmra.mxu0 %v9701
        %v9703 = vpop.f32.mrf.mxu0
        %v9704 = vadd.f32 %v9447, %v9703
        %v9705 = vpop.f32.mrf.mxu0
        %9706 = vmatprep.mubr.f32.mxu0 0.0
        %v9707 = vand.u32 %v9316, 4294901760
        %9708 = vmatmul.mubr.f32.gmra.mxu0 %v9707
        %v9709 = vpop.f32.mrf.mxu0
        %v9710 = vadd.f32 %v9457, %v9709
        %v9711 = vpop.f32.mrf.mxu0
        %9712 = vmatprep.mubr.f32.mxu0 0.0
        %v9713 = vand.u32 %v9319, 4294901760
        %9714 = vmatmul.mubr.f32.gmra.mxu0 %v9713
        %v9715 = vpop.f32.mrf.mxu0
        %v9716 = vadd.f32 %v9467, %v9715
        %v9717 = vpop.f32.mrf.mxu0
        %9718 = vmatprep.mubr.f32.mxu0 0.0
        %v9719 = vand.u32 %v9322, 4294901760
        %9720 = vmatmul.mubr.f32.gmra.mxu0 %v9719
        %v9721 = vpop.f32.mrf.mxu0
        %v9722 = vadd.f32 %v9477, %v9721
        %v9723 = vpop.f32.mrf.mxu0
        %9724 = vmatprep.mubr.f32.mxu0 0.0
        %v9725 = vand.u32 %v9325, 4294901760
        %9726 = vmatmul.mubr.f32.gmra.mxu0 %v9725
        %v9727 = vpop.f32.mrf.mxu0
        %v9728 = vadd.f32 %v9487, %v9727
        %v9729 = vpop.f32.mrf.mxu0
        %9730 = vmatprep.mubr.f32.mxu0 0.0
        %v9731 = vand.u32 %v9328, 4294901760
        %9732 = vmatmul.mubr.f32.gmra.mxu0 %v9731
        %v9733 = vpop.f32.mrf.mxu0
        %v9734 = vadd.f32 %v9497, %v9733
        %v9735 = vpop.f32.mrf.mxu0
        %9736 = vmatprep.mubr.f32.mxu0 0.0
        %v9737 = vand.u32 %v9331, 4294901760
        %9738 = vmatmul.mubr.f32.gmra.mxu0 %v9737
        %v9739 = vpop.f32.mrf.mxu0
        %v9740 = vadd.f32 %v9507, %v9739
        %v9741 = vpop.f32.mrf.mxu0
        %9742 = vmatprep.mubr.f32.mxu0 0.0
        %v9743 = vand.u32 %v9334, 4294901760
        %9744 = vmatmul.mubr.f32.gmra.mxu0 %v9743
        %v9745 = vpop.f32.mrf.mxu0
        %v9746 = vadd.f32 %v9517, %v9745
        %v9747 = vpop.f32.mrf.mxu0
        %9748 = vmatprep.mubr.f32.mxu0 0.0
        %v9749 = vand.u32 %v9337, 4294901760
        %9750 = vmatmul.mubr.f32.gmra.mxu0 %v9749
        %v9751 = vpop.f32.mrf.mxu0
        %v9752 = vadd.f32 %v9527, %v9751
        %v9753 = vpop.f32.mrf.mxu0
        %9754 = vmatprep.mubr.f32.mxu0 0.0
        %v9755 = vand.u32 %v9340, 4294901760
        %9756 = vmatmul.mubr.f32.gmra.mxu0 %v9755
        %v9757 = vpop.f32.mrf.mxu0
        %v9758 = vadd.f32 %v9537, %v9757
        %v9759 = vpop.f32.mrf.mxu0
        %9760 = vmatprep.mubr.f32.mxu0 0.0
        %v9761 = vand.u32 %v9343, 4294901760
        %9762 = vmatmul.mubr.f32.gmra.mxu0 %v9761
        %v9763 = vpop.f32.mrf.mxu0
        %v9764 = vadd.f32 %v9547, %v9763
        %v9765 = vpop.f32.mrf.mxu0
        %9766 = vmatprep.mubr.f32.mxu0 0.0
        %v9767 = vand.u32 %v9346, 4294901760
        %9768 = vmatmul.mubr.f32.gmra.mxu0 %v9767
        %v9769 = vpop.f32.mrf.mxu0
        %v9770 = vadd.f32 %v9557, %v9769
        %v9771 = vpop.f32.mrf.mxu0
        %9772 = vmatprep.mubr.f32.mxu0 0.0
        %v9773 = vand.u32 %v9349, 4294901760
        %9774 = vmatmul.mubr.f32.gmra.mxu0 %v9773
        %v9775 = vpop.f32.mrf.mxu0
        %v9776 = vadd.f32 %v9567, %v9775
        %v9777 = vpop.f32.mrf.mxu0
        %9778 = vmatprep.mubr.f32.mxu0 0.0
        %v9779 = vand.u32 %v9352, 4294901760
        %9780 = vmatmul.mubr.f32.gmra.mxu0 %v9779
        %v9781 = vpop.f32.mrf.mxu0
        %v9782 = vadd.f32 %v9577, %v9781
        %v9783 = vpop.f32.mrf.mxu0
        %9784 = vmatprep.mubr.f32.mxu0 0.0
        %v9785 = vand.u32 %v9355, 4294901760
        %9786 = vmatmul.mubr.f32.gmra.mxu0 %v9785
        %v9787 = vpop.f32.mrf.mxu0
        %v9788 = vadd.f32 %v9587, %v9787
        %v9789 = vpop.f32.mrf.mxu0
        %9790 = vdwg.mxu0
        %9791 = vmatprep.subr.mxu0 0.0
        %9792 = vmatpush1.msra.mxu0 0.0
        %9793 = vmatprep.subr.mxu0 0.0
        %9794 = vmatpush1.msra.mxu0 0.0
        %9795 = vmatprep.subr.mxu0 0.0
        %9796 = vmatpush1.msra.mxu0 0.0
        %9797 = vmatprep.subr.mxu0 0.0
        %9798 = vmatpush1.msra.mxu0 0.0
        %9799 = vmatprep.subr.mxu0 0.0
        %9800 = vmatpush1.msra.mxu0 0.0
        %9801 = vmatprep.subr.mxu0 0.0
        %9802 = vmatpush1.msra.mxu0 0.0
        %9803 = vmatprep.subr.mxu0 0.0
        %9804 = vmatpush1.msra.mxu0 0.0
        %9805 = vmatprep.subr.mxu0 0.0
        %9806 = vmatpush1.msra.mxu0 0.0
        %9807 = vmatprep.subr.mxu0 0.0
        %v9808 = vand.u32 %v9308, 4294901760
        %v9809 = vsub.f32 %v9308, %v9808
        %9810 = vmatpush1.msra.mxu0 %v9809
        %9811 = vmatprep.subr.mxu0 0.0
        %v9812 = vand.u32 %v9307, 4294901760
        %v9813 = vsub.f32 %v9307, %v9812
        %9814 = vmatpush1.msra.mxu0 %v9813
        %9815 = vmatprep.subr.mxu0 0.0
        %v9816 = vand.u32 %v9306, 4294901760
        %v9817 = vsub.f32 %v9306, %v9816
        %9818 = vmatpush1.msra.mxu0 %v9817
        %9819 = vmatprep.subr.mxu0 0.0
        %v9820 = vand.u32 %v9305, 4294901760
        %v9821 = vsub.f32 %v9305, %v9820
        %9822 = vmatpush1.msra.mxu0 %v9821
        %9823 = vmatprep.subr.mxu0 0.0
        %v9824 = vand.u32 %v9304, 4294901760
        %v9825 = vsub.f32 %v9304, %v9824
        %9826 = vmatpush1.msra.mxu0 %v9825
        %9827 = vmatprep.subr.mxu0 0.0
        %v9828 = vand.u32 %v9303, 4294901760
        %v9829 = vsub.f32 %v9303, %v9828
        %9830 = vmatpush1.msra.mxu0 %v9829
        %9831 = vmatprep.subr.mxu0 0.0
        %v9832 = vand.u32 %v9302, 4294901760
        %v9833 = vsub.f32 %v9302, %v9832
        %9834 = vmatpush1.msra.mxu0 %v9833
        %9835 = vmatprep.subr.mxu0 0.0
        %v9836 = vand.u32 %v9301, 4294901760
        %v9837 = vsub.f32 %v9301, %v9836
        %9838 = vmatpush1.msra.mxu0 %v9837
        %9839 = vmatprep.subr.mxu0 0.0
        %9840 = vmatpush2.msra.mxu0 0.0
        %9841 = vmatprep.subr.mxu0 0.0
        %9842 = vmatpush2.msra.mxu0 0.0
        %9843 = vmatprep.subr.mxu0 0.0
        %9844 = vmatpush2.msra.mxu0 0.0
        %9845 = vmatprep.subr.mxu0 0.0
        %9846 = vmatpush2.msra.mxu0 0.0
        %9847 = vmatprep.subr.mxu0 0.0
        %9848 = vmatpush2.msra.mxu0 0.0
        %9849 = vmatprep.subr.mxu0 0.0
        %9850 = vmatpush2.msra.mxu0 0.0
        %9851 = vmatprep.subr.mxu0 0.0
        %9852 = vmatpush2.msra.mxu0 0.0
        %9853 = vmatprep.subr.mxu0 0.0
        %9854 = vmatpush2.msra.mxu0 0.0
        %9855 = vmatprep.subr.mxu0 0.0
        %9856 = vmatpush2.msra.mxu0 0.0
        %9857 = vmatprep.subr.mxu0 0.0
        %9858 = vmatpush2.msra.mxu0 0.0
        %9859 = vmatprep.subr.mxu0 0.0
        %9860 = vmatpush2.msra.mxu0 0.0
        %9861 = vmatprep.subr.mxu0 0.0
        %9862 = vmatpush2.msra.mxu0 0.0
        %9863 = vmatprep.subr.mxu0 0.0
        %9864 = vmatpush2.msra.mxu0 0.0
        %9865 = vmatprep.subr.mxu0 0.0
        %9866 = vmatpush2.msra.mxu0 0.0
        %9867 = vmatprep.subr.mxu0 0.0
        %9868 = vmatpush2.msra.mxu0 0.0
        %9869 = vmatprep.subr.mxu0 0.0
        %9870 = vmatpush2.msra.mxu0 0.0
        %9871 = vmatprep.mubr.f32.mxu0 0.0
        %v9872 = vand.u32 %v9310, 4294901760
        %v9873 = vsub.f32 %v9310, %v9872
        %9874 = vmatmul.mubr.f32.gmra.mxu0 %v9873
        %v9875 = vpop.f32.mrf.mxu0
        %v9876 = vadd.f32 %v9698, %v9875
        %v9877 = vpop.f32.mrf.mxu0
        %9878 = vmatprep.mubr.f32.mxu0 0.0
        %v9879 = vand.u32 %v9313, 4294901760
        %v9880 = vsub.f32 %v9313, %v9879
        %9881 = vmatmul.mubr.f32.gmra.mxu0 %v9880
        %v9882 = vpop.f32.mrf.mxu0
        %v9883 = vadd.f32 %v9704, %v9882
        %v9884 = vpop.f32.mrf.mxu0
        %9885 = vmatprep.mubr.f32.mxu0 0.0
        %v9886 = vand.u32 %v9316, 4294901760
        %v9887 = vsub.f32 %v9316, %v9886
        %9888 = vmatmul.mubr.f32.gmra.mxu0 %v9887
        %v9889 = vpop.f32.mrf.mxu0
        %v9890 = vadd.f32 %v9710, %v9889
        %v9891 = vpop.f32.mrf.mxu0
        %9892 = vmatprep.mubr.f32.mxu0 0.0
        %v9893 = vand.u32 %v9319, 4294901760
        %v9894 = vsub.f32 %v9319, %v9893
        %9895 = vmatmul.mubr.f32.gmra.mxu0 %v9894
        %v9896 = vpop.f32.mrf.mxu0
        %v9897 = vadd.f32 %v9716, %v9896
        %v9898 = vpop.f32.mrf.mxu0
        %9899 = vmatprep.mubr.f32.mxu0 0.0
        %v9900 = vand.u32 %v9322, 4294901760
        %v9901 = vsub.f32 %v9322, %v9900
        %9902 = vmatmul.mubr.f32.gmra.mxu0 %v9901
        %v9903 = vpop.f32.mrf.mxu0
        %v9904 = vadd.f32 %v9722, %v9903
        %v9905 = vpop.f32.mrf.mxu0
        %9906 = vmatprep.mubr.f32.mxu0 0.0
        %v9907 = vand.u32 %v9325, 4294901760
        %v9908 = vsub.f32 %v9325, %v9907
        %9909 = vmatmul.mubr.f32.gmra.mxu0 %v9908
        %v9910 = vpop.f32.mrf.mxu0
        %v9911 = vadd.f32 %v9728, %v9910
        %v9912 = vpop.f32.mrf.mxu0
        %9913 = vmatprep.mubr.f32.mxu0 0.0
        %v9914 = vand.u32 %v9328, 4294901760
        %v9915 = vsub.f32 %v9328, %v9914
        %9916 = vmatmul.mubr.f32.gmra.mxu0 %v9915
        %v9917 = vpop.f32.mrf.mxu0
        %v9918 = vadd.f32 %v9734, %v9917
        %v9919 = vpop.f32.mrf.mxu0
        %9920 = vmatprep.mubr.f32.mxu0 0.0
        %v9921 = vand.u32 %v9331, 4294901760
        %v9922 = vsub.f32 %v9331, %v9921
        %9923 = vmatmul.mubr.f32.gmra.mxu0 %v9922
        %v9924 = vpop.f32.mrf.mxu0
        %v9925 = vadd.f32 %v9740, %v9924
        %v9926 = vpop.f32.mrf.mxu0
        %9927 = vmatprep.mubr.f32.mxu0 0.0
        %v9928 = vand.u32 %v9334, 4294901760
        %v9929 = vsub.f32 %v9334, %v9928
        %9930 = vmatmul.mubr.f32.gmra.mxu0 %v9929
        %v9931 = vpop.f32.mrf.mxu0
        %v9932 = vadd.f32 %v9746, %v9931
        %v9933 = vpop.f32.mrf.mxu0
        %9934 = vmatprep.mubr.f32.mxu0 0.0
        %v9935 = vand.u32 %v9337, 4294901760
        %v9936 = vsub.f32 %v9337, %v9935
        %9937 = vmatmul.mubr.f32.gmra.mxu0 %v9936
        %v9938 = vpop.f32.mrf.mxu0
        %v9939 = vadd.f32 %v9752, %v9938
        %v9940 = vpop.f32.mrf.mxu0
        %9941 = vmatprep.mubr.f32.mxu0 0.0
        %v9942 = vand.u32 %v9340, 4294901760
        %v9943 = vsub.f32 %v9340, %v9942
        %9944 = vmatmul.mubr.f32.gmra.mxu0 %v9943
        %v9945 = vpop.f32.mrf.mxu0
        %v9946 = vadd.f32 %v9758, %v9945
        %v9947 = vpop.f32.mrf.mxu0
        %9948 = vmatprep.mubr.f32.mxu0 0.0
        %v9949 = vand.u32 %v9343, 4294901760
        %v9950 = vsub.f32 %v9343, %v9949
        %9951 = vmatmul.mubr.f32.gmra.mxu0 %v9950
        %v9952 = vpop.f32.mrf.mxu0
        %v9953 = vadd.f32 %v9764, %v9952
        %v9954 = vpop.f32.mrf.mxu0
        %9955 = vmatprep.mubr.f32.mxu0 0.0
        %v9956 = vand.u32 %v9346, 4294901760
        %v9957 = vsub.f32 %v9346, %v9956
        %9958 = vmatmul.mubr.f32.gmra.mxu0 %v9957
        %v9959 = vpop.f32.mrf.mxu0
        %v9960 = vadd.f32 %v9770, %v9959
        %v9961 = vpop.f32.mrf.mxu0
        %9962 = vmatprep.mubr.f32.mxu0 0.0
        %v9963 = vand.u32 %v9349, 4294901760
        %v9964 = vsub.f32 %v9349, %v9963
        %9965 = vmatmul.mubr.f32.gmra.mxu0 %v9964
        %v9966 = vpop.f32.mrf.mxu0
        %v9967 = vadd.f32 %v9776, %v9966
        %v9968 = vpop.f32.mrf.mxu0
        %9969 = vmatprep.mubr.f32.mxu0 0.0
        %v9970 = vand.u32 %v9352, 4294901760
        %v9971 = vsub.f32 %v9352, %v9970
        %9972 = vmatmul.mubr.f32.gmra.mxu0 %v9971
        %v9973 = vpop.f32.mrf.mxu0
        %v9974 = vadd.f32 %v9782, %v9973
        %v9975 = vpop.f32.mrf.mxu0
        %9976 = vmatprep.mubr.f32.mxu0 0.0
        %v9977 = vand.u32 %v9355, 4294901760
        %v9978 = vsub.f32 %v9355, %v9977
        %9979 = vmatmul.mubr.f32.gmra.mxu0 %v9978
        %v9980 = vpop.f32.mrf.mxu0
        %v9981 = vadd.f32 %v9788, %v9980
        %v9982 = vpop.f32.mrf.mxu0
        %9983 = vdwg.mxu0
        %9984 = vmatprep.subr.mxu0 0.0
        %9985 = vmatpush1.msra.mxu0 0.0
        %9986 = vmatprep.subr.mxu0 0.0
        %9987 = vmatpush1.msra.mxu0 0.0
        %9988 = vmatprep.subr.mxu0 0.0
        %9989 = vmatpush1.msra.mxu0 0.0
        %9990 = vmatprep.subr.mxu0 0.0
        %9991 = vmatpush1.msra.mxu0 0.0
        %9992 = vmatprep.subr.mxu0 0.0
        %9993 = vmatpush1.msra.mxu0 0.0
        %9994 = vmatprep.subr.mxu0 0.0
        %9995 = vmatpush1.msra.mxu0 0.0
        %9996 = vmatprep.subr.mxu0 0.0
        %9997 = vmatpush1.msra.mxu0 0.0
        %9998 = vmatprep.subr.mxu0 0.0
        %9999 = vmatpush1.msra.mxu0 0.0
        %10000 = vmatprep.subr.mxu0 0.0
        %v10001 = vand.u32 %v9308, 4294901760
        %10002 = vmatpush1.msra.mxu0 %v10001
        %10003 = vmatprep.subr.mxu0 0.0
        %v10004 = vand.u32 %v9307, 4294901760
        %10005 = vmatpush1.msra.mxu0 %v10004
        %10006 = vmatprep.subr.mxu0 0.0
        %v10007 = vand.u32 %v9306, 4294901760
        %10008 = vmatpush1.msra.mxu0 %v10007
        %10009 = vmatprep.subr.mxu0 0.0
        %v10010 = vand.u32 %v9305, 4294901760
        %10011 = vmatpush1.msra.mxu0 %v10010
        %10012 = vmatprep.subr.mxu0 0.0
        %v10013 = vand.u32 %v9304, 4294901760
        %10014 = vmatpush1.msra.mxu0 %v10013
        %10015 = vmatprep.subr.mxu0 0.0
        %v10016 = vand.u32 %v9303, 4294901760
        %10017 = vmatpush1.msra.mxu0 %v10016
        %10018 = vmatprep.subr.mxu0 0.0
        %v10019 = vand.u32 %v9302, 4294901760
        %10020 = vmatpush1.msra.mxu0 %v10019
        %10021 = vmatprep.subr.mxu0 0.0
        %v10022 = vand.u32 %v9301, 4294901760
        %10023 = vmatpush1.msra.mxu0 %v10022
        %10024 = vmatprep.subr.mxu0 0.0
        %10025 = vmatpush2.msra.mxu0 0.0
        %10026 = vmatprep.subr.mxu0 0.0
        %10027 = vmatpush2.msra.mxu0 0.0
        %10028 = vmatprep.subr.mxu0 0.0
        %10029 = vmatpush2.msra.mxu0 0.0
        %10030 = vmatprep.subr.mxu0 0.0
        %10031 = vmatpush2.msra.mxu0 0.0
        %10032 = vmatprep.subr.mxu0 0.0
        %10033 = vmatpush2.msra.mxu0 0.0
        %10034 = vmatprep.subr.mxu0 0.0
        %10035 = vmatpush2.msra.mxu0 0.0
        %10036 = vmatprep.subr.mxu0 0.0
        %10037 = vmatpush2.msra.mxu0 0.0
        %10038 = vmatprep.subr.mxu0 0.0
        %10039 = vmatpush2.msra.mxu0 0.0
        %10040 = vmatprep.subr.mxu0 0.0
        %10041 = vmatpush2.msra.mxu0 0.0
        %10042 = vmatprep.subr.mxu0 0.0
        %10043 = vmatpush2.msra.mxu0 0.0
        %10044 = vmatprep.subr.mxu0 0.0
        %10045 = vmatpush2.msra.mxu0 0.0
        %10046 = vmatprep.subr.mxu0 0.0
        %10047 = vmatpush2.msra.mxu0 0.0
        %10048 = vmatprep.subr.mxu0 0.0
        %10049 = vmatpush2.msra.mxu0 0.0
        %10050 = vmatprep.subr.mxu0 0.0
        %10051 = vmatpush2.msra.mxu0 0.0
        %10052 = vmatprep.subr.mxu0 0.0
        %10053 = vmatpush2.msra.mxu0 0.0
        %10054 = vmatprep.subr.mxu0 0.0
        %10055 = vmatpush2.msra.mxu0 0.0
        %10056 = vmatprep.mubr.f32.mxu0 0.0
        %v10057 = vand.u32 %v9310, 4294901760
        %v10058 = vsub.f32 %v9310, %v10057
        %v10059 = vand.u32 %v10058, 4294901760
        %10060 = vmatmul.mubr.f32.gmra.mxu0 %v10059
        %v10061 = vpop.f32.mrf.mxu0
        %v10062 = vadd.f32 %v9876, %v10061
        %v10063 = vpop.f32.mrf.mxu0
        %10064 = vmatprep.mubr.f32.mxu0 0.0
        %v10065 = vand.u32 %v9313, 4294901760
        %v10066 = vsub.f32 %v9313, %v10065
        %v10067 = vand.u32 %v10066, 4294901760
        %10068 = vmatmul.mubr.f32.gmra.mxu0 %v10067
        %v10069 = vpop.f32.mrf.mxu0
        %v10070 = vadd.f32 %v9883, %v10069
        %v10071 = vpop.f32.mrf.mxu0
        %10072 = vmatprep.mubr.f32.mxu0 0.0
        %v10073 = vand.u32 %v9316, 4294901760
        %v10074 = vsub.f32 %v9316, %v10073
        %v10075 = vand.u32 %v10074, 4294901760
        %10076 = vmatmul.mubr.f32.gmra.mxu0 %v10075
        %v10077 = vpop.f32.mrf.mxu0
        %v10078 = vadd.f32 %v9890, %v10077
        %v10079 = vpop.f32.mrf.mxu0
        %10080 = vmatprep.mubr.f32.mxu0 0.0
        %v10081 = vand.u32 %v9319, 4294901760
        %v10082 = vsub.f32 %v9319, %v10081
        %v10083 = vand.u32 %v10082, 4294901760
        %10084 = vmatmul.mubr.f32.gmra.mxu0 %v10083
        %v10085 = vpop.f32.mrf.mxu0
        %v10086 = vadd.f32 %v9897, %v10085
        %v10087 = vpop.f32.mrf.mxu0
        %10088 = vmatprep.mubr.f32.mxu0 0.0
        %v10089 = vand.u32 %v9322, 4294901760
        %v10090 = vsub.f32 %v9322, %v10089
        %v10091 = vand.u32 %v10090, 4294901760
        %10092 = vmatmul.mubr.f32.gmra.mxu0 %v10091
        %v10093 = vpop.f32.mrf.mxu0
        %v10094 = vadd.f32 %v9904, %v10093
        %v10095 = vpop.f32.mrf.mxu0
        %10096 = vmatprep.mubr.f32.mxu0 0.0
        %v10097 = vand.u32 %v9325, 4294901760
        %v10098 = vsub.f32 %v9325, %v10097
        %v10099 = vand.u32 %v10098, 4294901760
        %10100 = vmatmul.mubr.f32.gmra.mxu0 %v10099
        %v10101 = vpop.f32.mrf.mxu0
        %v10102 = vadd.f32 %v9911, %v10101
        %v10103 = vpop.f32.mrf.mxu0
        %10104 = vmatprep.mubr.f32.mxu0 0.0
        %v10105 = vand.u32 %v9328, 4294901760
        %v10106 = vsub.f32 %v9328, %v10105
        %v10107 = vand.u32 %v10106, 4294901760
        %10108 = vmatmul.mubr.f32.gmra.mxu0 %v10107
        %v10109 = vpop.f32.mrf.mxu0
        %v10110 = vadd.f32 %v9918, %v10109
        %v10111 = vpop.f32.mrf.mxu0
        %10112 = vmatprep.mubr.f32.mxu0 0.0
        %v10113 = vand.u32 %v9331, 4294901760
        %v10114 = vsub.f32 %v9331, %v10113
        %v10115 = vand.u32 %v10114, 4294901760
        %10116 = vmatmul.mubr.f32.gmra.mxu0 %v10115
        %v10117 = vpop.f32.mrf.mxu0
        %v10118 = vadd.f32 %v9925, %v10117
        %v10119 = vpop.f32.mrf.mxu0
        %10120 = vmatprep.mubr.f32.mxu0 0.0
        %v10121 = vand.u32 %v9334, 4294901760
        %v10122 = vsub.f32 %v9334, %v10121
        %v10123 = vand.u32 %v10122, 4294901760
        %10124 = vmatmul.mubr.f32.gmra.mxu0 %v10123
        %v10125 = vpop.f32.mrf.mxu0
        %v10126 = vadd.f32 %v9932, %v10125
        %v10127 = vpop.f32.mrf.mxu0
        %10128 = vmatprep.mubr.f32.mxu0 0.0
        %v10129 = vand.u32 %v9337, 4294901760
        %v10130 = vsub.f32 %v9337, %v10129
        %v10131 = vand.u32 %v10130, 4294901760
        %10132 = vmatmul.mubr.f32.gmra.mxu0 %v10131
        %v10133 = vpop.f32.mrf.mxu0
        %v10134 = vadd.f32 %v9939, %v10133
        %v10135 = vpop.f32.mrf.mxu0
        %10136 = vmatprep.mubr.f32.mxu0 0.0
        %v10137 = vand.u32 %v9340, 4294901760
        %v10138 = vsub.f32 %v9340, %v10137
        %v10139 = vand.u32 %v10138, 4294901760
        %10140 = vmatmul.mubr.f32.gmra.mxu0 %v10139
        %v10141 = vpop.f32.mrf.mxu0
        %v10142 = vadd.f32 %v9946, %v10141
        %v10143 = vpop.f32.mrf.mxu0
        %10144 = vmatprep.mubr.f32.mxu0 0.0
        %v10145 = vand.u32 %v9343, 4294901760
        %v10146 = vsub.f32 %v9343, %v10145
        %v10147 = vand.u32 %v10146, 4294901760
        %10148 = vmatmul.mubr.f32.gmra.mxu0 %v10147
        %v10149 = vpop.f32.mrf.mxu0
        %v10150 = vadd.f32 %v9953, %v10149
        %v10151 = vpop.f32.mrf.mxu0
        %10152 = vmatprep.mubr.f32.mxu0 0.0
        %v10153 = vand.u32 %v9346, 4294901760
        %v10154 = vsub.f32 %v9346, %v10153
        %v10155 = vand.u32 %v10154, 4294901760
        %10156 = vmatmul.mubr.f32.gmra.mxu0 %v10155
        %v10157 = vpop.f32.mrf.mxu0
        %v10158 = vadd.f32 %v9960, %v10157
        %v10159 = vpop.f32.mrf.mxu0
        %10160 = vmatprep.mubr.f32.mxu0 0.0
        %v10161 = vand.u32 %v9349, 4294901760
        %v10162 = vsub.f32 %v9349, %v10161
        %v10163 = vand.u32 %v10162, 4294901760
        %10164 = vmatmul.mubr.f32.gmra.mxu0 %v10163
        %v10165 = vpop.f32.mrf.mxu0
        %v10166 = vadd.f32 %v9967, %v10165
        %v10167 = vpop.f32.mrf.mxu0
        %10168 = vmatprep.mubr.f32.mxu0 0.0
        %v10169 = vand.u32 %v9352, 4294901760
        %v10170 = vsub.f32 %v9352, %v10169
        %v10171 = vand.u32 %v10170, 4294901760
        %10172 = vmatmul.mubr.f32.gmra.mxu0 %v10171
        %v10173 = vpop.f32.mrf.mxu0
        %v10174 = vadd.f32 %v9974, %v10173
        %v10175 = vpop.f32.mrf.mxu0
        %10176 = vmatprep.mubr.f32.mxu0 0.0
        %v10177 = vand.u32 %v9355, 4294901760
        %v10178 = vsub.f32 %v9355, %v10177
        %v10179 = vand.u32 %v10178, 4294901760
        %10180 = vmatmul.mubr.f32.gmra.mxu0 %v10179
        %v10181 = vpop.f32.mrf.mxu0
        %v10182 = vadd.f32 %v9981, %v10181
        %v10183 = vpop.f32.mrf.mxu0
        %10184 = vdwg.mxu0
        %10185 = vmatprep.subr.mxu0 0.0
        %10186 = vmatpush1.msra.mxu0 0.0
        %10187 = vmatprep.subr.mxu0 0.0
        %10188 = vmatpush1.msra.mxu0 0.0
        %10189 = vmatprep.subr.mxu0 0.0
        %10190 = vmatpush1.msra.mxu0 0.0
        %10191 = vmatprep.subr.mxu0 0.0
        %10192 = vmatpush1.msra.mxu0 0.0
        %10193 = vmatprep.subr.mxu0 0.0
        %10194 = vmatpush1.msra.mxu0 0.0
        %10195 = vmatprep.subr.mxu0 0.0
        %10196 = vmatpush1.msra.mxu0 0.0
        %10197 = vmatprep.subr.mxu0 0.0
        %10198 = vmatpush1.msra.mxu0 0.0
        %10199 = vmatprep.subr.mxu0 0.0
        %10200 = vmatpush1.msra.mxu0 0.0
        %10201 = vmatprep.subr.mxu0 0.0
        %v10202 = vand.u32 %v9308, 4294901760
        %v10203 = vsub.f32 %v9308, %v10202
        %v10204 = vand.u32 %v10203, 4294901760
        %10205 = vmatpush1.msra.mxu0 %v10204
        %10206 = vmatprep.subr.mxu0 0.0
        %v10207 = vand.u32 %v9307, 4294901760
        %v10208 = vsub.f32 %v9307, %v10207
        %v10209 = vand.u32 %v10208, 4294901760
        %10210 = vmatpush1.msra.mxu0 %v10209
        %10211 = vmatprep.subr.mxu0 0.0
        %v10212 = vand.u32 %v9306, 4294901760
        %v10213 = vsub.f32 %v9306, %v10212
        %v10214 = vand.u32 %v10213, 4294901760
        %10215 = vmatpush1.msra.mxu0 %v10214
        %10216 = vmatprep.subr.mxu0 0.0
        %v10217 = vand.u32 %v9305, 4294901760
        %v10218 = vsub.f32 %v9305, %v10217
        %v10219 = vand.u32 %v10218, 4294901760
        %10220 = vmatpush1.msra.mxu0 %v10219
        %10221 = vmatprep.subr.mxu0 0.0
        %v10222 = vand.u32 %v9304, 4294901760
        %v10223 = vsub.f32 %v9304, %v10222
        %v10224 = vand.u32 %v10223, 4294901760
        %10225 = vmatpush1.msra.mxu0 %v10224
        %10226 = vmatprep.subr.mxu0 0.0
        %v10227 = vand.u32 %v9303, 4294901760
        %v10228 = vsub.f32 %v9303, %v10227
        %v10229 = vand.u32 %v10228, 4294901760
        %10230 = vmatpush1.msra.mxu0 %v10229
        %10231 = vmatprep.subr.mxu0 0.0
        %v10232 = vand.u32 %v9302, 4294901760
        %v10233 = vsub.f32 %v9302, %v10232
        %v10234 = vand.u32 %v10233, 4294901760
        %10235 = vmatpush1.msra.mxu0 %v10234
        %10236 = vmatprep.subr.mxu0 0.0
        %v10237 = vand.u32 %v9301, 4294901760
        %v10238 = vsub.f32 %v9301, %v10237
        %v10239 = vand.u32 %v10238, 4294901760
        %10240 = vmatpush1.msra.mxu0 %v10239
        %10241 = vmatprep.subr.mxu0 0.0
        %10242 = vmatpush2.msra.mxu0 0.0
        %10243 = vmatprep.subr.mxu0 0.0
        %10244 = vmatpush2.msra.mxu0 0.0
        %10245 = vmatprep.subr.mxu0 0.0
        %10246 = vmatpush2.msra.mxu0 0.0
        %10247 = vmatprep.subr.mxu0 0.0
        %10248 = vmatpush2.msra.mxu0 0.0
        %10249 = vmatprep.subr.mxu0 0.0
        %10250 = vmatpush2.msra.mxu0 0.0
        %10251 = vmatprep.subr.mxu0 0.0
        %10252 = vmatpush2.msra.mxu0 0.0
        %10253 = vmatprep.subr.mxu0 0.0
        %10254 = vmatpush2.msra.mxu0 0.0
        %10255 = vmatprep.subr.mxu0 0.0
        %10256 = vmatpush2.msra.mxu0 0.0
        %10257 = vmatprep.subr.mxu0 0.0
        %10258 = vmatpush2.msra.mxu0 0.0
        %10259 = vmatprep.subr.mxu0 0.0
        %10260 = vmatpush2.msra.mxu0 0.0
        %10261 = vmatprep.subr.mxu0 0.0
        %10262 = vmatpush2.msra.mxu0 0.0
        %10263 = vmatprep.subr.mxu0 0.0
        %10264 = vmatpush2.msra.mxu0 0.0
        %10265 = vmatprep.subr.mxu0 0.0
        %10266 = vmatpush2.msra.mxu0 0.0
        %10267 = vmatprep.subr.mxu0 0.0
        %10268 = vmatpush2.msra.mxu0 0.0
        %10269 = vmatprep.subr.mxu0 0.0
        %10270 = vmatpush2.msra.mxu0 0.0
        %10271 = vmatprep.subr.mxu0 0.0
        %10272 = vmatpush2.msra.mxu0 0.0
        %10273 = vmatprep.mubr.f32.mxu0 0.0
        %v10274 = vand.u32 %v9310, 4294901760
        %10275 = vmatmul.mubr.f32.gmra.mxu0 %v10274
        %v10276 = vpop.f32.mrf.mxu0
        %v10277 = vadd.f32 %v10062, %v10276
        %v10278 = vpop.f32.mrf.mxu0
        %10279 = vmatprep.mubr.f32.mxu0 0.0
        %v10280 = vand.u32 %v9313, 4294901760
        %10281 = vmatmul.mubr.f32.gmra.mxu0 %v10280
        %v10282 = vpop.f32.mrf.mxu0
        %v10283 = vadd.f32 %v10070, %v10282
        %v10284 = vpop.f32.mrf.mxu0
        %10285 = vmatprep.mubr.f32.mxu0 0.0
        %v10286 = vand.u32 %v9316, 4294901760
        %10287 = vmatmul.mubr.f32.gmra.mxu0 %v10286
        %v10288 = vpop.f32.mrf.mxu0
        %v10289 = vadd.f32 %v10078, %v10288
        %v10290 = vpop.f32.mrf.mxu0
        %10291 = vmatprep.mubr.f32.mxu0 0.0
        %v10292 = vand.u32 %v9319, 4294901760
        %10293 = vmatmul.mubr.f32.gmra.mxu0 %v10292
        %v10294 = vpop.f32.mrf.mxu0
        %v10295 = vadd.f32 %v10086, %v10294
        %v10296 = vpop.f32.mrf.mxu0
        %10297 = vmatprep.mubr.f32.mxu0 0.0
        %v10298 = vand.u32 %v9322, 4294901760
        %10299 = vmatmul.mubr.f32.gmra.mxu0 %v10298
        %v10300 = vpop.f32.mrf.mxu0
        %v10301 = vadd.f32 %v10094, %v10300
        %v10302 = vpop.f32.mrf.mxu0
        %10303 = vmatprep.mubr.f32.mxu0 0.0
        %v10304 = vand.u32 %v9325, 4294901760
        %10305 = vmatmul.mubr.f32.gmra.mxu0 %v10304
        %v10306 = vpop.f32.mrf.mxu0
        %v10307 = vadd.f32 %v10102, %v10306
        %v10308 = vpop.f32.mrf.mxu0
        %10309 = vmatprep.mubr.f32.mxu0 0.0
        %v10310 = vand.u32 %v9328, 4294901760
        %10311 = vmatmul.mubr.f32.gmra.mxu0 %v10310
        %v10312 = vpop.f32.mrf.mxu0
        %v10313 = vadd.f32 %v10110, %v10312
        %v10314 = vpop.f32.mrf.mxu0
        %10315 = vmatprep.mubr.f32.mxu0 0.0
        %v10316 = vand.u32 %v9331, 4294901760
        %10317 = vmatmul.mubr.f32.gmra.mxu0 %v10316
        %v10318 = vpop.f32.mrf.mxu0
        %v10319 = vadd.f32 %v10118, %v10318
        %v10320 = vpop.f32.mrf.mxu0
        %10321 = vmatprep.mubr.f32.mxu0 0.0
        %v10322 = vand.u32 %v9334, 4294901760
        %10323 = vmatmul.mubr.f32.gmra.mxu0 %v10322
        %v10324 = vpop.f32.mrf.mxu0
        %v10325 = vadd.f32 %v10126, %v10324
        %v10326 = vpop.f32.mrf.mxu0
        %10327 = vmatprep.mubr.f32.mxu0 0.0
        %v10328 = vand.u32 %v9337, 4294901760
        %10329 = vmatmul.mubr.f32.gmra.mxu0 %v10328
        %v10330 = vpop.f32.mrf.mxu0
        %v10331 = vadd.f32 %v10134, %v10330
        %v10332 = vpop.f32.mrf.mxu0
        %10333 = vmatprep.mubr.f32.mxu0 0.0
        %v10334 = vand.u32 %v9340, 4294901760
        %10335 = vmatmul.mubr.f32.gmra.mxu0 %v10334
        %v10336 = vpop.f32.mrf.mxu0
        %v10337 = vadd.f32 %v10142, %v10336
        %v10338 = vpop.f32.mrf.mxu0
        %10339 = vmatprep.mubr.f32.mxu0 0.0
        %v10340 = vand.u32 %v9343, 4294901760
        %10341 = vmatmul.mubr.f32.gmra.mxu0 %v10340
        %v10342 = vpop.f32.mrf.mxu0
        %v10343 = vadd.f32 %v10150, %v10342
        %v10344 = vpop.f32.mrf.mxu0
        %10345 = vmatprep.mubr.f32.mxu0 0.0
        %v10346 = vand.u32 %v9346, 4294901760
        %10347 = vmatmul.mubr.f32.gmra.mxu0 %v10346
        %v10348 = vpop.f32.mrf.mxu0
        %v10349 = vadd.f32 %v10158, %v10348
        %v10350 = vpop.f32.mrf.mxu0
        %10351 = vmatprep.mubr.f32.mxu0 0.0
        %v10352 = vand.u32 %v9349, 4294901760
        %10353 = vmatmul.mubr.f32.gmra.mxu0 %v10352
        %v10354 = vpop.f32.mrf.mxu0
        %v10355 = vadd.f32 %v10166, %v10354
        %v10356 = vpop.f32.mrf.mxu0
        %10357 = vmatprep.mubr.f32.mxu0 0.0
        %v10358 = vand.u32 %v9352, 4294901760
        %10359 = vmatmul.mubr.f32.gmra.mxu0 %v10358
        %v10360 = vpop.f32.mrf.mxu0
        %v10361 = vadd.f32 %v10174, %v10360
        %v10362 = vpop.f32.mrf.mxu0
        %10363 = vmatprep.mubr.f32.mxu0 0.0
        %v10364 = vand.u32 %v9355, 4294901760
        %10365 = vmatmul.mubr.f32.gmra.mxu0 %v10364
        %v10366 = vpop.f32.mrf.mxu0
        %v10367 = vadd.f32 %v10182, %v10366
        %v10368 = vpop.f32.mrf.mxu0
        %10369 = vdwg.mxu0
        %10370 = vmatprep.subr.mxu0 0.0
        %10371 = vmatpush1.msra.mxu0 0.0
        %10372 = vmatprep.subr.mxu0 0.0
        %10373 = vmatpush1.msra.mxu0 0.0
        %10374 = vmatprep.subr.mxu0 0.0
        %10375 = vmatpush1.msra.mxu0 0.0
        %10376 = vmatprep.subr.mxu0 0.0
        %10377 = vmatpush1.msra.mxu0 0.0
        %10378 = vmatprep.subr.mxu0 0.0
        %10379 = vmatpush1.msra.mxu0 0.0
        %10380 = vmatprep.subr.mxu0 0.0
        %10381 = vmatpush1.msra.mxu0 0.0
        %10382 = vmatprep.subr.mxu0 0.0
        %10383 = vmatpush1.msra.mxu0 0.0
        %10384 = vmatprep.subr.mxu0 0.0
        %10385 = vmatpush1.msra.mxu0 0.0
        %10386 = vmatprep.subr.mxu0 0.0
        %v10387 = vand.u32 %v9308, 4294901760
        %10388 = vmatpush1.msra.mxu0 %v10387
        %10389 = vmatprep.subr.mxu0 0.0
        %v10390 = vand.u32 %v9307, 4294901760
        %10391 = vmatpush1.msra.mxu0 %v10390
        %10392 = vmatprep.subr.mxu0 0.0
        %v10393 = vand.u32 %v9306, 4294901760
        %10394 = vmatpush1.msra.mxu0 %v10393
        %10395 = vmatprep.subr.mxu0 0.0
        %v10396 = vand.u32 %v9305, 4294901760
        %10397 = vmatpush1.msra.mxu0 %v10396
        %10398 = vmatprep.subr.mxu0 0.0
        %v10399 = vand.u32 %v9304, 4294901760
        %10400 = vmatpush1.msra.mxu0 %v10399
        %10401 = vmatprep.subr.mxu0 0.0
        %v10402 = vand.u32 %v9303, 4294901760
        %10403 = vmatpush1.msra.mxu0 %v10402
        %10404 = vmatprep.subr.mxu0 0.0
        %v10405 = vand.u32 %v9302, 4294901760
        %10406 = vmatpush1.msra.mxu0 %v10405
        %10407 = vmatprep.subr.mxu0 0.0
        %v10408 = vand.u32 %v9301, 4294901760
        %10409 = vmatpush1.msra.mxu0 %v10408
        %10410 = vmatprep.subr.mxu0 0.0
        %10411 = vmatpush2.msra.mxu0 0.0
        %10412 = vmatprep.subr.mxu0 0.0
        %10413 = vmatpush2.msra.mxu0 0.0
        %10414 = vmatprep.subr.mxu0 0.0
        %10415 = vmatpush2.msra.mxu0 0.0
        %10416 = vmatprep.subr.mxu0 0.0
        %10417 = vmatpush2.msra.mxu0 0.0
        %10418 = vmatprep.subr.mxu0 0.0
        %10419 = vmatpush2.msra.mxu0 0.0
        %10420 = vmatprep.subr.mxu0 0.0
        %10421 = vmatpush2.msra.mxu0 0.0
        %10422 = vmatprep.subr.mxu0 0.0
        %10423 = vmatpush2.msra.mxu0 0.0
        %10424 = vmatprep.subr.mxu0 0.0
        %10425 = vmatpush2.msra.mxu0 0.0
        %10426 = vmatprep.subr.mxu0 0.0
        %10427 = vmatpush2.msra.mxu0 0.0
        %10428 = vmatprep.subr.mxu0 0.0
        %10429 = vmatpush2.msra.mxu0 0.0
        %10430 = vmatprep.subr.mxu0 0.0
        %10431 = vmatpush2.msra.mxu0 0.0
        %10432 = vmatprep.subr.mxu0 0.0
        %10433 = vmatpush2.msra.mxu0 0.0
        %10434 = vmatprep.subr.mxu0 0.0
        %10435 = vmatpush2.msra.mxu0 0.0
        %10436 = vmatprep.subr.mxu0 0.0
        %10437 = vmatpush2.msra.mxu0 0.0
        %10438 = vmatprep.subr.mxu0 0.0
        %10439 = vmatpush2.msra.mxu0 0.0
        %10440 = vmatprep.subr.mxu0 0.0
        %10441 = vmatpush2.msra.mxu0 0.0
        %10442 = vmatprep.mubr.f32.mxu0 0.0
        %v10443 = vand.u32 %v9310, 4294901760
        %10444 = vmatmul.mubr.f32.gmra.mxu0 %v10443
        %v10445 = vpop.f32.mrf.mxu0
        %v10446 = vadd.f32 %v10277, %v10445
        %v10447 = vpop.f32.mrf.mxu0
        %10448 = vmatprep.mubr.f32.mxu0 0.0
        %v10449 = vand.u32 %v9313, 4294901760
        %10450 = vmatmul.mubr.f32.gmra.mxu0 %v10449
        %v10451 = vpop.f32.mrf.mxu0
        %v10452 = vadd.f32 %v10283, %v10451
        %v10453 = vpop.f32.mrf.mxu0
        %10454 = vmatprep.mubr.f32.mxu0 0.0
        %v10455 = vand.u32 %v9316, 4294901760
        %10456 = vmatmul.mubr.f32.gmra.mxu0 %v10455
        %v10457 = vpop.f32.mrf.mxu0
        %v10458 = vadd.f32 %v10289, %v10457
        %v10459 = vpop.f32.mrf.mxu0
        %10460 = vmatprep.mubr.f32.mxu0 0.0
        %v10461 = vand.u32 %v9319, 4294901760
        %10462 = vmatmul.mubr.f32.gmra.mxu0 %v10461
        %v10463 = vpop.f32.mrf.mxu0
        %v10464 = vadd.f32 %v10295, %v10463
        %v10465 = vpop.f32.mrf.mxu0
        %10466 = vmatprep.mubr.f32.mxu0 0.0
        %v10467 = vand.u32 %v9322, 4294901760
        %10468 = vmatmul.mubr.f32.gmra.mxu0 %v10467
        %v10469 = vpop.f32.mrf.mxu0
        %v10470 = vadd.f32 %v10301, %v10469
        %v10471 = vpop.f32.mrf.mxu0
        %10472 = vmatprep.mubr.f32.mxu0 0.0
        %v10473 = vand.u32 %v9325, 4294901760
        %10474 = vmatmul.mubr.f32.gmra.mxu0 %v10473
        %v10475 = vpop.f32.mrf.mxu0
        %v10476 = vadd.f32 %v10307, %v10475
        %v10477 = vpop.f32.mrf.mxu0
        %10478 = vmatprep.mubr.f32.mxu0 0.0
        %v10479 = vand.u32 %v9328, 4294901760
        %10480 = vmatmul.mubr.f32.gmra.mxu0 %v10479
        %v10481 = vpop.f32.mrf.mxu0
        %v10482 = vadd.f32 %v10313, %v10481
        %v10483 = vpop.f32.mrf.mxu0
        %10484 = vmatprep.mubr.f32.mxu0 0.0
        %v10485 = vand.u32 %v9331, 4294901760
        %10486 = vmatmul.mubr.f32.gmra.mxu0 %v10485
        %v10487 = vpop.f32.mrf.mxu0
        %v10488 = vadd.f32 %v10319, %v10487
        %v10489 = vpop.f32.mrf.mxu0
        %10490 = vmatprep.mubr.f32.mxu0 0.0
        %v10491 = vand.u32 %v9334, 4294901760
        %10492 = vmatmul.mubr.f32.gmra.mxu0 %v10491
        %v10493 = vpop.f32.mrf.mxu0
        %v10494 = vadd.f32 %v10325, %v10493
        %v10495 = vpop.f32.mrf.mxu0
        %10496 = vmatprep.mubr.f32.mxu0 0.0
        %v10497 = vand.u32 %v9337, 4294901760
        %10498 = vmatmul.mubr.f32.gmra.mxu0 %v10497
        %v10499 = vpop.f32.mrf.mxu0
        %v10500 = vadd.f32 %v10331, %v10499
        %v10501 = vpop.f32.mrf.mxu0
        %10502 = vmatprep.mubr.f32.mxu0 0.0
        %v10503 = vand.u32 %v9340, 4294901760
        %10504 = vmatmul.mubr.f32.gmra.mxu0 %v10503
        %v10505 = vpop.f32.mrf.mxu0
        %v10506 = vadd.f32 %v10337, %v10505
        %v10507 = vpop.f32.mrf.mxu0
        %10508 = vmatprep.mubr.f32.mxu0 0.0
        %v10509 = vand.u32 %v9343, 4294901760
        %10510 = vmatmul.mubr.f32.gmra.mxu0 %v10509
        %v10511 = vpop.f32.mrf.mxu0
        %v10512 = vadd.f32 %v10343, %v10511
        %v10513 = vpop.f32.mrf.mxu0
        %10514 = vmatprep.mubr.f32.mxu0 0.0
        %v10515 = vand.u32 %v9346, 4294901760
        %10516 = vmatmul.mubr.f32.gmra.mxu0 %v10515
        %v10517 = vpop.f32.mrf.mxu0
        %v10518 = vadd.f32 %v10349, %v10517
        %v10519 = vpop.f32.mrf.mxu0
        %10520 = vmatprep.mubr.f32.mxu0 0.0
        %v10521 = vand.u32 %v9349, 4294901760
        %10522 = vmatmul.mubr.f32.gmra.mxu0 %v10521
        %v10523 = vpop.f32.mrf.mxu0
        %v10524 = vadd.f32 %v10355, %v10523
        %v10525 = vpop.f32.mrf.mxu0
        %10526 = vmatprep.mubr.f32.mxu0 0.0
        %v10527 = vand.u32 %v9352, 4294901760
        %10528 = vmatmul.mubr.f32.gmra.mxu0 %v10527
        %v10529 = vpop.f32.mrf.mxu0
        %v10530 = vadd.f32 %v10361, %v10529
        %v10531 = vpop.f32.mrf.mxu0
        %10532 = vmatprep.mubr.f32.mxu0 0.0
        %v10533 = vand.u32 %v9355, 4294901760
        %10534 = vmatmul.mubr.f32.gmra.mxu0 %v10533
        %v10535 = vpop.f32.mrf.mxu0
        %v10536 = vadd.f32 %v10367, %v10535
        %v10537 = vpop.f32.mrf.mxu0
        %10538 = vdwg.mxu0
        %v10539 = vadd.f32 %v7582, %v10446
        %v10540 = vadd.f32 %v7583, %v10452
        %v10541 = vadd.f32 %v7584, %v10458
        %v10542 = vadd.f32 %v7585, %v10464
        %v10543 = vadd.f32 %v7586, %v10470
        %v10544 = vadd.f32 %v7587, %v10476
        %v10545 = vadd.f32 %v7588, %v10482
        %v10546 = vadd.f32 %v7589, %v10488
        %v10547 = vadd.f32 %v7590, %v10494
        %v10548 = vadd.f32 %v7591, %v10500
        %v10549 = vadd.f32 %v7592, %v10506
        %v10550 = vadd.f32 %v7593, %v10512
        %v10551 = vadd.f32 %v7594, %v10518
        %v10552 = vadd.f32 %v7595, %v10524
        %v10553 = vadd.f32 %v7596, %v10530
        %v10554 = vadd.f32 %v7597, %v10536
        %v10555 = vmax.f32 %v10539, 0.0
        %v10556 = vmax.f32 %v10540, 0.0
        %v10557 = vmax.f32 %v10541, 0.0
        %v10558 = vmax.f32 %v10542, 0.0
        %v10559 = vmax.f32 %v10543, 0.0
        %v10560 = vmax.f32 %v10544, 0.0
        %v10561 = vmax.f32 %v10545, 0.0
        %v10562 = vmax.f32 %v10546, 0.0
        %v10563 = vmax.f32 %v10547, 0.0
        %v10564 = vmax.f32 %v10548, 0.0
        %v10565 = vmax.f32 %v10549, 0.0
        %v10566 = vmax.f32 %v10550, 0.0
        %v10567 = vmax.f32 %v10551, 0.0
        %v10568 = vmax.f32 %v10552, 0.0
        %v10569 = vmax.f32 %v10553, 0.0
        %v10570 = vmax.f32 %v10554, 0.0
        %10571 = vst [vmem:[%s286] sm:$0xff] %v10555
        %10572 = vst [vmem:[%s286 + $0x8] sm:$0xff] %v10556
        %10573 = vst [vmem:[%s286 + $0x10] sm:$0xff] %v10557
        %10574 = vst [vmem:[%s286 + $0x18] sm:$0xff] %v10558
        %10575 = vst [vmem:[%s286 + $0x20] sm:$0xff] %v10559
        %10576 = vst [vmem:[%s286 + $0x28] sm:$0xff] %v10560
        %10577 = vst [vmem:[%s286 + $0x30] sm:$0xff] %v10561
        %10578 = vst [vmem:[%s286 + $0x38] sm:$0xff] %v10562
        %10579 = vst [vmem:[%s286 + $0x40] sm:$0xff] %v10563
        %10580 = vst [vmem:[%s286 + $0x48] sm:$0xff] %v10564
        %10581 = vst [vmem:[%s286 + $0x50] sm:$0xff] %v10565
        %10582 = vst [vmem:[%s286 + $0x58] sm:$0xff] %v10566
        %10583 = vst [vmem:[%s286 + $0x60] sm:$0xff] %v10567
        %10584 = vst [vmem:[%s286 + $0x68] sm:$0xff] %v10568
        %10585 = vst [vmem:[%s286 + $0x70] sm:$0xff] %v10569
        %10586 = vst [vmem:[%s286 + $0x78] sm:$0xff] %v10570
        %s10587 = sand.u32 %s167, 1
        %s10588 = scalar_lea.sflag [#allocation4], %s10587
        %s10589 = sand.u32 %s167, 1
        %s10590 = smul.addr %s10589, 128
        %s10591 = scalar_lea.vmem [#allocation5], %s10590
        // Predicated region
        $region49: #{tpu_custom_call.1} parent=43 // pred_check
          %p10592 = pneg %p177
        $region50: #{tpu_custom_call.1} parent=43 // pred_check_branch
          %10594 = sbr.rel (%p10592) target = $region52
        $region51: #{tpu_custom_call.1} parent=43 // pred_region
          %s10595 = smul.u32 16, %s23
          %s10597 = ssub.s32 2048, 2048
          %10598 = vsyncadd %s10588, %s10597
          %s10599 = smul.addr %s10595, 128
          %s10600 = scalar_lea.hbm %s6, %s10599
          %s10601 = sshll.u32 %s10591, 4
          %s10602 = int_to_ptr.vmem [resolvable:$true] %s10601
          %10607 = dma.vmem_to_hbm [thread:$0]  %s10602, 2048, %s10600, %s10588, 128, 128, 8
        $region52: #{tpu_custom_call.1} parent=43 // pred_fallthru
          _
      $region44: #{tpu_custom_call.1} parent=5 // pred_fallthru
        _
      %p10608 = scmp.le.s32.totalorder 2, %s18
      // Predicated region
      $region53: #{tpu_custom_call.1} parent=5 // pred_check
        %p10609 = pneg %p10608
      $region54: #{tpu_custom_call.1} parent=5 // pred_check_branch
        %10611 = sbr.rel (%p10609) target = $region56
      $region55: #{tpu_custom_call.1} parent=5 // pred_region
        %s10612 = ssub.s32 %s18, 2
        // Predicated region
        $region57: #{tpu_custom_call.1} parent=55 // pred_check
          %p10613 = pneg %p183
        $region58: #{tpu_custom_call.1} parent=55 // pred_check_branch
          %10615 = sbr.rel (%p10613) target = $region60
        $region59: #{tpu_custom_call.1} parent=55 // pred_region
          %s10616 = sand.u32 %s168, 1
          %s10617 = scalar_lea.sflag [#allocation4], %s10616
          %s10618 = sand.u32 %s168, 1
          %s10619 = smul.addr %s10618, 128
          %s10620 = scalar_lea.vmem [#allocation5], %s10619
          %10621 = dma.done %s10617, 2048
        $region60: #{tpu_custom_call.1} parent=55 // pred_fallthru
          _
      $region56: #{tpu_custom_call.1} parent=5 // pred_fallthru
        _
    $region6: #{tpu_custom_call.1} parent=1 // loop_footer
      %s22 = sadd.s32 1, %s18
    $region7: #{tpu_custom_call.1} parent=1 // loop_footer_branch
      %17 = sbr.rel target = $region3
    $region8: #{tpu_custom_call.1} parent=1 // loop_exit
      _
    %10622 = vsyncpa [#allocation3], 1
    %s10623 = scalar_lea.sflag [#allocation3], 1
    %10624 = vsyncpa %s10623, 1
    %10625 = vsyncpa [#allocation4], 1
    %s10626 = scalar_lea.sflag [#allocation4], 1
    %10627 = vsyncpa %s10626, 1

</llo_original>
